<compile_context>
chip_gen: v6e
topology: v6e:2x2x1
jax: 0.10.0
libtpu: 0.0.40
codegen_flags: <defaults>
</compile_context>

<pallas_src>
import functools

import jax
import jax.numpy as jnp
from jax.experimental import pallas as pl
from jax.experimental.pallas import tpu as pltpu


# ---------------------------------------------------------------------------
# Fused kernel: full TargetAttention forward for ONE image per grid step.
# ---------------------------------------------------------------------------

def _target_attention_kernel(x_ref, pred_ref, w1_ref, b1_ref, w2_ref, b2_ref,
                             w3_ref, b3_ref, out_ref, p2_ref, *, H, W, C1):
    """x_ref:    (1, 1, H*W)        single-channel input image (flattened)
       pred_ref: (1, 3, H*W)        prediction rows for this image
       w1_ref:   (3, C1, 25)        conv1 weights per branch (taps on last dim)
       b1_ref:   (3, C1, 1)
       w2_ref:   (3, C2, 25*C1)     conv2 im2col weights per branch
       b2_ref:   (3, C2, 1)
       w3_ref:   (3, C2, 1)         1x1 conv weights per branch
       b3_ref:   (3, 1, 1)
       out_ref:  (1, 3, H*W)
       p2_ref:   (25*C1, H*W)       VMEM scratch: im2col patch matrix
    """
    HW = H * W
    taps = [(kh, kw) for kh in range(5) for kw in range(5)]

    # Column-validity masks for dw = -2..2, shared by all taps/convs/branches
    # (hoisted: do not rebuild the iota inside the tap loops).
    col = jax.lax.broadcasted_iota(jnp.int32, (1, HW), 1) % W
    col_masks = [((col + dw >= 0) & (col + dw < W)).astype(jnp.float32)
                 for dw in range(-2, 3)]

    def shifted(a, kh, kw):
        """a[:, r*W+c] -> a[:, (r+kh-2)*W + (c+kw-2)], zero outside the image.

        Zero-filled lane shift handles the vertical (row) boundary; the column
        mask handles the horizontal boundary / row wrap-around.
        """
        dh, dw = kh - 2, kw - 2
        s = dh * W + dw
        c = a.shape[0]
        if s > 0:
            sh = jnp.concatenate(
                [a[:, s:], jnp.zeros((c, s), jnp.float32)], axis=1)
        elif s < 0:
            sh = jnp.concatenate(
                [jnp.zeros((c, -s), jnp.float32), a[:, :s]], axis=1)
        else:
            sh = a
        return sh * col_masks[dw + 2]

    cur = x_ref[0]                                   # (1, HW) current branch input
    for b in range(3):                               # three chained branches
        # ---- conv 5x5: 1 -> C1  (Cin == 1: 25 broadcast FMAs) ---------------
        w1 = w1_ref[b]                               # (C1, 25)
        acc1 = jnp.zeros((C1, HW), jnp.float32)
        for t, (kh, kw) in enumerate(taps):
            acc1 = acc1 + w1[:, t:t + 1] * shifted(cur, kh, kw)
        a1 = acc1 + b1_ref[b]                        # (C1, HW)
        a1 = jnp.where(a1 >= 0.0, a1, 0.2 * a1)      # LeakyReLU(0.2)

        # ---- conv 5x5: C1 -> C2 as a single im2col matmul -------------------
        for t, (kh, kw) in enumerate(taps):
            p2_ref[t * C1:(t + 1) * C1, :] = shifted(a1, kh, kw)
        a2 = jnp.dot(w2_ref[b], p2_ref[...],         # (C2, 25*C1) @ (25*C1, HW)
                     preferred_element_type=jnp.float32) + b2_ref[b]
        a2 = jnp.where(a2 >= 0.0, a2, 0.2 * a2)      # LeakyReLU(0.2)

        # ---- conv 1x1: C2 -> 1 (sublane reduction, bias init 2.0) -----------
        h = jnp.sum(a2 * w3_ref[b], axis=0, keepdims=True) + b3_ref[b]   # (1, HW)

        # attention_b = sigmoid(h); output row = prediction_b * attention_b
        out_ref[0, b, :] = pred_ref[0, b, :] * jax.nn.sigmoid(h[0])

        cur = h                                      # raw (pre-sigmoid) h feeds next branch


# ---------------------------------------------------------------------------
# Pallas wrapper
# ---------------------------------------------------------------------------

def target_attention_forward(input_nchw, prediction, params):
    """input_nchw: (N, 1, H, W); prediction: (3, N, H, W) -> (3, N, H, W)."""
    N, Cin, H, W = input_nchw.shape
    assert Cin == 1
    HW = H * W
    C1 = params["w1"].shape[1]
    C2 = params["w2"].shape[1]

    x = input_nchw.reshape(N, 1, HW)                             # lane-dense
    pred = jnp.transpose(prediction, (1, 0, 2, 3)).reshape(N, 3, HW)

    kernel = functools.partial(_target_attention_kernel, H=H, W=W, C1=C1)

    out = pl.pallas_call(
        kernel,
        out_shape=jax.ShapeDtypeStruct((N, 3, HW), jnp.float32),
        grid=(N,),
        in_specs=[
            pl.BlockSpec((1, 1, HW), lambda n: (n, 0, 0)),        # x
            pl.BlockSpec((1, 3, HW), lambda n: (n, 0, 0)),        # prediction
            pl.BlockSpec((3, C1, 25), lambda n: (0, 0, 0)),       # W1
            pl.BlockSpec((3, C1, 1), lambda n: (0, 0, 0)),        # B1
            pl.BlockSpec((3, C2, 25 * C1), lambda n: (0, 0, 0)),  # W2 (im2col)
            pl.BlockSpec((3, C2, 1), lambda n: (0, 0, 0)),        # B2
            pl.BlockSpec((3, C2, 1), lambda n: (0, 0, 0)),        # W3
            pl.BlockSpec((3, 1, 1), lambda n: (0, 0, 0)),         # B3
        ],
        out_specs=pl.BlockSpec((1, 3, HW), lambda n: (n, 0, 0)),
        scratch_shapes=[pltpu.VMEM((25 * C1, HW), jnp.float32)],  # im2col patches
        compiler_params=pltpu.CompilerParams(
            dimension_semantics=("parallel",)),
    )(x, pred, params["w1"], params["b1"], params["w2"], params["b2"],
      params["w3"], params["b3"])

    return jnp.transpose(out.reshape(N, 3, H, W), (1, 0, 2, 3))


# ---------------------------------------------------------------------------
# Deterministic parameter init (mirrors nn.Conv2d default init; last bias = 2.0)
# and packing into the fused kernel's layouts.
# ---------------------------------------------------------------------------

def init_branch_torch(key, final_bias=2.0):
    ks = jax.random.split(key, 5)

    def u(k, shape, fan_in):
        bound = 1.0 / jnp.sqrt(jnp.float32(fan_in))
        return jax.random.uniform(k, shape, jnp.float32, -bound, bound)

    return {
        "w1": u(ks[0], (16, 1, 5, 5), 1 * 25),     # torch OIHW
        "b1": u(ks[1], (16,), 1 * 25),
        "w2": u(ks[2], (32, 16, 5, 5), 16 * 25),
        "b2": u(ks[3], (32,), 16 * 25),
        "w3": u(ks[4], (1, 32, 1, 1), 32),
        "b3": jnp.full((1,), final_bias, jnp.float32),
    }


def pack_params(branches):
    """Stack the 3 branches and convert to the kernel layouts."""
    return {
        # (3, 16, 25): [o, kh*5+kw]
        "w1": jnp.stack([p["w1"].reshape(16, 25) for p in branches]),
        "b1": jnp.stack([p["b1"].reshape(16, 1) for p in branches]),
        # (3, 32, 400): [o, (kh*5+kw)*16 + i]  -- matches im2col row order
        "w2": jnp.stack([jnp.transpose(p["w2"], (0, 2, 3, 1)).reshape(32, 400)
                         for p in branches]),
        "b2": jnp.stack([p["b2"].reshape(32, 1) for p in branches]),
        # (3, 32, 1)
        "w3": jnp.stack([p["w3"].reshape(32, 1) for p in branches]),
        "b3": jnp.stack([p["b3"].reshape(1, 1) for p in branches]),
    }


# ---------------------------------------------------------------------------
# Pure-JAX reference (for correctness check)
# ---------------------------------------------------------------------------

def _ref_conv(x, w_hwio, b, pad):
    y = jax.lax.conv_general_dilated(
        x, w_hwio, window_strides=(1, 1), padding=[(pad, pad), (pad, pad)],
        dimension_numbers=("NHWC", "HWIO", "NHWC"),
        precision=jax.lax.Precision.HIGHEST)
    return y + b.reshape(1, 1, 1, -1)


def _ref_branch(x, p):
    h = _ref_conv(x, jnp.transpose(p["w1"], (2, 3, 1, 0)), p["b1"], 2)
    h = jnp.where(h >= 0, h, 0.2 * h)
    h = _ref_conv(h, jnp.transpose(p["w2"], (2, 3, 1, 0)), p["b2"], 2)
    h = jnp.where(h >= 0, h, 0.2 * h)
    h = _ref_conv(h, jnp.transpose(p["w3"], (2, 3, 1, 0)), p["b3"], 0)
    return h


def _ref_forward(input_nchw, prediction, branches):
    x = jnp.transpose(input_nchw, (0, 2, 3, 1))
    h1 = _ref_branch(x, branches[0])
    h2 = _ref_branch(h1, branches[1])
    h3 = _ref_branch(h2, branches[2])
    att = jnp.stack([jax.nn.sigmoid(h[..., 0]) for h in (h1, h2, h3)], axis=0)
    return prediction * att


# ---------------------------------------------------------------------------
# Main
# ---------------------------------------------------------------------------

if __name__ == "__main__":
    N, H, W = 2, 16, 16
    key = jax.random.PRNGKey(0)
    k_in, k_pred, k1, k2, k3 = jax.random.split(key, 5)

    # PyTorch-style inputs: input NCHW (N,1,H,W), prediction (3,N,H,W).
    input_nchw = jax.random.normal(k_in, (N, 1, H, W), jnp.float32)
    prediction = jax.random.normal(k_pred, (3, N, H, W), jnp.float32)

    branches = [init_branch_torch(k) for k in (k1, k2, k3)]
    params = pack_params(branches)

    fwd = jax.jit(target_attention_forward)
    out = fwd(input_nchw, prediction, params)
    out = jax.block_until_ready(out)

    ref = _ref_forward(input_nchw, prediction, branches)
    assert out.shape == (3, N, H, W)
    assert jnp.allclose(out, ref, atol=1e-3, rtol=1e-3), "mismatch vs reference"

    print("KERNEL_OK")
</pallas_src>

<mosaic_0001>
module attributes {stable_mosaic.version = 11 : i64} {
  func.func @_target_attention_kernel(%arg0: i32, %arg1: memref<1x1x256xf32, #tpu.memory_space<vmem>>, %arg2: memref<1x3x256xf32, #tpu.memory_space<vmem>>, %arg3: memref<3x16x25xf32, #tpu.memory_space<vmem>>, %arg4: memref<3x16x1xf32, #tpu.memory_space<vmem>>, %arg5: memref<3x32x400xf32, #tpu.memory_space<vmem>>, %arg6: memref<3x32x1xf32, #tpu.memory_space<vmem>>, %arg7: memref<3x32x1xf32, #tpu.memory_space<vmem>>, %arg8: memref<3x1x1xf32, #tpu.memory_space<vmem>>, %arg9: memref<1x3x256xf32, #tpu.memory_space<vmem>>, %arg10: memref<400x256xf32, #tpu.memory_space<vmem>>) attributes {dimension_semantics = [#tpu.dimension_semantics<parallel>], iteration_bounds = array<i64: 2>, scalar_prefetch = 0 : i64, scratch_operands = 1 : i64, tpu.core_type = #tpu.core_type<tc>, window_params = [{transform_indices = @transform_0, window_bounds = array<i64: 1, 1, 256>}, {transform_indices = @transform_1, window_bounds = array<i64: 1, 3, 256>}, {pipeline_mode = #tpu.pipeline_mode<synchronous>, transform_indices = @transform_2, window_bounds = array<i64: 3, 16, 25>}, {pipeline_mode = #tpu.pipeline_mode<synchronous>, transform_indices = @transform_3, window_bounds = array<i64: 3, 16, 1>}, {pipeline_mode = #tpu.pipeline_mode<synchronous>, transform_indices = @transform_4, window_bounds = array<i64: 3, 32, 400>}, {pipeline_mode = #tpu.pipeline_mode<synchronous>, transform_indices = @transform_5, window_bounds = array<i64: 3, 32, 1>}, {pipeline_mode = #tpu.pipeline_mode<synchronous>, transform_indices = @transform_6, window_bounds = array<i64: 3, 32, 1>}, {pipeline_mode = #tpu.pipeline_mode<synchronous>, transform_indices = @transform_7, window_bounds = array<i64: 3, 1, 1>}, {transform_indices = @transform_8, window_bounds = array<i64: 1, 3, 256>}]} {
    %0 = tpu.iota {dimensions = array<i32: 1>} : vector<1x256xi32>
    %c16_i32 = arith.constant 16 : i32
    %c0_i32 = arith.constant 0 : i32
    %1 = arith.cmpi eq, %c16_i32, %c0_i32 : i32
    %c1_i32 = arith.constant 1 : i32
    %2 = arith.select %1, %c1_i32, %c16_i32 : i32
    %3 = vector.broadcast %2 : i32 to vector<1x256xi32>
    %4 = arith.remsi %0, %3 : vector<1x256xi32>
    %c0_i32_0 = arith.constant 0 : i32
    %5 = vector.broadcast %c0_i32_0 : i32 to vector<1x256xi32>
    %6 = arith.cmpi ne, %4, %5 : vector<1x256xi32>
    %c0_i32_1 = arith.constant 0 : i32
    %7 = vector.broadcast %c0_i32_1 : i32 to vector<1x256xi32>
    %8 = arith.cmpi slt, %4, %7 : vector<1x256xi32>
    %c0_i32_2 = arith.constant 0 : i32
    %9 = arith.cmpi slt, %2, %c0_i32_2 : i32
    %10 = vector.broadcast %9 : i1 to vector<1x256xi1>
    %11 = vector.broadcast %10 : vector<1x256xi1> to vector<1x256xi1>
    %12 = arith.xori %8, %11 : vector<1x256xi1>
    %13 = arith.andi %12, %6 : vector<1x256xi1>
    %14 = vector.broadcast %2 : i32 to vector<1x256xi32>
    %15 = arith.addi %4, %14 : vector<1x256xi32>
    %16 = arith.select %13, %15, %4 : vector<1x256xi1>, vector<1x256xi32>
    %c-2_i32 = arith.constant -2 : i32
    %17 = vector.broadcast %c-2_i32 : i32 to vector<1x256xi32>
    %18 = arith.addi %16, %17 : vector<1x256xi32>
    %c0_i32_3 = arith.constant 0 : i32
    %19 = vector.broadcast %c0_i32_3 : i32 to vector<1x256xi32>
    %20 = arith.cmpi sge, %18, %19 : vector<1x256xi32>
    %c-2_i32_4 = arith.constant -2 : i32
    %21 = vector.broadcast %c-2_i32_4 : i32 to vector<1x256xi32>
    %22 = arith.addi %16, %21 : vector<1x256xi32>
    %c16_i32_5 = arith.constant 16 : i32
    %23 = vector.broadcast %c16_i32_5 : i32 to vector<1x256xi32>
    %24 = arith.cmpi slt, %22, %23 : vector<1x256xi32>
    %25 = arith.andi %20, %24 : vector<1x256xi1>
    %26 = arith.extui %25 : vector<1x256xi1> to vector<1x256xi32>
    %27 = arith.sitofp %26 : vector<1x256xi32> to vector<1x256xf32>
    %c-1_i32 = arith.constant -1 : i32
    %28 = vector.broadcast %c-1_i32 : i32 to vector<1x256xi32>
    %29 = arith.addi %16, %28 : vector<1x256xi32>
    %c0_i32_6 = arith.constant 0 : i32
    %30 = vector.broadcast %c0_i32_6 : i32 to vector<1x256xi32>
    %31 = arith.cmpi sge, %29, %30 : vector<1x256xi32>
    %c-1_i32_7 = arith.constant -1 : i32
    %32 = vector.broadcast %c-1_i32_7 : i32 to vector<1x256xi32>
    %33 = arith.addi %16, %32 : vector<1x256xi32>
    %c16_i32_8 = arith.constant 16 : i32
    %34 = vector.broadcast %c16_i32_8 : i32 to vector<1x256xi32>
    %35 = arith.cmpi slt, %33, %34 : vector<1x256xi32>
    %36 = arith.andi %31, %35 : vector<1x256xi1>
    %37 = arith.extui %36 : vector<1x256xi1> to vector<1x256xi32>
    %38 = arith.sitofp %37 : vector<1x256xi32> to vector<1x256xf32>
    %c0_i32_9 = arith.constant 0 : i32
    %39 = vector.broadcast %c0_i32_9 : i32 to vector<1x256xi32>
    %40 = arith.addi %16, %39 : vector<1x256xi32>
    %c0_i32_10 = arith.constant 0 : i32
    %41 = vector.broadcast %c0_i32_10 : i32 to vector<1x256xi32>
    %42 = arith.cmpi sge, %40, %41 : vector<1x256xi32>
    %c0_i32_11 = arith.constant 0 : i32
    %43 = vector.broadcast %c0_i32_11 : i32 to vector<1x256xi32>
    %44 = arith.addi %16, %43 : vector<1x256xi32>
    %c16_i32_12 = arith.constant 16 : i32
    %45 = vector.broadcast %c16_i32_12 : i32 to vector<1x256xi32>
    %46 = arith.cmpi slt, %44, %45 : vector<1x256xi32>
    %47 = arith.andi %42, %46 : vector<1x256xi1>
    %48 = arith.extui %47 : vector<1x256xi1> to vector<1x256xi32>
    %49 = arith.sitofp %48 : vector<1x256xi32> to vector<1x256xf32>
    %c1_i32_13 = arith.constant 1 : i32
    %50 = vector.broadcast %c1_i32_13 : i32 to vector<1x256xi32>
    %51 = arith.addi %16, %50 : vector<1x256xi32>
    %c0_i32_14 = arith.constant 0 : i32
    %52 = vector.broadcast %c0_i32_14 : i32 to vector<1x256xi32>
    %53 = arith.cmpi sge, %51, %52 : vector<1x256xi32>
    %c1_i32_15 = arith.constant 1 : i32
    %54 = vector.broadcast %c1_i32_15 : i32 to vector<1x256xi32>
    %55 = arith.addi %16, %54 : vector<1x256xi32>
    %c16_i32_16 = arith.constant 16 : i32
    %56 = vector.broadcast %c16_i32_16 : i32 to vector<1x256xi32>
    %57 = arith.cmpi slt, %55, %56 : vector<1x256xi32>
    %58 = arith.andi %53, %57 : vector<1x256xi1>
    %59 = arith.extui %58 : vector<1x256xi1> to vector<1x256xi32>
    %60 = arith.sitofp %59 : vector<1x256xi32> to vector<1x256xf32>
    %c2_i32 = arith.constant 2 : i32
    %61 = vector.broadcast %c2_i32 : i32 to vector<1x256xi32>
    %62 = arith.addi %16, %61 : vector<1x256xi32>
    %c0_i32_17 = arith.constant 0 : i32
    %63 = vector.broadcast %c0_i32_17 : i32 to vector<1x256xi32>
    %64 = arith.cmpi sge, %62, %63 : vector<1x256xi32>
    %c2_i32_18 = arith.constant 2 : i32
    %65 = vector.broadcast %c2_i32_18 : i32 to vector<1x256xi32>
    %66 = arith.addi %16, %65 : vector<1x256xi32>
    %c16_i32_19 = arith.constant 16 : i32
    %67 = vector.broadcast %c16_i32_19 : i32 to vector<1x256xi32>
    %68 = arith.cmpi slt, %66, %67 : vector<1x256xi32>
    %69 = arith.andi %64, %68 : vector<1x256xi1>
    %70 = arith.extui %69 : vector<1x256xi1> to vector<1x256xi32>
    %71 = arith.sitofp %70 : vector<1x256xi32> to vector<1x256xf32>
    %c0 = arith.constant 0 : index
    %c0_20 = arith.constant 0 : index
    %c0_21 = arith.constant 0 : index
    %72 = vector.load %arg1[%c0, %c0_20, %c0_21] : memref<1x1x256xf32, #tpu.memory_space<vmem>>, vector<1x1x256xf32>
    %73 = vector.shape_cast %72 : vector<1x1x256xf32> to vector<1x256xf32>
    %c0_22 = arith.constant 0 : index
    %c0_23 = arith.constant 0 : index
    %c0_24 = arith.constant 0 : index
    %74 = vector.load %arg3[%c0_22, %c0_23, %c0_24] : memref<3x16x25xf32, #tpu.memory_space<vmem>>, vector<1x16x25xf32>
    %75 = vector.shape_cast %74 : vector<1x16x25xf32> to vector<16x25xf32>
    %cst = arith.constant 0.000000e+00 : f32
    %76 = vector.broadcast %cst : f32 to vector<16x256xf32>
    %77 = vector.extract_strided_slice %75 {offsets = [0, 0], sizes = [16, 1], strides = [1, 1]} : vector<16x25xf32> to vector<16x1xf32>
    %cst_25 = arith.constant 0.000000e+00 : f32
    %78 = vector.broadcast %cst_25 : f32 to vector<1x34xf32>
    %79 = vector.extract_strided_slice %73 {offsets = [0, 0], sizes = [1, 222], strides = [1, 1]} : vector<1x256xf32> to vector<1x222xf32>
    %80 = tpu.concatenate %78, %79 in 1 : vector<1x34xf32>, vector<1x222xf32> -> vector<1x256xf32>
    %81 = arith.mulf %80, %27 : vector<1x256xf32>
    %82 = vector.broadcast %77 : vector<16x1xf32> to vector<16x256xf32>
    %83 = vector.broadcast %81 : vector<1x256xf32> to vector<16x256xf32>
    %84 = arith.mulf %82, %83 : vector<16x256xf32>
    %85 = arith.addf %76, %84 : vector<16x256xf32>
    %86 = vector.extract_strided_slice %75 {offsets = [0, 1], sizes = [16, 1], strides = [1, 1]} : vector<16x25xf32> to vector<16x1xf32>
    %cst_26 = arith.constant 0.000000e+00 : f32
    %87 = vector.broadcast %cst_26 : f32 to vector<1x33xf32>
    %88 = vector.extract_strided_slice %73 {offsets = [0, 0], sizes = [1, 223], strides = [1, 1]} : vector<1x256xf32> to vector<1x223xf32>
    %89 = tpu.concatenate %87, %88 in 1 : vector<1x33xf32>, vector<1x223xf32> -> vector<1x256xf32>
    %90 = arith.mulf %89, %38 : vector<1x256xf32>
    %91 = vector.broadcast %86 : vector<16x1xf32> to vector<16x256xf32>
    %92 = vector.broadcast %90 : vector<1x256xf32> to vector<16x256xf32>
    %93 = arith.mulf %91, %92 : vector<16x256xf32>
    %94 = arith.addf %85, %93 : vector<16x256xf32>
    %95 = vector.extract_strided_slice %75 {offsets = [0, 2], sizes = [16, 1], strides = [1, 1]} : vector<16x25xf32> to vector<16x1xf32>
    %cst_27 = arith.constant 0.000000e+00 : f32
    %96 = vector.broadcast %cst_27 : f32 to vector<1x32xf32>
    %97 = vector.extract_strided_slice %73 {offsets = [0, 0], sizes = [1, 224], strides = [1, 1]} : vector<1x256xf32> to vector<1x224xf32>
    %98 = tpu.concatenate %96, %97 in 1 : vector<1x32xf32>, vector<1x224xf32> -> vector<1x256xf32>
    %99 = arith.mulf %98, %49 : vector<1x256xf32>
    %100 = vector.broadcast %95 : vector<16x1xf32> to vector<16x256xf32>
    %101 = vector.broadcast %99 : vector<1x256xf32> to vector<16x256xf32>
    %102 = arith.mulf %100, %101 : vector<16x256xf32>
    %103 = arith.addf %94, %102 : vector<16x256xf32>
    %104 = vector.extract_strided_slice %75 {offsets = [0, 3], sizes = [16, 1], strides = [1, 1]} : vector<16x25xf32> to vector<16x1xf32>
    %cst_28 = arith.constant 0.000000e+00 : f32
    %105 = vector.broadcast %cst_28 : f32 to vector<1x31xf32>
    %106 = vector.extract_strided_slice %73 {offsets = [0, 0], sizes = [1, 225], strides = [1, 1]} : vector<1x256xf32> to vector<1x225xf32>
    %107 = tpu.concatenate %105, %106 in 1 : vector<1x31xf32>, vector<1x225xf32> -> vector<1x256xf32>
    %108 = arith.mulf %107, %60 : vector<1x256xf32>
    %109 = vector.broadcast %104 : vector<16x1xf32> to vector<16x256xf32>
    %110 = vector.broadcast %108 : vector<1x256xf32> to vector<16x256xf32>
    %111 = arith.mulf %109, %110 : vector<16x256xf32>
    %112 = arith.addf %103, %111 : vector<16x256xf32>
    %113 = vector.extract_strided_slice %75 {offsets = [0, 4], sizes = [16, 1], strides = [1, 1]} : vector<16x25xf32> to vector<16x1xf32>
    %cst_29 = arith.constant 0.000000e+00 : f32
    %114 = vector.broadcast %cst_29 : f32 to vector<1x30xf32>
    %115 = vector.extract_strided_slice %73 {offsets = [0, 0], sizes = [1, 226], strides = [1, 1]} : vector<1x256xf32> to vector<1x226xf32>
    %116 = tpu.concatenate %114, %115 in 1 : vector<1x30xf32>, vector<1x226xf32> -> vector<1x256xf32>
    %117 = arith.mulf %116, %71 : vector<1x256xf32>
    %118 = vector.broadcast %113 : vector<16x1xf32> to vector<16x256xf32>
    %119 = vector.broadcast %117 : vector<1x256xf32> to vector<16x256xf32>
    %120 = arith.mulf %118, %119 : vector<16x256xf32>
    %121 = arith.addf %112, %120 : vector<16x256xf32>
    %122 = vector.extract_strided_slice %75 {offsets = [0, 5], sizes = [16, 1], strides = [1, 1]} : vector<16x25xf32> to vector<16x1xf32>
    %cst_30 = arith.constant 0.000000e+00 : f32
    %123 = vector.broadcast %cst_30 : f32 to vector<1x18xf32>
    %124 = vector.extract_strided_slice %73 {offsets = [0, 0], sizes = [1, 238], strides = [1, 1]} : vector<1x256xf32> to vector<1x238xf32>
    %125 = tpu.concatenate %123, %124 in 1 : vector<1x18xf32>, vector<1x238xf32> -> vector<1x256xf32>
    %126 = arith.mulf %125, %27 : vector<1x256xf32>
    %127 = vector.broadcast %122 : vector<16x1xf32> to vector<16x256xf32>
    %128 = vector.broadcast %126 : vector<1x256xf32> to vector<16x256xf32>
    %129 = arith.mulf %127, %128 : vector<16x256xf32>
    %130 = arith.addf %121, %129 : vector<16x256xf32>
    %131 = vector.extract_strided_slice %75 {offsets = [0, 6], sizes = [16, 1], strides = [1, 1]} : vector<16x25xf32> to vector<16x1xf32>
    %cst_31 = arith.constant 0.000000e+00 : f32
    %132 = vector.broadcast %cst_31 : f32 to vector<1x17xf32>
    %133 = vector.extract_strided_slice %73 {offsets = [0, 0], sizes = [1, 239], strides = [1, 1]} : vector<1x256xf32> to vector<1x239xf32>
    %134 = tpu.concatenate %132, %133 in 1 : vector<1x17xf32>, vector<1x239xf32> -> vector<1x256xf32>
    %135 = arith.mulf %134, %38 : vector<1x256xf32>
    %136 = vector.broadcast %131 : vector<16x1xf32> to vector<16x256xf32>
    %137 = vector.broadcast %135 : vector<1x256xf32> to vector<16x256xf32>
    %138 = arith.mulf %136, %137 : vector<16x256xf32>
    %139 = arith.addf %130, %138 : vector<16x256xf32>
    %140 = vector.extract_strided_slice %75 {offsets = [0, 7], sizes = [16, 1], strides = [1, 1]} : vector<16x25xf32> to vector<16x1xf32>
    %cst_32 = arith.constant 0.000000e+00 : f32
    %141 = vector.broadcast %cst_32 : f32 to vector<1x16xf32>
    %142 = vector.extract_strided_slice %73 {offsets = [0, 0], sizes = [1, 240], strides = [1, 1]} : vector<1x256xf32> to vector<1x240xf32>
    %143 = tpu.concatenate %141, %142 in 1 : vector<1x16xf32>, vector<1x240xf32> -> vector<1x256xf32>
    %144 = arith.mulf %143, %49 : vector<1x256xf32>
    %145 = vector.broadcast %140 : vector<16x1xf32> to vector<16x256xf32>
    %146 = vector.broadcast %144 : vector<1x256xf32> to vector<16x256xf32>
    %147 = arith.mulf %145, %146 : vector<16x256xf32>
    %148 = arith.addf %139, %147 : vector<16x256xf32>
    %149 = vector.extract_strided_slice %75 {offsets = [0, 8], sizes = [16, 1], strides = [1, 1]} : vector<16x25xf32> to vector<16x1xf32>
    %cst_33 = arith.constant 0.000000e+00 : f32
    %150 = vector.broadcast %cst_33 : f32 to vector<1x15xf32>
    %151 = vector.extract_strided_slice %73 {offsets = [0, 0], sizes = [1, 241], strides = [1, 1]} : vector<1x256xf32> to vector<1x241xf32>
    %152 = tpu.concatenate %150, %151 in 1 : vector<1x15xf32>, vector<1x241xf32> -> vector<1x256xf32>
    %153 = arith.mulf %152, %60 : vector<1x256xf32>
    %154 = vector.broadcast %149 : vector<16x1xf32> to vector<16x256xf32>
    %155 = vector.broadcast %153 : vector<1x256xf32> to vector<16x256xf32>
    %156 = arith.mulf %154, %155 : vector<16x256xf32>
    %157 = arith.addf %148, %156 : vector<16x256xf32>
    %158 = vector.extract_strided_slice %75 {offsets = [0, 9], sizes = [16, 1], strides = [1, 1]} : vector<16x25xf32> to vector<16x1xf32>
    %cst_34 = arith.constant 0.000000e+00 : f32
    %159 = vector.broadcast %cst_34 : f32 to vector<1x14xf32>
    %160 = vector.extract_strided_slice %73 {offsets = [0, 0], sizes = [1, 242], strides = [1, 1]} : vector<1x256xf32> to vector<1x242xf32>
    %161 = tpu.concatenate %159, %160 in 1 : vector<1x14xf32>, vector<1x242xf32> -> vector<1x256xf32>
    %162 = arith.mulf %161, %71 : vector<1x256xf32>
    %163 = vector.broadcast %158 : vector<16x1xf32> to vector<16x256xf32>
    %164 = vector.broadcast %162 : vector<1x256xf32> to vector<16x256xf32>
    %165 = arith.mulf %163, %164 : vector<16x256xf32>
    %166 = arith.addf %157, %165 : vector<16x256xf32>
    %167 = vector.extract_strided_slice %75 {offsets = [0, 10], sizes = [16, 1], strides = [1, 1]} : vector<16x25xf32> to vector<16x1xf32>
    %cst_35 = arith.constant 0.000000e+00 : f32
    %168 = vector.broadcast %cst_35 : f32 to vector<1x2xf32>
    %169 = vector.extract_strided_slice %73 {offsets = [0, 0], sizes = [1, 254], strides = [1, 1]} : vector<1x256xf32> to vector<1x254xf32>
    %170 = tpu.concatenate %168, %169 in 1 : vector<1x2xf32>, vector<1x254xf32> -> vector<1x256xf32>
    %171 = arith.mulf %170, %27 : vector<1x256xf32>
    %172 = vector.broadcast %167 : vector<16x1xf32> to vector<16x256xf32>
    %173 = vector.broadcast %171 : vector<1x256xf32> to vector<16x256xf32>
    %174 = arith.mulf %172, %173 : vector<16x256xf32>
    %175 = arith.addf %166, %174 : vector<16x256xf32>
    %176 = vector.extract_strided_slice %75 {offsets = [0, 11], sizes = [16, 1], strides = [1, 1]} : vector<16x25xf32> to vector<16x1xf32>
    %cst_36 = arith.constant 0.000000e+00 : f32
    %177 = vector.broadcast %cst_36 : f32 to vector<1x1xf32>
    %178 = vector.extract_strided_slice %73 {offsets = [0, 0], sizes = [1, 255], strides = [1, 1]} : vector<1x256xf32> to vector<1x255xf32>
    %179 = tpu.concatenate %177, %178 in 1 : vector<1x1xf32>, vector<1x255xf32> -> vector<1x256xf32>
    %180 = arith.mulf %179, %38 : vector<1x256xf32>
    %181 = vector.broadcast %176 : vector<16x1xf32> to vector<16x256xf32>
    %182 = vector.broadcast %180 : vector<1x256xf32> to vector<16x256xf32>
    %183 = arith.mulf %181, %182 : vector<16x256xf32>
    %184 = arith.addf %175, %183 : vector<16x256xf32>
    %185 = vector.extract_strided_slice %75 {offsets = [0, 12], sizes = [16, 1], strides = [1, 1]} : vector<16x25xf32> to vector<16x1xf32>
    %186 = arith.mulf %73, %49 : vector<1x256xf32>
    %187 = vector.broadcast %185 : vector<16x1xf32> to vector<16x256xf32>
    %188 = vector.broadcast %186 : vector<1x256xf32> to vector<16x256xf32>
    %189 = arith.mulf %187, %188 : vector<16x256xf32>
    %190 = arith.addf %184, %189 : vector<16x256xf32>
    %191 = vector.extract_strided_slice %75 {offsets = [0, 13], sizes = [16, 1], strides = [1, 1]} : vector<16x25xf32> to vector<16x1xf32>
    %192 = vector.extract_strided_slice %73 {offsets = [0, 1], sizes = [1, 255], strides = [1, 1]} : vector<1x256xf32> to vector<1x255xf32>
    %cst_37 = arith.constant 0.000000e+00 : f32
    %193 = vector.broadcast %cst_37 : f32 to vector<1x1xf32>
    %194 = tpu.concatenate %192, %193 in 1 : vector<1x255xf32>, vector<1x1xf32> -> vector<1x256xf32>
    %195 = arith.mulf %194, %60 : vector<1x256xf32>
    %196 = vector.broadcast %191 : vector<16x1xf32> to vector<16x256xf32>
    %197 = vector.broadcast %195 : vector<1x256xf32> to vector<16x256xf32>
    %198 = arith.mulf %196, %197 : vector<16x256xf32>
    %199 = arith.addf %190, %198 : vector<16x256xf32>
    %200 = vector.extract_strided_slice %75 {offsets = [0, 14], sizes = [16, 1], strides = [1, 1]} : vector<16x25xf32> to vector<16x1xf32>
    %201 = vector.extract_strided_slice %73 {offsets = [0, 2], sizes = [1, 254], strides = [1, 1]} : vector<1x256xf32> to vector<1x254xf32>
    %cst_38 = arith.constant 0.000000e+00 : f32
    %202 = vector.broadcast %cst_38 : f32 to vector<1x2xf32>
    %203 = tpu.concatenate %201, %202 in 1 : vector<1x254xf32>, vector<1x2xf32> -> vector<1x256xf32>
    %204 = arith.mulf %203, %71 : vector<1x256xf32>
    %205 = vector.broadcast %200 : vector<16x1xf32> to vector<16x256xf32>
    %206 = vector.broadcast %204 : vector<1x256xf32> to vector<16x256xf32>
    %207 = arith.mulf %205, %206 : vector<16x256xf32>
    %208 = arith.addf %199, %207 : vector<16x256xf32>
    %209 = vector.extract_strided_slice %75 {offsets = [0, 15], sizes = [16, 1], strides = [1, 1]} : vector<16x25xf32> to vector<16x1xf32>
    %210 = vector.extract_strided_slice %73 {offsets = [0, 14], sizes = [1, 242], strides = [1, 1]} : vector<1x256xf32> to vector<1x242xf32>
    %cst_39 = arith.constant 0.000000e+00 : f32
    %211 = vector.broadcast %cst_39 : f32 to vector<1x14xf32>
    %212 = tpu.concatenate %210, %211 in 1 : vector<1x242xf32>, vector<1x14xf32> -> vector<1x256xf32>
    %213 = arith.mulf %212, %27 : vector<1x256xf32>
    %214 = vector.broadcast %209 : vector<16x1xf32> to vector<16x256xf32>
    %215 = vector.broadcast %213 : vector<1x256xf32> to vector<16x256xf32>
    %216 = arith.mulf %214, %215 : vector<16x256xf32>
    %217 = arith.addf %208, %216 : vector<16x256xf32>
    %218 = vector.extract_strided_slice %75 {offsets = [0, 16], sizes = [16, 1], strides = [1, 1]} : vector<16x25xf32> to vector<16x1xf32>
    %219 = vector.extract_strided_slice %73 {offsets = [0, 15], sizes = [1, 241], strides = [1, 1]} : vector<1x256xf32> to vector<1x241xf32>
    %cst_40 = arith.constant 0.000000e+00 : f32
    %220 = vector.broadcast %cst_40 : f32 to vector<1x15xf32>
    %221 = tpu.concatenate %219, %220 in 1 : vector<1x241xf32>, vector<1x15xf32> -> vector<1x256xf32>
    %222 = arith.mulf %221, %38 : vector<1x256xf32>
    %223 = vector.broadcast %218 : vector<16x1xf32> to vector<16x256xf32>
    %224 = vector.broadcast %222 : vector<1x256xf32> to vector<16x256xf32>
    %225 = arith.mulf %223, %224 : vector<16x256xf32>
    %226 = arith.addf %217, %225 : vector<16x256xf32>
    %227 = vector.extract_strided_slice %75 {offsets = [0, 17], sizes = [16, 1], strides = [1, 1]} : vector<16x25xf32> to vector<16x1xf32>
    %228 = vector.extract_strided_slice %73 {offsets = [0, 16], sizes = [1, 240], strides = [1, 1]} : vector<1x256xf32> to vector<1x240xf32>
    %cst_41 = arith.constant 0.000000e+00 : f32
    %229 = vector.broadcast %cst_41 : f32 to vector<1x16xf32>
    %230 = tpu.concatenate %228, %229 in 1 : vector<1x240xf32>, vector<1x16xf32> -> vector<1x256xf32>
    %231 = arith.mulf %230, %49 : vector<1x256xf32>
    %232 = vector.broadcast %227 : vector<16x1xf32> to vector<16x256xf32>
    %233 = vector.broadcast %231 : vector<1x256xf32> to vector<16x256xf32>
    %234 = arith.mulf %232, %233 : vector<16x256xf32>
    %235 = arith.addf %226, %234 : vector<16x256xf32>
    %236 = vector.extract_strided_slice %75 {offsets = [0, 18], sizes = [16, 1], strides = [1, 1]} : vector<16x25xf32> to vector<16x1xf32>
    %237 = vector.extract_strided_slice %73 {offsets = [0, 17], sizes = [1, 239], strides = [1, 1]} : vector<1x256xf32> to vector<1x239xf32>
    %cst_42 = arith.constant 0.000000e+00 : f32
    %238 = vector.broadcast %cst_42 : f32 to vector<1x17xf32>
    %239 = tpu.concatenate %237, %238 in 1 : vector<1x239xf32>, vector<1x17xf32> -> vector<1x256xf32>
    %240 = arith.mulf %239, %60 : vector<1x256xf32>
    %241 = vector.broadcast %236 : vector<16x1xf32> to vector<16x256xf32>
    %242 = vector.broadcast %240 : vector<1x256xf32> to vector<16x256xf32>
    %243 = arith.mulf %241, %242 : vector<16x256xf32>
    %244 = arith.addf %235, %243 : vector<16x256xf32>
    %245 = vector.extract_strided_slice %75 {offsets = [0, 19], sizes = [16, 1], strides = [1, 1]} : vector<16x25xf32> to vector<16x1xf32>
    %246 = vector.extract_strided_slice %73 {offsets = [0, 18], sizes = [1, 238], strides = [1, 1]} : vector<1x256xf32> to vector<1x238xf32>
    %cst_43 = arith.constant 0.000000e+00 : f32
    %247 = vector.broadcast %cst_43 : f32 to vector<1x18xf32>
    %248 = tpu.concatenate %246, %247 in 1 : vector<1x238xf32>, vector<1x18xf32> -> vector<1x256xf32>
    %249 = arith.mulf %248, %71 : vector<1x256xf32>
    %250 = vector.broadcast %245 : vector<16x1xf32> to vector<16x256xf32>
    %251 = vector.broadcast %249 : vector<1x256xf32> to vector<16x256xf32>
    %252 = arith.mulf %250, %251 : vector<16x256xf32>
    %253 = arith.addf %244, %252 : vector<16x256xf32>
    %254 = vector.extract_strided_slice %75 {offsets = [0, 20], sizes = [16, 1], strides = [1, 1]} : vector<16x25xf32> to vector<16x1xf32>
    %255 = vector.extract_strided_slice %73 {offsets = [0, 30], sizes = [1, 226], strides = [1, 1]} : vector<1x256xf32> to vector<1x226xf32>
    %cst_44 = arith.constant 0.000000e+00 : f32
    %256 = vector.broadcast %cst_44 : f32 to vector<1x30xf32>
    %257 = tpu.concatenate %255, %256 in 1 : vector<1x226xf32>, vector<1x30xf32> -> vector<1x256xf32>
    %258 = arith.mulf %257, %27 : vector<1x256xf32>
    %259 = vector.broadcast %254 : vector<16x1xf32> to vector<16x256xf32>
    %260 = vector.broadcast %258 : vector<1x256xf32> to vector<16x256xf32>
    %261 = arith.mulf %259, %260 : vector<16x256xf32>
    %262 = arith.addf %253, %261 : vector<16x256xf32>
    %263 = vector.extract_strided_slice %75 {offsets = [0, 21], sizes = [16, 1], strides = [1, 1]} : vector<16x25xf32> to vector<16x1xf32>
    %264 = vector.extract_strided_slice %73 {offsets = [0, 31], sizes = [1, 225], strides = [1, 1]} : vector<1x256xf32> to vector<1x225xf32>
    %cst_45 = arith.constant 0.000000e+00 : f32
    %265 = vector.broadcast %cst_45 : f32 to vector<1x31xf32>
    %266 = tpu.concatenate %264, %265 in 1 : vector<1x225xf32>, vector<1x31xf32> -> vector<1x256xf32>
    %267 = arith.mulf %266, %38 : vector<1x256xf32>
    %268 = vector.broadcast %263 : vector<16x1xf32> to vector<16x256xf32>
    %269 = vector.broadcast %267 : vector<1x256xf32> to vector<16x256xf32>
    %270 = arith.mulf %268, %269 : vector<16x256xf32>
    %271 = arith.addf %262, %270 : vector<16x256xf32>
    %272 = vector.extract_strided_slice %75 {offsets = [0, 22], sizes = [16, 1], strides = [1, 1]} : vector<16x25xf32> to vector<16x1xf32>
    %273 = vector.extract_strided_slice %73 {offsets = [0, 32], sizes = [1, 224], strides = [1, 1]} : vector<1x256xf32> to vector<1x224xf32>
    %cst_46 = arith.constant 0.000000e+00 : f32
    %274 = vector.broadcast %cst_46 : f32 to vector<1x32xf32>
    %275 = tpu.concatenate %273, %274 in 1 : vector<1x224xf32>, vector<1x32xf32> -> vector<1x256xf32>
    %276 = arith.mulf %275, %49 : vector<1x256xf32>
    %277 = vector.broadcast %272 : vector<16x1xf32> to vector<16x256xf32>
    %278 = vector.broadcast %276 : vector<1x256xf32> to vector<16x256xf32>
    %279 = arith.mulf %277, %278 : vector<16x256xf32>
    %280 = arith.addf %271, %279 : vector<16x256xf32>
    %281 = vector.extract_strided_slice %75 {offsets = [0, 23], sizes = [16, 1], strides = [1, 1]} : vector<16x25xf32> to vector<16x1xf32>
    %282 = vector.extract_strided_slice %73 {offsets = [0, 33], sizes = [1, 223], strides = [1, 1]} : vector<1x256xf32> to vector<1x223xf32>
    %cst_47 = arith.constant 0.000000e+00 : f32
    %283 = vector.broadcast %cst_47 : f32 to vector<1x33xf32>
    %284 = tpu.concatenate %282, %283 in 1 : vector<1x223xf32>, vector<1x33xf32> -> vector<1x256xf32>
    %285 = arith.mulf %284, %60 : vector<1x256xf32>
    %286 = vector.broadcast %281 : vector<16x1xf32> to vector<16x256xf32>
    %287 = vector.broadcast %285 : vector<1x256xf32> to vector<16x256xf32>
    %288 = arith.mulf %286, %287 : vector<16x256xf32>
    %289 = arith.addf %280, %288 : vector<16x256xf32>
    %290 = vector.extract_strided_slice %75 {offsets = [0, 24], sizes = [16, 1], strides = [1, 1]} : vector<16x25xf32> to vector<16x1xf32>
    %291 = vector.extract_strided_slice %73 {offsets = [0, 34], sizes = [1, 222], strides = [1, 1]} : vector<1x256xf32> to vector<1x222xf32>
    %cst_48 = arith.constant 0.000000e+00 : f32
    %292 = vector.broadcast %cst_48 : f32 to vector<1x34xf32>
    %293 = tpu.concatenate %291, %292 in 1 : vector<1x222xf32>, vector<1x34xf32> -> vector<1x256xf32>
    %294 = arith.mulf %293, %71 : vector<1x256xf32>
    %295 = vector.broadcast %290 : vector<16x1xf32> to vector<16x256xf32>
    %296 = vector.broadcast %294 : vector<1x256xf32> to vector<16x256xf32>
    %297 = arith.mulf %295, %296 : vector<16x256xf32>
    %298 = arith.addf %289, %297 : vector<16x256xf32>
    %c0_49 = arith.constant 0 : index
    %c0_50 = arith.constant 0 : index
    %c0_51 = arith.constant 0 : index
    %299 = vector.load %arg4[%c0_49, %c0_50, %c0_51] : memref<3x16x1xf32, #tpu.memory_space<vmem>>, vector<1x16x1xf32>
    %300 = vector.shape_cast %299 : vector<1x16x1xf32> to vector<16x1xf32>
    %301 = vector.broadcast %300 : vector<16x1xf32> to vector<16x256xf32>
    %302 = arith.addf %298, %301 : vector<16x256xf32>
    %cst_52 = arith.constant 0.000000e+00 : f32
    %303 = vector.broadcast %cst_52 : f32 to vector<16x256xf32>
    %304 = arith.cmpf oge, %302, %303 : vector<16x256xf32>
    %cst_53 = arith.constant 2.000000e-01 : f32
    %305 = vector.broadcast %cst_53 : f32 to vector<16x256xf32>
    %306 = arith.mulf %305, %302 : vector<16x256xf32>
    %307 = arith.select %304, %302, %306 : vector<16x256xi1>, vector<16x256xf32>
    %cst_54 = arith.constant 0.000000e+00 : f32
    %308 = vector.broadcast %cst_54 : f32 to vector<16x34xf32>
    %309 = vector.extract_strided_slice %307 {offsets = [0, 0], sizes = [16, 222], strides = [1, 1]} : vector<16x256xf32> to vector<16x222xf32>
    %310 = tpu.concatenate %308, %309 in 1 : vector<16x34xf32>, vector<16x222xf32> -> vector<16x256xf32>
    %311 = vector.broadcast %27 : vector<1x256xf32> to vector<16x256xf32>
    %312 = arith.mulf %310, %311 : vector<16x256xf32>
    %c0_55 = arith.constant 0 : index
    %c0_56 = arith.constant 0 : index
    %313 = vector.load %arg10[%c0_55, %c0_56] : memref<400x256xf32, #tpu.memory_space<vmem>>, vector<16x256xf32>
    tpu.vector_store %arg10[%c0_55, %c0_56], %312 {strides = array<i32>} : memref<400x256xf32, #tpu.memory_space<vmem>>, vector<16x256xf32>,
    %cst_57 = arith.constant 0.000000e+00 : f32
    %314 = vector.broadcast %cst_57 : f32 to vector<16x33xf32>
    %315 = vector.extract_strided_slice %307 {offsets = [0, 0], sizes = [16, 223], strides = [1, 1]} : vector<16x256xf32> to vector<16x223xf32>
    %316 = tpu.concatenate %314, %315 in 1 : vector<16x33xf32>, vector<16x223xf32> -> vector<16x256xf32>
    %317 = vector.broadcast %38 : vector<1x256xf32> to vector<16x256xf32>
    %318 = arith.mulf %316, %317 : vector<16x256xf32>
    %c16 = arith.constant 16 : index
    %c0_58 = arith.constant 0 : index
    %319 = vector.load %arg10[%c16, %c0_58] : memref<400x256xf32, #tpu.memory_space<vmem>>, vector<16x256xf32>
    tpu.vector_store %arg10[%c16, %c0_58], %318 {strides = array<i32>} : memref<400x256xf32, #tpu.memory_space<vmem>>, vector<16x256xf32>,
    %cst_59 = arith.constant 0.000000e+00 : f32
    %320 = vector.broadcast %cst_59 : f32 to vector<16x32xf32>
    %321 = vector.extract_strided_slice %307 {offsets = [0, 0], sizes = [16, 224], strides = [1, 1]} : vector<16x256xf32> to vector<16x224xf32>
    %322 = tpu.concatenate %320, %321 in 1 : vector<16x32xf32>, vector<16x224xf32> -> vector<16x256xf32>
    %323 = vector.broadcast %49 : vector<1x256xf32> to vector<16x256xf32>
    %324 = arith.mulf %322, %323 : vector<16x256xf32>
    %c32 = arith.constant 32 : index
    %c0_60 = arith.constant 0 : index
    %325 = vector.load %arg10[%c32, %c0_60] : memref<400x256xf32, #tpu.memory_space<vmem>>, vector<16x256xf32>
    tpu.vector_store %arg10[%c32, %c0_60], %324 {strides = array<i32>} : memref<400x256xf32, #tpu.memory_space<vmem>>, vector<16x256xf32>,
    %cst_61 = arith.constant 0.000000e+00 : f32
    %326 = vector.broadcast %cst_61 : f32 to vector<16x31xf32>
    %327 = vector.extract_strided_slice %307 {offsets = [0, 0], sizes = [16, 225], strides = [1, 1]} : vector<16x256xf32> to vector<16x225xf32>
    %328 = tpu.concatenate %326, %327 in 1 : vector<16x31xf32>, vector<16x225xf32> -> vector<16x256xf32>
    %329 = vector.broadcast %60 : vector<1x256xf32> to vector<16x256xf32>
    %330 = arith.mulf %328, %329 : vector<16x256xf32>
    %c48 = arith.constant 48 : index
    %c0_62 = arith.constant 0 : index
    %331 = vector.load %arg10[%c48, %c0_62] : memref<400x256xf32, #tpu.memory_space<vmem>>, vector<16x256xf32>
    tpu.vector_store %arg10[%c48, %c0_62], %330 {strides = array<i32>} : memref<400x256xf32, #tpu.memory_space<vmem>>, vector<16x256xf32>,
    %cst_63 = arith.constant 0.000000e+00 : f32
    %332 = vector.broadcast %cst_63 : f32 to vector<16x30xf32>
    %333 = vector.extract_strided_slice %307 {offsets = [0, 0], sizes = [16, 226], strides = [1, 1]} : vector<16x256xf32> to vector<16x226xf32>
    %334 = tpu.concatenate %332, %333 in 1 : vector<16x30xf32>, vector<16x226xf32> -> vector<16x256xf32>
    %335 = vector.broadcast %71 : vector<1x256xf32> to vector<16x256xf32>
    %336 = arith.mulf %334, %335 : vector<16x256xf32>
    %c64 = arith.constant 64 : index
    %c0_64 = arith.constant 0 : index
    %337 = vector.load %arg10[%c64, %c0_64] : memref<400x256xf32, #tpu.memory_space<vmem>>, vector<16x256xf32>
    tpu.vector_store %arg10[%c64, %c0_64], %336 {strides = array<i32>} : memref<400x256xf32, #tpu.memory_space<vmem>>, vector<16x256xf32>,
    %cst_65 = arith.constant 0.000000e+00 : f32
    %338 = vector.broadcast %cst_65 : f32 to vector<16x18xf32>
    %339 = vector.extract_strided_slice %307 {offsets = [0, 0], sizes = [16, 238], strides = [1, 1]} : vector<16x256xf32> to vector<16x238xf32>
    %340 = tpu.concatenate %338, %339 in 1 : vector<16x18xf32>, vector<16x238xf32> -> vector<16x256xf32>
    %341 = vector.broadcast %27 : vector<1x256xf32> to vector<16x256xf32>
    %342 = arith.mulf %340, %341 : vector<16x256xf32>
    %c80 = arith.constant 80 : index
    %c0_66 = arith.constant 0 : index
    %343 = vector.load %arg10[%c80, %c0_66] : memref<400x256xf32, #tpu.memory_space<vmem>>, vector<16x256xf32>
    tpu.vector_store %arg10[%c80, %c0_66], %342 {strides = array<i32>} : memref<400x256xf32, #tpu.memory_space<vmem>>, vector<16x256xf32>,
    %cst_67 = arith.constant 0.000000e+00 : f32
    %344 = vector.broadcast %cst_67 : f32 to vector<16x17xf32>
    %345 = vector.extract_strided_slice %307 {offsets = [0, 0], sizes = [16, 239], strides = [1, 1]} : vector<16x256xf32> to vector<16x239xf32>
    %346 = tpu.concatenate %344, %345 in 1 : vector<16x17xf32>, vector<16x239xf32> -> vector<16x256xf32>
    %347 = vector.broadcast %38 : vector<1x256xf32> to vector<16x256xf32>
    %348 = arith.mulf %346, %347 : vector<16x256xf32>
    %c96 = arith.constant 96 : index
    %c0_68 = arith.constant 0 : index
    %349 = vector.load %arg10[%c96, %c0_68] : memref<400x256xf32, #tpu.memory_space<vmem>>, vector<16x256xf32>
    tpu.vector_store %arg10[%c96, %c0_68], %348 {strides = array<i32>} : memref<400x256xf32, #tpu.memory_space<vmem>>, vector<16x256xf32>,
    %cst_69 = arith.constant 0.000000e+00 : f32
    %350 = vector.broadcast %cst_69 : f32 to vector<16x16xf32>
    %351 = vector.extract_strided_slice %307 {offsets = [0, 0], sizes = [16, 240], strides = [1, 1]} : vector<16x256xf32> to vector<16x240xf32>
    %352 = tpu.concatenate %350, %351 in 1 : vector<16x16xf32>, vector<16x240xf32> -> vector<16x256xf32>
    %353 = vector.broadcast %49 : vector<1x256xf32> to vector<16x256xf32>
    %354 = arith.mulf %352, %353 : vector<16x256xf32>
    %c112 = arith.constant 112 : index
    %c0_70 = arith.constant 0 : index
    %355 = vector.load %arg10[%c112, %c0_70] : memref<400x256xf32, #tpu.memory_space<vmem>>, vector<16x256xf32>
    tpu.vector_store %arg10[%c112, %c0_70], %354 {strides = array<i32>} : memref<400x256xf32, #tpu.memory_space<vmem>>, vector<16x256xf32>,
    %cst_71 = arith.constant 0.000000e+00 : f32
    %356 = vector.broadcast %cst_71 : f32 to vector<16x15xf32>
    %357 = vector.extract_strided_slice %307 {offsets = [0, 0], sizes = [16, 241], strides = [1, 1]} : vector<16x256xf32> to vector<16x241xf32>
    %358 = tpu.concatenate %356, %357 in 1 : vector<16x15xf32>, vector<16x241xf32> -> vector<16x256xf32>
    %359 = vector.broadcast %60 : vector<1x256xf32> to vector<16x256xf32>
    %360 = arith.mulf %358, %359 : vector<16x256xf32>
    %c128 = arith.constant 128 : index
    %c0_72 = arith.constant 0 : index
    %361 = vector.load %arg10[%c128, %c0_72] : memref<400x256xf32, #tpu.memory_space<vmem>>, vector<16x256xf32>
    tpu.vector_store %arg10[%c128, %c0_72], %360 {strides = array<i32>} : memref<400x256xf32, #tpu.memory_space<vmem>>, vector<16x256xf32>,
    %cst_73 = arith.constant 0.000000e+00 : f32
    %362 = vector.broadcast %cst_73 : f32 to vector<16x14xf32>
    %363 = vector.extract_strided_slice %307 {offsets = [0, 0], sizes = [16, 242], strides = [1, 1]} : vector<16x256xf32> to vector<16x242xf32>
    %364 = tpu.concatenate %362, %363 in 1 : vector<16x14xf32>, vector<16x242xf32> -> vector<16x256xf32>
    %365 = vector.broadcast %71 : vector<1x256xf32> to vector<16x256xf32>
    %366 = arith.mulf %364, %365 : vector<16x256xf32>
    %c144 = arith.constant 144 : index
    %c0_74 = arith.constant 0 : index
    %367 = vector.load %arg10[%c144, %c0_74] : memref<400x256xf32, #tpu.memory_space<vmem>>, vector<16x256xf32>
    tpu.vector_store %arg10[%c144, %c0_74], %366 {strides = array<i32>} : memref<400x256xf32, #tpu.memory_space<vmem>>, vector<16x256xf32>,
    %cst_75 = arith.constant 0.000000e+00 : f32
    %368 = vector.broadcast %cst_75 : f32 to vector<16x2xf32>
    %369 = vector.extract_strided_slice %307 {offsets = [0, 0], sizes = [16, 254], strides = [1, 1]} : vector<16x256xf32> to vector<16x254xf32>
    %370 = tpu.concatenate %368, %369 in 1 : vector<16x2xf32>, vector<16x254xf32> -> vector<16x256xf32>
    %371 = vector.broadcast %27 : vector<1x256xf32> to vector<16x256xf32>
    %372 = arith.mulf %370, %371 : vector<16x256xf32>
    %c160 = arith.constant 160 : index
    %c0_76 = arith.constant 0 : index
    %373 = vector.load %arg10[%c160, %c0_76] : memref<400x256xf32, #tpu.memory_space<vmem>>, vector<16x256xf32>
    tpu.vector_store %arg10[%c160, %c0_76], %372 {strides = array<i32>} : memref<400x256xf32, #tpu.memory_space<vmem>>, vector<16x256xf32>,
    %cst_77 = arith.constant 0.000000e+00 : f32
    %374 = vector.broadcast %cst_77 : f32 to vector<16x1xf32>
    %375 = vector.extract_strided_slice %307 {offsets = [0, 0], sizes = [16, 255], strides = [1, 1]} : vector<16x256xf32> to vector<16x255xf32>
    %376 = tpu.concatenate %374, %375 in 1 : vector<16x1xf32>, vector<16x255xf32> -> vector<16x256xf32>
    %377 = vector.broadcast %38 : vector<1x256xf32> to vector<16x256xf32>
    %378 = arith.mulf %376, %377 : vector<16x256xf32>
    %c176 = arith.constant 176 : index
    %c0_78 = arith.constant 0 : index
    %379 = vector.load %arg10[%c176, %c0_78] : memref<400x256xf32, #tpu.memory_space<vmem>>, vector<16x256xf32>
    tpu.vector_store %arg10[%c176, %c0_78], %378 {strides = array<i32>} : memref<400x256xf32, #tpu.memory_space<vmem>>, vector<16x256xf32>,
    %380 = vector.broadcast %49 : vector<1x256xf32> to vector<16x256xf32>
    %381 = arith.mulf %307, %380 : vector<16x256xf32>
    %c192 = arith.constant 192 : index
    %c0_79 = arith.constant 0 : index
    %382 = vector.load %arg10[%c192, %c0_79] : memref<400x256xf32, #tpu.memory_space<vmem>>, vector<16x256xf32>
    tpu.vector_store %arg10[%c192, %c0_79], %381 {strides = array<i32>} : memref<400x256xf32, #tpu.memory_space<vmem>>, vector<16x256xf32>,
    %383 = vector.extract_strided_slice %307 {offsets = [0, 1], sizes = [16, 255], strides = [1, 1]} : vector<16x256xf32> to vector<16x255xf32>
    %cst_80 = arith.constant 0.000000e+00 : f32
    %384 = vector.broadcast %cst_80 : f32 to vector<16x1xf32>
    %385 = tpu.concatenate %383, %384 in 1 : vector<16x255xf32>, vector<16x1xf32> -> vector<16x256xf32>
    %386 = vector.broadcast %60 : vector<1x256xf32> to vector<16x256xf32>
    %387 = arith.mulf %385, %386 : vector<16x256xf32>
    %c208 = arith.constant 208 : index
    %c0_81 = arith.constant 0 : index
    %388 = vector.load %arg10[%c208, %c0_81] : memref<400x256xf32, #tpu.memory_space<vmem>>, vector<16x256xf32>
    tpu.vector_store %arg10[%c208, %c0_81], %387 {strides = array<i32>} : memref<400x256xf32, #tpu.memory_space<vmem>>, vector<16x256xf32>,
    %389 = vector.extract_strided_slice %307 {offsets = [0, 2], sizes = [16, 254], strides = [1, 1]} : vector<16x256xf32> to vector<16x254xf32>
    %cst_82 = arith.constant 0.000000e+00 : f32
    %390 = vector.broadcast %cst_82 : f32 to vector<16x2xf32>
    %391 = tpu.concatenate %389, %390 in 1 : vector<16x254xf32>, vector<16x2xf32> -> vector<16x256xf32>
    %392 = vector.broadcast %71 : vector<1x256xf32> to vector<16x256xf32>
    %393 = arith.mulf %391, %392 : vector<16x256xf32>
    %c224 = arith.constant 224 : index
    %c0_83 = arith.constant 0 : index
    %394 = vector.load %arg10[%c224, %c0_83] : memref<400x256xf32, #tpu.memory_space<vmem>>, vector<16x256xf32>
    tpu.vector_store %arg10[%c224, %c0_83], %393 {strides = array<i32>} : memref<400x256xf32, #tpu.memory_space<vmem>>, vector<16x256xf32>,
    %395 = vector.extract_strided_slice %307 {offsets = [0, 14], sizes = [16, 242], strides = [1, 1]} : vector<16x256xf32> to vector<16x242xf32>
    %cst_84 = arith.constant 0.000000e+00 : f32
    %396 = vector.broadcast %cst_84 : f32 to vector<16x14xf32>
    %397 = tpu.concatenate %395, %396 in 1 : vector<16x242xf32>, vector<16x14xf32> -> vector<16x256xf32>
    %398 = vector.broadcast %27 : vector<1x256xf32> to vector<16x256xf32>
    %399 = arith.mulf %397, %398 : vector<16x256xf32>
    %c240 = arith.constant 240 : index
    %c0_85 = arith.constant 0 : index
    %400 = vector.load %arg10[%c240, %c0_85] : memref<400x256xf32, #tpu.memory_space<vmem>>, vector<16x256xf32>
    tpu.vector_store %arg10[%c240, %c0_85], %399 {strides = array<i32>} : memref<400x256xf32, #tpu.memory_space<vmem>>, vector<16x256xf32>,
    %401 = vector.extract_strided_slice %307 {offsets = [0, 15], sizes = [16, 241], strides = [1, 1]} : vector<16x256xf32> to vector<16x241xf32>
    %cst_86 = arith.constant 0.000000e+00 : f32
    %402 = vector.broadcast %cst_86 : f32 to vector<16x15xf32>
    %403 = tpu.concatenate %401, %402 in 1 : vector<16x241xf32>, vector<16x15xf32> -> vector<16x256xf32>
    %404 = vector.broadcast %38 : vector<1x256xf32> to vector<16x256xf32>
    %405 = arith.mulf %403, %404 : vector<16x256xf32>
    %c256 = arith.constant 256 : index
    %c0_87 = arith.constant 0 : index
    %406 = vector.load %arg10[%c256, %c0_87] : memref<400x256xf32, #tpu.memory_space<vmem>>, vector<16x256xf32>
    tpu.vector_store %arg10[%c256, %c0_87], %405 {strides = array<i32>} : memref<400x256xf32, #tpu.memory_space<vmem>>, vector<16x256xf32>,
    %407 = vector.extract_strided_slice %307 {offsets = [0, 16], sizes = [16, 240], strides = [1, 1]} : vector<16x256xf32> to vector<16x240xf32>
    %cst_88 = arith.constant 0.000000e+00 : f32
    %408 = vector.broadcast %cst_88 : f32 to vector<16x16xf32>
    %409 = tpu.concatenate %407, %408 in 1 : vector<16x240xf32>, vector<16x16xf32> -> vector<16x256xf32>
    %410 = vector.broadcast %49 : vector<1x256xf32> to vector<16x256xf32>
    %411 = arith.mulf %409, %410 : vector<16x256xf32>
    %c272 = arith.constant 272 : index
    %c0_89 = arith.constant 0 : index
    %412 = vector.load %arg10[%c272, %c0_89] : memref<400x256xf32, #tpu.memory_space<vmem>>, vector<16x256xf32>
    tpu.vector_store %arg10[%c272, %c0_89], %411 {strides = array<i32>} : memref<400x256xf32, #tpu.memory_space<vmem>>, vector<16x256xf32>,
    %413 = vector.extract_strided_slice %307 {offsets = [0, 17], sizes = [16, 239], strides = [1, 1]} : vector<16x256xf32> to vector<16x239xf32>
    %cst_90 = arith.constant 0.000000e+00 : f32
    %414 = vector.broadcast %cst_90 : f32 to vector<16x17xf32>
    %415 = tpu.concatenate %413, %414 in 1 : vector<16x239xf32>, vector<16x17xf32> -> vector<16x256xf32>
    %416 = vector.broadcast %60 : vector<1x256xf32> to vector<16x256xf32>
    %417 = arith.mulf %415, %416 : vector<16x256xf32>
    %c288 = arith.constant 288 : index
    %c0_91 = arith.constant 0 : index
    %418 = vector.load %arg10[%c288, %c0_91] : memref<400x256xf32, #tpu.memory_space<vmem>>, vector<16x256xf32>
    tpu.vector_store %arg10[%c288, %c0_91], %417 {strides = array<i32>} : memref<400x256xf32, #tpu.memory_space<vmem>>, vector<16x256xf32>,
    %419 = vector.extract_strided_slice %307 {offsets = [0, 18], sizes = [16, 238], strides = [1, 1]} : vector<16x256xf32> to vector<16x238xf32>
    %cst_92 = arith.constant 0.000000e+00 : f32
    %420 = vector.broadcast %cst_92 : f32 to vector<16x18xf32>
    %421 = tpu.concatenate %419, %420 in 1 : vector<16x238xf32>, vector<16x18xf32> -> vector<16x256xf32>
    %422 = vector.broadcast %71 : vector<1x256xf32> to vector<16x256xf32>
    %423 = arith.mulf %421, %422 : vector<16x256xf32>
    %c304 = arith.constant 304 : index
    %c0_93 = arith.constant 0 : index
    %424 = vector.load %arg10[%c304, %c0_93] : memref<400x256xf32, #tpu.memory_space<vmem>>, vector<16x256xf32>
    tpu.vector_store %arg10[%c304, %c0_93], %423 {strides = array<i32>} : memref<400x256xf32, #tpu.memory_space<vmem>>, vector<16x256xf32>,
    %425 = vector.extract_strided_slice %307 {offsets = [0, 30], sizes = [16, 226], strides = [1, 1]} : vector<16x256xf32> to vector<16x226xf32>
    %cst_94 = arith.constant 0.000000e+00 : f32
    %426 = vector.broadcast %cst_94 : f32 to vector<16x30xf32>
    %427 = tpu.concatenate %425, %426 in 1 : vector<16x226xf32>, vector<16x30xf32> -> vector<16x256xf32>
    %428 = vector.broadcast %27 : vector<1x256xf32> to vector<16x256xf32>
    %429 = arith.mulf %427, %428 : vector<16x256xf32>
    %c320 = arith.constant 320 : index
    %c0_95 = arith.constant 0 : index
    %430 = vector.load %arg10[%c320, %c0_95] : memref<400x256xf32, #tpu.memory_space<vmem>>, vector<16x256xf32>
    tpu.vector_store %arg10[%c320, %c0_95], %429 {strides = array<i32>} : memref<400x256xf32, #tpu.memory_space<vmem>>, vector<16x256xf32>,
    %431 = vector.extract_strided_slice %307 {offsets = [0, 31], sizes = [16, 225], strides = [1, 1]} : vector<16x256xf32> to vector<16x225xf32>
    %cst_96 = arith.constant 0.000000e+00 : f32
    %432 = vector.broadcast %cst_96 : f32 to vector<16x31xf32>
    %433 = tpu.concatenate %431, %432 in 1 : vector<16x225xf32>, vector<16x31xf32> -> vector<16x256xf32>
    %434 = vector.broadcast %38 : vector<1x256xf32> to vector<16x256xf32>
    %435 = arith.mulf %433, %434 : vector<16x256xf32>
    %c336 = arith.constant 336 : index
    %c0_97 = arith.constant 0 : index
    %436 = vector.load %arg10[%c336, %c0_97] : memref<400x256xf32, #tpu.memory_space<vmem>>, vector<16x256xf32>
    tpu.vector_store %arg10[%c336, %c0_97], %435 {strides = array<i32>} : memref<400x256xf32, #tpu.memory_space<vmem>>, vector<16x256xf32>,
    %437 = vector.extract_strided_slice %307 {offsets = [0, 32], sizes = [16, 224], strides = [1, 1]} : vector<16x256xf32> to vector<16x224xf32>
    %cst_98 = arith.constant 0.000000e+00 : f32
    %438 = vector.broadcast %cst_98 : f32 to vector<16x32xf32>
    %439 = tpu.concatenate %437, %438 in 1 : vector<16x224xf32>, vector<16x32xf32> -> vector<16x256xf32>
    %440 = vector.broadcast %49 : vector<1x256xf32> to vector<16x256xf32>
    %441 = arith.mulf %439, %440 : vector<16x256xf32>
    %c352 = arith.constant 352 : index
    %c0_99 = arith.constant 0 : index
    %442 = vector.load %arg10[%c352, %c0_99] : memref<400x256xf32, #tpu.memory_space<vmem>>, vector<16x256xf32>
    tpu.vector_store %arg10[%c352, %c0_99], %441 {strides = array<i32>} : memref<400x256xf32, #tpu.memory_space<vmem>>, vector<16x256xf32>,
    %443 = vector.extract_strided_slice %307 {offsets = [0, 33], sizes = [16, 223], strides = [1, 1]} : vector<16x256xf32> to vector<16x223xf32>
    %cst_100 = arith.constant 0.000000e+00 : f32
    %444 = vector.broadcast %cst_100 : f32 to vector<16x33xf32>
    %445 = tpu.concatenate %443, %444 in 1 : vector<16x223xf32>, vector<16x33xf32> -> vector<16x256xf32>
    %446 = vector.broadcast %60 : vector<1x256xf32> to vector<16x256xf32>
    %447 = arith.mulf %445, %446 : vector<16x256xf32>
    %c368 = arith.constant 368 : index
    %c0_101 = arith.constant 0 : index
    %448 = vector.load %arg10[%c368, %c0_101] : memref<400x256xf32, #tpu.memory_space<vmem>>, vector<16x256xf32>
    tpu.vector_store %arg10[%c368, %c0_101], %447 {strides = array<i32>} : memref<400x256xf32, #tpu.memory_space<vmem>>, vector<16x256xf32>,
    %449 = vector.extract_strided_slice %307 {offsets = [0, 34], sizes = [16, 222], strides = [1, 1]} : vector<16x256xf32> to vector<16x222xf32>
    %cst_102 = arith.constant 0.000000e+00 : f32
    %450 = vector.broadcast %cst_102 : f32 to vector<16x34xf32>
    %451 = tpu.concatenate %449, %450 in 1 : vector<16x222xf32>, vector<16x34xf32> -> vector<16x256xf32>
    %452 = vector.broadcast %71 : vector<1x256xf32> to vector<16x256xf32>
    %453 = arith.mulf %451, %452 : vector<16x256xf32>
    %c384 = arith.constant 384 : index
    %c0_103 = arith.constant 0 : index
    %454 = vector.load %arg10[%c384, %c0_103] : memref<400x256xf32, #tpu.memory_space<vmem>>, vector<16x256xf32>
    tpu.vector_store %arg10[%c384, %c0_103], %453 {strides = array<i32>} : memref<400x256xf32, #tpu.memory_space<vmem>>, vector<16x256xf32>,
    %c0_104 = arith.constant 0 : index
    %c0_105 = arith.constant 0 : index
    %c0_106 = arith.constant 0 : index
    %455 = vector.load %arg5[%c0_104, %c0_105, %c0_106] : memref<3x32x400xf32, #tpu.memory_space<vmem>>, vector<1x32x400xf32>
    %456 = vector.shape_cast %455 : vector<1x32x400xf32> to vector<32x400xf32>
    %c0_107 = arith.constant 0 : index
    %c0_108 = arith.constant 0 : index
    %457 = vector.load %arg10[%c0_107, %c0_108] : memref<400x256xf32, #tpu.memory_space<vmem>>, vector<400x256xf32>
    %cst_109 = arith.constant dense<0.000000e+00> : vector<32x256xf32>
    %458 = tpu.matmul %456, %457, %cst_109 {dimension_numbers = #tpu.dot_dimension_numbers<[1], [0], [0], [1], [0, 0, 1, 1], [], []>} : vector<32x400xf32>, vector<400x256xf32>, vector<32x256xf32> -> vector<32x256xf32>
    %c0_110 = arith.constant 0 : index
    %c0_111 = arith.constant 0 : index
    %c0_112 = arith.constant 0 : index
    %459 = vector.load %arg6[%c0_110, %c0_111, %c0_112] : memref<3x32x1xf32, #tpu.memory_space<vmem>>, vector<1x32x1xf32>
    %460 = vector.shape_cast %459 : vector<1x32x1xf32> to vector<32x1xf32>
    %461 = vector.broadcast %460 : vector<32x1xf32> to vector<32x256xf32>
    %462 = arith.addf %458, %461 : vector<32x256xf32>
    %cst_113 = arith.constant 0.000000e+00 : f32
    %463 = vector.broadcast %cst_113 : f32 to vector<32x256xf32>
    %464 = arith.cmpf oge, %462, %463 : vector<32x256xf32>
    %cst_114 = arith.constant 2.000000e-01 : f32
    %465 = vector.broadcast %cst_114 : f32 to vector<32x256xf32>
    %466 = arith.mulf %465, %462 : vector<32x256xf32>
    %467 = arith.select %464, %462, %466 : vector<32x256xi1>, vector<32x256xf32>
    %c0_115 = arith.constant 0 : index
    %c0_116 = arith.constant 0 : index
    %c0_117 = arith.constant 0 : index
    %468 = vector.load %arg7[%c0_115, %c0_116, %c0_117] : memref<3x32x1xf32, #tpu.memory_space<vmem>>, vector<1x32x1xf32>
    %469 = vector.shape_cast %468 : vector<1x32x1xf32> to vector<32x1xf32>
    %470 = vector.broadcast %469 : vector<32x1xf32> to vector<32x256xf32>
    %471 = arith.mulf %467, %470 : vector<32x256xf32>
    %cst_118 = arith.constant dense<0.000000e+00> : vector<256xf32>
    %472 = vector.multi_reduction <add>, %471, %cst_118 [0] : vector<32x256xf32> to vector<256xf32>
    %473 = vector.shape_cast %472 : vector<256xf32> to vector<1x256xf32>
    %c0_119 = arith.constant 0 : index
    %c0_120 = arith.constant 0 : index
    %c0_121 = arith.constant 0 : index
    %474 = vector.load %arg8[%c0_119, %c0_120, %c0_121] : memref<3x1x1xf32, #tpu.memory_space<vmem>>, vector<1x1x1xf32>
    %475 = vector.shape_cast %474 : vector<1x1x1xf32> to vector<1x1xf32>
    %476 = vector.broadcast %475 : vector<1x1xf32> to vector<1x256xf32>
    %477 = arith.addf %473, %476 : vector<1x256xf32>
    %c0_122 = arith.constant 0 : index
    %c0_123 = arith.constant 0 : index
    %c0_124 = arith.constant 0 : index
    %478 = vector.load %arg2[%c0_122, %c0_123, %c0_124] : memref<1x3x256xf32, #tpu.memory_space<vmem>>, vector<1x1x256xf32>
    %479 = vector.shape_cast %478 : vector<1x1x256xf32> to vector<256xf32>
    %480 = vector.shape_cast %477 : vector<1x256xf32> to vector<256xf32>
    %481 = arith.negf %480 : vector<256xf32>
    %482 = math.exp %481 : vector<256xf32>
    %cst_125 = arith.constant 1.000000e+00 : f32
    %483 = vector.broadcast %cst_125 : f32 to vector<256xf32>
    %484 = arith.addf %483, %482 : vector<256xf32>
    %485 = arith.divf %483, %484 : vector<256xf32>
    %486 = arith.mulf %479, %485 : vector<256xf32>
    %c0_126 = arith.constant 0 : index
    %c0_127 = arith.constant 0 : index
    %c0_128 = arith.constant 0 : index
    %487 = vector.load %arg9[%c0_126, %c0_127, %c0_128] : memref<1x3x256xf32, #tpu.memory_space<vmem>>, vector<1x1x256xf32>
    %488 = vector.shape_cast %487 : vector<1x1x256xf32> to vector<256xf32>
    %489 = vector.shape_cast %486 : vector<256xf32> to vector<1x1x256xf32>
    tpu.vector_store %arg9[%c0_126, %c0_127, %c0_128], %489 {strides = array<i32>} : memref<1x3x256xf32, #tpu.memory_space<vmem>>, vector<1x1x256xf32>,
    %c1 = arith.constant 1 : index
    %c0_129 = arith.constant 0 : index
    %c0_130 = arith.constant 0 : index
    %490 = vector.load %arg3[%c1, %c0_129, %c0_130] : memref<3x16x25xf32, #tpu.memory_space<vmem>>, vector<1x16x25xf32>
    %491 = vector.shape_cast %490 : vector<1x16x25xf32> to vector<16x25xf32>
    %cst_131 = arith.constant 0.000000e+00 : f32
    %492 = vector.broadcast %cst_131 : f32 to vector<16x256xf32>
    %493 = vector.extract_strided_slice %491 {offsets = [0, 0], sizes = [16, 1], strides = [1, 1]} : vector<16x25xf32> to vector<16x1xf32>
    %cst_132 = arith.constant 0.000000e+00 : f32
    %494 = vector.broadcast %cst_132 : f32 to vector<1x34xf32>
    %495 = vector.extract_strided_slice %477 {offsets = [0, 0], sizes = [1, 222], strides = [1, 1]} : vector<1x256xf32> to vector<1x222xf32>
    %496 = tpu.concatenate %494, %495 in 1 : vector<1x34xf32>, vector<1x222xf32> -> vector<1x256xf32>
    %497 = arith.mulf %496, %27 : vector<1x256xf32>
    %498 = vector.broadcast %493 : vector<16x1xf32> to vector<16x256xf32>
    %499 = vector.broadcast %497 : vector<1x256xf32> to vector<16x256xf32>
    %500 = arith.mulf %498, %499 : vector<16x256xf32>
    %501 = arith.addf %492, %500 : vector<16x256xf32>
    %502 = vector.extract_strided_slice %491 {offsets = [0, 1], sizes = [16, 1], strides = [1, 1]} : vector<16x25xf32> to vector<16x1xf32>
    %cst_133 = arith.constant 0.000000e+00 : f32
    %503 = vector.broadcast %cst_133 : f32 to vector<1x33xf32>
    %504 = vector.extract_strided_slice %477 {offsets = [0, 0], sizes = [1, 223], strides = [1, 1]} : vector<1x256xf32> to vector<1x223xf32>
    %505 = tpu.concatenate %503, %504 in 1 : vector<1x33xf32>, vector<1x223xf32> -> vector<1x256xf32>
    %506 = arith.mulf %505, %38 : vector<1x256xf32>
    %507 = vector.broadcast %502 : vector<16x1xf32> to vector<16x256xf32>
    %508 = vector.broadcast %506 : vector<1x256xf32> to vector<16x256xf32>
    %509 = arith.mulf %507, %508 : vector<16x256xf32>
    %510 = arith.addf %501, %509 : vector<16x256xf32>
    %511 = vector.extract_strided_slice %491 {offsets = [0, 2], sizes = [16, 1], strides = [1, 1]} : vector<16x25xf32> to vector<16x1xf32>
    %cst_134 = arith.constant 0.000000e+00 : f32
    %512 = vector.broadcast %cst_134 : f32 to vector<1x32xf32>
    %513 = vector.extract_strided_slice %477 {offsets = [0, 0], sizes = [1, 224], strides = [1, 1]} : vector<1x256xf32> to vector<1x224xf32>
    %514 = tpu.concatenate %512, %513 in 1 : vector<1x32xf32>, vector<1x224xf32> -> vector<1x256xf32>
    %515 = arith.mulf %514, %49 : vector<1x256xf32>
    %516 = vector.broadcast %511 : vector<16x1xf32> to vector<16x256xf32>
    %517 = vector.broadcast %515 : vector<1x256xf32> to vector<16x256xf32>
    %518 = arith.mulf %516, %517 : vector<16x256xf32>
    %519 = arith.addf %510, %518 : vector<16x256xf32>
    %520 = vector.extract_strided_slice %491 {offsets = [0, 3], sizes = [16, 1], strides = [1, 1]} : vector<16x25xf32> to vector<16x1xf32>
    %cst_135 = arith.constant 0.000000e+00 : f32
    %521 = vector.broadcast %cst_135 : f32 to vector<1x31xf32>
    %522 = vector.extract_strided_slice %477 {offsets = [0, 0], sizes = [1, 225], strides = [1, 1]} : vector<1x256xf32> to vector<1x225xf32>
    %523 = tpu.concatenate %521, %522 in 1 : vector<1x31xf32>, vector<1x225xf32> -> vector<1x256xf32>
    %524 = arith.mulf %523, %60 : vector<1x256xf32>
    %525 = vector.broadcast %520 : vector<16x1xf32> to vector<16x256xf32>
    %526 = vector.broadcast %524 : vector<1x256xf32> to vector<16x256xf32>
    %527 = arith.mulf %525, %526 : vector<16x256xf32>
    %528 = arith.addf %519, %527 : vector<16x256xf32>
    %529 = vector.extract_strided_slice %491 {offsets = [0, 4], sizes = [16, 1], strides = [1, 1]} : vector<16x25xf32> to vector<16x1xf32>
    %cst_136 = arith.constant 0.000000e+00 : f32
    %530 = vector.broadcast %cst_136 : f32 to vector<1x30xf32>
    %531 = vector.extract_strided_slice %477 {offsets = [0, 0], sizes = [1, 226], strides = [1, 1]} : vector<1x256xf32> to vector<1x226xf32>
    %532 = tpu.concatenate %530, %531 in 1 : vector<1x30xf32>, vector<1x226xf32> -> vector<1x256xf32>
    %533 = arith.mulf %532, %71 : vector<1x256xf32>
    %534 = vector.broadcast %529 : vector<16x1xf32> to vector<16x256xf32>
    %535 = vector.broadcast %533 : vector<1x256xf32> to vector<16x256xf32>
    %536 = arith.mulf %534, %535 : vector<16x256xf32>
    %537 = arith.addf %528, %536 : vector<16x256xf32>
    %538 = vector.extract_strided_slice %491 {offsets = [0, 5], sizes = [16, 1], strides = [1, 1]} : vector<16x25xf32> to vector<16x1xf32>
    %cst_137 = arith.constant 0.000000e+00 : f32
    %539 = vector.broadcast %cst_137 : f32 to vector<1x18xf32>
    %540 = vector.extract_strided_slice %477 {offsets = [0, 0], sizes = [1, 238], strides = [1, 1]} : vector<1x256xf32> to vector<1x238xf32>
    %541 = tpu.concatenate %539, %540 in 1 : vector<1x18xf32>, vector<1x238xf32> -> vector<1x256xf32>
    %542 = arith.mulf %541, %27 : vector<1x256xf32>
    %543 = vector.broadcast %538 : vector<16x1xf32> to vector<16x256xf32>
    %544 = vector.broadcast %542 : vector<1x256xf32> to vector<16x256xf32>
    %545 = arith.mulf %543, %544 : vector<16x256xf32>
    %546 = arith.addf %537, %545 : vector<16x256xf32>
    %547 = vector.extract_strided_slice %491 {offsets = [0, 6], sizes = [16, 1], strides = [1, 1]} : vector<16x25xf32> to vector<16x1xf32>
    %cst_138 = arith.constant 0.000000e+00 : f32
    %548 = vector.broadcast %cst_138 : f32 to vector<1x17xf32>
    %549 = vector.extract_strided_slice %477 {offsets = [0, 0], sizes = [1, 239], strides = [1, 1]} : vector<1x256xf32> to vector<1x239xf32>
    %550 = tpu.concatenate %548, %549 in 1 : vector<1x17xf32>, vector<1x239xf32> -> vector<1x256xf32>
    %551 = arith.mulf %550, %38 : vector<1x256xf32>
    %552 = vector.broadcast %547 : vector<16x1xf32> to vector<16x256xf32>
    %553 = vector.broadcast %551 : vector<1x256xf32> to vector<16x256xf32>
    %554 = arith.mulf %552, %553 : vector<16x256xf32>
    %555 = arith.addf %546, %554 : vector<16x256xf32>
    %556 = vector.extract_strided_slice %491 {offsets = [0, 7], sizes = [16, 1], strides = [1, 1]} : vector<16x25xf32> to vector<16x1xf32>
    %cst_139 = arith.constant 0.000000e+00 : f32
    %557 = vector.broadcast %cst_139 : f32 to vector<1x16xf32>
    %558 = vector.extract_strided_slice %477 {offsets = [0, 0], sizes = [1, 240], strides = [1, 1]} : vector<1x256xf32> to vector<1x240xf32>
    %559 = tpu.concatenate %557, %558 in 1 : vector<1x16xf32>, vector<1x240xf32> -> vector<1x256xf32>
    %560 = arith.mulf %559, %49 : vector<1x256xf32>
    %561 = vector.broadcast %556 : vector<16x1xf32> to vector<16x256xf32>
    %562 = vector.broadcast %560 : vector<1x256xf32> to vector<16x256xf32>
    %563 = arith.mulf %561, %562 : vector<16x256xf32>
    %564 = arith.addf %555, %563 : vector<16x256xf32>
    %565 = vector.extract_strided_slice %491 {offsets = [0, 8], sizes = [16, 1], strides = [1, 1]} : vector<16x25xf32> to vector<16x1xf32>
    %cst_140 = arith.constant 0.000000e+00 : f32
    %566 = vector.broadcast %cst_140 : f32 to vector<1x15xf32>
    %567 = vector.extract_strided_slice %477 {offsets = [0, 0], sizes = [1, 241], strides = [1, 1]} : vector<1x256xf32> to vector<1x241xf32>
    %568 = tpu.concatenate %566, %567 in 1 : vector<1x15xf32>, vector<1x241xf32> -> vector<1x256xf32>
    %569 = arith.mulf %568, %60 : vector<1x256xf32>
    %570 = vector.broadcast %565 : vector<16x1xf32> to vector<16x256xf32>
    %571 = vector.broadcast %569 : vector<1x256xf32> to vector<16x256xf32>
    %572 = arith.mulf %570, %571 : vector<16x256xf32>
    %573 = arith.addf %564, %572 : vector<16x256xf32>
    %574 = vector.extract_strided_slice %491 {offsets = [0, 9], sizes = [16, 1], strides = [1, 1]} : vector<16x25xf32> to vector<16x1xf32>
    %cst_141 = arith.constant 0.000000e+00 : f32
    %575 = vector.broadcast %cst_141 : f32 to vector<1x14xf32>
    %576 = vector.extract_strided_slice %477 {offsets = [0, 0], sizes = [1, 242], strides = [1, 1]} : vector<1x256xf32> to vector<1x242xf32>
    %577 = tpu.concatenate %575, %576 in 1 : vector<1x14xf32>, vector<1x242xf32> -> vector<1x256xf32>
    %578 = arith.mulf %577, %71 : vector<1x256xf32>
    %579 = vector.broadcast %574 : vector<16x1xf32> to vector<16x256xf32>
    %580 = vector.broadcast %578 : vector<1x256xf32> to vector<16x256xf32>
    %581 = arith.mulf %579, %580 : vector<16x256xf32>
    %582 = arith.addf %573, %581 : vector<16x256xf32>
    %583 = vector.extract_strided_slice %491 {offsets = [0, 10], sizes = [16, 1], strides = [1, 1]} : vector<16x25xf32> to vector<16x1xf32>
    %cst_142 = arith.constant 0.000000e+00 : f32
    %584 = vector.broadcast %cst_142 : f32 to vector<1x2xf32>
    %585 = vector.extract_strided_slice %477 {offsets = [0, 0], sizes = [1, 254], strides = [1, 1]} : vector<1x256xf32> to vector<1x254xf32>
    %586 = tpu.concatenate %584, %585 in 1 : vector<1x2xf32>, vector<1x254xf32> -> vector<1x256xf32>
    %587 = arith.mulf %586, %27 : vector<1x256xf32>
    %588 = vector.broadcast %583 : vector<16x1xf32> to vector<16x256xf32>
    %589 = vector.broadcast %587 : vector<1x256xf32> to vector<16x256xf32>
    %590 = arith.mulf %588, %589 : vector<16x256xf32>
    %591 = arith.addf %582, %590 : vector<16x256xf32>
    %592 = vector.extract_strided_slice %491 {offsets = [0, 11], sizes = [16, 1], strides = [1, 1]} : vector<16x25xf32> to vector<16x1xf32>
    %cst_143 = arith.constant 0.000000e+00 : f32
    %593 = vector.broadcast %cst_143 : f32 to vector<1x1xf32>
    %594 = vector.extract_strided_slice %477 {offsets = [0, 0], sizes = [1, 255], strides = [1, 1]} : vector<1x256xf32> to vector<1x255xf32>
    %595 = tpu.concatenate %593, %594 in 1 : vector<1x1xf32>, vector<1x255xf32> -> vector<1x256xf32>
    %596 = arith.mulf %595, %38 : vector<1x256xf32>
    %597 = vector.broadcast %592 : vector<16x1xf32> to vector<16x256xf32>
    %598 = vector.broadcast %596 : vector<1x256xf32> to vector<16x256xf32>
    %599 = arith.mulf %597, %598 : vector<16x256xf32>
    %600 = arith.addf %591, %599 : vector<16x256xf32>
    %601 = vector.extract_strided_slice %491 {offsets = [0, 12], sizes = [16, 1], strides = [1, 1]} : vector<16x25xf32> to vector<16x1xf32>
    %602 = arith.mulf %477, %49 : vector<1x256xf32>
    %603 = vector.broadcast %601 : vector<16x1xf32> to vector<16x256xf32>
    %604 = vector.broadcast %602 : vector<1x256xf32> to vector<16x256xf32>
    %605 = arith.mulf %603, %604 : vector<16x256xf32>
    %606 = arith.addf %600, %605 : vector<16x256xf32>
    %607 = vector.extract_strided_slice %491 {offsets = [0, 13], sizes = [16, 1], strides = [1, 1]} : vector<16x25xf32> to vector<16x1xf32>
    %608 = vector.extract_strided_slice %477 {offsets = [0, 1], sizes = [1, 255], strides = [1, 1]} : vector<1x256xf32> to vector<1x255xf32>
    %cst_144 = arith.constant 0.000000e+00 : f32
    %609 = vector.broadcast %cst_144 : f32 to vector<1x1xf32>
    %610 = tpu.concatenate %608, %609 in 1 : vector<1x255xf32>, vector<1x1xf32> -> vector<1x256xf32>
    %611 = arith.mulf %610, %60 : vector<1x256xf32>
    %612 = vector.broadcast %607 : vector<16x1xf32> to vector<16x256xf32>
    %613 = vector.broadcast %611 : vector<1x256xf32> to vector<16x256xf32>
    %614 = arith.mulf %612, %613 : vector<16x256xf32>
    %615 = arith.addf %606, %614 : vector<16x256xf32>
    %616 = vector.extract_strided_slice %491 {offsets = [0, 14], sizes = [16, 1], strides = [1, 1]} : vector<16x25xf32> to vector<16x1xf32>
    %617 = vector.extract_strided_slice %477 {offsets = [0, 2], sizes = [1, 254], strides = [1, 1]} : vector<1x256xf32> to vector<1x254xf32>
    %cst_145 = arith.constant 0.000000e+00 : f32
    %618 = vector.broadcast %cst_145 : f32 to vector<1x2xf32>
    %619 = tpu.concatenate %617, %618 in 1 : vector<1x254xf32>, vector<1x2xf32> -> vector<1x256xf32>
    %620 = arith.mulf %619, %71 : vector<1x256xf32>
    %621 = vector.broadcast %616 : vector<16x1xf32> to vector<16x256xf32>
    %622 = vector.broadcast %620 : vector<1x256xf32> to vector<16x256xf32>
    %623 = arith.mulf %621, %622 : vector<16x256xf32>
    %624 = arith.addf %615, %623 : vector<16x256xf32>
    %625 = vector.extract_strided_slice %491 {offsets = [0, 15], sizes = [16, 1], strides = [1, 1]} : vector<16x25xf32> to vector<16x1xf32>
    %626 = vector.extract_strided_slice %477 {offsets = [0, 14], sizes = [1, 242], strides = [1, 1]} : vector<1x256xf32> to vector<1x242xf32>
    %cst_146 = arith.constant 0.000000e+00 : f32
    %627 = vector.broadcast %cst_146 : f32 to vector<1x14xf32>
    %628 = tpu.concatenate %626, %627 in 1 : vector<1x242xf32>, vector<1x14xf32> -> vector<1x256xf32>
    %629 = arith.mulf %628, %27 : vector<1x256xf32>
    %630 = vector.broadcast %625 : vector<16x1xf32> to vector<16x256xf32>
    %631 = vector.broadcast %629 : vector<1x256xf32> to vector<16x256xf32>
    %632 = arith.mulf %630, %631 : vector<16x256xf32>
    %633 = arith.addf %624, %632 : vector<16x256xf32>
    %634 = vector.extract_strided_slice %491 {offsets = [0, 16], sizes = [16, 1], strides = [1, 1]} : vector<16x25xf32> to vector<16x1xf32>
    %635 = vector.extract_strided_slice %477 {offsets = [0, 15], sizes = [1, 241], strides = [1, 1]} : vector<1x256xf32> to vector<1x241xf32>
    %cst_147 = arith.constant 0.000000e+00 : f32
    %636 = vector.broadcast %cst_147 : f32 to vector<1x15xf32>
    %637 = tpu.concatenate %635, %636 in 1 : vector<1x241xf32>, vector<1x15xf32> -> vector<1x256xf32>
    %638 = arith.mulf %637, %38 : vector<1x256xf32>
    %639 = vector.broadcast %634 : vector<16x1xf32> to vector<16x256xf32>
    %640 = vector.broadcast %638 : vector<1x256xf32> to vector<16x256xf32>
    %641 = arith.mulf %639, %640 : vector<16x256xf32>
    %642 = arith.addf %633, %641 : vector<16x256xf32>
    %643 = vector.extract_strided_slice %491 {offsets = [0, 17], sizes = [16, 1], strides = [1, 1]} : vector<16x25xf32> to vector<16x1xf32>
    %644 = vector.extract_strided_slice %477 {offsets = [0, 16], sizes = [1, 240], strides = [1, 1]} : vector<1x256xf32> to vector<1x240xf32>
    %cst_148 = arith.constant 0.000000e+00 : f32
    %645 = vector.broadcast %cst_148 : f32 to vector<1x16xf32>
    %646 = tpu.concatenate %644, %645 in 1 : vector<1x240xf32>, vector<1x16xf32> -> vector<1x256xf32>
    %647 = arith.mulf %646, %49 : vector<1x256xf32>
    %648 = vector.broadcast %643 : vector<16x1xf32> to vector<16x256xf32>
    %649 = vector.broadcast %647 : vector<1x256xf32> to vector<16x256xf32>
    %650 = arith.mulf %648, %649 : vector<16x256xf32>
    %651 = arith.addf %642, %650 : vector<16x256xf32>
    %652 = vector.extract_strided_slice %491 {offsets = [0, 18], sizes = [16, 1], strides = [1, 1]} : vector<16x25xf32> to vector<16x1xf32>
    %653 = vector.extract_strided_slice %477 {offsets = [0, 17], sizes = [1, 239], strides = [1, 1]} : vector<1x256xf32> to vector<1x239xf32>
    %cst_149 = arith.constant 0.000000e+00 : f32
    %654 = vector.broadcast %cst_149 : f32 to vector<1x17xf32>
    %655 = tpu.concatenate %653, %654 in 1 : vector<1x239xf32>, vector<1x17xf32> -> vector<1x256xf32>
    %656 = arith.mulf %655, %60 : vector<1x256xf32>
    %657 = vector.broadcast %652 : vector<16x1xf32> to vector<16x256xf32>
    %658 = vector.broadcast %656 : vector<1x256xf32> to vector<16x256xf32>
    %659 = arith.mulf %657, %658 : vector<16x256xf32>
    %660 = arith.addf %651, %659 : vector<16x256xf32>
    %661 = vector.extract_strided_slice %491 {offsets = [0, 19], sizes = [16, 1], strides = [1, 1]} : vector<16x25xf32> to vector<16x1xf32>
    %662 = vector.extract_strided_slice %477 {offsets = [0, 18], sizes = [1, 238], strides = [1, 1]} : vector<1x256xf32> to vector<1x238xf32>
    %cst_150 = arith.constant 0.000000e+00 : f32
    %663 = vector.broadcast %cst_150 : f32 to vector<1x18xf32>
    %664 = tpu.concatenate %662, %663 in 1 : vector<1x238xf32>, vector<1x18xf32> -> vector<1x256xf32>
    %665 = arith.mulf %664, %71 : vector<1x256xf32>
    %666 = vector.broadcast %661 : vector<16x1xf32> to vector<16x256xf32>
    %667 = vector.broadcast %665 : vector<1x256xf32> to vector<16x256xf32>
    %668 = arith.mulf %666, %667 : vector<16x256xf32>
    %669 = arith.addf %660, %668 : vector<16x256xf32>
    %670 = vector.extract_strided_slice %491 {offsets = [0, 20], sizes = [16, 1], strides = [1, 1]} : vector<16x25xf32> to vector<16x1xf32>
    %671 = vector.extract_strided_slice %477 {offsets = [0, 30], sizes = [1, 226], strides = [1, 1]} : vector<1x256xf32> to vector<1x226xf32>
    %cst_151 = arith.constant 0.000000e+00 : f32
    %672 = vector.broadcast %cst_151 : f32 to vector<1x30xf32>
    %673 = tpu.concatenate %671, %672 in 1 : vector<1x226xf32>, vector<1x30xf32> -> vector<1x256xf32>
    %674 = arith.mulf %673, %27 : vector<1x256xf32>
    %675 = vector.broadcast %670 : vector<16x1xf32> to vector<16x256xf32>
    %676 = vector.broadcast %674 : vector<1x256xf32> to vector<16x256xf32>
    %677 = arith.mulf %675, %676 : vector<16x256xf32>
    %678 = arith.addf %669, %677 : vector<16x256xf32>
    %679 = vector.extract_strided_slice %491 {offsets = [0, 21], sizes = [16, 1], strides = [1, 1]} : vector<16x25xf32> to vector<16x1xf32>
    %680 = vector.extract_strided_slice %477 {offsets = [0, 31], sizes = [1, 225], strides = [1, 1]} : vector<1x256xf32> to vector<1x225xf32>
    %cst_152 = arith.constant 0.000000e+00 : f32
    %681 = vector.broadcast %cst_152 : f32 to vector<1x31xf32>
    %682 = tpu.concatenate %680, %681 in 1 : vector<1x225xf32>, vector<1x31xf32> -> vector<1x256xf32>
    %683 = arith.mulf %682, %38 : vector<1x256xf32>
    %684 = vector.broadcast %679 : vector<16x1xf32> to vector<16x256xf32>
    %685 = vector.broadcast %683 : vector<1x256xf32> to vector<16x256xf32>
    %686 = arith.mulf %684, %685 : vector<16x256xf32>
    %687 = arith.addf %678, %686 : vector<16x256xf32>
    %688 = vector.extract_strided_slice %491 {offsets = [0, 22], sizes = [16, 1], strides = [1, 1]} : vector<16x25xf32> to vector<16x1xf32>
    %689 = vector.extract_strided_slice %477 {offsets = [0, 32], sizes = [1, 224], strides = [1, 1]} : vector<1x256xf32> to vector<1x224xf32>
    %cst_153 = arith.constant 0.000000e+00 : f32
    %690 = vector.broadcast %cst_153 : f32 to vector<1x32xf32>
    %691 = tpu.concatenate %689, %690 in 1 : vector<1x224xf32>, vector<1x32xf32> -> vector<1x256xf32>
    %692 = arith.mulf %691, %49 : vector<1x256xf32>
    %693 = vector.broadcast %688 : vector<16x1xf32> to vector<16x256xf32>
    %694 = vector.broadcast %692 : vector<1x256xf32> to vector<16x256xf32>
    %695 = arith.mulf %693, %694 : vector<16x256xf32>
    %696 = arith.addf %687, %695 : vector<16x256xf32>
    %697 = vector.extract_strided_slice %491 {offsets = [0, 23], sizes = [16, 1], strides = [1, 1]} : vector<16x25xf32> to vector<16x1xf32>
    %698 = vector.extract_strided_slice %477 {offsets = [0, 33], sizes = [1, 223], strides = [1, 1]} : vector<1x256xf32> to vector<1x223xf32>
    %cst_154 = arith.constant 0.000000e+00 : f32
    %699 = vector.broadcast %cst_154 : f32 to vector<1x33xf32>
    %700 = tpu.concatenate %698, %699 in 1 : vector<1x223xf32>, vector<1x33xf32> -> vector<1x256xf32>
    %701 = arith.mulf %700, %60 : vector<1x256xf32>
    %702 = vector.broadcast %697 : vector<16x1xf32> to vector<16x256xf32>
    %703 = vector.broadcast %701 : vector<1x256xf32> to vector<16x256xf32>
    %704 = arith.mulf %702, %703 : vector<16x256xf32>
    %705 = arith.addf %696, %704 : vector<16x256xf32>
    %706 = vector.extract_strided_slice %491 {offsets = [0, 24], sizes = [16, 1], strides = [1, 1]} : vector<16x25xf32> to vector<16x1xf32>
    %707 = vector.extract_strided_slice %477 {offsets = [0, 34], sizes = [1, 222], strides = [1, 1]} : vector<1x256xf32> to vector<1x222xf32>
    %cst_155 = arith.constant 0.000000e+00 : f32
    %708 = vector.broadcast %cst_155 : f32 to vector<1x34xf32>
    %709 = tpu.concatenate %707, %708 in 1 : vector<1x222xf32>, vector<1x34xf32> -> vector<1x256xf32>
    %710 = arith.mulf %709, %71 : vector<1x256xf32>
    %711 = vector.broadcast %706 : vector<16x1xf32> to vector<16x256xf32>
    %712 = vector.broadcast %710 : vector<1x256xf32> to vector<16x256xf32>
    %713 = arith.mulf %711, %712 : vector<16x256xf32>
    %714 = arith.addf %705, %713 : vector<16x256xf32>
    %c1_156 = arith.constant 1 : index
    %c0_157 = arith.constant 0 : index
    %c0_158 = arith.constant 0 : index
    %715 = vector.load %arg4[%c1_156, %c0_157, %c0_158] : memref<3x16x1xf32, #tpu.memory_space<vmem>>, vector<1x16x1xf32>
    %716 = vector.shape_cast %715 : vector<1x16x1xf32> to vector<16x1xf32>
    %717 = vector.broadcast %716 : vector<16x1xf32> to vector<16x256xf32>
    %718 = arith.addf %714, %717 : vector<16x256xf32>
    %cst_159 = arith.constant 0.000000e+00 : f32
    %719 = vector.broadcast %cst_159 : f32 to vector<16x256xf32>
    %720 = arith.cmpf oge, %718, %719 : vector<16x256xf32>
    %cst_160 = arith.constant 2.000000e-01 : f32
    %721 = vector.broadcast %cst_160 : f32 to vector<16x256xf32>
    %722 = arith.mulf %721, %718 : vector<16x256xf32>
    %723 = arith.select %720, %718, %722 : vector<16x256xi1>, vector<16x256xf32>
    %cst_161 = arith.constant 0.000000e+00 : f32
    %724 = vector.broadcast %cst_161 : f32 to vector<16x34xf32>
    %725 = vector.extract_strided_slice %723 {offsets = [0, 0], sizes = [16, 222], strides = [1, 1]} : vector<16x256xf32> to vector<16x222xf32>
    %726 = tpu.concatenate %724, %725 in 1 : vector<16x34xf32>, vector<16x222xf32> -> vector<16x256xf32>
    %727 = vector.broadcast %27 : vector<1x256xf32> to vector<16x256xf32>
    %728 = arith.mulf %726, %727 : vector<16x256xf32>
    %c0_162 = arith.constant 0 : index
    %c0_163 = arith.constant 0 : index
    %729 = vector.load %arg10[%c0_162, %c0_163] : memref<400x256xf32, #tpu.memory_space<vmem>>, vector<16x256xf32>
    tpu.vector_store %arg10[%c0_162, %c0_163], %728 {strides = array<i32>} : memref<400x256xf32, #tpu.memory_space<vmem>>, vector<16x256xf32>,
    %cst_164 = arith.constant 0.000000e+00 : f32
    %730 = vector.broadcast %cst_164 : f32 to vector<16x33xf32>
    %731 = vector.extract_strided_slice %723 {offsets = [0, 0], sizes = [16, 223], strides = [1, 1]} : vector<16x256xf32> to vector<16x223xf32>
    %732 = tpu.concatenate %730, %731 in 1 : vector<16x33xf32>, vector<16x223xf32> -> vector<16x256xf32>
    %733 = vector.broadcast %38 : vector<1x256xf32> to vector<16x256xf32>
    %734 = arith.mulf %732, %733 : vector<16x256xf32>
    %c16_165 = arith.constant 16 : index
    %c0_166 = arith.constant 0 : index
    %735 = vector.load %arg10[%c16_165, %c0_166] : memref<400x256xf32, #tpu.memory_space<vmem>>, vector<16x256xf32>
    tpu.vector_store %arg10[%c16_165, %c0_166], %734 {strides = array<i32>} : memref<400x256xf32, #tpu.memory_space<vmem>>, vector<16x256xf32>,
    %cst_167 = arith.constant 0.000000e+00 : f32
    %736 = vector.broadcast %cst_167 : f32 to vector<16x32xf32>
    %737 = vector.extract_strided_slice %723 {offsets = [0, 0], sizes = [16, 224], strides = [1, 1]} : vector<16x256xf32> to vector<16x224xf32>
    %738 = tpu.concatenate %736, %737 in 1 : vector<16x32xf32>, vector<16x224xf32> -> vector<16x256xf32>
    %739 = vector.broadcast %49 : vector<1x256xf32> to vector<16x256xf32>
    %740 = arith.mulf %738, %739 : vector<16x256xf32>
    %c32_168 = arith.constant 32 : index
    %c0_169 = arith.constant 0 : index
    %741 = vector.load %arg10[%c32_168, %c0_169] : memref<400x256xf32, #tpu.memory_space<vmem>>, vector<16x256xf32>
    tpu.vector_store %arg10[%c32_168, %c0_169], %740 {strides = array<i32>} : memref<400x256xf32, #tpu.memory_space<vmem>>, vector<16x256xf32>,
    %cst_170 = arith.constant 0.000000e+00 : f32
    %742 = vector.broadcast %cst_170 : f32 to vector<16x31xf32>
    %743 = vector.extract_strided_slice %723 {offsets = [0, 0], sizes = [16, 225], strides = [1, 1]} : vector<16x256xf32> to vector<16x225xf32>
    %744 = tpu.concatenate %742, %743 in 1 : vector<16x31xf32>, vector<16x225xf32> -> vector<16x256xf32>
    %745 = vector.broadcast %60 : vector<1x256xf32> to vector<16x256xf32>
    %746 = arith.mulf %744, %745 : vector<16x256xf32>
    %c48_171 = arith.constant 48 : index
    %c0_172 = arith.constant 0 : index
    %747 = vector.load %arg10[%c48_171, %c0_172] : memref<400x256xf32, #tpu.memory_space<vmem>>, vector<16x256xf32>
    tpu.vector_store %arg10[%c48_171, %c0_172], %746 {strides = array<i32>} : memref<400x256xf32, #tpu.memory_space<vmem>>, vector<16x256xf32>,
    %cst_173 = arith.constant 0.000000e+00 : f32
    %748 = vector.broadcast %cst_173 : f32 to vector<16x30xf32>
    %749 = vector.extract_strided_slice %723 {offsets = [0, 0], sizes = [16, 226], strides = [1, 1]} : vector<16x256xf32> to vector<16x226xf32>
    %750 = tpu.concatenate %748, %749 in 1 : vector<16x30xf32>, vector<16x226xf32> -> vector<16x256xf32>
    %751 = vector.broadcast %71 : vector<1x256xf32> to vector<16x256xf32>
    %752 = arith.mulf %750, %751 : vector<16x256xf32>
    %c64_174 = arith.constant 64 : index
    %c0_175 = arith.constant 0 : index
    %753 = vector.load %arg10[%c64_174, %c0_175] : memref<400x256xf32, #tpu.memory_space<vmem>>, vector<16x256xf32>
    tpu.vector_store %arg10[%c64_174, %c0_175], %752 {strides = array<i32>} : memref<400x256xf32, #tpu.memory_space<vmem>>, vector<16x256xf32>,
    %cst_176 = arith.constant 0.000000e+00 : f32
    %754 = vector.broadcast %cst_176 : f32 to vector<16x18xf32>
    %755 = vector.extract_strided_slice %723 {offsets = [0, 0], sizes = [16, 238], strides = [1, 1]} : vector<16x256xf32> to vector<16x238xf32>
    %756 = tpu.concatenate %754, %755 in 1 : vector<16x18xf32>, vector<16x238xf32> -> vector<16x256xf32>
    %757 = vector.broadcast %27 : vector<1x256xf32> to vector<16x256xf32>
    %758 = arith.mulf %756, %757 : vector<16x256xf32>
    %c80_177 = arith.constant 80 : index
    %c0_178 = arith.constant 0 : index
    %759 = vector.load %arg10[%c80_177, %c0_178] : memref<400x256xf32, #tpu.memory_space<vmem>>, vector<16x256xf32>
    tpu.vector_store %arg10[%c80_177, %c0_178], %758 {strides = array<i32>} : memref<400x256xf32, #tpu.memory_space<vmem>>, vector<16x256xf32>,
    %cst_179 = arith.constant 0.000000e+00 : f32
    %760 = vector.broadcast %cst_179 : f32 to vector<16x17xf32>
    %761 = vector.extract_strided_slice %723 {offsets = [0, 0], sizes = [16, 239], strides = [1, 1]} : vector<16x256xf32> to vector<16x239xf32>
    %762 = tpu.concatenate %760, %761 in 1 : vector<16x17xf32>, vector<16x239xf32> -> vector<16x256xf32>
    %763 = vector.broadcast %38 : vector<1x256xf32> to vector<16x256xf32>
    %764 = arith.mulf %762, %763 : vector<16x256xf32>
    %c96_180 = arith.constant 96 : index
    %c0_181 = arith.constant 0 : index
    %765 = vector.load %arg10[%c96_180, %c0_181] : memref<400x256xf32, #tpu.memory_space<vmem>>, vector<16x256xf32>
    tpu.vector_store %arg10[%c96_180, %c0_181], %764 {strides = array<i32>} : memref<400x256xf32, #tpu.memory_space<vmem>>, vector<16x256xf32>,
    %cst_182 = arith.constant 0.000000e+00 : f32
    %766 = vector.broadcast %cst_182 : f32 to vector<16x16xf32>
    %767 = vector.extract_strided_slice %723 {offsets = [0, 0], sizes = [16, 240], strides = [1, 1]} : vector<16x256xf32> to vector<16x240xf32>
    %768 = tpu.concatenate %766, %767 in 1 : vector<16x16xf32>, vector<16x240xf32> -> vector<16x256xf32>
    %769 = vector.broadcast %49 : vector<1x256xf32> to vector<16x256xf32>
    %770 = arith.mulf %768, %769 : vector<16x256xf32>
    %c112_183 = arith.constant 112 : index
    %c0_184 = arith.constant 0 : index
    %771 = vector.load %arg10[%c112_183, %c0_184] : memref<400x256xf32, #tpu.memory_space<vmem>>, vector<16x256xf32>
    tpu.vector_store %arg10[%c112_183, %c0_184], %770 {strides = array<i32>} : memref<400x256xf32, #tpu.memory_space<vmem>>, vector<16x256xf32>,
    %cst_185 = arith.constant 0.000000e+00 : f32
    %772 = vector.broadcast %cst_185 : f32 to vector<16x15xf32>
    %773 = vector.extract_strided_slice %723 {offsets = [0, 0], sizes = [16, 241], strides = [1, 1]} : vector<16x256xf32> to vector<16x241xf32>
    %774 = tpu.concatenate %772, %773 in 1 : vector<16x15xf32>, vector<16x241xf32> -> vector<16x256xf32>
    %775 = vector.broadcast %60 : vector<1x256xf32> to vector<16x256xf32>
    %776 = arith.mulf %774, %775 : vector<16x256xf32>
    %c128_186 = arith.constant 128 : index
    %c0_187 = arith.constant 0 : index
    %777 = vector.load %arg10[%c128_186, %c0_187] : memref<400x256xf32, #tpu.memory_space<vmem>>, vector<16x256xf32>
    tpu.vector_store %arg10[%c128_186, %c0_187], %776 {strides = array<i32>} : memref<400x256xf32, #tpu.memory_space<vmem>>, vector<16x256xf32>,
    %cst_188 = arith.constant 0.000000e+00 : f32
    %778 = vector.broadcast %cst_188 : f32 to vector<16x14xf32>
    %779 = vector.extract_strided_slice %723 {offsets = [0, 0], sizes = [16, 242], strides = [1, 1]} : vector<16x256xf32> to vector<16x242xf32>
    %780 = tpu.concatenate %778, %779 in 1 : vector<16x14xf32>, vector<16x242xf32> -> vector<16x256xf32>
    %781 = vector.broadcast %71 : vector<1x256xf32> to vector<16x256xf32>
    %782 = arith.mulf %780, %781 : vector<16x256xf32>
    %c144_189 = arith.constant 144 : index
    %c0_190 = arith.constant 0 : index
    %783 = vector.load %arg10[%c144_189, %c0_190] : memref<400x256xf32, #tpu.memory_space<vmem>>, vector<16x256xf32>
    tpu.vector_store %arg10[%c144_189, %c0_190], %782 {strides = array<i32>} : memref<400x256xf32, #tpu.memory_space<vmem>>, vector<16x256xf32>,
    %cst_191 = arith.constant 0.000000e+00 : f32
    %784 = vector.broadcast %cst_191 : f32 to vector<16x2xf32>
    %785 = vector.extract_strided_slice %723 {offsets = [0, 0], sizes = [16, 254], strides = [1, 1]} : vector<16x256xf32> to vector<16x254xf32>
    %786 = tpu.concatenate %784, %785 in 1 : vector<16x2xf32>, vector<16x254xf32> -> vector<16x256xf32>
    %787 = vector.broadcast %27 : vector<1x256xf32> to vector<16x256xf32>
    %788 = arith.mulf %786, %787 : vector<16x256xf32>
    %c160_192 = arith.constant 160 : index
    %c0_193 = arith.constant 0 : index
    %789 = vector.load %arg10[%c160_192, %c0_193] : memref<400x256xf32, #tpu.memory_space<vmem>>, vector<16x256xf32>
    tpu.vector_store %arg10[%c160_192, %c0_193], %788 {strides = array<i32>} : memref<400x256xf32, #tpu.memory_space<vmem>>, vector<16x256xf32>,
    %cst_194 = arith.constant 0.000000e+00 : f32
    %790 = vector.broadcast %cst_194 : f32 to vector<16x1xf32>
    %791 = vector.extract_strided_slice %723 {offsets = [0, 0], sizes = [16, 255], strides = [1, 1]} : vector<16x256xf32> to vector<16x255xf32>
    %792 = tpu.concatenate %790, %791 in 1 : vector<16x1xf32>, vector<16x255xf32> -> vector<16x256xf32>
    %793 = vector.broadcast %38 : vector<1x256xf32> to vector<16x256xf32>
    %794 = arith.mulf %792, %793 : vector<16x256xf32>
    %c176_195 = arith.constant 176 : index
    %c0_196 = arith.constant 0 : index
    %795 = vector.load %arg10[%c176_195, %c0_196] : memref<400x256xf32, #tpu.memory_space<vmem>>, vector<16x256xf32>
    tpu.vector_store %arg10[%c176_195, %c0_196], %794 {strides = array<i32>} : memref<400x256xf32, #tpu.memory_space<vmem>>, vector<16x256xf32>,
    %796 = vector.broadcast %49 : vector<1x256xf32> to vector<16x256xf32>
    %797 = arith.mulf %723, %796 : vector<16x256xf32>
    %c192_197 = arith.constant 192 : index
    %c0_198 = arith.constant 0 : index
    %798 = vector.load %arg10[%c192_197, %c0_198] : memref<400x256xf32, #tpu.memory_space<vmem>>, vector<16x256xf32>
    tpu.vector_store %arg10[%c192_197, %c0_198], %797 {strides = array<i32>} : memref<400x256xf32, #tpu.memory_space<vmem>>, vector<16x256xf32>,
    %799 = vector.extract_strided_slice %723 {offsets = [0, 1], sizes = [16, 255], strides = [1, 1]} : vector<16x256xf32> to vector<16x255xf32>
    %cst_199 = arith.constant 0.000000e+00 : f32
    %800 = vector.broadcast %cst_199 : f32 to vector<16x1xf32>
    %801 = tpu.concatenate %799, %800 in 1 : vector<16x255xf32>, vector<16x1xf32> -> vector<16x256xf32>
    %802 = vector.broadcast %60 : vector<1x256xf32> to vector<16x256xf32>
    %803 = arith.mulf %801, %802 : vector<16x256xf32>
    %c208_200 = arith.constant 208 : index
    %c0_201 = arith.constant 0 : index
    %804 = vector.load %arg10[%c208_200, %c0_201] : memref<400x256xf32, #tpu.memory_space<vmem>>, vector<16x256xf32>
    tpu.vector_store %arg10[%c208_200, %c0_201], %803 {strides = array<i32>} : memref<400x256xf32, #tpu.memory_space<vmem>>, vector<16x256xf32>,
    %805 = vector.extract_strided_slice %723 {offsets = [0, 2], sizes = [16, 254], strides = [1, 1]} : vector<16x256xf32> to vector<16x254xf32>
    %cst_202 = arith.constant 0.000000e+00 : f32
    %806 = vector.broadcast %cst_202 : f32 to vector<16x2xf32>
    %807 = tpu.concatenate %805, %806 in 1 : vector<16x254xf32>, vector<16x2xf32> -> vector<16x256xf32>
    %808 = vector.broadcast %71 : vector<1x256xf32> to vector<16x256xf32>
    %809 = arith.mulf %807, %808 : vector<16x256xf32>
    %c224_203 = arith.constant 224 : index
    %c0_204 = arith.constant 0 : index
    %810 = vector.load %arg10[%c224_203, %c0_204] : memref<400x256xf32, #tpu.memory_space<vmem>>, vector<16x256xf32>
    tpu.vector_store %arg10[%c224_203, %c0_204], %809 {strides = array<i32>} : memref<400x256xf32, #tpu.memory_space<vmem>>, vector<16x256xf32>,
    %811 = vector.extract_strided_slice %723 {offsets = [0, 14], sizes = [16, 242], strides = [1, 1]} : vector<16x256xf32> to vector<16x242xf32>
    %cst_205 = arith.constant 0.000000e+00 : f32
    %812 = vector.broadcast %cst_205 : f32 to vector<16x14xf32>
    %813 = tpu.concatenate %811, %812 in 1 : vector<16x242xf32>, vector<16x14xf32> -> vector<16x256xf32>
    %814 = vector.broadcast %27 : vector<1x256xf32> to vector<16x256xf32>
    %815 = arith.mulf %813, %814 : vector<16x256xf32>
    %c240_206 = arith.constant 240 : index
    %c0_207 = arith.constant 0 : index
    %816 = vector.load %arg10[%c240_206, %c0_207] : memref<400x256xf32, #tpu.memory_space<vmem>>, vector<16x256xf32>
    tpu.vector_store %arg10[%c240_206, %c0_207], %815 {strides = array<i32>} : memref<400x256xf32, #tpu.memory_space<vmem>>, vector<16x256xf32>,
    %817 = vector.extract_strided_slice %723 {offsets = [0, 15], sizes = [16, 241], strides = [1, 1]} : vector<16x256xf32> to vector<16x241xf32>
    %cst_208 = arith.constant 0.000000e+00 : f32
    %818 = vector.broadcast %cst_208 : f32 to vector<16x15xf32>
    %819 = tpu.concatenate %817, %818 in 1 : vector<16x241xf32>, vector<16x15xf32> -> vector<16x256xf32>
    %820 = vector.broadcast %38 : vector<1x256xf32> to vector<16x256xf32>
    %821 = arith.mulf %819, %820 : vector<16x256xf32>
    %c256_209 = arith.constant 256 : index
    %c0_210 = arith.constant 0 : index
    %822 = vector.load %arg10[%c256_209, %c0_210] : memref<400x256xf32, #tpu.memory_space<vmem>>, vector<16x256xf32>
    tpu.vector_store %arg10[%c256_209, %c0_210], %821 {strides = array<i32>} : memref<400x256xf32, #tpu.memory_space<vmem>>, vector<16x256xf32>,
    %823 = vector.extract_strided_slice %723 {offsets = [0, 16], sizes = [16, 240], strides = [1, 1]} : vector<16x256xf32> to vector<16x240xf32>
    %cst_211 = arith.constant 0.000000e+00 : f32
    %824 = vector.broadcast %cst_211 : f32 to vector<16x16xf32>
    %825 = tpu.concatenate %823, %824 in 1 : vector<16x240xf32>, vector<16x16xf32> -> vector<16x256xf32>
    %826 = vector.broadcast %49 : vector<1x256xf32> to vector<16x256xf32>
    %827 = arith.mulf %825, %826 : vector<16x256xf32>
    %c272_212 = arith.constant 272 : index
    %c0_213 = arith.constant 0 : index
    %828 = vector.load %arg10[%c272_212, %c0_213] : memref<400x256xf32, #tpu.memory_space<vmem>>, vector<16x256xf32>
    tpu.vector_store %arg10[%c272_212, %c0_213], %827 {strides = array<i32>} : memref<400x256xf32, #tpu.memory_space<vmem>>, vector<16x256xf32>,
    %829 = vector.extract_strided_slice %723 {offsets = [0, 17], sizes = [16, 239], strides = [1, 1]} : vector<16x256xf32> to vector<16x239xf32>
    %cst_214 = arith.constant 0.000000e+00 : f32
    %830 = vector.broadcast %cst_214 : f32 to vector<16x17xf32>
    %831 = tpu.concatenate %829, %830 in 1 : vector<16x239xf32>, vector<16x17xf32> -> vector<16x256xf32>
    %832 = vector.broadcast %60 : vector<1x256xf32> to vector<16x256xf32>
    %833 = arith.mulf %831, %832 : vector<16x256xf32>
    %c288_215 = arith.constant 288 : index
    %c0_216 = arith.constant 0 : index
    %834 = vector.load %arg10[%c288_215, %c0_216] : memref<400x256xf32, #tpu.memory_space<vmem>>, vector<16x256xf32>
    tpu.vector_store %arg10[%c288_215, %c0_216], %833 {strides = array<i32>} : memref<400x256xf32, #tpu.memory_space<vmem>>, vector<16x256xf32>,
    %835 = vector.extract_strided_slice %723 {offsets = [0, 18], sizes = [16, 238], strides = [1, 1]} : vector<16x256xf32> to vector<16x238xf32>
    %cst_217 = arith.constant 0.000000e+00 : f32
    %836 = vector.broadcast %cst_217 : f32 to vector<16x18xf32>
    %837 = tpu.concatenate %835, %836 in 1 : vector<16x238xf32>, vector<16x18xf32> -> vector<16x256xf32>
    %838 = vector.broadcast %71 : vector<1x256xf32> to vector<16x256xf32>
    %839 = arith.mulf %837, %838 : vector<16x256xf32>
    %c304_218 = arith.constant 304 : index
    %c0_219 = arith.constant 0 : index
    %840 = vector.load %arg10[%c304_218, %c0_219] : memref<400x256xf32, #tpu.memory_space<vmem>>, vector<16x256xf32>
    tpu.vector_store %arg10[%c304_218, %c0_219], %839 {strides = array<i32>} : memref<400x256xf32, #tpu.memory_space<vmem>>, vector<16x256xf32>,
    %841 = vector.extract_strided_slice %723 {offsets = [0, 30], sizes = [16, 226], strides = [1, 1]} : vector<16x256xf32> to vector<16x226xf32>
    %cst_220 = arith.constant 0.000000e+00 : f32
    %842 = vector.broadcast %cst_220 : f32 to vector<16x30xf32>
    %843 = tpu.concatenate %841, %842 in 1 : vector<16x226xf32>, vector<16x30xf32> -> vector<16x256xf32>
    %844 = vector.broadcast %27 : vector<1x256xf32> to vector<16x256xf32>
    %845 = arith.mulf %843, %844 : vector<16x256xf32>
    %c320_221 = arith.constant 320 : index
    %c0_222 = arith.constant 0 : index
    %846 = vector.load %arg10[%c320_221, %c0_222] : memref<400x256xf32, #tpu.memory_space<vmem>>, vector<16x256xf32>
    tpu.vector_store %arg10[%c320_221, %c0_222], %845 {strides = array<i32>} : memref<400x256xf32, #tpu.memory_space<vmem>>, vector<16x256xf32>,
    %847 = vector.extract_strided_slice %723 {offsets = [0, 31], sizes = [16, 225], strides = [1, 1]} : vector<16x256xf32> to vector<16x225xf32>
    %cst_223 = arith.constant 0.000000e+00 : f32
    %848 = vector.broadcast %cst_223 : f32 to vector<16x31xf32>
    %849 = tpu.concatenate %847, %848 in 1 : vector<16x225xf32>, vector<16x31xf32> -> vector<16x256xf32>
    %850 = vector.broadcast %38 : vector<1x256xf32> to vector<16x256xf32>
    %851 = arith.mulf %849, %850 : vector<16x256xf32>
    %c336_224 = arith.constant 336 : index
    %c0_225 = arith.constant 0 : index
    %852 = vector.load %arg10[%c336_224, %c0_225] : memref<400x256xf32, #tpu.memory_space<vmem>>, vector<16x256xf32>
    tpu.vector_store %arg10[%c336_224, %c0_225], %851 {strides = array<i32>} : memref<400x256xf32, #tpu.memory_space<vmem>>, vector<16x256xf32>,
    %853 = vector.extract_strided_slice %723 {offsets = [0, 32], sizes = [16, 224], strides = [1, 1]} : vector<16x256xf32> to vector<16x224xf32>
    %cst_226 = arith.constant 0.000000e+00 : f32
    %854 = vector.broadcast %cst_226 : f32 to vector<16x32xf32>
    %855 = tpu.concatenate %853, %854 in 1 : vector<16x224xf32>, vector<16x32xf32> -> vector<16x256xf32>
    %856 = vector.broadcast %49 : vector<1x256xf32> to vector<16x256xf32>
    %857 = arith.mulf %855, %856 : vector<16x256xf32>
    %c352_227 = arith.constant 352 : index
    %c0_228 = arith.constant 0 : index
    %858 = vector.load %arg10[%c352_227, %c0_228] : memref<400x256xf32, #tpu.memory_space<vmem>>, vector<16x256xf32>
    tpu.vector_store %arg10[%c352_227, %c0_228], %857 {strides = array<i32>} : memref<400x256xf32, #tpu.memory_space<vmem>>, vector<16x256xf32>,
    %859 = vector.extract_strided_slice %723 {offsets = [0, 33], sizes = [16, 223], strides = [1, 1]} : vector<16x256xf32> to vector<16x223xf32>
    %cst_229 = arith.constant 0.000000e+00 : f32
    %860 = vector.broadcast %cst_229 : f32 to vector<16x33xf32>
    %861 = tpu.concatenate %859, %860 in 1 : vector<16x223xf32>, vector<16x33xf32> -> vector<16x256xf32>
    %862 = vector.broadcast %60 : vector<1x256xf32> to vector<16x256xf32>
    %863 = arith.mulf %861, %862 : vector<16x256xf32>
    %c368_230 = arith.constant 368 : index
    %c0_231 = arith.constant 0 : index
    %864 = vector.load %arg10[%c368_230, %c0_231] : memref<400x256xf32, #tpu.memory_space<vmem>>, vector<16x256xf32>
    tpu.vector_store %arg10[%c368_230, %c0_231], %863 {strides = array<i32>} : memref<400x256xf32, #tpu.memory_space<vmem>>, vector<16x256xf32>,
    %865 = vector.extract_strided_slice %723 {offsets = [0, 34], sizes = [16, 222], strides = [1, 1]} : vector<16x256xf32> to vector<16x222xf32>
    %cst_232 = arith.constant 0.000000e+00 : f32
    %866 = vector.broadcast %cst_232 : f32 to vector<16x34xf32>
    %867 = tpu.concatenate %865, %866 in 1 : vector<16x222xf32>, vector<16x34xf32> -> vector<16x256xf32>
    %868 = vector.broadcast %71 : vector<1x256xf32> to vector<16x256xf32>
    %869 = arith.mulf %867, %868 : vector<16x256xf32>
    %c384_233 = arith.constant 384 : index
    %c0_234 = arith.constant 0 : index
    %870 = vector.load %arg10[%c384_233, %c0_234] : memref<400x256xf32, #tpu.memory_space<vmem>>, vector<16x256xf32>
    tpu.vector_store %arg10[%c384_233, %c0_234], %869 {strides = array<i32>} : memref<400x256xf32, #tpu.memory_space<vmem>>, vector<16x256xf32>,
    %c1_235 = arith.constant 1 : index
    %c0_236 = arith.constant 0 : index
    %c0_237 = arith.constant 0 : index
    %871 = vector.load %arg5[%c1_235, %c0_236, %c0_237] : memref<3x32x400xf32, #tpu.memory_space<vmem>>, vector<1x32x400xf32>
    %872 = vector.shape_cast %871 : vector<1x32x400xf32> to vector<32x400xf32>
    %c0_238 = arith.constant 0 : index
    %c0_239 = arith.constant 0 : index
    %873 = vector.load %arg10[%c0_238, %c0_239] : memref<400x256xf32, #tpu.memory_space<vmem>>, vector<400x256xf32>
    %cst_240 = arith.constant dense<0.000000e+00> : vector<32x256xf32>
    %874 = tpu.matmul %872, %873, %cst_240 {dimension_numbers = #tpu.dot_dimension_numbers<[1], [0], [0], [1], [0, 0, 1, 1], [], []>} : vector<32x400xf32>, vector<400x256xf32>, vector<32x256xf32> -> vector<32x256xf32>
    %c1_241 = arith.constant 1 : index
    %c0_242 = arith.constant 0 : index
    %c0_243 = arith.constant 0 : index
    %875 = vector.load %arg6[%c1_241, %c0_242, %c0_243] : memref<3x32x1xf32, #tpu.memory_space<vmem>>, vector<1x32x1xf32>
    %876 = vector.shape_cast %875 : vector<1x32x1xf32> to vector<32x1xf32>
    %877 = vector.broadcast %876 : vector<32x1xf32> to vector<32x256xf32>
    %878 = arith.addf %874, %877 : vector<32x256xf32>
    %cst_244 = arith.constant 0.000000e+00 : f32
    %879 = vector.broadcast %cst_244 : f32 to vector<32x256xf32>
    %880 = arith.cmpf oge, %878, %879 : vector<32x256xf32>
    %cst_245 = arith.constant 2.000000e-01 : f32
    %881 = vector.broadcast %cst_245 : f32 to vector<32x256xf32>
    %882 = arith.mulf %881, %878 : vector<32x256xf32>
    %883 = arith.select %880, %878, %882 : vector<32x256xi1>, vector<32x256xf32>
    %c1_246 = arith.constant 1 : index
    %c0_247 = arith.constant 0 : index
    %c0_248 = arith.constant 0 : index
    %884 = vector.load %arg7[%c1_246, %c0_247, %c0_248] : memref<3x32x1xf32, #tpu.memory_space<vmem>>, vector<1x32x1xf32>
    %885 = vector.shape_cast %884 : vector<1x32x1xf32> to vector<32x1xf32>
    %886 = vector.broadcast %885 : vector<32x1xf32> to vector<32x256xf32>
    %887 = arith.mulf %883, %886 : vector<32x256xf32>
    %cst_249 = arith.constant dense<0.000000e+00> : vector<256xf32>
    %888 = vector.multi_reduction <add>, %887, %cst_249 [0] : vector<32x256xf32> to vector<256xf32>
    %889 = vector.shape_cast %888 : vector<256xf32> to vector<1x256xf32>
    %c1_250 = arith.constant 1 : index
    %c0_251 = arith.constant 0 : index
    %c0_252 = arith.constant 0 : index
    %890 = vector.load %arg8[%c1_250, %c0_251, %c0_252] : memref<3x1x1xf32, #tpu.memory_space<vmem>>, vector<1x1x1xf32>
    %891 = vector.shape_cast %890 : vector<1x1x1xf32> to vector<1x1xf32>
    %892 = vector.broadcast %891 : vector<1x1xf32> to vector<1x256xf32>
    %893 = arith.addf %889, %892 : vector<1x256xf32>
    %c0_253 = arith.constant 0 : index
    %c1_254 = arith.constant 1 : index
    %c0_255 = arith.constant 0 : index
    %894 = vector.load %arg2[%c0_253, %c1_254, %c0_255] : memref<1x3x256xf32, #tpu.memory_space<vmem>>, vector<1x1x256xf32>
    %895 = vector.shape_cast %894 : vector<1x1x256xf32> to vector<256xf32>
    %896 = vector.shape_cast %893 : vector<1x256xf32> to vector<256xf32>
    %897 = arith.negf %896 : vector<256xf32>
    %898 = math.exp %897 : vector<256xf32>
    %cst_256 = arith.constant 1.000000e+00 : f32
    %899 = vector.broadcast %cst_256 : f32 to vector<256xf32>
    %900 = arith.addf %899, %898 : vector<256xf32>
    %901 = arith.divf %899, %900 : vector<256xf32>
    %902 = arith.mulf %895, %901 : vector<256xf32>
    %c0_257 = arith.constant 0 : index
    %c1_258 = arith.constant 1 : index
    %c0_259 = arith.constant 0 : index
    %903 = vector.load %arg9[%c0_257, %c1_258, %c0_259] : memref<1x3x256xf32, #tpu.memory_space<vmem>>, vector<1x1x256xf32>
    %904 = vector.shape_cast %903 : vector<1x1x256xf32> to vector<256xf32>
    %905 = vector.shape_cast %902 : vector<256xf32> to vector<1x1x256xf32>
    tpu.vector_store %arg9[%c0_257, %c1_258, %c0_259], %905 {strides = array<i32>} : memref<1x3x256xf32, #tpu.memory_space<vmem>>, vector<1x1x256xf32>,
    %c2 = arith.constant 2 : index
    %c0_260 = arith.constant 0 : index
    %c0_261 = arith.constant 0 : index
    %906 = vector.load %arg3[%c2, %c0_260, %c0_261] : memref<3x16x25xf32, #tpu.memory_space<vmem>>, vector<1x16x25xf32>
    %907 = vector.shape_cast %906 : vector<1x16x25xf32> to vector<16x25xf32>
    %cst_262 = arith.constant 0.000000e+00 : f32
    %908 = vector.broadcast %cst_262 : f32 to vector<16x256xf32>
    %909 = vector.extract_strided_slice %907 {offsets = [0, 0], sizes = [16, 1], strides = [1, 1]} : vector<16x25xf32> to vector<16x1xf32>
    %cst_263 = arith.constant 0.000000e+00 : f32
    %910 = vector.broadcast %cst_263 : f32 to vector<1x34xf32>
    %911 = vector.extract_strided_slice %893 {offsets = [0, 0], sizes = [1, 222], strides = [1, 1]} : vector<1x256xf32> to vector<1x222xf32>
    %912 = tpu.concatenate %910, %911 in 1 : vector<1x34xf32>, vector<1x222xf32> -> vector<1x256xf32>
    %913 = arith.mulf %912, %27 : vector<1x256xf32>
    %914 = vector.broadcast %909 : vector<16x1xf32> to vector<16x256xf32>
    %915 = vector.broadcast %913 : vector<1x256xf32> to vector<16x256xf32>
    %916 = arith.mulf %914, %915 : vector<16x256xf32>
    %917 = arith.addf %908, %916 : vector<16x256xf32>
    %918 = vector.extract_strided_slice %907 {offsets = [0, 1], sizes = [16, 1], strides = [1, 1]} : vector<16x25xf32> to vector<16x1xf32>
    %cst_264 = arith.constant 0.000000e+00 : f32
    %919 = vector.broadcast %cst_264 : f32 to vector<1x33xf32>
    %920 = vector.extract_strided_slice %893 {offsets = [0, 0], sizes = [1, 223], strides = [1, 1]} : vector<1x256xf32> to vector<1x223xf32>
    %921 = tpu.concatenate %919, %920 in 1 : vector<1x33xf32>, vector<1x223xf32> -> vector<1x256xf32>
    %922 = arith.mulf %921, %38 : vector<1x256xf32>
    %923 = vector.broadcast %918 : vector<16x1xf32> to vector<16x256xf32>
    %924 = vector.broadcast %922 : vector<1x256xf32> to vector<16x256xf32>
    %925 = arith.mulf %923, %924 : vector<16x256xf32>
    %926 = arith.addf %917, %925 : vector<16x256xf32>
    %927 = vector.extract_strided_slice %907 {offsets = [0, 2], sizes = [16, 1], strides = [1, 1]} : vector<16x25xf32> to vector<16x1xf32>
    %cst_265 = arith.constant 0.000000e+00 : f32
    %928 = vector.broadcast %cst_265 : f32 to vector<1x32xf32>
    %929 = vector.extract_strided_slice %893 {offsets = [0, 0], sizes = [1, 224], strides = [1, 1]} : vector<1x256xf32> to vector<1x224xf32>
    %930 = tpu.concatenate %928, %929 in 1 : vector<1x32xf32>, vector<1x224xf32> -> vector<1x256xf32>
    %931 = arith.mulf %930, %49 : vector<1x256xf32>
    %932 = vector.broadcast %927 : vector<16x1xf32> to vector<16x256xf32>
    %933 = vector.broadcast %931 : vector<1x256xf32> to vector<16x256xf32>
    %934 = arith.mulf %932, %933 : vector<16x256xf32>
    %935 = arith.addf %926, %934 : vector<16x256xf32>
    %936 = vector.extract_strided_slice %907 {offsets = [0, 3], sizes = [16, 1], strides = [1, 1]} : vector<16x25xf32> to vector<16x1xf32>
    %cst_266 = arith.constant 0.000000e+00 : f32
    %937 = vector.broadcast %cst_266 : f32 to vector<1x31xf32>
    %938 = vector.extract_strided_slice %893 {offsets = [0, 0], sizes = [1, 225], strides = [1, 1]} : vector<1x256xf32> to vector<1x225xf32>
    %939 = tpu.concatenate %937, %938 in 1 : vector<1x31xf32>, vector<1x225xf32> -> vector<1x256xf32>
    %940 = arith.mulf %939, %60 : vector<1x256xf32>
    %941 = vector.broadcast %936 : vector<16x1xf32> to vector<16x256xf32>
    %942 = vector.broadcast %940 : vector<1x256xf32> to vector<16x256xf32>
    %943 = arith.mulf %941, %942 : vector<16x256xf32>
    %944 = arith.addf %935, %943 : vector<16x256xf32>
    %945 = vector.extract_strided_slice %907 {offsets = [0, 4], sizes = [16, 1], strides = [1, 1]} : vector<16x25xf32> to vector<16x1xf32>
    %cst_267 = arith.constant 0.000000e+00 : f32
    %946 = vector.broadcast %cst_267 : f32 to vector<1x30xf32>
    %947 = vector.extract_strided_slice %893 {offsets = [0, 0], sizes = [1, 226], strides = [1, 1]} : vector<1x256xf32> to vector<1x226xf32>
    %948 = tpu.concatenate %946, %947 in 1 : vector<1x30xf32>, vector<1x226xf32> -> vector<1x256xf32>
    %949 = arith.mulf %948, %71 : vector<1x256xf32>
    %950 = vector.broadcast %945 : vector<16x1xf32> to vector<16x256xf32>
    %951 = vector.broadcast %949 : vector<1x256xf32> to vector<16x256xf32>
    %952 = arith.mulf %950, %951 : vector<16x256xf32>
    %953 = arith.addf %944, %952 : vector<16x256xf32>
    %954 = vector.extract_strided_slice %907 {offsets = [0, 5], sizes = [16, 1], strides = [1, 1]} : vector<16x25xf32> to vector<16x1xf32>
    %cst_268 = arith.constant 0.000000e+00 : f32
    %955 = vector.broadcast %cst_268 : f32 to vector<1x18xf32>
    %956 = vector.extract_strided_slice %893 {offsets = [0, 0], sizes = [1, 238], strides = [1, 1]} : vector<1x256xf32> to vector<1x238xf32>
    %957 = tpu.concatenate %955, %956 in 1 : vector<1x18xf32>, vector<1x238xf32> -> vector<1x256xf32>
    %958 = arith.mulf %957, %27 : vector<1x256xf32>
    %959 = vector.broadcast %954 : vector<16x1xf32> to vector<16x256xf32>
    %960 = vector.broadcast %958 : vector<1x256xf32> to vector<16x256xf32>
    %961 = arith.mulf %959, %960 : vector<16x256xf32>
    %962 = arith.addf %953, %961 : vector<16x256xf32>
    %963 = vector.extract_strided_slice %907 {offsets = [0, 6], sizes = [16, 1], strides = [1, 1]} : vector<16x25xf32> to vector<16x1xf32>
    %cst_269 = arith.constant 0.000000e+00 : f32
    %964 = vector.broadcast %cst_269 : f32 to vector<1x17xf32>
    %965 = vector.extract_strided_slice %893 {offsets = [0, 0], sizes = [1, 239], strides = [1, 1]} : vector<1x256xf32> to vector<1x239xf32>
    %966 = tpu.concatenate %964, %965 in 1 : vector<1x17xf32>, vector<1x239xf32> -> vector<1x256xf32>
    %967 = arith.mulf %966, %38 : vector<1x256xf32>
    %968 = vector.broadcast %963 : vector<16x1xf32> to vector<16x256xf32>
    %969 = vector.broadcast %967 : vector<1x256xf32> to vector<16x256xf32>
    %970 = arith.mulf %968, %969 : vector<16x256xf32>
    %971 = arith.addf %962, %970 : vector<16x256xf32>
    %972 = vector.extract_strided_slice %907 {offsets = [0, 7], sizes = [16, 1], strides = [1, 1]} : vector<16x25xf32> to vector<16x1xf32>
    %cst_270 = arith.constant 0.000000e+00 : f32
    %973 = vector.broadcast %cst_270 : f32 to vector<1x16xf32>
    %974 = vector.extract_strided_slice %893 {offsets = [0, 0], sizes = [1, 240], strides = [1, 1]} : vector<1x256xf32> to vector<1x240xf32>
    %975 = tpu.concatenate %973, %974 in 1 : vector<1x16xf32>, vector<1x240xf32> -> vector<1x256xf32>
    %976 = arith.mulf %975, %49 : vector<1x256xf32>
    %977 = vector.broadcast %972 : vector<16x1xf32> to vector<16x256xf32>
    %978 = vector.broadcast %976 : vector<1x256xf32> to vector<16x256xf32>
    %979 = arith.mulf %977, %978 : vector<16x256xf32>
    %980 = arith.addf %971, %979 : vector<16x256xf32>
    %981 = vector.extract_strided_slice %907 {offsets = [0, 8], sizes = [16, 1], strides = [1, 1]} : vector<16x25xf32> to vector<16x1xf32>
    %cst_271 = arith.constant 0.000000e+00 : f32
    %982 = vector.broadcast %cst_271 : f32 to vector<1x15xf32>
    %983 = vector.extract_strided_slice %893 {offsets = [0, 0], sizes = [1, 241], strides = [1, 1]} : vector<1x256xf32> to vector<1x241xf32>
    %984 = tpu.concatenate %982, %983 in 1 : vector<1x15xf32>, vector<1x241xf32> -> vector<1x256xf32>
    %985 = arith.mulf %984, %60 : vector<1x256xf32>
    %986 = vector.broadcast %981 : vector<16x1xf32> to vector<16x256xf32>
    %987 = vector.broadcast %985 : vector<1x256xf32> to vector<16x256xf32>
    %988 = arith.mulf %986, %987 : vector<16x256xf32>
    %989 = arith.addf %980, %988 : vector<16x256xf32>
    %990 = vector.extract_strided_slice %907 {offsets = [0, 9], sizes = [16, 1], strides = [1, 1]} : vector<16x25xf32> to vector<16x1xf32>
    %cst_272 = arith.constant 0.000000e+00 : f32
    %991 = vector.broadcast %cst_272 : f32 to vector<1x14xf32>
    %992 = vector.extract_strided_slice %893 {offsets = [0, 0], sizes = [1, 242], strides = [1, 1]} : vector<1x256xf32> to vector<1x242xf32>
    %993 = tpu.concatenate %991, %992 in 1 : vector<1x14xf32>, vector<1x242xf32> -> vector<1x256xf32>
    %994 = arith.mulf %993, %71 : vector<1x256xf32>
    %995 = vector.broadcast %990 : vector<16x1xf32> to vector<16x256xf32>
    %996 = vector.broadcast %994 : vector<1x256xf32> to vector<16x256xf32>
    %997 = arith.mulf %995, %996 : vector<16x256xf32>
    %998 = arith.addf %989, %997 : vector<16x256xf32>
    %999 = vector.extract_strided_slice %907 {offsets = [0, 10], sizes = [16, 1], strides = [1, 1]} : vector<16x25xf32> to vector<16x1xf32>
    %cst_273 = arith.constant 0.000000e+00 : f32
    %1000 = vector.broadcast %cst_273 : f32 to vector<1x2xf32>
    %1001 = vector.extract_strided_slice %893 {offsets = [0, 0], sizes = [1, 254], strides = [1, 1]} : vector<1x256xf32> to vector<1x254xf32>
    %1002 = tpu.concatenate %1000, %1001 in 1 : vector<1x2xf32>, vector<1x254xf32> -> vector<1x256xf32>
    %1003 = arith.mulf %1002, %27 : vector<1x256xf32>
    %1004 = vector.broadcast %999 : vector<16x1xf32> to vector<16x256xf32>
    %1005 = vector.broadcast %1003 : vector<1x256xf32> to vector<16x256xf32>
    %1006 = arith.mulf %1004, %1005 : vector<16x256xf32>
    %1007 = arith.addf %998, %1006 : vector<16x256xf32>
    %1008 = vector.extract_strided_slice %907 {offsets = [0, 11], sizes = [16, 1], strides = [1, 1]} : vector<16x25xf32> to vector<16x1xf32>
    %cst_274 = arith.constant 0.000000e+00 : f32
    %1009 = vector.broadcast %cst_274 : f32 to vector<1x1xf32>
    %1010 = vector.extract_strided_slice %893 {offsets = [0, 0], sizes = [1, 255], strides = [1, 1]} : vector<1x256xf32> to vector<1x255xf32>
    %1011 = tpu.concatenate %1009, %1010 in 1 : vector<1x1xf32>, vector<1x255xf32> -> vector<1x256xf32>
    %1012 = arith.mulf %1011, %38 : vector<1x256xf32>
    %1013 = vector.broadcast %1008 : vector<16x1xf32> to vector<16x256xf32>
    %1014 = vector.broadcast %1012 : vector<1x256xf32> to vector<16x256xf32>
    %1015 = arith.mulf %1013, %1014 : vector<16x256xf32>
    %1016 = arith.addf %1007, %1015 : vector<16x256xf32>
    %1017 = vector.extract_strided_slice %907 {offsets = [0, 12], sizes = [16, 1], strides = [1, 1]} : vector<16x25xf32> to vector<16x1xf32>
    %1018 = arith.mulf %893, %49 : vector<1x256xf32>
    %1019 = vector.broadcast %1017 : vector<16x1xf32> to vector<16x256xf32>
    %1020 = vector.broadcast %1018 : vector<1x256xf32> to vector<16x256xf32>
    %1021 = arith.mulf %1019, %1020 : vector<16x256xf32>
    %1022 = arith.addf %1016, %1021 : vector<16x256xf32>
    %1023 = vector.extract_strided_slice %907 {offsets = [0, 13], sizes = [16, 1], strides = [1, 1]} : vector<16x25xf32> to vector<16x1xf32>
    %1024 = vector.extract_strided_slice %893 {offsets = [0, 1], sizes = [1, 255], strides = [1, 1]} : vector<1x256xf32> to vector<1x255xf32>
    %cst_275 = arith.constant 0.000000e+00 : f32
    %1025 = vector.broadcast %cst_275 : f32 to vector<1x1xf32>
    %1026 = tpu.concatenate %1024, %1025 in 1 : vector<1x255xf32>, vector<1x1xf32> -> vector<1x256xf32>
    %1027 = arith.mulf %1026, %60 : vector<1x256xf32>
    %1028 = vector.broadcast %1023 : vector<16x1xf32> to vector<16x256xf32>
    %1029 = vector.broadcast %1027 : vector<1x256xf32> to vector<16x256xf32>
    %1030 = arith.mulf %1028, %1029 : vector<16x256xf32>
    %1031 = arith.addf %1022, %1030 : vector<16x256xf32>
    %1032 = vector.extract_strided_slice %907 {offsets = [0, 14], sizes = [16, 1], strides = [1, 1]} : vector<16x25xf32> to vector<16x1xf32>
    %1033 = vector.extract_strided_slice %893 {offsets = [0, 2], sizes = [1, 254], strides = [1, 1]} : vector<1x256xf32> to vector<1x254xf32>
    %cst_276 = arith.constant 0.000000e+00 : f32
    %1034 = vector.broadcast %cst_276 : f32 to vector<1x2xf32>
    %1035 = tpu.concatenate %1033, %1034 in 1 : vector<1x254xf32>, vector<1x2xf32> -> vector<1x256xf32>
    %1036 = arith.mulf %1035, %71 : vector<1x256xf32>
    %1037 = vector.broadcast %1032 : vector<16x1xf32> to vector<16x256xf32>
    %1038 = vector.broadcast %1036 : vector<1x256xf32> to vector<16x256xf32>
    %1039 = arith.mulf %1037, %1038 : vector<16x256xf32>
    %1040 = arith.addf %1031, %1039 : vector<16x256xf32>
    %1041 = vector.extract_strided_slice %907 {offsets = [0, 15], sizes = [16, 1], strides = [1, 1]} : vector<16x25xf32> to vector<16x1xf32>
    %1042 = vector.extract_strided_slice %893 {offsets = [0, 14], sizes = [1, 242], strides = [1, 1]} : vector<1x256xf32> to vector<1x242xf32>
    %cst_277 = arith.constant 0.000000e+00 : f32
    %1043 = vector.broadcast %cst_277 : f32 to vector<1x14xf32>
    %1044 = tpu.concatenate %1042, %1043 in 1 : vector<1x242xf32>, vector<1x14xf32> -> vector<1x256xf32>
    %1045 = arith.mulf %1044, %27 : vector<1x256xf32>
    %1046 = vector.broadcast %1041 : vector<16x1xf32> to vector<16x256xf32>
    %1047 = vector.broadcast %1045 : vector<1x256xf32> to vector<16x256xf32>
    %1048 = arith.mulf %1046, %1047 : vector<16x256xf32>
    %1049 = arith.addf %1040, %1048 : vector<16x256xf32>
    %1050 = vector.extract_strided_slice %907 {offsets = [0, 16], sizes = [16, 1], strides = [1, 1]} : vector<16x25xf32> to vector<16x1xf32>
    %1051 = vector.extract_strided_slice %893 {offsets = [0, 15], sizes = [1, 241], strides = [1, 1]} : vector<1x256xf32> to vector<1x241xf32>
    %cst_278 = arith.constant 0.000000e+00 : f32
    %1052 = vector.broadcast %cst_278 : f32 to vector<1x15xf32>
    %1053 = tpu.concatenate %1051, %1052 in 1 : vector<1x241xf32>, vector<1x15xf32> -> vector<1x256xf32>
    %1054 = arith.mulf %1053, %38 : vector<1x256xf32>
    %1055 = vector.broadcast %1050 : vector<16x1xf32> to vector<16x256xf32>
    %1056 = vector.broadcast %1054 : vector<1x256xf32> to vector<16x256xf32>
    %1057 = arith.mulf %1055, %1056 : vector<16x256xf32>
    %1058 = arith.addf %1049, %1057 : vector<16x256xf32>
    %1059 = vector.extract_strided_slice %907 {offsets = [0, 17], sizes = [16, 1], strides = [1, 1]} : vector<16x25xf32> to vector<16x1xf32>
    %1060 = vector.extract_strided_slice %893 {offsets = [0, 16], sizes = [1, 240], strides = [1, 1]} : vector<1x256xf32> to vector<1x240xf32>
    %cst_279 = arith.constant 0.000000e+00 : f32
    %1061 = vector.broadcast %cst_279 : f32 to vector<1x16xf32>
    %1062 = tpu.concatenate %1060, %1061 in 1 : vector<1x240xf32>, vector<1x16xf32> -> vector<1x256xf32>
    %1063 = arith.mulf %1062, %49 : vector<1x256xf32>
    %1064 = vector.broadcast %1059 : vector<16x1xf32> to vector<16x256xf32>
    %1065 = vector.broadcast %1063 : vector<1x256xf32> to vector<16x256xf32>
    %1066 = arith.mulf %1064, %1065 : vector<16x256xf32>
    %1067 = arith.addf %1058, %1066 : vector<16x256xf32>
    %1068 = vector.extract_strided_slice %907 {offsets = [0, 18], sizes = [16, 1], strides = [1, 1]} : vector<16x25xf32> to vector<16x1xf32>
    %1069 = vector.extract_strided_slice %893 {offsets = [0, 17], sizes = [1, 239], strides = [1, 1]} : vector<1x256xf32> to vector<1x239xf32>
    %cst_280 = arith.constant 0.000000e+00 : f32
    %1070 = vector.broadcast %cst_280 : f32 to vector<1x17xf32>
    %1071 = tpu.concatenate %1069, %1070 in 1 : vector<1x239xf32>, vector<1x17xf32> -> vector<1x256xf32>
    %1072 = arith.mulf %1071, %60 : vector<1x256xf32>
    %1073 = vector.broadcast %1068 : vector<16x1xf32> to vector<16x256xf32>
    %1074 = vector.broadcast %1072 : vector<1x256xf32> to vector<16x256xf32>
    %1075 = arith.mulf %1073, %1074 : vector<16x256xf32>
    %1076 = arith.addf %1067, %1075 : vector<16x256xf32>
    %1077 = vector.extract_strided_slice %907 {offsets = [0, 19], sizes = [16, 1], strides = [1, 1]} : vector<16x25xf32> to vector<16x1xf32>
    %1078 = vector.extract_strided_slice %893 {offsets = [0, 18], sizes = [1, 238], strides = [1, 1]} : vector<1x256xf32> to vector<1x238xf32>
    %cst_281 = arith.constant 0.000000e+00 : f32
    %1079 = vector.broadcast %cst_281 : f32 to vector<1x18xf32>
    %1080 = tpu.concatenate %1078, %1079 in 1 : vector<1x238xf32>, vector<1x18xf32> -> vector<1x256xf32>
    %1081 = arith.mulf %1080, %71 : vector<1x256xf32>
    %1082 = vector.broadcast %1077 : vector<16x1xf32> to vector<16x256xf32>
    %1083 = vector.broadcast %1081 : vector<1x256xf32> to vector<16x256xf32>
    %1084 = arith.mulf %1082, %1083 : vector<16x256xf32>
    %1085 = arith.addf %1076, %1084 : vector<16x256xf32>
    %1086 = vector.extract_strided_slice %907 {offsets = [0, 20], sizes = [16, 1], strides = [1, 1]} : vector<16x25xf32> to vector<16x1xf32>
    %1087 = vector.extract_strided_slice %893 {offsets = [0, 30], sizes = [1, 226], strides = [1, 1]} : vector<1x256xf32> to vector<1x226xf32>
    %cst_282 = arith.constant 0.000000e+00 : f32
    %1088 = vector.broadcast %cst_282 : f32 to vector<1x30xf32>
    %1089 = tpu.concatenate %1087, %1088 in 1 : vector<1x226xf32>, vector<1x30xf32> -> vector<1x256xf32>
    %1090 = arith.mulf %1089, %27 : vector<1x256xf32>
    %1091 = vector.broadcast %1086 : vector<16x1xf32> to vector<16x256xf32>
    %1092 = vector.broadcast %1090 : vector<1x256xf32> to vector<16x256xf32>
    %1093 = arith.mulf %1091, %1092 : vector<16x256xf32>
    %1094 = arith.addf %1085, %1093 : vector<16x256xf32>
    %1095 = vector.extract_strided_slice %907 {offsets = [0, 21], sizes = [16, 1], strides = [1, 1]} : vector<16x25xf32> to vector<16x1xf32>
    %1096 = vector.extract_strided_slice %893 {offsets = [0, 31], sizes = [1, 225], strides = [1, 1]} : vector<1x256xf32> to vector<1x225xf32>
    %cst_283 = arith.constant 0.000000e+00 : f32
    %1097 = vector.broadcast %cst_283 : f32 to vector<1x31xf32>
    %1098 = tpu.concatenate %1096, %1097 in 1 : vector<1x225xf32>, vector<1x31xf32> -> vector<1x256xf32>
    %1099 = arith.mulf %1098, %38 : vector<1x256xf32>
    %1100 = vector.broadcast %1095 : vector<16x1xf32> to vector<16x256xf32>
    %1101 = vector.broadcast %1099 : vector<1x256xf32> to vector<16x256xf32>
    %1102 = arith.mulf %1100, %1101 : vector<16x256xf32>
    %1103 = arith.addf %1094, %1102 : vector<16x256xf32>
    %1104 = vector.extract_strided_slice %907 {offsets = [0, 22], sizes = [16, 1], strides = [1, 1]} : vector<16x25xf32> to vector<16x1xf32>
    %1105 = vector.extract_strided_slice %893 {offsets = [0, 32], sizes = [1, 224], strides = [1, 1]} : vector<1x256xf32> to vector<1x224xf32>
    %cst_284 = arith.constant 0.000000e+00 : f32
    %1106 = vector.broadcast %cst_284 : f32 to vector<1x32xf32>
    %1107 = tpu.concatenate %1105, %1106 in 1 : vector<1x224xf32>, vector<1x32xf32> -> vector<1x256xf32>
    %1108 = arith.mulf %1107, %49 : vector<1x256xf32>
    %1109 = vector.broadcast %1104 : vector<16x1xf32> to vector<16x256xf32>
    %1110 = vector.broadcast %1108 : vector<1x256xf32> to vector<16x256xf32>
    %1111 = arith.mulf %1109, %1110 : vector<16x256xf32>
    %1112 = arith.addf %1103, %1111 : vector<16x256xf32>
    %1113 = vector.extract_strided_slice %907 {offsets = [0, 23], sizes = [16, 1], strides = [1, 1]} : vector<16x25xf32> to vector<16x1xf32>
    %1114 = vector.extract_strided_slice %893 {offsets = [0, 33], sizes = [1, 223], strides = [1, 1]} : vector<1x256xf32> to vector<1x223xf32>
    %cst_285 = arith.constant 0.000000e+00 : f32
    %1115 = vector.broadcast %cst_285 : f32 to vector<1x33xf32>
    %1116 = tpu.concatenate %1114, %1115 in 1 : vector<1x223xf32>, vector<1x33xf32> -> vector<1x256xf32>
    %1117 = arith.mulf %1116, %60 : vector<1x256xf32>
    %1118 = vector.broadcast %1113 : vector<16x1xf32> to vector<16x256xf32>
    %1119 = vector.broadcast %1117 : vector<1x256xf32> to vector<16x256xf32>
    %1120 = arith.mulf %1118, %1119 : vector<16x256xf32>
    %1121 = arith.addf %1112, %1120 : vector<16x256xf32>
    %1122 = vector.extract_strided_slice %907 {offsets = [0, 24], sizes = [16, 1], strides = [1, 1]} : vector<16x25xf32> to vector<16x1xf32>
    %1123 = vector.extract_strided_slice %893 {offsets = [0, 34], sizes = [1, 222], strides = [1, 1]} : vector<1x256xf32> to vector<1x222xf32>
    %cst_286 = arith.constant 0.000000e+00 : f32
    %1124 = vector.broadcast %cst_286 : f32 to vector<1x34xf32>
    %1125 = tpu.concatenate %1123, %1124 in 1 : vector<1x222xf32>, vector<1x34xf32> -> vector<1x256xf32>
    %1126 = arith.mulf %1125, %71 : vector<1x256xf32>
    %1127 = vector.broadcast %1122 : vector<16x1xf32> to vector<16x256xf32>
    %1128 = vector.broadcast %1126 : vector<1x256xf32> to vector<16x256xf32>
    %1129 = arith.mulf %1127, %1128 : vector<16x256xf32>
    %1130 = arith.addf %1121, %1129 : vector<16x256xf32>
    %c2_287 = arith.constant 2 : index
    %c0_288 = arith.constant 0 : index
    %c0_289 = arith.constant 0 : index
    %1131 = vector.load %arg4[%c2_287, %c0_288, %c0_289] : memref<3x16x1xf32, #tpu.memory_space<vmem>>, vector<1x16x1xf32>
    %1132 = vector.shape_cast %1131 : vector<1x16x1xf32> to vector<16x1xf32>
    %1133 = vector.broadcast %1132 : vector<16x1xf32> to vector<16x256xf32>
    %1134 = arith.addf %1130, %1133 : vector<16x256xf32>
    %cst_290 = arith.constant 0.000000e+00 : f32
    %1135 = vector.broadcast %cst_290 : f32 to vector<16x256xf32>
    %1136 = arith.cmpf oge, %1134, %1135 : vector<16x256xf32>
    %cst_291 = arith.constant 2.000000e-01 : f32
    %1137 = vector.broadcast %cst_291 : f32 to vector<16x256xf32>
    %1138 = arith.mulf %1137, %1134 : vector<16x256xf32>
    %1139 = arith.select %1136, %1134, %1138 : vector<16x256xi1>, vector<16x256xf32>
    %cst_292 = arith.constant 0.000000e+00 : f32
    %1140 = vector.broadcast %cst_292 : f32 to vector<16x34xf32>
    %1141 = vector.extract_strided_slice %1139 {offsets = [0, 0], sizes = [16, 222], strides = [1, 1]} : vector<16x256xf32> to vector<16x222xf32>
    %1142 = tpu.concatenate %1140, %1141 in 1 : vector<16x34xf32>, vector<16x222xf32> -> vector<16x256xf32>
    %1143 = vector.broadcast %27 : vector<1x256xf32> to vector<16x256xf32>
    %1144 = arith.mulf %1142, %1143 : vector<16x256xf32>
    %c0_293 = arith.constant 0 : index
    %c0_294 = arith.constant 0 : index
    %1145 = vector.load %arg10[%c0_293, %c0_294] : memref<400x256xf32, #tpu.memory_space<vmem>>, vector<16x256xf32>
    tpu.vector_store %arg10[%c0_293, %c0_294], %1144 {strides = array<i32>} : memref<400x256xf32, #tpu.memory_space<vmem>>, vector<16x256xf32>,
    %cst_295 = arith.constant 0.000000e+00 : f32
    %1146 = vector.broadcast %cst_295 : f32 to vector<16x33xf32>
    %1147 = vector.extract_strided_slice %1139 {offsets = [0, 0], sizes = [16, 223], strides = [1, 1]} : vector<16x256xf32> to vector<16x223xf32>
    %1148 = tpu.concatenate %1146, %1147 in 1 : vector<16x33xf32>, vector<16x223xf32> -> vector<16x256xf32>
    %1149 = vector.broadcast %38 : vector<1x256xf32> to vector<16x256xf32>
    %1150 = arith.mulf %1148, %1149 : vector<16x256xf32>
    %c16_296 = arith.constant 16 : index
    %c0_297 = arith.constant 0 : index
    %1151 = vector.load %arg10[%c16_296, %c0_297] : memref<400x256xf32, #tpu.memory_space<vmem>>, vector<16x256xf32>
    tpu.vector_store %arg10[%c16_296, %c0_297], %1150 {strides = array<i32>} : memref<400x256xf32, #tpu.memory_space<vmem>>, vector<16x256xf32>,
    %cst_298 = arith.constant 0.000000e+00 : f32
    %1152 = vector.broadcast %cst_298 : f32 to vector<16x32xf32>
    %1153 = vector.extract_strided_slice %1139 {offsets = [0, 0], sizes = [16, 224], strides = [1, 1]} : vector<16x256xf32> to vector<16x224xf32>
    %1154 = tpu.concatenate %1152, %1153 in 1 : vector<16x32xf32>, vector<16x224xf32> -> vector<16x256xf32>
    %1155 = vector.broadcast %49 : vector<1x256xf32> to vector<16x256xf32>
    %1156 = arith.mulf %1154, %1155 : vector<16x256xf32>
    %c32_299 = arith.constant 32 : index
    %c0_300 = arith.constant 0 : index
    %1157 = vector.load %arg10[%c32_299, %c0_300] : memref<400x256xf32, #tpu.memory_space<vmem>>, vector<16x256xf32>
    tpu.vector_store %arg10[%c32_299, %c0_300], %1156 {strides = array<i32>} : memref<400x256xf32, #tpu.memory_space<vmem>>, vector<16x256xf32>,
    %cst_301 = arith.constant 0.000000e+00 : f32
    %1158 = vector.broadcast %cst_301 : f32 to vector<16x31xf32>
    %1159 = vector.extract_strided_slice %1139 {offsets = [0, 0], sizes = [16, 225], strides = [1, 1]} : vector<16x256xf32> to vector<16x225xf32>
    %1160 = tpu.concatenate %1158, %1159 in 1 : vector<16x31xf32>, vector<16x225xf32> -> vector<16x256xf32>
    %1161 = vector.broadcast %60 : vector<1x256xf32> to vector<16x256xf32>
    %1162 = arith.mulf %1160, %1161 : vector<16x256xf32>
    %c48_302 = arith.constant 48 : index
    %c0_303 = arith.constant 0 : index
    %1163 = vector.load %arg10[%c48_302, %c0_303] : memref<400x256xf32, #tpu.memory_space<vmem>>, vector<16x256xf32>
    tpu.vector_store %arg10[%c48_302, %c0_303], %1162 {strides = array<i32>} : memref<400x256xf32, #tpu.memory_space<vmem>>, vector<16x256xf32>,
    %cst_304 = arith.constant 0.000000e+00 : f32
    %1164 = vector.broadcast %cst_304 : f32 to vector<16x30xf32>
    %1165 = vector.extract_strided_slice %1139 {offsets = [0, 0], sizes = [16, 226], strides = [1, 1]} : vector<16x256xf32> to vector<16x226xf32>
    %1166 = tpu.concatenate %1164, %1165 in 1 : vector<16x30xf32>, vector<16x226xf32> -> vector<16x256xf32>
    %1167 = vector.broadcast %71 : vector<1x256xf32> to vector<16x256xf32>
    %1168 = arith.mulf %1166, %1167 : vector<16x256xf32>
    %c64_305 = arith.constant 64 : index
    %c0_306 = arith.constant 0 : index
    %1169 = vector.load %arg10[%c64_305, %c0_306] : memref<400x256xf32, #tpu.memory_space<vmem>>, vector<16x256xf32>
    tpu.vector_store %arg10[%c64_305, %c0_306], %1168 {strides = array<i32>} : memref<400x256xf32, #tpu.memory_space<vmem>>, vector<16x256xf32>,
    %cst_307 = arith.constant 0.000000e+00 : f32
    %1170 = vector.broadcast %cst_307 : f32 to vector<16x18xf32>
    %1171 = vector.extract_strided_slice %1139 {offsets = [0, 0], sizes = [16, 238], strides = [1, 1]} : vector<16x256xf32> to vector<16x238xf32>
    %1172 = tpu.concatenate %1170, %1171 in 1 : vector<16x18xf32>, vector<16x238xf32> -> vector<16x256xf32>
    %1173 = vector.broadcast %27 : vector<1x256xf32> to vector<16x256xf32>
    %1174 = arith.mulf %1172, %1173 : vector<16x256xf32>
    %c80_308 = arith.constant 80 : index
    %c0_309 = arith.constant 0 : index
    %1175 = vector.load %arg10[%c80_308, %c0_309] : memref<400x256xf32, #tpu.memory_space<vmem>>, vector<16x256xf32>
    tpu.vector_store %arg10[%c80_308, %c0_309], %1174 {strides = array<i32>} : memref<400x256xf32, #tpu.memory_space<vmem>>, vector<16x256xf32>,
    %cst_310 = arith.constant 0.000000e+00 : f32
    %1176 = vector.broadcast %cst_310 : f32 to vector<16x17xf32>
    %1177 = vector.extract_strided_slice %1139 {offsets = [0, 0], sizes = [16, 239], strides = [1, 1]} : vector<16x256xf32> to vector<16x239xf32>
    %1178 = tpu.concatenate %1176, %1177 in 1 : vector<16x17xf32>, vector<16x239xf32> -> vector<16x256xf32>
    %1179 = vector.broadcast %38 : vector<1x256xf32> to vector<16x256xf32>
    %1180 = arith.mulf %1178, %1179 : vector<16x256xf32>
    %c96_311 = arith.constant 96 : index
    %c0_312 = arith.constant 0 : index
    %1181 = vector.load %arg10[%c96_311, %c0_312] : memref<400x256xf32, #tpu.memory_space<vmem>>, vector<16x256xf32>
    tpu.vector_store %arg10[%c96_311, %c0_312], %1180 {strides = array<i32>} : memref<400x256xf32, #tpu.memory_space<vmem>>, vector<16x256xf32>,
    %cst_313 = arith.constant 0.000000e+00 : f32
    %1182 = vector.broadcast %cst_313 : f32 to vector<16x16xf32>
    %1183 = vector.extract_strided_slice %1139 {offsets = [0, 0], sizes = [16, 240], strides = [1, 1]} : vector<16x256xf32> to vector<16x240xf32>
    %1184 = tpu.concatenate %1182, %1183 in 1 : vector<16x16xf32>, vector<16x240xf32> -> vector<16x256xf32>
    %1185 = vector.broadcast %49 : vector<1x256xf32> to vector<16x256xf32>
    %1186 = arith.mulf %1184, %1185 : vector<16x256xf32>
    %c112_314 = arith.constant 112 : index
    %c0_315 = arith.constant 0 : index
    %1187 = vector.load %arg10[%c112_314, %c0_315] : memref<400x256xf32, #tpu.memory_space<vmem>>, vector<16x256xf32>
    tpu.vector_store %arg10[%c112_314, %c0_315], %1186 {strides = array<i32>} : memref<400x256xf32, #tpu.memory_space<vmem>>, vector<16x256xf32>,
    %cst_316 = arith.constant 0.000000e+00 : f32
    %1188 = vector.broadcast %cst_316 : f32 to vector<16x15xf32>
    %1189 = vector.extract_strided_slice %1139 {offsets = [0, 0], sizes = [16, 241], strides = [1, 1]} : vector<16x256xf32> to vector<16x241xf32>
    %1190 = tpu.concatenate %1188, %1189 in 1 : vector<16x15xf32>, vector<16x241xf32> -> vector<16x256xf32>
    %1191 = vector.broadcast %60 : vector<1x256xf32> to vector<16x256xf32>
    %1192 = arith.mulf %1190, %1191 : vector<16x256xf32>
    %c128_317 = arith.constant 128 : index
    %c0_318 = arith.constant 0 : index
    %1193 = vector.load %arg10[%c128_317, %c0_318] : memref<400x256xf32, #tpu.memory_space<vmem>>, vector<16x256xf32>
    tpu.vector_store %arg10[%c128_317, %c0_318], %1192 {strides = array<i32>} : memref<400x256xf32, #tpu.memory_space<vmem>>, vector<16x256xf32>,
    %cst_319 = arith.constant 0.000000e+00 : f32
    %1194 = vector.broadcast %cst_319 : f32 to vector<16x14xf32>
    %1195 = vector.extract_strided_slice %1139 {offsets = [0, 0], sizes = [16, 242], strides = [1, 1]} : vector<16x256xf32> to vector<16x242xf32>
    %1196 = tpu.concatenate %1194, %1195 in 1 : vector<16x14xf32>, vector<16x242xf32> -> vector<16x256xf32>
    %1197 = vector.broadcast %71 : vector<1x256xf32> to vector<16x256xf32>
    %1198 = arith.mulf %1196, %1197 : vector<16x256xf32>
    %c144_320 = arith.constant 144 : index
    %c0_321 = arith.constant 0 : index
    %1199 = vector.load %arg10[%c144_320, %c0_321] : memref<400x256xf32, #tpu.memory_space<vmem>>, vector<16x256xf32>
    tpu.vector_store %arg10[%c144_320, %c0_321], %1198 {strides = array<i32>} : memref<400x256xf32, #tpu.memory_space<vmem>>, vector<16x256xf32>,
    %cst_322 = arith.constant 0.000000e+00 : f32
    %1200 = vector.broadcast %cst_322 : f32 to vector<16x2xf32>
    %1201 = vector.extract_strided_slice %1139 {offsets = [0, 0], sizes = [16, 254], strides = [1, 1]} : vector<16x256xf32> to vector<16x254xf32>
    %1202 = tpu.concatenate %1200, %1201 in 1 : vector<16x2xf32>, vector<16x254xf32> -> vector<16x256xf32>
    %1203 = vector.broadcast %27 : vector<1x256xf32> to vector<16x256xf32>
    %1204 = arith.mulf %1202, %1203 : vector<16x256xf32>
    %c160_323 = arith.constant 160 : index
    %c0_324 = arith.constant 0 : index
    %1205 = vector.load %arg10[%c160_323, %c0_324] : memref<400x256xf32, #tpu.memory_space<vmem>>, vector<16x256xf32>
    tpu.vector_store %arg10[%c160_323, %c0_324], %1204 {strides = array<i32>} : memref<400x256xf32, #tpu.memory_space<vmem>>, vector<16x256xf32>,
    %cst_325 = arith.constant 0.000000e+00 : f32
    %1206 = vector.broadcast %cst_325 : f32 to vector<16x1xf32>
    %1207 = vector.extract_strided_slice %1139 {offsets = [0, 0], sizes = [16, 255], strides = [1, 1]} : vector<16x256xf32> to vector<16x255xf32>
    %1208 = tpu.concatenate %1206, %1207 in 1 : vector<16x1xf32>, vector<16x255xf32> -> vector<16x256xf32>
    %1209 = vector.broadcast %38 : vector<1x256xf32> to vector<16x256xf32>
    %1210 = arith.mulf %1208, %1209 : vector<16x256xf32>
    %c176_326 = arith.constant 176 : index
    %c0_327 = arith.constant 0 : index
    %1211 = vector.load %arg10[%c176_326, %c0_327] : memref<400x256xf32, #tpu.memory_space<vmem>>, vector<16x256xf32>
    tpu.vector_store %arg10[%c176_326, %c0_327], %1210 {strides = array<i32>} : memref<400x256xf32, #tpu.memory_space<vmem>>, vector<16x256xf32>,
    %1212 = vector.broadcast %49 : vector<1x256xf32> to vector<16x256xf32>
    %1213 = arith.mulf %1139, %1212 : vector<16x256xf32>
    %c192_328 = arith.constant 192 : index
    %c0_329 = arith.constant 0 : index
    %1214 = vector.load %arg10[%c192_328, %c0_329] : memref<400x256xf32, #tpu.memory_space<vmem>>, vector<16x256xf32>
    tpu.vector_store %arg10[%c192_328, %c0_329], %1213 {strides = array<i32>} : memref<400x256xf32, #tpu.memory_space<vmem>>, vector<16x256xf32>,
    %1215 = vector.extract_strided_slice %1139 {offsets = [0, 1], sizes = [16, 255], strides = [1, 1]} : vector<16x256xf32> to vector<16x255xf32>
    %cst_330 = arith.constant 0.000000e+00 : f32
    %1216 = vector.broadcast %cst_330 : f32 to vector<16x1xf32>
    %1217 = tpu.concatenate %1215, %1216 in 1 : vector<16x255xf32>, vector<16x1xf32> -> vector<16x256xf32>
    %1218 = vector.broadcast %60 : vector<1x256xf32> to vector<16x256xf32>
    %1219 = arith.mulf %1217, %1218 : vector<16x256xf32>
    %c208_331 = arith.constant 208 : index
    %c0_332 = arith.constant 0 : index
    %1220 = vector.load %arg10[%c208_331, %c0_332] : memref<400x256xf32, #tpu.memory_space<vmem>>, vector<16x256xf32>
    tpu.vector_store %arg10[%c208_331, %c0_332], %1219 {strides = array<i32>} : memref<400x256xf32, #tpu.memory_space<vmem>>, vector<16x256xf32>,
    %1221 = vector.extract_strided_slice %1139 {offsets = [0, 2], sizes = [16, 254], strides = [1, 1]} : vector<16x256xf32> to vector<16x254xf32>
    %cst_333 = arith.constant 0.000000e+00 : f32
    %1222 = vector.broadcast %cst_333 : f32 to vector<16x2xf32>
    %1223 = tpu.concatenate %1221, %1222 in 1 : vector<16x254xf32>, vector<16x2xf32> -> vector<16x256xf32>
    %1224 = vector.broadcast %71 : vector<1x256xf32> to vector<16x256xf32>
    %1225 = arith.mulf %1223, %1224 : vector<16x256xf32>
    %c224_334 = arith.constant 224 : index
    %c0_335 = arith.constant 0 : index
    %1226 = vector.load %arg10[%c224_334, %c0_335] : memref<400x256xf32, #tpu.memory_space<vmem>>, vector<16x256xf32>
    tpu.vector_store %arg10[%c224_334, %c0_335], %1225 {strides = array<i32>} : memref<400x256xf32, #tpu.memory_space<vmem>>, vector<16x256xf32>,
    %1227 = vector.extract_strided_slice %1139 {offsets = [0, 14], sizes = [16, 242], strides = [1, 1]} : vector<16x256xf32> to vector<16x242xf32>
    %cst_336 = arith.constant 0.000000e+00 : f32
    %1228 = vector.broadcast %cst_336 : f32 to vector<16x14xf32>
    %1229 = tpu.concatenate %1227, %1228 in 1 : vector<16x242xf32>, vector<16x14xf32> -> vector<16x256xf32>
    %1230 = vector.broadcast %27 : vector<1x256xf32> to vector<16x256xf32>
    %1231 = arith.mulf %1229, %1230 : vector<16x256xf32>
    %c240_337 = arith.constant 240 : index
    %c0_338 = arith.constant 0 : index
    %1232 = vector.load %arg10[%c240_337, %c0_338] : memref<400x256xf32, #tpu.memory_space<vmem>>, vector<16x256xf32>
    tpu.vector_store %arg10[%c240_337, %c0_338], %1231 {strides = array<i32>} : memref<400x256xf32, #tpu.memory_space<vmem>>, vector<16x256xf32>,
    %1233 = vector.extract_strided_slice %1139 {offsets = [0, 15], sizes = [16, 241], strides = [1, 1]} : vector<16x256xf32> to vector<16x241xf32>
    %cst_339 = arith.constant 0.000000e+00 : f32
    %1234 = vector.broadcast %cst_339 : f32 to vector<16x15xf32>
    %1235 = tpu.concatenate %1233, %1234 in 1 : vector<16x241xf32>, vector<16x15xf32> -> vector<16x256xf32>
    %1236 = vector.broadcast %38 : vector<1x256xf32> to vector<16x256xf32>
    %1237 = arith.mulf %1235, %1236 : vector<16x256xf32>
    %c256_340 = arith.constant 256 : index
    %c0_341 = arith.constant 0 : index
    %1238 = vector.load %arg10[%c256_340, %c0_341] : memref<400x256xf32, #tpu.memory_space<vmem>>, vector<16x256xf32>
    tpu.vector_store %arg10[%c256_340, %c0_341], %1237 {strides = array<i32>} : memref<400x256xf32, #tpu.memory_space<vmem>>, vector<16x256xf32>,
    %1239 = vector.extract_strided_slice %1139 {offsets = [0, 16], sizes = [16, 240], strides = [1, 1]} : vector<16x256xf32> to vector<16x240xf32>
    %cst_342 = arith.constant 0.000000e+00 : f32
    %1240 = vector.broadcast %cst_342 : f32 to vector<16x16xf32>
    %1241 = tpu.concatenate %1239, %1240 in 1 : vector<16x240xf32>, vector<16x16xf32> -> vector<16x256xf32>
    %1242 = vector.broadcast %49 : vector<1x256xf32> to vector<16x256xf32>
    %1243 = arith.mulf %1241, %1242 : vector<16x256xf32>
    %c272_343 = arith.constant 272 : index
    %c0_344 = arith.constant 0 : index
    %1244 = vector.load %arg10[%c272_343, %c0_344] : memref<400x256xf32, #tpu.memory_space<vmem>>, vector<16x256xf32>
    tpu.vector_store %arg10[%c272_343, %c0_344], %1243 {strides = array<i32>} : memref<400x256xf32, #tpu.memory_space<vmem>>, vector<16x256xf32>,
    %1245 = vector.extract_strided_slice %1139 {offsets = [0, 17], sizes = [16, 239], strides = [1, 1]} : vector<16x256xf32> to vector<16x239xf32>
    %cst_345 = arith.constant 0.000000e+00 : f32
    %1246 = vector.broadcast %cst_345 : f32 to vector<16x17xf32>
    %1247 = tpu.concatenate %1245, %1246 in 1 : vector<16x239xf32>, vector<16x17xf32> -> vector<16x256xf32>
    %1248 = vector.broadcast %60 : vector<1x256xf32> to vector<16x256xf32>
    %1249 = arith.mulf %1247, %1248 : vector<16x256xf32>
    %c288_346 = arith.constant 288 : index
    %c0_347 = arith.constant 0 : index
    %1250 = vector.load %arg10[%c288_346, %c0_347] : memref<400x256xf32, #tpu.memory_space<vmem>>, vector<16x256xf32>
    tpu.vector_store %arg10[%c288_346, %c0_347], %1249 {strides = array<i32>} : memref<400x256xf32, #tpu.memory_space<vmem>>, vector<16x256xf32>,
    %1251 = vector.extract_strided_slice %1139 {offsets = [0, 18], sizes = [16, 238], strides = [1, 1]} : vector<16x256xf32> to vector<16x238xf32>
    %cst_348 = arith.constant 0.000000e+00 : f32
    %1252 = vector.broadcast %cst_348 : f32 to vector<16x18xf32>
    %1253 = tpu.concatenate %1251, %1252 in 1 : vector<16x238xf32>, vector<16x18xf32> -> vector<16x256xf32>
    %1254 = vector.broadcast %71 : vector<1x256xf32> to vector<16x256xf32>
    %1255 = arith.mulf %1253, %1254 : vector<16x256xf32>
    %c304_349 = arith.constant 304 : index
    %c0_350 = arith.constant 0 : index
    %1256 = vector.load %arg10[%c304_349, %c0_350] : memref<400x256xf32, #tpu.memory_space<vmem>>, vector<16x256xf32>
    tpu.vector_store %arg10[%c304_349, %c0_350], %1255 {strides = array<i32>} : memref<400x256xf32, #tpu.memory_space<vmem>>, vector<16x256xf32>,
    %1257 = vector.extract_strided_slice %1139 {offsets = [0, 30], sizes = [16, 226], strides = [1, 1]} : vector<16x256xf32> to vector<16x226xf32>
    %cst_351 = arith.constant 0.000000e+00 : f32
    %1258 = vector.broadcast %cst_351 : f32 to vector<16x30xf32>
    %1259 = tpu.concatenate %1257, %1258 in 1 : vector<16x226xf32>, vector<16x30xf32> -> vector<16x256xf32>
    %1260 = vector.broadcast %27 : vector<1x256xf32> to vector<16x256xf32>
    %1261 = arith.mulf %1259, %1260 : vector<16x256xf32>
    %c320_352 = arith.constant 320 : index
    %c0_353 = arith.constant 0 : index
    %1262 = vector.load %arg10[%c320_352, %c0_353] : memref<400x256xf32, #tpu.memory_space<vmem>>, vector<16x256xf32>
    tpu.vector_store %arg10[%c320_352, %c0_353], %1261 {strides = array<i32>} : memref<400x256xf32, #tpu.memory_space<vmem>>, vector<16x256xf32>,
    %1263 = vector.extract_strided_slice %1139 {offsets = [0, 31], sizes = [16, 225], strides = [1, 1]} : vector<16x256xf32> to vector<16x225xf32>
    %cst_354 = arith.constant 0.000000e+00 : f32
    %1264 = vector.broadcast %cst_354 : f32 to vector<16x31xf32>
    %1265 = tpu.concatenate %1263, %1264 in 1 : vector<16x225xf32>, vector<16x31xf32> -> vector<16x256xf32>
    %1266 = vector.broadcast %38 : vector<1x256xf32> to vector<16x256xf32>
    %1267 = arith.mulf %1265, %1266 : vector<16x256xf32>
    %c336_355 = arith.constant 336 : index
    %c0_356 = arith.constant 0 : index
    %1268 = vector.load %arg10[%c336_355, %c0_356] : memref<400x256xf32, #tpu.memory_space<vmem>>, vector<16x256xf32>
    tpu.vector_store %arg10[%c336_355, %c0_356], %1267 {strides = array<i32>} : memref<400x256xf32, #tpu.memory_space<vmem>>, vector<16x256xf32>,
    %1269 = vector.extract_strided_slice %1139 {offsets = [0, 32], sizes = [16, 224], strides = [1, 1]} : vector<16x256xf32> to vector<16x224xf32>
    %cst_357 = arith.constant 0.000000e+00 : f32
    %1270 = vector.broadcast %cst_357 : f32 to vector<16x32xf32>
    %1271 = tpu.concatenate %1269, %1270 in 1 : vector<16x224xf32>, vector<16x32xf32> -> vector<16x256xf32>
    %1272 = vector.broadcast %49 : vector<1x256xf32> to vector<16x256xf32>
    %1273 = arith.mulf %1271, %1272 : vector<16x256xf32>
    %c352_358 = arith.constant 352 : index
    %c0_359 = arith.constant 0 : index
    %1274 = vector.load %arg10[%c352_358, %c0_359] : memref<400x256xf32, #tpu.memory_space<vmem>>, vector<16x256xf32>
    tpu.vector_store %arg10[%c352_358, %c0_359], %1273 {strides = array<i32>} : memref<400x256xf32, #tpu.memory_space<vmem>>, vector<16x256xf32>,
    %1275 = vector.extract_strided_slice %1139 {offsets = [0, 33], sizes = [16, 223], strides = [1, 1]} : vector<16x256xf32> to vector<16x223xf32>
    %cst_360 = arith.constant 0.000000e+00 : f32
    %1276 = vector.broadcast %cst_360 : f32 to vector<16x33xf32>
    %1277 = tpu.concatenate %1275, %1276 in 1 : vector<16x223xf32>, vector<16x33xf32> -> vector<16x256xf32>
    %1278 = vector.broadcast %60 : vector<1x256xf32> to vector<16x256xf32>
    %1279 = arith.mulf %1277, %1278 : vector<16x256xf32>
    %c368_361 = arith.constant 368 : index
    %c0_362 = arith.constant 0 : index
    %1280 = vector.load %arg10[%c368_361, %c0_362] : memref<400x256xf32, #tpu.memory_space<vmem>>, vector<16x256xf32>
    tpu.vector_store %arg10[%c368_361, %c0_362], %1279 {strides = array<i32>} : memref<400x256xf32, #tpu.memory_space<vmem>>, vector<16x256xf32>,
    %1281 = vector.extract_strided_slice %1139 {offsets = [0, 34], sizes = [16, 222], strides = [1, 1]} : vector<16x256xf32> to vector<16x222xf32>
    %cst_363 = arith.constant 0.000000e+00 : f32
    %1282 = vector.broadcast %cst_363 : f32 to vector<16x34xf32>
    %1283 = tpu.concatenate %1281, %1282 in 1 : vector<16x222xf32>, vector<16x34xf32> -> vector<16x256xf32>
    %1284 = vector.broadcast %71 : vector<1x256xf32> to vector<16x256xf32>
    %1285 = arith.mulf %1283, %1284 : vector<16x256xf32>
    %c384_364 = arith.constant 384 : index
    %c0_365 = arith.constant 0 : index
    %1286 = vector.load %arg10[%c384_364, %c0_365] : memref<400x256xf32, #tpu.memory_space<vmem>>, vector<16x256xf32>
    tpu.vector_store %arg10[%c384_364, %c0_365], %1285 {strides = array<i32>} : memref<400x256xf32, #tpu.memory_space<vmem>>, vector<16x256xf32>,
    %c2_366 = arith.constant 2 : index
    %c0_367 = arith.constant 0 : index
    %c0_368 = arith.constant 0 : index
    %1287 = vector.load %arg5[%c2_366, %c0_367, %c0_368] : memref<3x32x400xf32, #tpu.memory_space<vmem>>, vector<1x32x400xf32>
    %1288 = vector.shape_cast %1287 : vector<1x32x400xf32> to vector<32x400xf32>
    %c0_369 = arith.constant 0 : index
    %c0_370 = arith.constant 0 : index
    %1289 = vector.load %arg10[%c0_369, %c0_370] : memref<400x256xf32, #tpu.memory_space<vmem>>, vector<400x256xf32>
    %cst_371 = arith.constant dense<0.000000e+00> : vector<32x256xf32>
    %1290 = tpu.matmul %1288, %1289, %cst_371 {dimension_numbers = #tpu.dot_dimension_numbers<[1], [0], [0], [1], [0, 0, 1, 1], [], []>} : vector<32x400xf32>, vector<400x256xf32>, vector<32x256xf32> -> vector<32x256xf32>
    %c2_372 = arith.constant 2 : index
    %c0_373 = arith.constant 0 : index
    %c0_374 = arith.constant 0 : index
    %1291 = vector.load %arg6[%c2_372, %c0_373, %c0_374] : memref<3x32x1xf32, #tpu.memory_space<vmem>>, vector<1x32x1xf32>
    %1292 = vector.shape_cast %1291 : vector<1x32x1xf32> to vector<32x1xf32>
    %1293 = vector.broadcast %1292 : vector<32x1xf32> to vector<32x256xf32>
    %1294 = arith.addf %1290, %1293 : vector<32x256xf32>
    %cst_375 = arith.constant 0.000000e+00 : f32
    %1295 = vector.broadcast %cst_375 : f32 to vector<32x256xf32>
    %1296 = arith.cmpf oge, %1294, %1295 : vector<32x256xf32>
    %cst_376 = arith.constant 2.000000e-01 : f32
    %1297 = vector.broadcast %cst_376 : f32 to vector<32x256xf32>
    %1298 = arith.mulf %1297, %1294 : vector<32x256xf32>
    %1299 = arith.select %1296, %1294, %1298 : vector<32x256xi1>, vector<32x256xf32>
    %c2_377 = arith.constant 2 : index
    %c0_378 = arith.constant 0 : index
    %c0_379 = arith.constant 0 : index
    %1300 = vector.load %arg7[%c2_377, %c0_378, %c0_379] : memref<3x32x1xf32, #tpu.memory_space<vmem>>, vector<1x32x1xf32>
    %1301 = vector.shape_cast %1300 : vector<1x32x1xf32> to vector<32x1xf32>
    %1302 = vector.broadcast %1301 : vector<32x1xf32> to vector<32x256xf32>
    %1303 = arith.mulf %1299, %1302 : vector<32x256xf32>
    %cst_380 = arith.constant dense<0.000000e+00> : vector<256xf32>
    %1304 = vector.multi_reduction <add>, %1303, %cst_380 [0] : vector<32x256xf32> to vector<256xf32>
    %1305 = vector.shape_cast %1304 : vector<256xf32> to vector<1x256xf32>
    %c2_381 = arith.constant 2 : index
    %c0_382 = arith.constant 0 : index
    %c0_383 = arith.constant 0 : index
    %1306 = vector.load %arg8[%c2_381, %c0_382, %c0_383] : memref<3x1x1xf32, #tpu.memory_space<vmem>>, vector<1x1x1xf32>
    %1307 = vector.shape_cast %1306 : vector<1x1x1xf32> to vector<1x1xf32>
    %1308 = vector.broadcast %1307 : vector<1x1xf32> to vector<1x256xf32>
    %1309 = arith.addf %1305, %1308 : vector<1x256xf32>
    %c0_384 = arith.constant 0 : index
    %c2_385 = arith.constant 2 : index
    %c0_386 = arith.constant 0 : index
    %1310 = vector.load %arg2[%c0_384, %c2_385, %c0_386] : memref<1x3x256xf32, #tpu.memory_space<vmem>>, vector<1x1x256xf32>
    %1311 = vector.shape_cast %1310 : vector<1x1x256xf32> to vector<256xf32>
    %1312 = vector.shape_cast %1309 : vector<1x256xf32> to vector<256xf32>
    %1313 = arith.negf %1312 : vector<256xf32>
    %1314 = math.exp %1313 : vector<256xf32>
    %cst_387 = arith.constant 1.000000e+00 : f32
    %1315 = vector.broadcast %cst_387 : f32 to vector<256xf32>
    %1316 = arith.addf %1315, %1314 : vector<256xf32>
    %1317 = arith.divf %1315, %1316 : vector<256xf32>
    %1318 = arith.mulf %1311, %1317 : vector<256xf32>
    %c0_388 = arith.constant 0 : index
    %c2_389 = arith.constant 2 : index
    %c0_390 = arith.constant 0 : index
    %1319 = vector.load %arg9[%c0_388, %c2_389, %c0_390] : memref<1x3x256xf32, #tpu.memory_space<vmem>>, vector<1x1x256xf32>
    %1320 = vector.shape_cast %1319 : vector<1x1x256xf32> to vector<256xf32>
    %1321 = vector.shape_cast %1318 : vector<256xf32> to vector<1x1x256xf32>
    tpu.vector_store %arg9[%c0_388, %c2_389, %c0_390], %1321 {strides = array<i32>} : memref<1x3x256xf32, #tpu.memory_space<vmem>>, vector<1x1x256xf32>,
    return
  }
  func.func @transform_0(%arg0: i32) -> (i32, i32, i32) {
    %c0_i32 = arith.constant 0 : i32
    %c0_i32_0 = arith.constant 0 : i32
    %c0_i32_1 = arith.constant 0 : i32
    return %arg0, %c0_i32, %c0_i32_0 : i32, i32, i32
  }
  func.func @transform_1(%arg0: i32) -> (i32, i32, i32) {
    %c0_i32 = arith.constant 0 : i32
    %c0_i32_0 = arith.constant 0 : i32
    %c0_i32_1 = arith.constant 0 : i32
    return %arg0, %c0_i32, %c0_i32_0 : i32, i32, i32
  }
  func.func @transform_2(%arg0: i32) -> (i32, i32, i32) {
    %c0_i32 = arith.constant 0 : i32
    %c0_i32_0 = arith.constant 0 : i32
    %c0_i32_1 = arith.constant 0 : i32
    %c0_i32_2 = arith.constant 0 : i32
    return %c0_i32, %c0_i32_0, %c0_i32_1 : i32, i32, i32
  }
  func.func @transform_3(%arg0: i32) -> (i32, i32, i32) {
    %c0_i32 = arith.constant 0 : i32
    %c0_i32_0 = arith.constant 0 : i32
    %c0_i32_1 = arith.constant 0 : i32
    %c0_i32_2 = arith.constant 0 : i32
    return %c0_i32, %c0_i32_0, %c0_i32_1 : i32, i32, i32
  }
  func.func @transform_4(%arg0: i32) -> (i32, i32, i32) {
    %c0_i32 = arith.constant 0 : i32
    %c0_i32_0 = arith.constant 0 : i32
    %c0_i32_1 = arith.constant 0 : i32
    %c0_i32_2 = arith.constant 0 : i32
    return %c0_i32, %c0_i32_0, %c0_i32_1 : i32, i32, i32
  }
  func.func @transform_5(%arg0: i32) -> (i32, i32, i32) {
    %c0_i32 = arith.constant 0 : i32
    %c0_i32_0 = arith.constant 0 : i32
    %c0_i32_1 = arith.constant 0 : i32
    %c0_i32_2 = arith.constant 0 : i32
    return %c0_i32, %c0_i32_0, %c0_i32_1 : i32, i32, i32
  }
  func.func @transform_6(%arg0: i32) -> (i32, i32, i32) {
    %c0_i32 = arith.constant 0 : i32
    %c0_i32_0 = arith.constant 0 : i32
    %c0_i32_1 = arith.constant 0 : i32
    %c0_i32_2 = arith.constant 0 : i32
    return %c0_i32, %c0_i32_0, %c0_i32_1 : i32, i32, i32
  }
  func.func @transform_7(%arg0: i32) -> (i32, i32, i32) {
    %c0_i32 = arith.constant 0 : i32
    %c0_i32_0 = arith.constant 0 : i32
    %c0_i32_1 = arith.constant 0 : i32
    %c0_i32_2 = arith.constant 0 : i32
    return %c0_i32, %c0_i32_0, %c0_i32_1 : i32, i32, i32
  }
  func.func @transform_8(%arg0: i32) -> (i32, i32, i32) {
    %c0_i32 = arith.constant 0 : i32
    %c0_i32_0 = arith.constant 0 : i32
    %c0_i32_1 = arith.constant 0 : i32
    return %arg0, %c0_i32, %c0_i32_0 : i32, i32, i32
  }
}

</mosaic_0001>

<llo_original>
// kernel: target_attention_forward.1
$region0: #{target_attention_forward.1}
  #allocation0 [shape = 'u32[]', space=smem, size = 0x4, offset = 0x4, fixed_abs, tag = 'smem constant byte address 0x4 - core index']
  #allocation1 [shape = 'u32[144,128]{1,0:T(1,128)}', space=vmem, size = 0x12000, scoped, tag = 'internal scratch']
  #allocation2 [shape = 'f32[400,256]{1,0:T(8,128)}', space=vmem, size = 0x64000, scoped, tag = 'scratch operand']
  %s0 = inlined_call_operand.vmem [shape: f32[2,1,256], index: 0, kind: input, shape index: {}]
  %s1 = inlined_call_operand.vmem [shape: f32[2,3,256], index: 1, kind: input, shape index: {}]
  %s2 = inlined_call_operand.vmem [shape: f32[3,16,25], index: 2, kind: input, shape index: {}]
  %s3 = inlined_call_operand.vmem [shape: f32[3,16,1], index: 3, kind: input, shape index: {}]
  %s4 = inlined_call_operand.vmem [shape: f32[3,32,400], index: 4, kind: input, shape index: {}]
  %s5 = inlined_call_operand.vmem [shape: f32[3,32,1], index: 5, kind: input, shape index: {}]
  %s6 = inlined_call_operand.vmem [shape: f32[3,32,1], index: 6, kind: input, shape index: {}]
  %s7 = inlined_call_operand.vmem [shape: f32[3,1,1], index: 7, kind: input, shape index: {}]
  %s8 = inlined_call_operand.vmem [shape: f32[2,3,256], index: 8, kind: output, shape index: {}]
  %s9 = sld [smem:[#allocation0]]
  $region65: #{target_attention_forward.1} parent=0
    _
  %s11 = ssub.s32 1, %s9
  %s12 = scalar_select 0, %s11, %s9
  loop: start=0, step=1, limit=4
  $region2: #{target_attention_forward.1} parent=0 // loop_pre_header
    _
  $region3: #{target_attention_forward.1} parent=0 // loop_header
    %s14 = sphi 0, %s18
    %p15 = scmp.ge.s32.totalorder %s14, 4
    %s24 = sphi 0, %s26
    %s27 = sphi 0, %s24
    %s28 = sphi 0, %s27
    %s44 = sphi 0, %s28
    %s50 = sphi 0, %s52
    %s53 = sphi 0, %s50
    %s54 = sphi 0, %s53
    %s70 = sphi 0, %s54
    %s74 = sphi 0, %s74
    %s76 = sphi 0, %s74
    %s77 = sphi 0, %s76
    %s91 = sphi 0, %s77
    %s95 = sphi 0, %s95
    %s97 = sphi 0, %s95
    %s98 = sphi 0, %s97
    %s112 = sphi 0, %s98
    %s116 = sphi 0, %s116
    %s118 = sphi 0, %s116
    %s119 = sphi 0, %s118
    %s133 = sphi 0, %s119
    %s137 = sphi 0, %s137
    %s139 = sphi 0, %s137
    %s140 = sphi 0, %s139
    %s154 = sphi 0, %s140
    %s158 = sphi 0, %s158
    %s160 = sphi 0, %s158
    %s161 = sphi 0, %s160
    %s175 = sphi 0, %s161
    %s179 = sphi 0, %s179
    %s181 = sphi 0, %s179
    %s182 = sphi 0, %s181
    %s196 = sphi 0, %s182
    %s202 = sphi 0, %s204
    %s205 = sphi 0, %s202
    %s206 = sphi 0, %s205
    %s222 = sphi 0, %s206
  $region4: #{target_attention_forward.1} parent=0 // loop_header_branch
    %17 = sbr.rel (%p15) target = $region8
  $region5: #{target_attention_forward.1} parent=0 // loop_body
    %s19 = ssub.s32 %s14, 1
    %s20 = ssub.s32 %s14, 2
    %s21 = sadd.s32 %s14, 1
    %s22 = ssub.s32 %s14, %s21
    %p23 = scmp.eq.s32.totalorder %s22, 0
    %s25 = sadd.s32 %s24, 1
    %s26 = scalar_select %p23, %s24, %s25
    %p29 = pneg %p23
    %p30 = scmp.eq.s32.totalorder %s14, 1
    %p31 = por %p29, %p30
    %p32 = scmp.ne.s32.totalorder %s24, %s27
    %p33 = scmp.eq.s32.totalorder %s14, 0
    %p34 = por %p32, %p33
    %p35 = scmp.ne.s32.totalorder %s24, %s27
    %p36 = scmp.eq.s32.totalorder %s19, 1
    %p37 = por %p35, %p36
    %p38 = scmp.ne.s32.totalorder %s27, %s28
    %p39 = scmp.eq.s32.totalorder %s19, 0
    %p40 = por %p38, %p39
    %p41 = scmp.ne.s32.totalorder %s27, %s28
    %p42 = scmp.eq.s32.totalorder %s20, 1
    %p43 = por %p41, %p42
    %p45 = scmp.ne.s32.totalorder %s28, %s44
    %p46 = scmp.eq.s32.totalorder %s20, 0
    %p47 = por %p45, %p46
    %s48 = ssub.s32 %s14, %s21
    %p49 = scmp.eq.s32.totalorder %s48, 0
    %s51 = sadd.s32 %s50, 1
    %s52 = scalar_select %p49, %s50, %s51
    %p55 = pneg %p49
    %p56 = scmp.eq.s32.totalorder %s14, 1
    %p57 = por %p55, %p56
    %p58 = scmp.ne.s32.totalorder %s50, %s53
    %p59 = scmp.eq.s32.totalorder %s14, 0
    %p60 = por %p58, %p59
    %p61 = scmp.ne.s32.totalorder %s50, %s53
    %p62 = scmp.eq.s32.totalorder %s19, 1
    %p63 = por %p61, %p62
    %p64 = scmp.ne.s32.totalorder %s53, %s54
    %p65 = scmp.eq.s32.totalorder %s19, 0
    %p66 = por %p64, %p65
    %p67 = scmp.ne.s32.totalorder %s53, %s54
    %p68 = scmp.eq.s32.totalorder %s20, 1
    %p69 = por %p67, %p68
    %p71 = scmp.ne.s32.totalorder %s54, %s70
    %p72 = scmp.eq.s32.totalorder %s20, 0
    %p73 = por %p71, %p72
    %s75 = sadd.s32 %s74, 1
    %p78 = scmp.eq.s32.totalorder %s14, 1
    %p79 = scmp.ne.s32.totalorder %s74, %s76
    %p80 = scmp.eq.s32.totalorder %s14, 0
    %p81 = por %p79, %p80
    %p82 = scmp.ne.s32.totalorder %s74, %s76
    %p83 = scmp.eq.s32.totalorder %s19, 1
    %p84 = por %p82, %p83
    %p85 = scmp.ne.s32.totalorder %s76, %s77
    %p86 = scmp.eq.s32.totalorder %s19, 0
    %p87 = por %p85, %p86
    %p88 = scmp.ne.s32.totalorder %s76, %s77
    %p89 = scmp.eq.s32.totalorder %s20, 1
    %p90 = por %p88, %p89
    %p92 = scmp.ne.s32.totalorder %s77, %s91
    %p93 = scmp.eq.s32.totalorder %s20, 0
    %p94 = por %p92, %p93
    %s96 = sadd.s32 %s95, 1
    %p99 = scmp.eq.s32.totalorder %s14, 1
    %p100 = scmp.ne.s32.totalorder %s95, %s97
    %p101 = scmp.eq.s32.totalorder %s14, 0
    %p102 = por %p100, %p101
    %p103 = scmp.ne.s32.totalorder %s95, %s97
    %p104 = scmp.eq.s32.totalorder %s19, 1
    %p105 = por %p103, %p104
    %p106 = scmp.ne.s32.totalorder %s97, %s98
    %p107 = scmp.eq.s32.totalorder %s19, 0
    %p108 = por %p106, %p107
    %p109 = scmp.ne.s32.totalorder %s97, %s98
    %p110 = scmp.eq.s32.totalorder %s20, 1
    %p111 = por %p109, %p110
    %p113 = scmp.ne.s32.totalorder %s98, %s112
    %p114 = scmp.eq.s32.totalorder %s20, 0
    %p115 = por %p113, %p114
    %s117 = sadd.s32 %s116, 1
    %p120 = scmp.eq.s32.totalorder %s14, 1
    %p121 = scmp.ne.s32.totalorder %s116, %s118
    %p122 = scmp.eq.s32.totalorder %s14, 0
    %p123 = por %p121, %p122
    %p124 = scmp.ne.s32.totalorder %s116, %s118
    %p125 = scmp.eq.s32.totalorder %s19, 1
    %p126 = por %p124, %p125
    %p127 = scmp.ne.s32.totalorder %s118, %s119
    %p128 = scmp.eq.s32.totalorder %s19, 0
    %p129 = por %p127, %p128
    %p130 = scmp.ne.s32.totalorder %s118, %s119
    %p131 = scmp.eq.s32.totalorder %s20, 1
    %p132 = por %p130, %p131
    %p134 = scmp.ne.s32.totalorder %s119, %s133
    %p135 = scmp.eq.s32.totalorder %s20, 0
    %p136 = por %p134, %p135
    %s138 = sadd.s32 %s137, 1
    %p141 = scmp.eq.s32.totalorder %s14, 1
    %p142 = scmp.ne.s32.totalorder %s137, %s139
    %p143 = scmp.eq.s32.totalorder %s14, 0
    %p144 = por %p142, %p143
    %p145 = scmp.ne.s32.totalorder %s137, %s139
    %p146 = scmp.eq.s32.totalorder %s19, 1
    %p147 = por %p145, %p146
    %p148 = scmp.ne.s32.totalorder %s139, %s140
    %p149 = scmp.eq.s32.totalorder %s19, 0
    %p150 = por %p148, %p149
    %p151 = scmp.ne.s32.totalorder %s139, %s140
    %p152 = scmp.eq.s32.totalorder %s20, 1
    %p153 = por %p151, %p152
    %p155 = scmp.ne.s32.totalorder %s140, %s154
    %p156 = scmp.eq.s32.totalorder %s20, 0
    %p157 = por %p155, %p156
    %s159 = sadd.s32 %s158, 1
    %p162 = scmp.eq.s32.totalorder %s14, 1
    %p163 = scmp.ne.s32.totalorder %s158, %s160
    %p164 = scmp.eq.s32.totalorder %s14, 0
    %p165 = por %p163, %p164
    %p166 = scmp.ne.s32.totalorder %s158, %s160
    %p167 = scmp.eq.s32.totalorder %s19, 1
    %p168 = por %p166, %p167
    %p169 = scmp.ne.s32.totalorder %s160, %s161
    %p170 = scmp.eq.s32.totalorder %s19, 0
    %p171 = por %p169, %p170
    %p172 = scmp.ne.s32.totalorder %s160, %s161
    %p173 = scmp.eq.s32.totalorder %s20, 1
    %p174 = por %p172, %p173
    %p176 = scmp.ne.s32.totalorder %s161, %s175
    %p177 = scmp.eq.s32.totalorder %s20, 0
    %p178 = por %p176, %p177
    %s180 = sadd.s32 %s179, 1
    %p183 = scmp.eq.s32.totalorder %s14, 1
    %p184 = scmp.ne.s32.totalorder %s179, %s181
    %p185 = scmp.eq.s32.totalorder %s14, 0
    %p186 = por %p184, %p185
    %p187 = scmp.ne.s32.totalorder %s179, %s181
    %p188 = scmp.eq.s32.totalorder %s19, 1
    %p189 = por %p187, %p188
    %p190 = scmp.ne.s32.totalorder %s181, %s182
    %p191 = scmp.eq.s32.totalorder %s19, 0
    %p192 = por %p190, %p191
    %p193 = scmp.ne.s32.totalorder %s181, %s182
    %p194 = scmp.eq.s32.totalorder %s20, 1
    %p195 = por %p193, %p194
    %p197 = scmp.ne.s32.totalorder %s182, %s196
    %p198 = scmp.eq.s32.totalorder %s20, 0
    %p199 = por %p197, %p198
    %s200 = ssub.s32 %s14, %s21
    %p201 = scmp.eq.s32.totalorder %s200, 0
    %s203 = sadd.s32 %s202, 1
    %s204 = scalar_select %p201, %s202, %s203
    %p207 = pneg %p201
    %p208 = scmp.eq.s32.totalorder %s14, 1
    %p209 = por %p207, %p208
    %p210 = scmp.ne.s32.totalorder %s202, %s205
    %p211 = scmp.eq.s32.totalorder %s14, 0
    %p212 = por %p210, %p211
    %p213 = scmp.ne.s32.totalorder %s202, %s205
    %p214 = scmp.eq.s32.totalorder %s19, 1
    %p215 = por %p213, %p214
    %p216 = scmp.ne.s32.totalorder %s205, %s206
    %p217 = scmp.eq.s32.totalorder %s19, 0
    %p218 = por %p216, %p217
    %p219 = scmp.ne.s32.totalorder %s205, %s206
    %p220 = scmp.eq.s32.totalorder %s20, 1
    %p221 = por %p219, %p220
    %p223 = scmp.ne.s32.totalorder %s206, %s222
    %p224 = scmp.eq.s32.totalorder %s20, 0
    %p225 = por %p223, %p224
    %p226 = scmp.le.s32.totalorder 1, %s14
    %p227 = scmp.lt.s32.totalorder %s14, 3
    %p228 = pnand %p226, %p227
    %p229 = pneg %p228
    // Predicated region
    $region9: #{target_attention_forward.1} parent=5 // pred_check
      _
    $region10: #{target_attention_forward.1} parent=5 // pred_check_branch
      %231 = sbr.rel (%p228) target = $region12
    $region11: #{target_attention_forward.1} parent=5 // pred_region
      %s232 = ssub.s32 %s14, 1
      // Predicated region
      $region13: #{target_attention_forward.1} parent=11 // pred_check
        %p233 = pneg %p87
      $region14: #{target_attention_forward.1} parent=11 // pred_check_branch
        %235 = sbr.rel (%p233) target = $region16
      $region15: #{target_attention_forward.1} parent=11 // pred_region
        _
      $region16: #{target_attention_forward.1} parent=11 // pred_fallthru
        _
      // Predicated region
      $region17: #{target_attention_forward.1} parent=11 // pred_check
        %p236 = pneg %p108
      $region18: #{target_attention_forward.1} parent=11 // pred_check_branch
        %238 = sbr.rel (%p236) target = $region20
      $region19: #{target_attention_forward.1} parent=11 // pred_region
        _
      $region20: #{target_attention_forward.1} parent=11 // pred_fallthru
        _
      // Predicated region
      $region21: #{target_attention_forward.1} parent=11 // pred_check
        %p239 = pneg %p129
      $region22: #{target_attention_forward.1} parent=11 // pred_check_branch
        %241 = sbr.rel (%p239) target = $region24
      $region23: #{target_attention_forward.1} parent=11 // pred_region
        _
      $region24: #{target_attention_forward.1} parent=11 // pred_fallthru
        _
      // Predicated region
      $region25: #{target_attention_forward.1} parent=11 // pred_check
        %p242 = pneg %p150
      $region26: #{target_attention_forward.1} parent=11 // pred_check_branch
        %244 = sbr.rel (%p242) target = $region28
      $region27: #{target_attention_forward.1} parent=11 // pred_region
        _
      $region28: #{target_attention_forward.1} parent=11 // pred_fallthru
        _
      // Predicated region
      $region29: #{target_attention_forward.1} parent=11 // pred_check
        %p245 = pneg %p171
      $region30: #{target_attention_forward.1} parent=11 // pred_check_branch
        %247 = sbr.rel (%p245) target = $region32
      $region31: #{target_attention_forward.1} parent=11 // pred_region
        _
      $region32: #{target_attention_forward.1} parent=11 // pred_fallthru
        _
      // Predicated region
      $region33: #{target_attention_forward.1} parent=11 // pred_check
        %p248 = pneg %p192
      $region34: #{target_attention_forward.1} parent=11 // pred_check_branch
        %250 = sbr.rel (%p248) target = $region36
      $region35: #{target_attention_forward.1} parent=11 // pred_region
        _
      $region36: #{target_attention_forward.1} parent=11 // pred_fallthru
        _
    $region12: #{target_attention_forward.1} parent=5 // pred_fallthru
      _
    %p251 = scmp.lt.s32.totalorder %s14, 2
    // Predicated region
    $region37: #{target_attention_forward.1} parent=5 // pred_check
      %p252 = pneg %p251
    $region38: #{target_attention_forward.1} parent=5 // pred_check_branch
      %254 = sbr.rel (%p252) target = $region40
    $region39: #{target_attention_forward.1} parent=5 // pred_region
      // Predicated region
      $region41: #{target_attention_forward.1} parent=39 // pred_check
        %p255 = pneg %p34
      $region42: #{target_attention_forward.1} parent=39 // pred_check_branch
        %257 = sbr.rel (%p255) target = $region44
      $region43: #{target_attention_forward.1} parent=39 // pred_region
        %p258 = scmp.lt.s32.totalorder %s14, 1
        %s259 = scalar_select %p258, %s14, 1
        %s260 = smul.addr %s259, 2
        %s261 = scalar_lea.vmem %s0, %s260
      $region44: #{target_attention_forward.1} parent=39 // pred_fallthru
        _
      // Predicated region
      $region45: #{target_attention_forward.1} parent=39 // pred_check
        %p262 = pneg %p60
      $region46: #{target_attention_forward.1} parent=39 // pred_check_branch
        %264 = sbr.rel (%p262) target = $region48
      $region47: #{target_attention_forward.1} parent=39 // pred_region
        %p265 = scmp.lt.s32.totalorder %s14, 1
        %s266 = scalar_select %p265, %s14, 1
        %s267 = smul.addr %s266, 2
        %s268 = smul.addr %s267, 4
        %s269 = scalar_lea.vmem %s1, %s268
      $region48: #{target_attention_forward.1} parent=39 // pred_fallthru
        _
    $region40: #{target_attention_forward.1} parent=5 // pred_fallthru
      _
    %p270 = scmp.le.s32.totalorder 1, %s14
    %p271 = scmp.lt.s32.totalorder %s14, 3
    %p272 = pnand %p270, %p271
    %p273 = pneg %p272
    // Predicated region
    $region49: #{target_attention_forward.1} parent=5 // pred_check
      _
    $region50: #{target_attention_forward.1} parent=5 // pred_check_branch
      %275 = sbr.rel (%p272) target = $region52
    $region51: #{target_attention_forward.1} parent=5 // pred_region
      %s276 = ssub.s32 %s14, 1
      %p277 = scmp.lt.s32.totalorder %s19, 1
      %s278 = scalar_select %p277, %s19, 1
      %s279 = smul.addr %s278, 2
      %s280 = scalar_lea.vmem %s0, %s279
      %p281 = pneg %p40
      %p282 = pneg %p37
      %p283 = scmp.lt.s32.totalorder %s19, 1
      %s284 = scalar_select %p283, %s19, 1
      %s285 = smul.addr %s284, 2
      %s286 = smul.addr %s285, 4
      %s287 = scalar_lea.vmem %s1, %s286
      %p288 = pneg %p66
      %p289 = pneg %p63
      %p290 = pneg %p87
      %p291 = pneg %p84
      %p292 = pneg %p108
      %p293 = pneg %p105
      %p294 = pneg %p129
      %p295 = pneg %p126
      %p296 = pneg %p150
      %p297 = pneg %p147
      %p298 = pneg %p171
      %p299 = pneg %p168
      %p300 = pneg %p192
      %p301 = pneg %p189
      %p302 = pneg %p218
      %p303 = pneg %p215
      %p304 = scmp.lt.s32.totalorder %s19, 1
      %s305 = scalar_select %p304, %s19, 1
      %s306 = smul.addr %s305, 2
      %s307 = smul.addr %s306, 4
      %s308 = scalar_lea.vmem %s8, %s307
      %p309 = scmp.lt.s32.totalorder %s19, 1
      %s310 = scalar_select %p309, %s19, 1
      %s311 = smul.addr %s310, 2
      %s312 = scalar_lea.vmem %s0, %s311
      %p313 = scmp.lt.s32.totalorder %s19, 1
      %s314 = scalar_select %p313, %s19, 1
      %s315 = smul.addr %s314, 2
      %s316 = smul.addr %s315, 4
      %s317 = scalar_lea.vmem %s1, %s316
      %p318 = scmp.lt.s32.totalorder %s19, 1
      %s319 = scalar_select %p318, %s19, 1
      %s320 = smul.addr %s319, 2
      %s321 = smul.addr %s320, 4
      %s322 = scalar_lea.vmem %s8, %s321
      %v323 = vlaneseq
      %v324 = vand.u32 %v323, 127
      %v325 = vadd.s32 %v324, 128
      %vm326 = vcmp.lt.s32.totalorder %v324, 0
      %v327 = vsub.s32 0, %v324
      %v328 = vsel %vm326, %v327, %v324
      %v329 = vshrl.u32 %v328, 4
      %v330 = vand.u32 %v328, 15
      %v331 = vsub.s32 0, %v330
      %v332 = vsel %vm326, %v331, %v330
      %vm333 = vcmp.lt.s32.totalorder %v325, 0
      %v334 = vsub.s32 0, %v325
      %v335 = vsel %vm333, %v334, %v325
      %v336 = vshrl.u32 %v335, 4
      %v337 = vand.u32 %v335, 15
      %v338 = vsub.s32 0, %v337
      %v339 = vsel %vm333, %v338, %v337
      %vm340 = vcmp.ne.s32.totalorder %v332, 0
      %vm341 = vcmp.ne.s32.totalorder %v339, 0
      %vm342 = vcmp.lt.s32.totalorder %v332, 0
      %vm343 = vcmp.lt.s32.totalorder %v339, 0
      %vm344 = vmand %vm342, %vm340
      %vm345 = vmand %vm343, %vm341
      %v346 = vadd.s32 %v332, 16
      %v347 = vadd.s32 %v339, 16
      %v348 = vsel %vm344, %v346, %v332
      %v349 = vsel %vm345, %v347, %v339
      %v350 = vadd.s32 %v348, 4294967294
      %v351 = vadd.s32 %v349, 4294967294
      %vm352 = vcmp.ge.s32.totalorder %v350, 0
      %vm353 = vcmp.ge.s32.totalorder %v351, 0
      %vm354 = vcmp.lt.s32.totalorder %v350, 16
      %vm355 = vcmp.lt.s32.totalorder %v351, 16
      %vm356 = vmand %vm352, %vm354
      %vm357 = vmand %vm353, %vm355
      %v358 = vsel %vm356, 1, 0
      %v359 = vsel %vm357, 1, 0
      %v360 = vcvt.s32.f32 %v358
      %v361 = vcvt.s32.f32 %v359
      %v362 = vadd.s32 %v348, 4294967295
      %v363 = vadd.s32 %v349, 4294967295
      %vm364 = vcmp.ge.s32.totalorder %v362, 0
      %vm365 = vcmp.ge.s32.totalorder %v363, 0
      %vm366 = vcmp.lt.s32.totalorder %v362, 16
      %vm367 = vcmp.lt.s32.totalorder %v363, 16
      %vm368 = vmand %vm364, %vm366
      %vm369 = vmand %vm365, %vm367
      %v370 = vsel %vm368, 1, 0
      %v371 = vsel %vm369, 1, 0
      %v372 = vcvt.s32.f32 %v370
      %v373 = vcvt.s32.f32 %v371
      %vm374 = vcmp.ge.s32.totalorder %v348, 0
      %vm375 = vcmp.ge.s32.totalorder %v349, 0
      %vm376 = vcmp.lt.s32.totalorder %v348, 16
      %vm377 = vcmp.lt.s32.totalorder %v349, 16
      %vm378 = vmand %vm374, %vm376
      %vm379 = vmand %vm375, %vm377
      %v380 = vsel %vm378, 1, 0
      %v381 = vsel %vm379, 1, 0
      %v382 = vcvt.s32.f32 %v380
      %v383 = vcvt.s32.f32 %v381
      %v384 = vadd.s32 %v348, 1
      %v385 = vadd.s32 %v349, 1
      %vm386 = vcmp.ge.s32.totalorder %v384, 0
      %vm387 = vcmp.ge.s32.totalorder %v385, 0
      %vm388 = vcmp.lt.s32.totalorder %v384, 16
      %vm389 = vcmp.lt.s32.totalorder %v385, 16
      %vm390 = vmand %vm386, %vm388
      %vm391 = vmand %vm387, %vm389
      %v392 = vsel %vm390, 1, 0
      %v393 = vsel %vm391, 1, 0
      %v394 = vcvt.s32.f32 %v392
      %v395 = vcvt.s32.f32 %v393
      %v396 = vadd.s32 %v348, 2
      %v397 = vadd.s32 %v349, 2
      %vm398 = vcmp.ge.s32.totalorder %v396, 0
      %vm399 = vcmp.ge.s32.totalorder %v397, 0
      %vm400 = vcmp.lt.s32.totalorder %v396, 16
      %vm401 = vcmp.lt.s32.totalorder %v397, 16
      %vm402 = vmand %vm398, %vm400
      %vm403 = vmand %vm399, %vm401
      %v404 = vsel %vm402, 1, 0
      %v405 = vsel %vm403, 1, 0
      %v406 = vcvt.s32.f32 %v404
      %v407 = vcvt.s32.f32 %v405
      %v408 = vld [vmem:[%s312] sm:$0x3]
      %v409 = vld [vmem:[%s2] sm:$0xff]
      %v410 = vld [vmem:[%s2 + $0x8] sm:$0xff]
      %v412 = vlaneseq
      %v413 = vshrl.u32 %v412, 7
      %v414 = vsub.s32 0, %v413
      %v415 = vrot.slane %v408, %v414
      %v416 = vlaneseq
      %v417 = vshrl.u32 %v416, 7
      %v418 = vsub.s32 1, %v417
      %v419 = vrot.slane %v408, %v418
      %420 = vrot.lane.b32.xlu0 %v415, 34
      %v421 = vpop.permute.xlu0 %420
      %422 = vrot.lane.b32.xlu0 %v419, 34
      %v423 = vpop.permute.xlu0 %422
      %vm424 = vcmask 277504
      %v425 = vsel %vm424, %v421, %v423
      %v428 = vsel %vm424, 0.0, %v421
      %v429 = vmul.f32 %v428, %v360
      %v430 = vmul.f32 %v425, %v361
      %432 = vset.pattern.permute.xlu0 0
      %433 = vperm.xlu0 %432, %v409
      %v434 = vpop.permute.xlu0 %433
      %437 = vset.pattern.permute.xlu0 0
      %438 = vperm.xlu0 %437, %v410
      %v439 = vpop.permute.xlu0 %438
      %v441 = vlaneseq
      %v442 = vshrl.u32 %v441, 7
      %v443 = vsub.s32 0, %v442
      %v444 = vrot.slane %v429, %v443
      %v445 = vlaneseq
      %v446 = vshrl.u32 %v445, 7
      %v447 = vsub.s32 0, %v446
      %v448 = vrot.slane %v430, %v447
      %v449 = vmul.f32 %v434, %v444
      %v450 = vmul.f32 %v434, %v448
      %v451 = vmul.f32 %v439, %v444
      %v452 = vmul.f32 %v439, %v448
      %v453 = vadd.f32 %v449, 0.0
      %v454 = vadd.f32 %v450, 0.0
      %v455 = vadd.f32 %v451, 0.0
      %v456 = vadd.f32 %v452, 0.0
      %457 = vrot.lane.b32.xlu0 %v415, 33
      %v458 = vpop.permute.xlu0 %457
      %459 = vrot.lane.b32.xlu0 %v419, 33
      %v460 = vpop.permute.xlu0 %459
      %vm461 = vcmask 269312
      %v462 = vsel %vm461, %v458, %v460
      %v465 = vsel %vm461, 0.0, %v458
      %v466 = vmul.f32 %v465, %v372
      %v467 = vmul.f32 %v462, %v373
      %468 = vset.pattern.permute.xlu0 1
      %469 = vperm.xlu0 %468, %v409
      %v470 = vpop.permute.xlu0 %469
      %472 = vset.pattern.permute.xlu0 1
      %473 = vperm.xlu0 %472, %v410
      %v474 = vpop.permute.xlu0 %473
      %v476 = vlaneseq
      %v477 = vshrl.u32 %v476, 7
      %v478 = vsub.s32 0, %v477
      %v479 = vrot.slane %v466, %v478
      %v480 = vlaneseq
      %v481 = vshrl.u32 %v480, 7
      %v482 = vsub.s32 0, %v481
      %v483 = vrot.slane %v467, %v482
      %v484 = vmul.f32 %v470, %v479
      %v485 = vmul.f32 %v470, %v483
      %v486 = vmul.f32 %v474, %v479
      %v487 = vmul.f32 %v474, %v483
      %v488 = vadd.f32 %v453, %v484
      %v489 = vadd.f32 %v454, %v485
      %v490 = vadd.f32 %v455, %v486
      %v491 = vadd.f32 %v456, %v487
      %492 = vrot.lane.b32.xlu0 %v415, 32
      %v493 = vpop.permute.xlu0 %492
      %494 = vrot.lane.b32.xlu0 %v419, 32
      %v495 = vpop.permute.xlu0 %494
      %vm496 = vcmask 261120
      %v497 = vsel %vm496, %v493, %v495
      %v500 = vsel %vm496, 0.0, %v493
      %v501 = vmul.f32 %v500, %v382
      %v502 = vmul.f32 %v497, %v383
      %503 = vset.pattern.permute.xlu0 2
      %504 = vperm.xlu0 %503, %v409
      %v505 = vpop.permute.xlu0 %504
      %507 = vset.pattern.permute.xlu0 2
      %508 = vperm.xlu0 %507, %v410
      %v509 = vpop.permute.xlu0 %508
      %v511 = vlaneseq
      %v512 = vshrl.u32 %v511, 7
      %v513 = vsub.s32 0, %v512
      %v514 = vrot.slane %v501, %v513
      %v515 = vlaneseq
      %v516 = vshrl.u32 %v515, 7
      %v517 = vsub.s32 0, %v516
      %v518 = vrot.slane %v502, %v517
      %v519 = vmul.f32 %v505, %v514
      %v520 = vmul.f32 %v505, %v518
      %v521 = vmul.f32 %v509, %v514
      %v522 = vmul.f32 %v509, %v518
      %v523 = vadd.f32 %v488, %v519
      %v524 = vadd.f32 %v489, %v520
      %v525 = vadd.f32 %v490, %v521
      %v526 = vadd.f32 %v491, %v522
      %527 = vrot.lane.b32.xlu0 %v415, 31
      %v528 = vpop.permute.xlu0 %527
      %529 = vrot.lane.b32.xlu0 %v419, 31
      %v530 = vpop.permute.xlu0 %529
      %vm531 = vcmask 252928
      %v532 = vsel %vm531, %v528, %v530
      %v535 = vsel %vm531, 0.0, %v528
      %v536 = vmul.f32 %v535, %v394
      %v537 = vmul.f32 %v532, %v395
      %538 = vset.pattern.permute.xlu0 3
      %539 = vperm.xlu0 %538, %v409
      %v540 = vpop.permute.xlu0 %539
      %542 = vset.pattern.permute.xlu0 3
      %543 = vperm.xlu0 %542, %v410
      %v544 = vpop.permute.xlu0 %543
      %v546 = vlaneseq
      %v547 = vshrl.u32 %v546, 7
      %v548 = vsub.s32 0, %v547
      %v549 = vrot.slane %v536, %v548
      %v550 = vlaneseq
      %v551 = vshrl.u32 %v550, 7
      %v552 = vsub.s32 0, %v551
      %v553 = vrot.slane %v537, %v552
      %v554 = vmul.f32 %v540, %v549
      %v555 = vmul.f32 %v540, %v553
      %v556 = vmul.f32 %v544, %v549
      %v557 = vmul.f32 %v544, %v553
      %v558 = vadd.f32 %v523, %v554
      %v559 = vadd.f32 %v524, %v555
      %v560 = vadd.f32 %v525, %v556
      %v561 = vadd.f32 %v526, %v557
      %562 = vrot.lane.b32.xlu0 %v415, 30
      %v563 = vpop.permute.xlu0 %562
      %564 = vrot.lane.b32.xlu0 %v419, 30
      %v565 = vpop.permute.xlu0 %564
      %vm566 = vcmask 244736
      %v567 = vsel %vm566, %v563, %v565
      %v570 = vsel %vm566, 0.0, %v563
      %v571 = vmul.f32 %v570, %v406
      %v572 = vmul.f32 %v567, %v407
      %573 = vset.pattern.permute.xlu0 4
      %574 = vperm.xlu0 %573, %v409
      %v575 = vpop.permute.xlu0 %574
      %577 = vset.pattern.permute.xlu0 4
      %578 = vperm.xlu0 %577, %v410
      %v579 = vpop.permute.xlu0 %578
      %v581 = vlaneseq
      %v582 = vshrl.u32 %v581, 7
      %v583 = vsub.s32 0, %v582
      %v584 = vrot.slane %v571, %v583
      %v585 = vlaneseq
      %v586 = vshrl.u32 %v585, 7
      %v587 = vsub.s32 0, %v586
      %v588 = vrot.slane %v572, %v587
      %v589 = vmul.f32 %v575, %v584
      %v590 = vmul.f32 %v575, %v588
      %v591 = vmul.f32 %v579, %v584
      %v592 = vmul.f32 %v579, %v588
      %v593 = vadd.f32 %v558, %v589
      %v594 = vadd.f32 %v559, %v590
      %v595 = vadd.f32 %v560, %v591
      %v596 = vadd.f32 %v561, %v592
      %597 = vrot.lane.b32.xlu0 %v415, 18
      %v598 = vpop.permute.xlu0 %597
      %599 = vrot.lane.b32.xlu0 %v419, 18
      %v600 = vpop.permute.xlu0 %599
      %vm601 = vcmask 146432
      %v602 = vsel %vm601, %v598, %v600
      %v605 = vsel %vm601, 0.0, %v598
      %v606 = vmul.f32 %v605, %v360
      %v607 = vmul.f32 %v602, %v361
      %608 = vset.pattern.permute.xlu0 5
      %609 = vperm.xlu0 %608, %v409
      %v610 = vpop.permute.xlu0 %609
      %612 = vset.pattern.permute.xlu0 5
      %613 = vperm.xlu0 %612, %v410
      %v614 = vpop.permute.xlu0 %613
      %v616 = vlaneseq
      %v617 = vshrl.u32 %v616, 7
      %v618 = vsub.s32 0, %v617
      %v619 = vrot.slane %v606, %v618
      %v620 = vlaneseq
      %v621 = vshrl.u32 %v620, 7
      %v622 = vsub.s32 0, %v621
      %v623 = vrot.slane %v607, %v622
      %v624 = vmul.f32 %v610, %v619
      %v625 = vmul.f32 %v610, %v623
      %v626 = vmul.f32 %v614, %v619
      %v627 = vmul.f32 %v614, %v623
      %v628 = vadd.f32 %v593, %v624
      %v629 = vadd.f32 %v594, %v625
      %v630 = vadd.f32 %v595, %v626
      %v631 = vadd.f32 %v596, %v627
      %632 = vrot.lane.b32.xlu0 %v415, 17
      %v633 = vpop.permute.xlu0 %632
      %634 = vrot.lane.b32.xlu0 %v419, 17
      %v635 = vpop.permute.xlu0 %634
      %vm636 = vcmask 138240
      %v637 = vsel %vm636, %v633, %v635
      %v640 = vsel %vm636, 0.0, %v633
      %v641 = vmul.f32 %v640, %v372
      %v642 = vmul.f32 %v637, %v373
      %643 = vset.pattern.permute.xlu0 6
      %644 = vperm.xlu0 %643, %v409
      %v645 = vpop.permute.xlu0 %644
      %647 = vset.pattern.permute.xlu0 6
      %648 = vperm.xlu0 %647, %v410
      %v649 = vpop.permute.xlu0 %648
      %v651 = vlaneseq
      %v652 = vshrl.u32 %v651, 7
      %v653 = vsub.s32 0, %v652
      %v654 = vrot.slane %v641, %v653
      %v655 = vlaneseq
      %v656 = vshrl.u32 %v655, 7
      %v657 = vsub.s32 0, %v656
      %v658 = vrot.slane %v642, %v657
      %v659 = vmul.f32 %v645, %v654
      %v660 = vmul.f32 %v645, %v658
      %v661 = vmul.f32 %v649, %v654
      %v662 = vmul.f32 %v649, %v658
      %v663 = vadd.f32 %v628, %v659
      %v664 = vadd.f32 %v629, %v660
      %v665 = vadd.f32 %v630, %v661
      %v666 = vadd.f32 %v631, %v662
      %667 = vrot.lane.b32.xlu0 %v415, 16
      %v668 = vpop.permute.xlu0 %667
      %669 = vrot.lane.b32.xlu0 %v419, 16
      %v670 = vpop.permute.xlu0 %669
      %vm671 = vcmask 130048
      %v672 = vsel %vm671, %v668, %v670
      %v675 = vsel %vm671, 0.0, %v668
      %v676 = vmul.f32 %v675, %v382
      %v677 = vmul.f32 %v672, %v383
      %678 = vset.pattern.permute.xlu0 7
      %679 = vperm.xlu0 %678, %v409
      %v680 = vpop.permute.xlu0 %679
      %682 = vset.pattern.permute.xlu0 7
      %683 = vperm.xlu0 %682, %v410
      %v684 = vpop.permute.xlu0 %683
      %v686 = vlaneseq
      %v687 = vshrl.u32 %v686, 7
      %v688 = vsub.s32 0, %v687
      %v689 = vrot.slane %v676, %v688
      %v690 = vlaneseq
      %v691 = vshrl.u32 %v690, 7
      %v692 = vsub.s32 0, %v691
      %v693 = vrot.slane %v677, %v692
      %v694 = vmul.f32 %v680, %v689
      %v695 = vmul.f32 %v680, %v693
      %v696 = vmul.f32 %v684, %v689
      %v697 = vmul.f32 %v684, %v693
      %v698 = vadd.f32 %v663, %v694
      %v699 = vadd.f32 %v664, %v695
      %v700 = vadd.f32 %v665, %v696
      %v701 = vadd.f32 %v666, %v697
      %702 = vrot.lane.b32.xlu0 %v415, 15
      %v703 = vpop.permute.xlu0 %702
      %704 = vrot.lane.b32.xlu0 %v419, 15
      %v705 = vpop.permute.xlu0 %704
      %vm706 = vcmask 121856
      %v707 = vsel %vm706, %v703, %v705
      %v710 = vsel %vm706, 0.0, %v703
      %v711 = vmul.f32 %v710, %v394
      %v712 = vmul.f32 %v707, %v395
      %713 = vset.pattern.permute.xlu0 8
      %714 = vperm.xlu0 %713, %v409
      %v715 = vpop.permute.xlu0 %714
      %717 = vset.pattern.permute.xlu0 8
      %718 = vperm.xlu0 %717, %v410
      %v719 = vpop.permute.xlu0 %718
      %v721 = vlaneseq
      %v722 = vshrl.u32 %v721, 7
      %v723 = vsub.s32 0, %v722
      %v724 = vrot.slane %v711, %v723
      %v725 = vlaneseq
      %v726 = vshrl.u32 %v725, 7
      %v727 = vsub.s32 0, %v726
      %v728 = vrot.slane %v712, %v727
      %v729 = vmul.f32 %v715, %v724
      %v730 = vmul.f32 %v715, %v728
      %v731 = vmul.f32 %v719, %v724
      %v732 = vmul.f32 %v719, %v728
      %v733 = vadd.f32 %v698, %v729
      %v734 = vadd.f32 %v699, %v730
      %v735 = vadd.f32 %v700, %v731
      %v736 = vadd.f32 %v701, %v732
      %737 = vrot.lane.b32.xlu0 %v415, 14
      %v738 = vpop.permute.xlu0 %737
      %739 = vrot.lane.b32.xlu0 %v419, 14
      %v740 = vpop.permute.xlu0 %739
      %vm741 = vcmask 113664
      %v742 = vsel %vm741, %v738, %v740
      %v745 = vsel %vm741, 0.0, %v738
      %v746 = vmul.f32 %v745, %v406
      %v747 = vmul.f32 %v742, %v407
      %748 = vset.pattern.permute.xlu0 9
      %749 = vperm.xlu0 %748, %v409
      %v750 = vpop.permute.xlu0 %749
      %752 = vset.pattern.permute.xlu0 9
      %753 = vperm.xlu0 %752, %v410
      %v754 = vpop.permute.xlu0 %753
      %v756 = vlaneseq
      %v757 = vshrl.u32 %v756, 7
      %v758 = vsub.s32 0, %v757
      %v759 = vrot.slane %v746, %v758
      %v760 = vlaneseq
      %v761 = vshrl.u32 %v760, 7
      %v762 = vsub.s32 0, %v761
      %v763 = vrot.slane %v747, %v762
      %v764 = vmul.f32 %v750, %v759
      %v765 = vmul.f32 %v750, %v763
      %v766 = vmul.f32 %v754, %v759
      %v767 = vmul.f32 %v754, %v763
      %v768 = vadd.f32 %v733, %v764
      %v769 = vadd.f32 %v734, %v765
      %v770 = vadd.f32 %v735, %v766
      %v771 = vadd.f32 %v736, %v767
      %772 = vrot.lane.b32.xlu0 %v415, 2
      %v773 = vpop.permute.xlu0 %772
      %774 = vrot.lane.b32.xlu0 %v419, 2
      %v775 = vpop.permute.xlu0 %774
      %vm776 = vcmask 15360
      %v777 = vsel %vm776, %v773, %v775
      %v780 = vsel %vm776, 0.0, %v773
      %v781 = vmul.f32 %v780, %v360
      %v782 = vmul.f32 %v777, %v361
      %783 = vset.pattern.permute.xlu0 10
      %784 = vperm.xlu0 %783, %v409
      %v785 = vpop.permute.xlu0 %784
      %787 = vset.pattern.permute.xlu0 10
      %788 = vperm.xlu0 %787, %v410
      %v789 = vpop.permute.xlu0 %788
      %v791 = vlaneseq
      %v792 = vshrl.u32 %v791, 7
      %v793 = vsub.s32 0, %v792
      %v794 = vrot.slane %v781, %v793
      %v795 = vlaneseq
      %v796 = vshrl.u32 %v795, 7
      %v797 = vsub.s32 0, %v796
      %v798 = vrot.slane %v782, %v797
      %v799 = vmul.f32 %v785, %v794
      %v800 = vmul.f32 %v785, %v798
      %v801 = vmul.f32 %v789, %v794
      %v802 = vmul.f32 %v789, %v798
      %v803 = vadd.f32 %v768, %v799
      %v804 = vadd.f32 %v769, %v800
      %v805 = vadd.f32 %v770, %v801
      %v806 = vadd.f32 %v771, %v802
      %807 = vrot.lane.b32.xlu0 %v415, 1
      %v808 = vpop.permute.xlu0 %807
      %809 = vrot.lane.b32.xlu0 %v419, 1
      %v810 = vpop.permute.xlu0 %809
      %vm811 = vcmask 7168
      %v812 = vsel %vm811, %v808, %v810
      %v815 = vsel %vm811, 0.0, %v808
      %v816 = vmul.f32 %v815, %v372
      %v817 = vmul.f32 %v812, %v373
      %818 = vset.pattern.permute.xlu0 11
      %819 = vperm.xlu0 %818, %v409
      %v820 = vpop.permute.xlu0 %819
      %822 = vset.pattern.permute.xlu0 11
      %823 = vperm.xlu0 %822, %v410
      %v824 = vpop.permute.xlu0 %823
      %v826 = vlaneseq
      %v827 = vshrl.u32 %v826, 7
      %v828 = vsub.s32 0, %v827
      %v829 = vrot.slane %v816, %v828
      %v830 = vlaneseq
      %v831 = vshrl.u32 %v830, 7
      %v832 = vsub.s32 0, %v831
      %v833 = vrot.slane %v817, %v832
      %v834 = vmul.f32 %v820, %v829
      %v835 = vmul.f32 %v820, %v833
      %v836 = vmul.f32 %v824, %v829
      %v837 = vmul.f32 %v824, %v833
      %v838 = vadd.f32 %v803, %v834
      %v839 = vadd.f32 %v804, %v835
      %v840 = vadd.f32 %v805, %v836
      %v841 = vadd.f32 %v806, %v837
      %v844 = vcombine.low %v382, %v383
      %v846 = vunpack.c.l.s4 1966171168
      %v847 = vunpack.c.0.s8 %v846
      %v848 = vlaneseq
      %v849 = vshrl.u32 %v848, 7
      %v850 = vsub.s32 %v847, %v849
      %v851 = vrot.slane %v844, %v850
      %v853 = vunpack.c.l.s4 1966171168
      %v854 = vunpack.c.0.s8 %v853
      %v855 = vlaneseq
      %v856 = vshrl.u32 %v855, 7
      %v857 = vsub.s32 %v854, %v856
      %v858 = vrot.slane %v851, %v857
      %v860 = vmul.f32 %v408, %v858
      %861 = vset.pattern.permute.xlu0 12
      %862 = vperm.xlu0 %861, %v409
      %v863 = vpop.permute.xlu0 %862
      %865 = vset.pattern.permute.xlu0 12
      %866 = vperm.xlu0 %865, %v410
      %v867 = vpop.permute.xlu0 %866
      %v870 = vlaneseq
      %v871 = vshrl.u32 %v870, 7
      %v872 = vsub.s32 0, %v871
      %v873 = vrot.slane %v860, %v872
      %v874 = vlaneseq
      %v875 = vshrl.u32 %v874, 7
      %v876 = vsub.s32 1, %v875
      %v877 = vrot.slane %v860, %v876
      %v880 = vmul.f32 %v863, %v873
      %v881 = vmul.f32 %v863, %v877
      %v882 = vmul.f32 %v867, %v873
      %v883 = vmul.f32 %v867, %v877
      %v884 = vadd.f32 %v838, %v880
      %v885 = vadd.f32 %v839, %v881
      %v886 = vadd.f32 %v840, %v882
      %v887 = vadd.f32 %v841, %v883
      %888 = vrot.lane.b32.xlu0 %v415, 127
      %v889 = vpop.permute.xlu0 %888
      %890 = vrot.lane.b32.xlu0 %v419, 127
      %v891 = vpop.permute.xlu0 %890
      %vm892 = vcmask 1039360
      %v893 = vsel %vm892, %v889, %v891
      %v896 = vsel %vm892, %v891, 0.0
      %v897 = vmul.f32 %v893, %v394
      %v898 = vmul.f32 %v896, %v395
      %899 = vset.pattern.permute.xlu0 13
      %900 = vperm.xlu0 %899, %v409
      %v901 = vpop.permute.xlu0 %900
      %903 = vset.pattern.permute.xlu0 13
      %904 = vperm.xlu0 %903, %v410
      %v905 = vpop.permute.xlu0 %904
      %v907 = vlaneseq
      %v908 = vshrl.u32 %v907, 7
      %v909 = vsub.s32 0, %v908
      %v910 = vrot.slane %v897, %v909
      %v911 = vlaneseq
      %v912 = vshrl.u32 %v911, 7
      %v913 = vsub.s32 0, %v912
      %v914 = vrot.slane %v898, %v913
      %v915 = vmul.f32 %v901, %v910
      %v916 = vmul.f32 %v901, %v914
      %v917 = vmul.f32 %v905, %v910
      %v918 = vmul.f32 %v905, %v914
      %v919 = vadd.f32 %v884, %v915
      %v920 = vadd.f32 %v885, %v916
      %v921 = vadd.f32 %v886, %v917
      %v922 = vadd.f32 %v887, %v918
      %923 = vrot.lane.b32.xlu0 %v415, 126
      %v924 = vpop.permute.xlu0 %923
      %925 = vrot.lane.b32.xlu0 %v419, 126
      %v926 = vpop.permute.xlu0 %925
      %vm927 = vcmask 1031168
      %v928 = vsel %vm927, %v924, %v926
      %v931 = vsel %vm927, %v926, 0.0
      %v932 = vmul.f32 %v928, %v406
      %v933 = vmul.f32 %v931, %v407
      %934 = vset.pattern.permute.xlu0 14
      %935 = vperm.xlu0 %934, %v409
      %v936 = vpop.permute.xlu0 %935
      %938 = vset.pattern.permute.xlu0 14
      %939 = vperm.xlu0 %938, %v410
      %v940 = vpop.permute.xlu0 %939
      %v942 = vlaneseq
      %v943 = vshrl.u32 %v942, 7
      %v944 = vsub.s32 0, %v943
      %v945 = vrot.slane %v932, %v944
      %v946 = vlaneseq
      %v947 = vshrl.u32 %v946, 7
      %v948 = vsub.s32 0, %v947
      %v949 = vrot.slane %v933, %v948
      %v950 = vmul.f32 %v936, %v945
      %v951 = vmul.f32 %v936, %v949
      %v952 = vmul.f32 %v940, %v945
      %v953 = vmul.f32 %v940, %v949
      %v954 = vadd.f32 %v919, %v950
      %v955 = vadd.f32 %v920, %v951
      %v956 = vadd.f32 %v921, %v952
      %v957 = vadd.f32 %v922, %v953
      %958 = vrot.lane.b32.xlu0 %v415, 114
      %v959 = vpop.permute.xlu0 %958
      %960 = vrot.lane.b32.xlu0 %v419, 114
      %v961 = vpop.permute.xlu0 %960
      %vm962 = vcmask 932864
      %v963 = vsel %vm962, %v959, %v961
      %v966 = vsel %vm962, %v961, 0.0
      %v967 = vmul.f32 %v963, %v360
      %v968 = vmul.f32 %v966, %v361
      %969 = vset.pattern.permute.xlu0 15
      %970 = vperm.xlu0 %969, %v409
      %v971 = vpop.permute.xlu0 %970
      %973 = vset.pattern.permute.xlu0 15
      %974 = vperm.xlu0 %973, %v410
      %v975 = vpop.permute.xlu0 %974
      %v977 = vlaneseq
      %v978 = vshrl.u32 %v977, 7
      %v979 = vsub.s32 0, %v978
      %v980 = vrot.slane %v967, %v979
      %v981 = vlaneseq
      %v982 = vshrl.u32 %v981, 7
      %v983 = vsub.s32 0, %v982
      %v984 = vrot.slane %v968, %v983
      %v985 = vmul.f32 %v971, %v980
      %v986 = vmul.f32 %v971, %v984
      %v987 = vmul.f32 %v975, %v980
      %v988 = vmul.f32 %v975, %v984
      %v989 = vadd.f32 %v954, %v985
      %v990 = vadd.f32 %v955, %v986
      %v991 = vadd.f32 %v956, %v987
      %v992 = vadd.f32 %v957, %v988
      %993 = vrot.lane.b32.xlu0 %v415, 113
      %v994 = vpop.permute.xlu0 %993
      %995 = vrot.lane.b32.xlu0 %v419, 113
      %v996 = vpop.permute.xlu0 %995
      %vm997 = vcmask 924672
      %v998 = vsel %vm997, %v994, %v996
      %v1001 = vsel %vm997, %v996, 0.0
      %v1002 = vmul.f32 %v998, %v372
      %v1003 = vmul.f32 %v1001, %v373
      %1004 = vset.pattern.permute.xlu0 16
      %1005 = vperm.xlu0 %1004, %v409
      %v1006 = vpop.permute.xlu0 %1005
      %1008 = vset.pattern.permute.xlu0 16
      %1009 = vperm.xlu0 %1008, %v410
      %v1010 = vpop.permute.xlu0 %1009
      %v1012 = vlaneseq
      %v1013 = vshrl.u32 %v1012, 7
      %v1014 = vsub.s32 0, %v1013
      %v1015 = vrot.slane %v1002, %v1014
      %v1016 = vlaneseq
      %v1017 = vshrl.u32 %v1016, 7
      %v1018 = vsub.s32 0, %v1017
      %v1019 = vrot.slane %v1003, %v1018
      %v1020 = vmul.f32 %v1006, %v1015
      %v1021 = vmul.f32 %v1006, %v1019
      %v1022 = vmul.f32 %v1010, %v1015
      %v1023 = vmul.f32 %v1010, %v1019
      %v1024 = vadd.f32 %v989, %v1020
      %v1025 = vadd.f32 %v990, %v1021
      %v1026 = vadd.f32 %v991, %v1022
      %v1027 = vadd.f32 %v992, %v1023
      %1028 = vrot.lane.b32.xlu0 %v415, 112
      %v1029 = vpop.permute.xlu0 %1028
      %1030 = vrot.lane.b32.xlu0 %v419, 112
      %v1031 = vpop.permute.xlu0 %1030
      %vm1032 = vcmask 916480
      %v1033 = vsel %vm1032, %v1029, %v1031
      %v1036 = vsel %vm1032, %v1031, 0.0
      %v1037 = vmul.f32 %v1033, %v382
      %v1038 = vmul.f32 %v1036, %v383
      %1039 = vset.pattern.permute.xlu0 17
      %1040 = vperm.xlu0 %1039, %v409
      %v1041 = vpop.permute.xlu0 %1040
      %1043 = vset.pattern.permute.xlu0 17
      %1044 = vperm.xlu0 %1043, %v410
      %v1045 = vpop.permute.xlu0 %1044
      %v1047 = vlaneseq
      %v1048 = vshrl.u32 %v1047, 7
      %v1049 = vsub.s32 0, %v1048
      %v1050 = vrot.slane %v1037, %v1049
      %v1051 = vlaneseq
      %v1052 = vshrl.u32 %v1051, 7
      %v1053 = vsub.s32 0, %v1052
      %v1054 = vrot.slane %v1038, %v1053
      %v1055 = vmul.f32 %v1041, %v1050
      %v1056 = vmul.f32 %v1041, %v1054
      %v1057 = vmul.f32 %v1045, %v1050
      %v1058 = vmul.f32 %v1045, %v1054
      %v1059 = vadd.f32 %v1024, %v1055
      %v1060 = vadd.f32 %v1025, %v1056
      %v1061 = vadd.f32 %v1026, %v1057
      %v1062 = vadd.f32 %v1027, %v1058
      %1063 = vrot.lane.b32.xlu0 %v415, 111
      %v1064 = vpop.permute.xlu0 %1063
      %1065 = vrot.lane.b32.xlu0 %v419, 111
      %v1066 = vpop.permute.xlu0 %1065
      %vm1067 = vcmask 908288
      %v1068 = vsel %vm1067, %v1064, %v1066
      %v1071 = vsel %vm1067, %v1066, 0.0
      %v1072 = vmul.f32 %v1068, %v394
      %v1073 = vmul.f32 %v1071, %v395
      %1074 = vset.pattern.permute.xlu0 18
      %1075 = vperm.xlu0 %1074, %v409
      %v1076 = vpop.permute.xlu0 %1075
      %1078 = vset.pattern.permute.xlu0 18
      %1079 = vperm.xlu0 %1078, %v410
      %v1080 = vpop.permute.xlu0 %1079
      %v1082 = vlaneseq
      %v1083 = vshrl.u32 %v1082, 7
      %v1084 = vsub.s32 0, %v1083
      %v1085 = vrot.slane %v1072, %v1084
      %v1086 = vlaneseq
      %v1087 = vshrl.u32 %v1086, 7
      %v1088 = vsub.s32 0, %v1087
      %v1089 = vrot.slane %v1073, %v1088
      %v1090 = vmul.f32 %v1076, %v1085
      %v1091 = vmul.f32 %v1076, %v1089
      %v1092 = vmul.f32 %v1080, %v1085
      %v1093 = vmul.f32 %v1080, %v1089
      %v1094 = vadd.f32 %v1059, %v1090
      %v1095 = vadd.f32 %v1060, %v1091
      %v1096 = vadd.f32 %v1061, %v1092
      %v1097 = vadd.f32 %v1062, %v1093
      %1098 = vrot.lane.b32.xlu0 %v415, 110
      %v1099 = vpop.permute.xlu0 %1098
      %1100 = vrot.lane.b32.xlu0 %v419, 110
      %v1101 = vpop.permute.xlu0 %1100
      %vm1102 = vcmask 900096
      %v1103 = vsel %vm1102, %v1099, %v1101
      %v1106 = vsel %vm1102, %v1101, 0.0
      %v1107 = vmul.f32 %v1103, %v406
      %v1108 = vmul.f32 %v1106, %v407
      %1109 = vset.pattern.permute.xlu0 19
      %1110 = vperm.xlu0 %1109, %v409
      %v1111 = vpop.permute.xlu0 %1110
      %1113 = vset.pattern.permute.xlu0 19
      %1114 = vperm.xlu0 %1113, %v410
      %v1115 = vpop.permute.xlu0 %1114
      %v1117 = vlaneseq
      %v1118 = vshrl.u32 %v1117, 7
      %v1119 = vsub.s32 0, %v1118
      %v1120 = vrot.slane %v1107, %v1119
      %v1121 = vlaneseq
      %v1122 = vshrl.u32 %v1121, 7
      %v1123 = vsub.s32 0, %v1122
      %v1124 = vrot.slane %v1108, %v1123
      %v1125 = vmul.f32 %v1111, %v1120
      %v1126 = vmul.f32 %v1111, %v1124
      %v1127 = vmul.f32 %v1115, %v1120
      %v1128 = vmul.f32 %v1115, %v1124
      %v1129 = vadd.f32 %v1094, %v1125
      %v1130 = vadd.f32 %v1095, %v1126
      %v1131 = vadd.f32 %v1096, %v1127
      %v1132 = vadd.f32 %v1097, %v1128
      %1133 = vrot.lane.b32.xlu0 %v415, 98
      %v1134 = vpop.permute.xlu0 %1133
      %1135 = vrot.lane.b32.xlu0 %v419, 98
      %v1136 = vpop.permute.xlu0 %1135
      %vm1137 = vcmask 801792
      %v1138 = vsel %vm1137, %v1134, %v1136
      %v1141 = vsel %vm1137, %v1136, 0.0
      %v1142 = vmul.f32 %v1138, %v360
      %v1143 = vmul.f32 %v1141, %v361
      %1144 = vset.pattern.permute.xlu0 20
      %1145 = vperm.xlu0 %1144, %v409
      %v1146 = vpop.permute.xlu0 %1145
      %1148 = vset.pattern.permute.xlu0 20
      %1149 = vperm.xlu0 %1148, %v410
      %v1150 = vpop.permute.xlu0 %1149
      %v1152 = vlaneseq
      %v1153 = vshrl.u32 %v1152, 7
      %v1154 = vsub.s32 0, %v1153
      %v1155 = vrot.slane %v1142, %v1154
      %v1156 = vlaneseq
      %v1157 = vshrl.u32 %v1156, 7
      %v1158 = vsub.s32 0, %v1157
      %v1159 = vrot.slane %v1143, %v1158
      %v1160 = vmul.f32 %v1146, %v1155
      %v1161 = vmul.f32 %v1146, %v1159
      %v1162 = vmul.f32 %v1150, %v1155
      %v1163 = vmul.f32 %v1150, %v1159
      %v1164 = vadd.f32 %v1129, %v1160
      %v1165 = vadd.f32 %v1130, %v1161
      %v1166 = vadd.f32 %v1131, %v1162
      %v1167 = vadd.f32 %v1132, %v1163
      %1168 = vrot.lane.b32.xlu0 %v415, 97
      %v1169 = vpop.permute.xlu0 %1168
      %1170 = vrot.lane.b32.xlu0 %v419, 97
      %v1171 = vpop.permute.xlu0 %1170
      %vm1172 = vcmask 793600
      %v1173 = vsel %vm1172, %v1169, %v1171
      %v1176 = vsel %vm1172, %v1171, 0.0
      %v1177 = vmul.f32 %v1173, %v372
      %v1178 = vmul.f32 %v1176, %v373
      %1179 = vset.pattern.permute.xlu0 21
      %1180 = vperm.xlu0 %1179, %v409
      %v1181 = vpop.permute.xlu0 %1180
      %1183 = vset.pattern.permute.xlu0 21
      %1184 = vperm.xlu0 %1183, %v410
      %v1185 = vpop.permute.xlu0 %1184
      %v1187 = vlaneseq
      %v1188 = vshrl.u32 %v1187, 7
      %v1189 = vsub.s32 0, %v1188
      %v1190 = vrot.slane %v1177, %v1189
      %v1191 = vlaneseq
      %v1192 = vshrl.u32 %v1191, 7
      %v1193 = vsub.s32 0, %v1192
      %v1194 = vrot.slane %v1178, %v1193
      %v1195 = vmul.f32 %v1181, %v1190
      %v1196 = vmul.f32 %v1181, %v1194
      %v1197 = vmul.f32 %v1185, %v1190
      %v1198 = vmul.f32 %v1185, %v1194
      %v1199 = vadd.f32 %v1164, %v1195
      %v1200 = vadd.f32 %v1165, %v1196
      %v1201 = vadd.f32 %v1166, %v1197
      %v1202 = vadd.f32 %v1167, %v1198
      %1203 = vrot.lane.b32.xlu0 %v415, 96
      %v1204 = vpop.permute.xlu0 %1203
      %1205 = vrot.lane.b32.xlu0 %v419, 96
      %v1206 = vpop.permute.xlu0 %1205
      %vm1207 = vcmask 785408
      %v1208 = vsel %vm1207, %v1204, %v1206
      %v1211 = vsel %vm1207, %v1206, 0.0
      %v1212 = vmul.f32 %v1208, %v382
      %v1213 = vmul.f32 %v1211, %v383
      %1214 = vset.pattern.permute.xlu0 22
      %1215 = vperm.xlu0 %1214, %v409
      %v1216 = vpop.permute.xlu0 %1215
      %1218 = vset.pattern.permute.xlu0 22
      %1219 = vperm.xlu0 %1218, %v410
      %v1220 = vpop.permute.xlu0 %1219
      %v1222 = vlaneseq
      %v1223 = vshrl.u32 %v1222, 7
      %v1224 = vsub.s32 0, %v1223
      %v1225 = vrot.slane %v1212, %v1224
      %v1226 = vlaneseq
      %v1227 = vshrl.u32 %v1226, 7
      %v1228 = vsub.s32 0, %v1227
      %v1229 = vrot.slane %v1213, %v1228
      %v1230 = vmul.f32 %v1216, %v1225
      %v1231 = vmul.f32 %v1216, %v1229
      %v1232 = vmul.f32 %v1220, %v1225
      %v1233 = vmul.f32 %v1220, %v1229
      %v1234 = vadd.f32 %v1199, %v1230
      %v1235 = vadd.f32 %v1200, %v1231
      %v1236 = vadd.f32 %v1201, %v1232
      %v1237 = vadd.f32 %v1202, %v1233
      %1238 = vrot.lane.b32.xlu0 %v415, 95
      %v1239 = vpop.permute.xlu0 %1238
      %1240 = vrot.lane.b32.xlu0 %v419, 95
      %v1241 = vpop.permute.xlu0 %1240
      %vm1242 = vcmask 777216
      %v1243 = vsel %vm1242, %v1239, %v1241
      %v1246 = vsel %vm1242, %v1241, 0.0
      %v1247 = vmul.f32 %v1243, %v394
      %v1248 = vmul.f32 %v1246, %v395
      %1249 = vset.pattern.permute.xlu0 23
      %1250 = vperm.xlu0 %1249, %v409
      %v1251 = vpop.permute.xlu0 %1250
      %1253 = vset.pattern.permute.xlu0 23
      %1254 = vperm.xlu0 %1253, %v410
      %v1255 = vpop.permute.xlu0 %1254
      %v1257 = vlaneseq
      %v1258 = vshrl.u32 %v1257, 7
      %v1259 = vsub.s32 0, %v1258
      %v1260 = vrot.slane %v1247, %v1259
      %v1261 = vlaneseq
      %v1262 = vshrl.u32 %v1261, 7
      %v1263 = vsub.s32 0, %v1262
      %v1264 = vrot.slane %v1248, %v1263
      %v1265 = vmul.f32 %v1251, %v1260
      %v1266 = vmul.f32 %v1251, %v1264
      %v1267 = vmul.f32 %v1255, %v1260
      %v1268 = vmul.f32 %v1255, %v1264
      %v1269 = vadd.f32 %v1234, %v1265
      %v1270 = vadd.f32 %v1235, %v1266
      %v1271 = vadd.f32 %v1236, %v1267
      %v1272 = vadd.f32 %v1237, %v1268
      %1273 = vrot.lane.b32.xlu0 %v415, 94
      %v1274 = vpop.permute.xlu0 %1273
      %1275 = vrot.lane.b32.xlu0 %v419, 94
      %v1276 = vpop.permute.xlu0 %1275
      %vm1277 = vcmask 769024
      %v1278 = vsel %vm1277, %v1274, %v1276
      %v1281 = vsel %vm1277, %v1276, 0.0
      %v1282 = vmul.f32 %v1278, %v406
      %v1283 = vmul.f32 %v1281, %v407
      %1284 = vset.pattern.permute.xlu0 24
      %1285 = vperm.xlu0 %1284, %v409
      %v1286 = vpop.permute.xlu0 %1285
      %1288 = vset.pattern.permute.xlu0 24
      %1289 = vperm.xlu0 %1288, %v410
      %v1290 = vpop.permute.xlu0 %1289
      %v1292 = vlaneseq
      %v1293 = vshrl.u32 %v1292, 7
      %v1294 = vsub.s32 0, %v1293
      %v1295 = vrot.slane %v1282, %v1294
      %v1296 = vlaneseq
      %v1297 = vshrl.u32 %v1296, 7
      %v1298 = vsub.s32 0, %v1297
      %v1299 = vrot.slane %v1283, %v1298
      %v1300 = vmul.f32 %v1286, %v1295
      %v1301 = vmul.f32 %v1286, %v1299
      %v1302 = vmul.f32 %v1290, %v1295
      %v1303 = vmul.f32 %v1290, %v1299
      %v1304 = vadd.f32 %v1269, %v1300
      %v1305 = vadd.f32 %v1270, %v1301
      %v1306 = vadd.f32 %v1271, %v1302
      %v1307 = vadd.f32 %v1272, %v1303
      %v1308 = vld [vmem:[%s3] sm:$0xff]
      %v1309 = vld [vmem:[%s3 + $0x8] sm:$0xff]
      %1311 = vset.pattern.permute.xlu0 0
      %1312 = vperm.xlu0 %1311, %v1308
      %v1313 = vpop.permute.xlu0 %1312
      %1316 = vset.pattern.permute.xlu0 0
      %1317 = vperm.xlu0 %1316, %v1309
      %v1318 = vpop.permute.xlu0 %1317
      %v1320 = vadd.f32 %v1304, %v1313
      %v1321 = vadd.f32 %v1305, %v1313
      %v1322 = vadd.f32 %v1306, %v1318
      %v1323 = vadd.f32 %v1307, %v1318
      %vm1324 = vcmp.ge.f32.partialorder %v1320, 0.0
      %vm1325 = vcmp.ge.f32.partialorder %v1321, 0.0
      %vm1326 = vcmp.ge.f32.partialorder %v1322, 0.0
      %vm1327 = vcmp.ge.f32.partialorder %v1323, 0.0
      %v1328 = vmul.f32 %v1320, 0.2
      %v1329 = vmul.f32 %v1321, 0.2
      %v1330 = vmul.f32 %v1322, 0.2
      %v1331 = vmul.f32 %v1323, 0.2
      %v1332 = vsel %vm1324, %v1320, %v1328
      %v1333 = vsel %vm1325, %v1321, %v1329
      %v1334 = vsel %vm1326, %v1322, %v1330
      %v1335 = vsel %vm1327, %v1323, %v1331
      %1340 = vrot.lane.b32.xlu0 %v1332, 34
      %v1341 = vpop.permute.xlu0 %1340
      %1342 = vrot.lane.b32.xlu0 %v1333, 34
      %v1343 = vpop.permute.xlu0 %1342
      %1344 = vrot.lane.b32.xlu0 %v1334, 34
      %v1345 = vpop.permute.xlu0 %1344
      %1346 = vrot.lane.b32.xlu0 %v1335, 34
      %v1347 = vpop.permute.xlu0 %1346
      %v1348 = vsel %vm424, %v1341, %v1343
      %v1349 = vsel %vm424, %v1345, %v1347
      %v1354 = vsel %vm424, 0.0, %v1341
      %v1355 = vsel %vm424, 0.0, %v1345
      %v1356 = vmul.f32 %v1354, %v360
      %v1357 = vmul.f32 %v1348, %v361
      %v1358 = vmul.f32 %v1355, %v360
      %v1359 = vmul.f32 %v1349, %v361
      %1360 = vst [vmem:[#allocation2] sm:$0xff] %v1356
      %1361 = vst [vmem:[#allocation2 + $0x8] sm:$0xff] %v1357
      %1362 = vst [vmem:[#allocation2 + $0x10] sm:$0xff] %v1358
      %1363 = vst [vmem:[#allocation2 + $0x18] sm:$0xff] %v1359
      %1364 = vrot.lane.b32.xlu0 %v1332, 33
      %v1365 = vpop.permute.xlu0 %1364
      %1366 = vrot.lane.b32.xlu0 %v1333, 33
      %v1367 = vpop.permute.xlu0 %1366
      %1368 = vrot.lane.b32.xlu0 %v1334, 33
      %v1369 = vpop.permute.xlu0 %1368
      %1370 = vrot.lane.b32.xlu0 %v1335, 33
      %v1371 = vpop.permute.xlu0 %1370
      %v1372 = vsel %vm461, %v1365, %v1367
      %v1373 = vsel %vm461, %v1369, %v1371
      %v1378 = vsel %vm461, 0.0, %v1365
      %v1379 = vsel %vm461, 0.0, %v1369
      %v1380 = vmul.f32 %v1378, %v372
      %v1381 = vmul.f32 %v1372, %v373
      %v1382 = vmul.f32 %v1379, %v372
      %v1383 = vmul.f32 %v1373, %v373
      %1384 = vst [vmem:[#allocation2 + $0x20] sm:$0xff] %v1380
      %1385 = vst [vmem:[#allocation2 + $0x28] sm:$0xff] %v1381
      %1386 = vst [vmem:[#allocation2 + $0x30] sm:$0xff] %v1382
      %1387 = vst [vmem:[#allocation2 + $0x38] sm:$0xff] %v1383
      %1388 = vrot.lane.b32.xlu0 %v1332, 32
      %v1389 = vpop.permute.xlu0 %1388
      %1390 = vrot.lane.b32.xlu0 %v1333, 32
      %v1391 = vpop.permute.xlu0 %1390
      %1392 = vrot.lane.b32.xlu0 %v1334, 32
      %v1393 = vpop.permute.xlu0 %1392
      %1394 = vrot.lane.b32.xlu0 %v1335, 32
      %v1395 = vpop.permute.xlu0 %1394
      %v1396 = vsel %vm496, %v1389, %v1391
      %v1397 = vsel %vm496, %v1393, %v1395
      %v1402 = vsel %vm496, 0.0, %v1389
      %v1403 = vsel %vm496, 0.0, %v1393
      %v1404 = vmul.f32 %v1402, %v382
      %v1405 = vmul.f32 %v1396, %v383
      %v1406 = vmul.f32 %v1403, %v382
      %v1407 = vmul.f32 %v1397, %v383
      %1408 = vst [vmem:[#allocation2 + $0x40] sm:$0xff] %v1404
      %1409 = vst [vmem:[#allocation2 + $0x48] sm:$0xff] %v1405
      %1410 = vst [vmem:[#allocation2 + $0x50] sm:$0xff] %v1406
      %1411 = vst [vmem:[#allocation2 + $0x58] sm:$0xff] %v1407
      %1412 = vrot.lane.b32.xlu0 %v1332, 31
      %v1413 = vpop.permute.xlu0 %1412
      %1414 = vrot.lane.b32.xlu0 %v1333, 31
      %v1415 = vpop.permute.xlu0 %1414
      %1416 = vrot.lane.b32.xlu0 %v1334, 31
      %v1417 = vpop.permute.xlu0 %1416
      %1418 = vrot.lane.b32.xlu0 %v1335, 31
      %v1419 = vpop.permute.xlu0 %1418
      %v1420 = vsel %vm531, %v1413, %v1415
      %v1421 = vsel %vm531, %v1417, %v1419
      %v1426 = vsel %vm531, 0.0, %v1413
      %v1427 = vsel %vm531, 0.0, %v1417
      %v1428 = vmul.f32 %v1426, %v394
      %v1429 = vmul.f32 %v1420, %v395
      %v1430 = vmul.f32 %v1427, %v394
      %v1431 = vmul.f32 %v1421, %v395
      %1432 = vst [vmem:[#allocation2 + $0x60] sm:$0xff] %v1428
      %1433 = vst [vmem:[#allocation2 + $0x68] sm:$0xff] %v1429
      %1434 = vst [vmem:[#allocation2 + $0x70] sm:$0xff] %v1430
      %1435 = vst [vmem:[#allocation2 + $0x78] sm:$0xff] %v1431
      %1436 = vrot.lane.b32.xlu0 %v1332, 30
      %v1437 = vpop.permute.xlu0 %1436
      %1438 = vrot.lane.b32.xlu0 %v1333, 30
      %v1439 = vpop.permute.xlu0 %1438
      %1440 = vrot.lane.b32.xlu0 %v1334, 30
      %v1441 = vpop.permute.xlu0 %1440
      %1442 = vrot.lane.b32.xlu0 %v1335, 30
      %v1443 = vpop.permute.xlu0 %1442
      %v1444 = vsel %vm566, %v1437, %v1439
      %v1445 = vsel %vm566, %v1441, %v1443
      %v1450 = vsel %vm566, 0.0, %v1437
      %v1451 = vsel %vm566, 0.0, %v1441
      %v1452 = vmul.f32 %v1450, %v406
      %v1453 = vmul.f32 %v1444, %v407
      %v1454 = vmul.f32 %v1451, %v406
      %v1455 = vmul.f32 %v1445, %v407
      %1456 = vst [vmem:[#allocation2 + $0x80] sm:$0xff] %v1452
      %1457 = vst [vmem:[#allocation2 + $0x88] sm:$0xff] %v1453
      %1458 = vst [vmem:[#allocation2 + $0x90] sm:$0xff] %v1454
      %1459 = vst [vmem:[#allocation2 + $0x98] sm:$0xff] %v1455
      %1460 = vrot.lane.b32.xlu0 %v1332, 18
      %v1461 = vpop.permute.xlu0 %1460
      %1462 = vrot.lane.b32.xlu0 %v1333, 18
      %v1463 = vpop.permute.xlu0 %1462
      %1464 = vrot.lane.b32.xlu0 %v1334, 18
      %v1465 = vpop.permute.xlu0 %1464
      %1466 = vrot.lane.b32.xlu0 %v1335, 18
      %v1467 = vpop.permute.xlu0 %1466
      %v1468 = vsel %vm601, %v1461, %v1463
      %v1469 = vsel %vm601, %v1465, %v1467
      %v1474 = vsel %vm601, 0.0, %v1461
      %v1475 = vsel %vm601, 0.0, %v1465
      %v1476 = vmul.f32 %v1474, %v360
      %v1477 = vmul.f32 %v1468, %v361
      %v1478 = vmul.f32 %v1475, %v360
      %v1479 = vmul.f32 %v1469, %v361
      %1480 = vst [vmem:[#allocation2 + $0xa0] sm:$0xff] %v1476
      %1481 = vst [vmem:[#allocation2 + $0xa8] sm:$0xff] %v1477
      %1482 = vst [vmem:[#allocation2 + $0xb0] sm:$0xff] %v1478
      %1483 = vst [vmem:[#allocation2 + $0xb8] sm:$0xff] %v1479
      %1484 = vrot.lane.b32.xlu0 %v1332, 17
      %v1485 = vpop.permute.xlu0 %1484
      %1486 = vrot.lane.b32.xlu0 %v1333, 17
      %v1487 = vpop.permute.xlu0 %1486
      %1488 = vrot.lane.b32.xlu0 %v1334, 17
      %v1489 = vpop.permute.xlu0 %1488
      %1490 = vrot.lane.b32.xlu0 %v1335, 17
      %v1491 = vpop.permute.xlu0 %1490
      %v1492 = vsel %vm636, %v1485, %v1487
      %v1493 = vsel %vm636, %v1489, %v1491
      %v1498 = vsel %vm636, 0.0, %v1485
      %v1499 = vsel %vm636, 0.0, %v1489
      %v1500 = vmul.f32 %v1498, %v372
      %v1501 = vmul.f32 %v1492, %v373
      %v1502 = vmul.f32 %v1499, %v372
      %v1503 = vmul.f32 %v1493, %v373
      %1504 = vst [vmem:[#allocation2 + $0xc0] sm:$0xff] %v1500
      %1505 = vst [vmem:[#allocation2 + $0xc8] sm:$0xff] %v1501
      %1506 = vst [vmem:[#allocation2 + $0xd0] sm:$0xff] %v1502
      %1507 = vst [vmem:[#allocation2 + $0xd8] sm:$0xff] %v1503
      %1508 = vrot.lane.b32.xlu0 %v1332, 16
      %v1509 = vpop.permute.xlu0 %1508
      %1510 = vrot.lane.b32.xlu0 %v1333, 16
      %v1511 = vpop.permute.xlu0 %1510
      %1512 = vrot.lane.b32.xlu0 %v1334, 16
      %v1513 = vpop.permute.xlu0 %1512
      %1514 = vrot.lane.b32.xlu0 %v1335, 16
      %v1515 = vpop.permute.xlu0 %1514
      %v1516 = vsel %vm671, %v1509, %v1511
      %v1517 = vsel %vm671, %v1513, %v1515
      %v1522 = vsel %vm671, 0.0, %v1509
      %v1523 = vsel %vm671, 0.0, %v1513
      %v1524 = vmul.f32 %v1522, %v382
      %v1525 = vmul.f32 %v1516, %v383
      %v1526 = vmul.f32 %v1523, %v382
      %v1527 = vmul.f32 %v1517, %v383
      %1528 = vst [vmem:[#allocation2 + $0xe0] sm:$0xff] %v1524
      %1529 = vst [vmem:[#allocation2 + $0xe8] sm:$0xff] %v1525
      %1530 = vst [vmem:[#allocation2 + $0xf0] sm:$0xff] %v1526
      %1531 = vst [vmem:[#allocation2 + $0xf8] sm:$0xff] %v1527
      %1532 = vrot.lane.b32.xlu0 %v1332, 15
      %v1533 = vpop.permute.xlu0 %1532
      %1534 = vrot.lane.b32.xlu0 %v1333, 15
      %v1535 = vpop.permute.xlu0 %1534
      %1536 = vrot.lane.b32.xlu0 %v1334, 15
      %v1537 = vpop.permute.xlu0 %1536
      %1538 = vrot.lane.b32.xlu0 %v1335, 15
      %v1539 = vpop.permute.xlu0 %1538
      %v1540 = vsel %vm706, %v1533, %v1535
      %v1541 = vsel %vm706, %v1537, %v1539
      %v1546 = vsel %vm706, 0.0, %v1533
      %v1547 = vsel %vm706, 0.0, %v1537
      %v1548 = vmul.f32 %v1546, %v394
      %v1549 = vmul.f32 %v1540, %v395
      %v1550 = vmul.f32 %v1547, %v394
      %v1551 = vmul.f32 %v1541, %v395
      %1552 = vst [vmem:[#allocation2 + $0x100] sm:$0xff] %v1548
      %1553 = vst [vmem:[#allocation2 + $0x108] sm:$0xff] %v1549
      %1554 = vst [vmem:[#allocation2 + $0x110] sm:$0xff] %v1550
      %1555 = vst [vmem:[#allocation2 + $0x118] sm:$0xff] %v1551
      %1556 = vrot.lane.b32.xlu0 %v1332, 14
      %v1557 = vpop.permute.xlu0 %1556
      %1558 = vrot.lane.b32.xlu0 %v1333, 14
      %v1559 = vpop.permute.xlu0 %1558
      %1560 = vrot.lane.b32.xlu0 %v1334, 14
      %v1561 = vpop.permute.xlu0 %1560
      %1562 = vrot.lane.b32.xlu0 %v1335, 14
      %v1563 = vpop.permute.xlu0 %1562
      %v1564 = vsel %vm741, %v1557, %v1559
      %v1565 = vsel %vm741, %v1561, %v1563
      %v1570 = vsel %vm741, 0.0, %v1557
      %v1571 = vsel %vm741, 0.0, %v1561
      %v1572 = vmul.f32 %v1570, %v406
      %v1573 = vmul.f32 %v1564, %v407
      %v1574 = vmul.f32 %v1571, %v406
      %v1575 = vmul.f32 %v1565, %v407
      %1576 = vst [vmem:[#allocation2 + $0x120] sm:$0xff] %v1572
      %1577 = vst [vmem:[#allocation2 + $0x128] sm:$0xff] %v1573
      %1578 = vst [vmem:[#allocation2 + $0x130] sm:$0xff] %v1574
      %1579 = vst [vmem:[#allocation2 + $0x138] sm:$0xff] %v1575
      %1580 = vrot.lane.b32.xlu0 %v1332, 2
      %v1581 = vpop.permute.xlu0 %1580
      %1582 = vrot.lane.b32.xlu0 %v1333, 2
      %v1583 = vpop.permute.xlu0 %1582
      %1584 = vrot.lane.b32.xlu0 %v1334, 2
      %v1585 = vpop.permute.xlu0 %1584
      %1586 = vrot.lane.b32.xlu0 %v1335, 2
      %v1587 = vpop.permute.xlu0 %1586
      %v1588 = vsel %vm776, %v1581, %v1583
      %v1589 = vsel %vm776, %v1585, %v1587
      %v1594 = vsel %vm776, 0.0, %v1581
      %v1595 = vsel %vm776, 0.0, %v1585
      %v1596 = vmul.f32 %v1594, %v360
      %v1597 = vmul.f32 %v1588, %v361
      %v1598 = vmul.f32 %v1595, %v360
      %v1599 = vmul.f32 %v1589, %v361
      %1600 = vst [vmem:[#allocation2 + $0x140] sm:$0xff] %v1596
      %1601 = vst [vmem:[#allocation2 + $0x148] sm:$0xff] %v1597
      %1602 = vst [vmem:[#allocation2 + $0x150] sm:$0xff] %v1598
      %1603 = vst [vmem:[#allocation2 + $0x158] sm:$0xff] %v1599
      %1604 = vrot.lane.b32.xlu0 %v1332, 1
      %v1605 = vpop.permute.xlu0 %1604
      %1606 = vrot.lane.b32.xlu0 %v1333, 1
      %v1607 = vpop.permute.xlu0 %1606
      %1608 = vrot.lane.b32.xlu0 %v1334, 1
      %v1609 = vpop.permute.xlu0 %1608
      %1610 = vrot.lane.b32.xlu0 %v1335, 1
      %v1611 = vpop.permute.xlu0 %1610
      %v1612 = vsel %vm811, %v1605, %v1607
      %v1613 = vsel %vm811, %v1609, %v1611
      %v1618 = vsel %vm811, 0.0, %v1605
      %v1619 = vsel %vm811, 0.0, %v1609
      %v1620 = vmul.f32 %v1618, %v372
      %v1621 = vmul.f32 %v1612, %v373
      %v1622 = vmul.f32 %v1619, %v372
      %v1623 = vmul.f32 %v1613, %v373
      %1624 = vst [vmem:[#allocation2 + $0x160] sm:$0xff] %v1620
      %1625 = vst [vmem:[#allocation2 + $0x168] sm:$0xff] %v1621
      %1626 = vst [vmem:[#allocation2 + $0x170] sm:$0xff] %v1622
      %1627 = vst [vmem:[#allocation2 + $0x178] sm:$0xff] %v1623
      %v1628 = vmul.f32 %v1332, %v382
      %v1629 = vmul.f32 %v1333, %v383
      %v1630 = vmul.f32 %v1334, %v382
      %v1631 = vmul.f32 %v1335, %v383
      %1632 = vst [vmem:[#allocation2 + $0x180] sm:$0xff] %v1628
      %1633 = vst [vmem:[#allocation2 + $0x188] sm:$0xff] %v1629
      %1634 = vst [vmem:[#allocation2 + $0x190] sm:$0xff] %v1630
      %1635 = vst [vmem:[#allocation2 + $0x198] sm:$0xff] %v1631
      %1636 = vrot.lane.b32.xlu0 %v1332, 127
      %v1637 = vpop.permute.xlu0 %1636
      %1638 = vrot.lane.b32.xlu0 %v1333, 127
      %v1639 = vpop.permute.xlu0 %1638
      %1640 = vrot.lane.b32.xlu0 %v1334, 127
      %v1641 = vpop.permute.xlu0 %1640
      %1642 = vrot.lane.b32.xlu0 %v1335, 127
      %v1643 = vpop.permute.xlu0 %1642
      %v1644 = vsel %vm892, %v1637, %v1639
      %v1645 = vsel %vm892, %v1641, %v1643
      %v1650 = vsel %vm892, %v1639, 0.0
      %v1651 = vsel %vm892, %v1643, 0.0
      %v1652 = vmul.f32 %v1644, %v394
      %v1653 = vmul.f32 %v1650, %v395
      %v1654 = vmul.f32 %v1645, %v394
      %v1655 = vmul.f32 %v1651, %v395
      %1656 = vst [vmem:[#allocation2 + $0x1a0] sm:$0xff] %v1652
      %1657 = vst [vmem:[#allocation2 + $0x1a8] sm:$0xff] %v1653
      %1658 = vst [vmem:[#allocation2 + $0x1b0] sm:$0xff] %v1654
      %1659 = vst [vmem:[#allocation2 + $0x1b8] sm:$0xff] %v1655
      %1660 = vrot.lane.b32.xlu0 %v1332, 126
      %v1661 = vpop.permute.xlu0 %1660
      %1662 = vrot.lane.b32.xlu0 %v1333, 126
      %v1663 = vpop.permute.xlu0 %1662
      %1664 = vrot.lane.b32.xlu0 %v1334, 126
      %v1665 = vpop.permute.xlu0 %1664
      %1666 = vrot.lane.b32.xlu0 %v1335, 126
      %v1667 = vpop.permute.xlu0 %1666
      %v1668 = vsel %vm927, %v1661, %v1663
      %v1669 = vsel %vm927, %v1665, %v1667
      %v1674 = vsel %vm927, %v1663, 0.0
      %v1675 = vsel %vm927, %v1667, 0.0
      %v1676 = vmul.f32 %v1668, %v406
      %v1677 = vmul.f32 %v1674, %v407
      %v1678 = vmul.f32 %v1669, %v406
      %v1679 = vmul.f32 %v1675, %v407
      %1680 = vst [vmem:[#allocation2 + $0x1c0] sm:$0xff] %v1676
      %1681 = vst [vmem:[#allocation2 + $0x1c8] sm:$0xff] %v1677
      %1682 = vst [vmem:[#allocation2 + $0x1d0] sm:$0xff] %v1678
      %1683 = vst [vmem:[#allocation2 + $0x1d8] sm:$0xff] %v1679
      %1684 = vrot.lane.b32.xlu0 %v1332, 114
      %v1685 = vpop.permute.xlu0 %1684
      %1686 = vrot.lane.b32.xlu0 %v1333, 114
      %v1687 = vpop.permute.xlu0 %1686
      %1688 = vrot.lane.b32.xlu0 %v1334, 114
      %v1689 = vpop.permute.xlu0 %1688
      %1690 = vrot.lane.b32.xlu0 %v1335, 114
      %v1691 = vpop.permute.xlu0 %1690
      %v1692 = vsel %vm962, %v1685, %v1687
      %v1693 = vsel %vm962, %v1689, %v1691
      %v1698 = vsel %vm962, %v1687, 0.0
      %v1699 = vsel %vm962, %v1691, 0.0
      %v1700 = vmul.f32 %v1692, %v360
      %v1701 = vmul.f32 %v1698, %v361
      %v1702 = vmul.f32 %v1693, %v360
      %v1703 = vmul.f32 %v1699, %v361
      %1704 = vst [vmem:[#allocation2 + $0x1e0] sm:$0xff] %v1700
      %1705 = vst [vmem:[#allocation2 + $0x1e8] sm:$0xff] %v1701
      %1706 = vst [vmem:[#allocation2 + $0x1f0] sm:$0xff] %v1702
      %1707 = vst [vmem:[#allocation2 + $0x1f8] sm:$0xff] %v1703
      %1708 = vrot.lane.b32.xlu0 %v1332, 113
      %v1709 = vpop.permute.xlu0 %1708
      %1710 = vrot.lane.b32.xlu0 %v1333, 113
      %v1711 = vpop.permute.xlu0 %1710
      %1712 = vrot.lane.b32.xlu0 %v1334, 113
      %v1713 = vpop.permute.xlu0 %1712
      %1714 = vrot.lane.b32.xlu0 %v1335, 113
      %v1715 = vpop.permute.xlu0 %1714
      %v1716 = vsel %vm997, %v1709, %v1711
      %v1717 = vsel %vm997, %v1713, %v1715
      %v1722 = vsel %vm997, %v1711, 0.0
      %v1723 = vsel %vm997, %v1715, 0.0
      %v1724 = vmul.f32 %v1716, %v372
      %v1725 = vmul.f32 %v1722, %v373
      %v1726 = vmul.f32 %v1717, %v372
      %v1727 = vmul.f32 %v1723, %v373
      %1728 = vst [vmem:[#allocation2 + $0x200] sm:$0xff] %v1724
      %1729 = vst [vmem:[#allocation2 + $0x208] sm:$0xff] %v1725
      %1730 = vst [vmem:[#allocation2 + $0x210] sm:$0xff] %v1726
      %1731 = vst [vmem:[#allocation2 + $0x218] sm:$0xff] %v1727
      %1732 = vrot.lane.b32.xlu0 %v1332, 112
      %v1733 = vpop.permute.xlu0 %1732
      %1734 = vrot.lane.b32.xlu0 %v1333, 112
      %v1735 = vpop.permute.xlu0 %1734
      %1736 = vrot.lane.b32.xlu0 %v1334, 112
      %v1737 = vpop.permute.xlu0 %1736
      %1738 = vrot.lane.b32.xlu0 %v1335, 112
      %v1739 = vpop.permute.xlu0 %1738
      %v1740 = vsel %vm1032, %v1733, %v1735
      %v1741 = vsel %vm1032, %v1737, %v1739
      %v1746 = vsel %vm1032, %v1735, 0.0
      %v1747 = vsel %vm1032, %v1739, 0.0
      %v1748 = vmul.f32 %v1740, %v382
      %v1749 = vmul.f32 %v1746, %v383
      %v1750 = vmul.f32 %v1741, %v382
      %v1751 = vmul.f32 %v1747, %v383
      %1752 = vst [vmem:[#allocation2 + $0x220] sm:$0xff] %v1748
      %1753 = vst [vmem:[#allocation2 + $0x228] sm:$0xff] %v1749
      %1754 = vst [vmem:[#allocation2 + $0x230] sm:$0xff] %v1750
      %1755 = vst [vmem:[#allocation2 + $0x238] sm:$0xff] %v1751
      %1756 = vrot.lane.b32.xlu0 %v1332, 111
      %v1757 = vpop.permute.xlu0 %1756
      %1758 = vrot.lane.b32.xlu0 %v1333, 111
      %v1759 = vpop.permute.xlu0 %1758
      %1760 = vrot.lane.b32.xlu0 %v1334, 111
      %v1761 = vpop.permute.xlu0 %1760
      %1762 = vrot.lane.b32.xlu0 %v1335, 111
      %v1763 = vpop.permute.xlu0 %1762
      %v1764 = vsel %vm1067, %v1757, %v1759
      %v1765 = vsel %vm1067, %v1761, %v1763
      %v1770 = vsel %vm1067, %v1759, 0.0
      %v1771 = vsel %vm1067, %v1763, 0.0
      %v1772 = vmul.f32 %v1764, %v394
      %v1773 = vmul.f32 %v1770, %v395
      %v1774 = vmul.f32 %v1765, %v394
      %v1775 = vmul.f32 %v1771, %v395
      %1776 = vst [vmem:[#allocation2 + $0x240] sm:$0xff] %v1772
      %1777 = vst [vmem:[#allocation2 + $0x248] sm:$0xff] %v1773
      %1778 = vst [vmem:[#allocation2 + $0x250] sm:$0xff] %v1774
      %1779 = vst [vmem:[#allocation2 + $0x258] sm:$0xff] %v1775
      %1780 = vrot.lane.b32.xlu0 %v1332, 110
      %v1781 = vpop.permute.xlu0 %1780
      %1782 = vrot.lane.b32.xlu0 %v1333, 110
      %v1783 = vpop.permute.xlu0 %1782
      %1784 = vrot.lane.b32.xlu0 %v1334, 110
      %v1785 = vpop.permute.xlu0 %1784
      %1786 = vrot.lane.b32.xlu0 %v1335, 110
      %v1787 = vpop.permute.xlu0 %1786
      %v1788 = vsel %vm1102, %v1781, %v1783
      %v1789 = vsel %vm1102, %v1785, %v1787
      %v1794 = vsel %vm1102, %v1783, 0.0
      %v1795 = vsel %vm1102, %v1787, 0.0
      %v1796 = vmul.f32 %v1788, %v406
      %v1797 = vmul.f32 %v1794, %v407
      %v1798 = vmul.f32 %v1789, %v406
      %v1799 = vmul.f32 %v1795, %v407
      %1800 = vst [vmem:[#allocation2 + $0x260] sm:$0xff] %v1796
      %1801 = vst [vmem:[#allocation2 + $0x268] sm:$0xff] %v1797
      %1802 = vst [vmem:[#allocation2 + $0x270] sm:$0xff] %v1798
      %1803 = vst [vmem:[#allocation2 + $0x278] sm:$0xff] %v1799
      %1804 = vrot.lane.b32.xlu0 %v1332, 98
      %v1805 = vpop.permute.xlu0 %1804
      %1806 = vrot.lane.b32.xlu0 %v1333, 98
      %v1807 = vpop.permute.xlu0 %1806
      %1808 = vrot.lane.b32.xlu0 %v1334, 98
      %v1809 = vpop.permute.xlu0 %1808
      %1810 = vrot.lane.b32.xlu0 %v1335, 98
      %v1811 = vpop.permute.xlu0 %1810
      %v1812 = vsel %vm1137, %v1805, %v1807
      %v1813 = vsel %vm1137, %v1809, %v1811
      %v1818 = vsel %vm1137, %v1807, 0.0
      %v1819 = vsel %vm1137, %v1811, 0.0
      %v1820 = vmul.f32 %v1812, %v360
      %v1821 = vmul.f32 %v1818, %v361
      %v1822 = vmul.f32 %v1813, %v360
      %v1823 = vmul.f32 %v1819, %v361
      %1824 = vst [vmem:[#allocation2 + $0x280] sm:$0xff] %v1820
      %1825 = vst [vmem:[#allocation2 + $0x288] sm:$0xff] %v1821
      %1826 = vst [vmem:[#allocation2 + $0x290] sm:$0xff] %v1822
      %1827 = vst [vmem:[#allocation2 + $0x298] sm:$0xff] %v1823
      %1828 = vrot.lane.b32.xlu0 %v1332, 97
      %v1829 = vpop.permute.xlu0 %1828
      %1830 = vrot.lane.b32.xlu0 %v1333, 97
      %v1831 = vpop.permute.xlu0 %1830
      %1832 = vrot.lane.b32.xlu0 %v1334, 97
      %v1833 = vpop.permute.xlu0 %1832
      %1834 = vrot.lane.b32.xlu0 %v1335, 97
      %v1835 = vpop.permute.xlu0 %1834
      %v1836 = vsel %vm1172, %v1829, %v1831
      %v1837 = vsel %vm1172, %v1833, %v1835
      %v1842 = vsel %vm1172, %v1831, 0.0
      %v1843 = vsel %vm1172, %v1835, 0.0
      %v1844 = vmul.f32 %v1836, %v372
      %v1845 = vmul.f32 %v1842, %v373
      %v1846 = vmul.f32 %v1837, %v372
      %v1847 = vmul.f32 %v1843, %v373
      %1848 = vst [vmem:[#allocation2 + $0x2a0] sm:$0xff] %v1844
      %1849 = vst [vmem:[#allocation2 + $0x2a8] sm:$0xff] %v1845
      %1850 = vst [vmem:[#allocation2 + $0x2b0] sm:$0xff] %v1846
      %1851 = vst [vmem:[#allocation2 + $0x2b8] sm:$0xff] %v1847
      %1852 = vrot.lane.b32.xlu0 %v1332, 96
      %v1853 = vpop.permute.xlu0 %1852
      %1854 = vrot.lane.b32.xlu0 %v1333, 96
      %v1855 = vpop.permute.xlu0 %1854
      %1856 = vrot.lane.b32.xlu0 %v1334, 96
      %v1857 = vpop.permute.xlu0 %1856
      %1858 = vrot.lane.b32.xlu0 %v1335, 96
      %v1859 = vpop.permute.xlu0 %1858
      %v1860 = vsel %vm1207, %v1853, %v1855
      %v1861 = vsel %vm1207, %v1857, %v1859
      %v1866 = vsel %vm1207, %v1855, 0.0
      %v1867 = vsel %vm1207, %v1859, 0.0
      %v1868 = vmul.f32 %v1860, %v382
      %v1869 = vmul.f32 %v1866, %v383
      %v1870 = vmul.f32 %v1861, %v382
      %v1871 = vmul.f32 %v1867, %v383
      %1872 = vst [vmem:[#allocation2 + $0x2c0] sm:$0xff] %v1868
      %1873 = vst [vmem:[#allocation2 + $0x2c8] sm:$0xff] %v1869
      %1874 = vst [vmem:[#allocation2 + $0x2d0] sm:$0xff] %v1870
      %1875 = vst [vmem:[#allocation2 + $0x2d8] sm:$0xff] %v1871
      %1876 = vrot.lane.b32.xlu0 %v1332, 95
      %v1877 = vpop.permute.xlu0 %1876
      %1878 = vrot.lane.b32.xlu0 %v1333, 95
      %v1879 = vpop.permute.xlu0 %1878
      %1880 = vrot.lane.b32.xlu0 %v1334, 95
      %v1881 = vpop.permute.xlu0 %1880
      %1882 = vrot.lane.b32.xlu0 %v1335, 95
      %v1883 = vpop.permute.xlu0 %1882
      %v1884 = vsel %vm1242, %v1877, %v1879
      %v1885 = vsel %vm1242, %v1881, %v1883
      %v1890 = vsel %vm1242, %v1879, 0.0
      %v1891 = vsel %vm1242, %v1883, 0.0
      %v1892 = vmul.f32 %v1884, %v394
      %v1893 = vmul.f32 %v1890, %v395
      %v1894 = vmul.f32 %v1885, %v394
      %v1895 = vmul.f32 %v1891, %v395
      %1896 = vst [vmem:[#allocation2 + $0x2e0] sm:$0xff] %v1892
      %1897 = vst [vmem:[#allocation2 + $0x2e8] sm:$0xff] %v1893
      %1898 = vst [vmem:[#allocation2 + $0x2f0] sm:$0xff] %v1894
      %1899 = vst [vmem:[#allocation2 + $0x2f8] sm:$0xff] %v1895
      %1900 = vrot.lane.b32.xlu0 %v1332, 94
      %v1901 = vpop.permute.xlu0 %1900
      %1902 = vrot.lane.b32.xlu0 %v1333, 94
      %v1903 = vpop.permute.xlu0 %1902
      %1904 = vrot.lane.b32.xlu0 %v1334, 94
      %v1905 = vpop.permute.xlu0 %1904
      %1906 = vrot.lane.b32.xlu0 %v1335, 94
      %v1907 = vpop.permute.xlu0 %1906
      %v1908 = vsel %vm1277, %v1901, %v1903
      %v1909 = vsel %vm1277, %v1905, %v1907
      %v1914 = vsel %vm1277, %v1903, 0.0
      %v1915 = vsel %vm1277, %v1907, 0.0
      %v1916 = vmul.f32 %v1908, %v406
      %v1917 = vmul.f32 %v1914, %v407
      %v1918 = vmul.f32 %v1909, %v406
      %v1919 = vmul.f32 %v1915, %v407
      %1920 = vst [vmem:[#allocation2 + $0x300] sm:$0xff] %v1916
      %1921 = vst [vmem:[#allocation2 + $0x308] sm:$0xff] %v1917
      %1922 = vst [vmem:[#allocation2 + $0x310] sm:$0xff] %v1918
      %1923 = vst [vmem:[#allocation2 + $0x318] sm:$0xff] %v1919
      %v1924 = vld [vmem:[%s4] sm:$0xff]
      %v1925 = vld [vmem:[%s4 + $0x8] sm:$0xff]
      %v1926 = vld [vmem:[%s4 + $0x10] sm:$0xff]
      %v1927 = vld [vmem:[%s4 + $0x18] sm:$0xff]
      %v1928 = vld [vmem:[%s4 + $0x20] sm:$0xff]
      %v1929 = vld [vmem:[%s4 + $0x28] sm:$0xff]
      %v1930 = vld [vmem:[%s4 + $0x30] sm:$0xff]
      %v1931 = vld [vmem:[%s4 + $0x38] sm:$0xff]
      %v1932 = vld [vmem:[%s4 + $0x40] sm:$0xff]
      %v1933 = vld [vmem:[%s4 + $0x48] sm:$0xff]
      %v1934 = vld [vmem:[%s4 + $0x50] sm:$0xff]
      %v1935 = vld [vmem:[%s4 + $0x58] sm:$0xff]
      %v1936 = vld [vmem:[%s4 + $0x60] sm:$0xff]
      %v1937 = vld [vmem:[%s4 + $0x68] sm:$0xff]
      %v1938 = vld [vmem:[%s4 + $0x70] sm:$0xff]
      %v1939 = vld [vmem:[%s4 + $0x78] sm:$0xff]
      %v1940 = vld [vmem:[#allocation2] sm:$0xff]
      %v1941 = vld [vmem:[#allocation2 + $0x8] sm:$0xff]
      %v1942 = vld [vmem:[#allocation2 + $0x10] sm:$0xff]
      %v1943 = vld [vmem:[#allocation2 + $0x18] sm:$0xff]
      %v1944 = vld [vmem:[#allocation2 + $0x20] sm:$0xff]
      %v1945 = vld [vmem:[#allocation2 + $0x28] sm:$0xff]
      %v1946 = vld [vmem:[#allocation2 + $0x30] sm:$0xff]
      %v1947 = vld [vmem:[#allocation2 + $0x38] sm:$0xff]
      %v1948 = vld [vmem:[#allocation2 + $0x40] sm:$0xff]
      %v1949 = vld [vmem:[#allocation2 + $0x48] sm:$0xff]
      %v1950 = vld [vmem:[#allocation2 + $0x50] sm:$0xff]
      %v1951 = vld [vmem:[#allocation2 + $0x58] sm:$0xff]
      %v1952 = vld [vmem:[#allocation2 + $0x60] sm:$0xff]
      %v1953 = vld [vmem:[#allocation2 + $0x68] sm:$0xff]
      %v1954 = vld [vmem:[#allocation2 + $0x70] sm:$0xff]
      %v1955 = vld [vmem:[#allocation2 + $0x78] sm:$0xff]
      %v1956 = vld [vmem:[#allocation2 + $0x80] sm:$0xff]
      %v1957 = vld [vmem:[#allocation2 + $0x88] sm:$0xff]
      %v1958 = vld [vmem:[#allocation2 + $0x90] sm:$0xff]
      %v1959 = vld [vmem:[#allocation2 + $0x98] sm:$0xff]
      %v1960 = vld [vmem:[#allocation2 + $0xa0] sm:$0xff]
      %v1961 = vld [vmem:[#allocation2 + $0xa8] sm:$0xff]
      %v1962 = vld [vmem:[#allocation2 + $0xb0] sm:$0xff]
      %v1963 = vld [vmem:[#allocation2 + $0xb8] sm:$0xff]
      %v1964 = vld [vmem:[#allocation2 + $0xc0] sm:$0xff]
      %v1965 = vld [vmem:[#allocation2 + $0xc8] sm:$0xff]
      %v1966 = vld [vmem:[#allocation2 + $0xd0] sm:$0xff]
      %v1967 = vld [vmem:[#allocation2 + $0xd8] sm:$0xff]
      %v1968 = vld [vmem:[#allocation2 + $0xe0] sm:$0xff]
      %v1969 = vld [vmem:[#allocation2 + $0xe8] sm:$0xff]
      %v1970 = vld [vmem:[#allocation2 + $0xf0] sm:$0xff]
      %v1971 = vld [vmem:[#allocation2 + $0xf8] sm:$0xff]
      %v1972 = vld [vmem:[#allocation2 + $0x100] sm:$0xff]
      %v1973 = vld [vmem:[#allocation2 + $0x108] sm:$0xff]
      %v1974 = vld [vmem:[#allocation2 + $0x110] sm:$0xff]
      %v1975 = vld [vmem:[#allocation2 + $0x118] sm:$0xff]
      %v1976 = vld [vmem:[#allocation2 + $0x120] sm:$0xff]
      %v1977 = vld [vmem:[#allocation2 + $0x128] sm:$0xff]
      %v1978 = vld [vmem:[#allocation2 + $0x130] sm:$0xff]
      %v1979 = vld [vmem:[#allocation2 + $0x138] sm:$0xff]
      %v1980 = vld [vmem:[#allocation2 + $0x140] sm:$0xff]
      %v1981 = vld [vmem:[#allocation2 + $0x148] sm:$0xff]
      %v1982 = vld [vmem:[#allocation2 + $0x150] sm:$0xff]
      %v1983 = vld [vmem:[#allocation2 + $0x158] sm:$0xff]
      %v1984 = vld [vmem:[#allocation2 + $0x160] sm:$0xff]
      %v1985 = vld [vmem:[#allocation2 + $0x168] sm:$0xff]
      %v1986 = vld [vmem:[#allocation2 + $0x170] sm:$0xff]
      %v1987 = vld [vmem:[#allocation2 + $0x178] sm:$0xff]
      %v1988 = vld [vmem:[#allocation2 + $0x180] sm:$0xff]
      %v1989 = vld [vmem:[#allocation2 + $0x188] sm:$0xff]
      %v1990 = vld [vmem:[#allocation2 + $0x190] sm:$0xff]
      %v1991 = vld [vmem:[#allocation2 + $0x198] sm:$0xff]
      %v1992 = vld [vmem:[#allocation2 + $0x1a0] sm:$0xff]
      %v1993 = vld [vmem:[#allocation2 + $0x1a8] sm:$0xff]
      %v1994 = vld [vmem:[#allocation2 + $0x1b0] sm:$0xff]
      %v1995 = vld [vmem:[#allocation2 + $0x1b8] sm:$0xff]
      %v1996 = vld [vmem:[#allocation2 + $0x1c0] sm:$0xff]
      %v1997 = vld [vmem:[#allocation2 + $0x1c8] sm:$0xff]
      %v1998 = vld [vmem:[#allocation2 + $0x1d0] sm:$0xff]
      %v1999 = vld [vmem:[#allocation2 + $0x1d8] sm:$0xff]
      %v2000 = vld [vmem:[#allocation2 + $0x1e0] sm:$0xff]
      %v2001 = vld [vmem:[#allocation2 + $0x1e8] sm:$0xff]
      %v2002 = vld [vmem:[#allocation2 + $0x1f0] sm:$0xff]
      %v2003 = vld [vmem:[#allocation2 + $0x1f8] sm:$0xff]
      %v2004 = vld [vmem:[#allocation2 + $0x200] sm:$0xff]
      %v2005 = vld [vmem:[#allocation2 + $0x208] sm:$0xff]
      %v2006 = vld [vmem:[#allocation2 + $0x210] sm:$0xff]
      %v2007 = vld [vmem:[#allocation2 + $0x218] sm:$0xff]
      %v2008 = vld [vmem:[#allocation2 + $0x220] sm:$0xff]
      %v2009 = vld [vmem:[#allocation2 + $0x228] sm:$0xff]
      %v2010 = vld [vmem:[#allocation2 + $0x230] sm:$0xff]
      %v2011 = vld [vmem:[#allocation2 + $0x238] sm:$0xff]
      %v2012 = vld [vmem:[#allocation2 + $0x240] sm:$0xff]
      %v2013 = vld [vmem:[#allocation2 + $0x248] sm:$0xff]
      %v2014 = vld [vmem:[#allocation2 + $0x250] sm:$0xff]
      %v2015 = vld [vmem:[#allocation2 + $0x258] sm:$0xff]
      %v2016 = vld [vmem:[#allocation2 + $0x260] sm:$0xff]
      %v2017 = vld [vmem:[#allocation2 + $0x268] sm:$0xff]
      %v2018 = vld [vmem:[#allocation2 + $0x270] sm:$0xff]
      %v2019 = vld [vmem:[#allocation2 + $0x278] sm:$0xff]
      %v2020 = vld [vmem:[#allocation2 + $0x280] sm:$0xff]
      %v2021 = vld [vmem:[#allocation2 + $0x288] sm:$0xff]
      %v2022 = vld [vmem:[#allocation2 + $0x290] sm:$0xff]
      %v2023 = vld [vmem:[#allocation2 + $0x298] sm:$0xff]
      %v2024 = vld [vmem:[#allocation2 + $0x2a0] sm:$0xff]
      %v2025 = vld [vmem:[#allocation2 + $0x2a8] sm:$0xff]
      %v2026 = vld [vmem:[#allocation2 + $0x2b0] sm:$0xff]
      %v2027 = vld [vmem:[#allocation2 + $0x2b8] sm:$0xff]
      %v2028 = vld [vmem:[#allocation2 + $0x2c0] sm:$0xff]
      %v2029 = vld [vmem:[#allocation2 + $0x2c8] sm:$0xff]
      %v2030 = vld [vmem:[#allocation2 + $0x2d0] sm:$0xff]
      %v2031 = vld [vmem:[#allocation2 + $0x2d8] sm:$0xff]
      %v2032 = vld [vmem:[#allocation2 + $0x2e0] sm:$0xff]
      %v2033 = vld [vmem:[#allocation2 + $0x2e8] sm:$0xff]
      %v2034 = vld [vmem:[#allocation2 + $0x2f0] sm:$0xff]
      %v2035 = vld [vmem:[#allocation2 + $0x2f8] sm:$0xff]
      %v2036 = vld [vmem:[#allocation2 + $0x300] sm:$0xff]
      %v2037 = vld [vmem:[#allocation2 + $0x308] sm:$0xff]
      %v2038 = vld [vmem:[#allocation2 + $0x310] sm:$0xff]
      %v2039 = vld [vmem:[#allocation2 + $0x318] sm:$0xff]
      %v2040 = vld [vmem:[%s5] sm:$0xff]
      %v2041 = vld [vmem:[%s5 + $0x8] sm:$0xff]
      %v2042 = vld [vmem:[%s5 + $0x10] sm:$0xff]
      %v2043 = vld [vmem:[%s5 + $0x18] sm:$0xff]
      %2045 = vset.pattern.permute.xlu0 0
      %2046 = vperm.xlu0 %2045, %v2040
      %v2047 = vpop.permute.xlu0 %2046
      %2050 = vset.pattern.permute.xlu0 0
      %2051 = vperm.xlu0 %2050, %v2041
      %v2052 = vpop.permute.xlu0 %2051
      %2055 = vset.pattern.permute.xlu0 0
      %2056 = vperm.xlu0 %2055, %v2042
      %v2057 = vpop.permute.xlu0 %2056
      %2060 = vset.pattern.permute.xlu0 0
      %2061 = vperm.xlu0 %2060, %v2043
      %v2062 = vpop.permute.xlu0 %2061
      %v2065 = vsel %vm671, %v1927, 0
      %v2068 = vsel %vm671, %v1931, 0
      %v2071 = vsel %vm671, %v1935, 0
      %v2074 = vsel %vm671, %v1939, 0
      %2076 = vmatprep.subr.mxu0 %v1971
      %2077 = vmatpush1.msra.mxu0 %v1970
      %2078 = vmatprep.subr.mxu0 %v1969
      %2079 = vmatpush1.msra.mxu0 %v1968
      %2080 = vmatprep.subr.mxu0 %v1967
      %2081 = vmatpush1.msra.mxu0 %v1966
      %2082 = vmatprep.subr.mxu0 %v1965
      %2083 = vmatpush1.msra.mxu0 %v1964
      %2084 = vmatprep.subr.mxu0 %v1963
      %2085 = vmatpush1.msra.mxu0 %v1962
      %2086 = vmatprep.subr.mxu0 %v1961
      %2087 = vmatpush1.msra.mxu0 %v1960
      %2088 = vmatprep.subr.mxu0 %v1959
      %2089 = vmatpush1.msra.mxu0 %v1958
      %2090 = vmatprep.subr.mxu0 %v1957
      %2091 = vmatpush1.msra.mxu0 %v1956
      %2092 = vmatprep.subr.mxu0 %v1955
      %2093 = vmatpush1.msra.mxu0 %v1954
      %2094 = vmatprep.subr.mxu0 %v1953
      %2095 = vmatpush1.msra.mxu0 %v1952
      %2096 = vmatprep.subr.mxu0 %v1951
      %2097 = vmatpush1.msra.mxu0 %v1950
      %2098 = vmatprep.subr.mxu0 %v1949
      %2099 = vmatpush1.msra.mxu0 %v1948
      %2100 = vmatprep.subr.mxu0 %v1947
      %2101 = vmatpush1.msra.mxu0 %v1946
      %2102 = vmatprep.subr.mxu0 %v1945
      %2103 = vmatpush1.msra.mxu0 %v1944
      %2104 = vmatprep.subr.mxu0 %v1943
      %2105 = vmatpush1.msra.mxu0 %v1942
      %2106 = vmatprep.subr.mxu0 %v1941
      %2107 = vmatpush1.msra.mxu0 %v1940
      %2108 = vmatprep.subr.mxu0 %v2003
      %2109 = vmatpush2.msra.mxu0 %v2002
      %2110 = vmatprep.subr.mxu0 %v2001
      %2111 = vmatpush2.msra.mxu0 %v2000
      %2112 = vmatprep.subr.mxu0 %v1999
      %2113 = vmatpush2.msra.mxu0 %v1998
      %2114 = vmatprep.subr.mxu0 %v1997
      %2115 = vmatpush2.msra.mxu0 %v1996
      %2116 = vmatprep.subr.mxu0 %v1995
      %2117 = vmatpush2.msra.mxu0 %v1994
      %2118 = vmatprep.subr.mxu0 %v1993
      %2119 = vmatpush2.msra.mxu0 %v1992
      %2120 = vmatprep.subr.mxu0 %v1991
      %2121 = vmatpush2.msra.mxu0 %v1990
      %2122 = vmatprep.subr.mxu0 %v1989
      %2123 = vmatpush2.msra.mxu0 %v1988
      %2124 = vmatprep.subr.mxu0 %v1987
      %2125 = vmatpush2.msra.mxu0 %v1986
      %2126 = vmatprep.subr.mxu0 %v1985
      %2127 = vmatpush2.msra.mxu0 %v1984
      %2128 = vmatprep.subr.mxu0 %v1983
      %2129 = vmatpush2.msra.mxu0 %v1982
      %2130 = vmatprep.subr.mxu0 %v1981
      %2131 = vmatpush2.msra.mxu0 %v1980
      %2132 = vmatprep.subr.mxu0 %v1979
      %2133 = vmatpush2.msra.mxu0 %v1978
      %2134 = vmatprep.subr.mxu0 %v1977
      %2135 = vmatpush2.msra.mxu0 %v1976
      %2136 = vmatprep.subr.mxu0 %v1975
      %2137 = vmatpush2.msra.mxu0 %v1974
      %2138 = vmatprep.subr.mxu0 %v1973
      %2139 = vmatpush2.msra.mxu0 %v1972
      %2140 = vmatprep.mubr.f32.mxu0 %v1925
      %2141 = vmatmul.mubr.f32.gmra.mxu0 %v1924
      %v2142 = vpop.f32.mrf.mxu0
      %v2143 = vadd.f32 %v2047, %v2142
      %v2144 = vpop.f32.mrf.mxu0
      %v2145 = vadd.f32 %v2047, %v2144
      %2146 = vmatprep.mubr.f32.mxu0 %v1929
      %2147 = vmatmul.mubr.f32.gmra.mxu0 %v1928
      %v2148 = vpop.f32.mrf.mxu0
      %v2149 = vadd.f32 %v2052, %v2148
      %v2150 = vpop.f32.mrf.mxu0
      %v2151 = vadd.f32 %v2052, %v2150
      %2152 = vmatprep.mubr.f32.mxu0 %v1933
      %2153 = vmatmul.mubr.f32.gmra.mxu0 %v1932
      %v2154 = vpop.f32.mrf.mxu0
      %v2155 = vadd.f32 %v2057, %v2154
      %v2156 = vpop.f32.mrf.mxu0
      %v2157 = vadd.f32 %v2057, %v2156
      %2158 = vmatprep.mubr.f32.mxu0 %v1937
      %2159 = vmatmul.mubr.f32.gmra.mxu0 %v1936
      %v2160 = vpop.f32.mrf.mxu0
      %v2161 = vadd.f32 %v2062, %v2160
      %v2162 = vpop.f32.mrf.mxu0
      %v2163 = vadd.f32 %v2062, %v2162
      %2164 = vdwg.mxu0
      %2165 = vmatprep.subr.mxu0 %v2035
      %2166 = vmatpush1.msra.mxu0 %v2034
      %2167 = vmatprep.subr.mxu0 %v2033
      %2168 = vmatpush1.msra.mxu0 %v2032
      %2169 = vmatprep.subr.mxu0 %v2031
      %2170 = vmatpush1.msra.mxu0 %v2030
      %2171 = vmatprep.subr.mxu0 %v2029
      %2172 = vmatpush1.msra.mxu0 %v2028
      %2173 = vmatprep.subr.mxu0 %v2027
      %2174 = vmatpush1.msra.mxu0 %v2026
      %2175 = vmatprep.subr.mxu0 %v2025
      %2176 = vmatpush1.msra.mxu0 %v2024
      %2177 = vmatprep.subr.mxu0 %v2023
      %2178 = vmatpush1.msra.mxu0 %v2022
      %2179 = vmatprep.subr.mxu0 %v2021
      %2180 = vmatpush1.msra.mxu0 %v2020
      %2181 = vmatprep.subr.mxu0 %v2019
      %2182 = vmatpush1.msra.mxu0 %v2018
      %2183 = vmatprep.subr.mxu0 %v2017
      %2184 = vmatpush1.msra.mxu0 %v2016
      %2185 = vmatprep.subr.mxu0 %v2015
      %2186 = vmatpush1.msra.mxu0 %v2014
      %2187 = vmatprep.subr.mxu0 %v2013
      %2188 = vmatpush1.msra.mxu0 %v2012
      %2189 = vmatprep.subr.mxu0 %v2011
      %2190 = vmatpush1.msra.mxu0 %v2010
      %2191 = vmatprep.subr.mxu0 %v2009
      %2192 = vmatpush1.msra.mxu0 %v2008
      %2193 = vmatprep.subr.mxu0 %v2007
      %2194 = vmatpush1.msra.mxu0 %v2006
      %2195 = vmatprep.subr.mxu0 %v2005
      %2196 = vmatpush1.msra.mxu0 %v2004
      %2197 = vmatprep.subr.mxu0 0.0
      %2198 = vmatpush2.msra.mxu0 0.0
      %2199 = vmatprep.subr.mxu0 0.0
      %2200 = vmatpush2.msra.mxu0 0.0
      %2201 = vmatprep.subr.mxu0 0.0
      %2202 = vmatpush2.msra.mxu0 0.0
      %2203 = vmatprep.subr.mxu0 0.0
      %2204 = vmatpush2.msra.mxu0 0.0
      %2205 = vmatprep.subr.mxu0 0.0
      %2206 = vmatpush2.msra.mxu0 0.0
      %2207 = vmatprep.subr.mxu0 0.0
      %2208 = vmatpush2.msra.mxu0 0.0
      %2209 = vmatprep.subr.mxu0 0.0
      %2210 = vmatpush2.msra.mxu0 0.0
      %2211 = vmatprep.subr.mxu0 0.0
      %2212 = vmatpush2.msra.mxu0 0.0
      %2213 = vmatprep.subr.mxu0 0.0
      %2214 = vmatpush2.msra.mxu0 0.0
      %2215 = vmatprep.subr.mxu0 0.0
      %2216 = vmatpush2.msra.mxu0 0.0
      %2217 = vmatprep.subr.mxu0 0.0
      %2218 = vmatpush2.msra.mxu0 0.0
      %2219 = vmatprep.subr.mxu0 0.0
      %2220 = vmatpush2.msra.mxu0 0.0
      %2221 = vmatprep.subr.mxu0 0.0
      %2222 = vmatpush2.msra.mxu0 0.0
      %2223 = vmatprep.subr.mxu0 0.0
      %2224 = vmatpush2.msra.mxu0 0.0
      %2225 = vmatprep.subr.mxu0 %v2039
      %2226 = vmatpush2.msra.mxu0 %v2038
      %2227 = vmatprep.subr.mxu0 %v2037
      %2228 = vmatpush2.msra.mxu0 %v2036
      %2229 = vmatprep.mubr.f32.mxu0 %v2065
      %2230 = vmatmul.mubr.f32.gmra.mxu0 %v1926
      %v2231 = vpop.f32.mrf.mxu0
      %v2232 = vadd.f32 %v2143, %v2231
      %v2233 = vpop.f32.mrf.mxu0
      %v2234 = vadd.f32 %v2145, %v2233
      %2235 = vmatprep.mubr.f32.mxu0 %v2068
      %2236 = vmatmul.mubr.f32.gmra.mxu0 %v1930
      %v2237 = vpop.f32.mrf.mxu0
      %v2238 = vadd.f32 %v2149, %v2237
      %v2239 = vpop.f32.mrf.mxu0
      %v2240 = vadd.f32 %v2151, %v2239
      %2241 = vmatprep.mubr.f32.mxu0 %v2071
      %2242 = vmatmul.mubr.f32.gmra.mxu0 %v1934
      %v2243 = vpop.f32.mrf.mxu0
      %v2244 = vadd.f32 %v2155, %v2243
      %v2245 = vpop.f32.mrf.mxu0
      %v2246 = vadd.f32 %v2157, %v2245
      %2247 = vmatprep.mubr.f32.mxu0 %v2074
      %2248 = vmatmul.mubr.f32.gmra.mxu0 %v1938
      %v2249 = vpop.f32.mrf.mxu0
      %v2250 = vadd.f32 %v2161, %v2249
      %v2251 = vpop.f32.mrf.mxu0
      %v2252 = vadd.f32 %v2163, %v2251
      %2253 = vdwg.mxu0
      %vm2254 = vcmp.ge.f32.partialorder %v2232, 0.0
      %vm2255 = vcmp.ge.f32.partialorder %v2234, 0.0
      %vm2256 = vcmp.ge.f32.partialorder %v2238, 0.0
      %vm2257 = vcmp.ge.f32.partialorder %v2240, 0.0
      %vm2258 = vcmp.ge.f32.partialorder %v2244, 0.0
      %vm2259 = vcmp.ge.f32.partialorder %v2246, 0.0
      %vm2260 = vcmp.ge.f32.partialorder %v2250, 0.0
      %vm2261 = vcmp.ge.f32.partialorder %v2252, 0.0
      %v2262 = vmul.f32 %v2232, 0.2
      %v2263 = vmul.f32 %v2234, 0.2
      %v2264 = vmul.f32 %v2238, 0.2
      %v2265 = vmul.f32 %v2240, 0.2
      %v2266 = vmul.f32 %v2244, 0.2
      %v2267 = vmul.f32 %v2246, 0.2
      %v2268 = vmul.f32 %v2250, 0.2
      %v2269 = vmul.f32 %v2252, 0.2
      %v2270 = vsel %vm2254, %v2232, %v2262
      %v2271 = vsel %vm2255, %v2234, %v2263
      %v2272 = vsel %vm2256, %v2238, %v2264
      %v2273 = vsel %vm2257, %v2240, %v2265
      %v2274 = vsel %vm2258, %v2244, %v2266
      %v2275 = vsel %vm2259, %v2246, %v2267
      %v2276 = vsel %vm2260, %v2250, %v2268
      %v2277 = vsel %vm2261, %v2252, %v2269
      %v2278 = vld [vmem:[%s6] sm:$0xff]
      %v2279 = vld [vmem:[%s6 + $0x8] sm:$0xff]
      %v2280 = vld [vmem:[%s6 + $0x10] sm:$0xff]
      %v2281 = vld [vmem:[%s6 + $0x18] sm:$0xff]
      %2283 = vset.pattern.permute.xlu0 0
      %2284 = vperm.xlu0 %2283, %v2278
      %v2285 = vpop.permute.xlu0 %2284
      %2288 = vset.pattern.permute.xlu0 0
      %2289 = vperm.xlu0 %2288, %v2279
      %v2290 = vpop.permute.xlu0 %2289
      %2293 = vset.pattern.permute.xlu0 0
      %2294 = vperm.xlu0 %2293, %v2280
      %v2295 = vpop.permute.xlu0 %2294
      %2298 = vset.pattern.permute.xlu0 0
      %2299 = vperm.xlu0 %2298, %v2281
      %v2300 = vpop.permute.xlu0 %2299
      %v2302 = vmul.f32 %v2270, %v2285
      %v2303 = vmul.f32 %v2271, %v2285
      %v2304 = vmul.f32 %v2272, %v2290
      %v2305 = vmul.f32 %v2273, %v2290
      %v2306 = vmul.f32 %v2274, %v2295
      %v2307 = vmul.f32 %v2275, %v2295
      %v2308 = vmul.f32 %v2276, %v2300
      %v2309 = vmul.f32 %v2277, %v2300
      %v2310 = vadd.f32 %v2302, %v2304
      %v2311 = vadd.f32 %v2310, %v2306
      %v2312 = vadd.f32 %v2311, %v2308
      %v2313 = vrot.slane %v2312, 4
      %v2314 = vadd.f32 %v2312, %v2313
      %v2315 = vrot.slane %v2314, 2
      %v2316 = vadd.f32 %v2314, %v2315
      %v2317 = vrot.slane %v2316, 1
      %v2318 = vadd.f32 %v2316, %v2317
      %v2319 = vadd.f32 %v2303, %v2305
      %v2320 = vadd.f32 %v2319, %v2307
      %v2321 = vadd.f32 %v2320, %v2309
      %v2322 = vrot.slane %v2321, 4
      %v2323 = vadd.f32 %v2321, %v2322
      %v2324 = vrot.slane %v2323, 2
      %v2325 = vadd.f32 %v2323, %v2324
      %v2326 = vrot.slane %v2325, 1
      %v2327 = vadd.f32 %v2325, %v2326
      %v2328 = vld [vmem:[%s7] sm:$0x1]
      %2330 = vset.pattern.permute.xlu0 0
      %2331 = vperm.xlu0 %2330, %v2328
      %v2332 = vpop.permute.xlu0 %2331
      %v2334 = vlaneseq
      %v2335 = vshrl.u32 %v2334, 7
      %v2336 = vsub.s32 0, %v2335
      %v2337 = vrot.slane %v2332, %v2336
      %v2338 = vadd.f32 %v2318, %v2337
      %v2339 = vadd.f32 %v2327, %v2337
      %v2340 = vld [vmem:[%s317] ss:$4 sm:$0x3]
      %v2341 = vxor.u32 %v2338, 2147483648
      %v2342 = vxor.u32 %v2339, 2147483648
      %v2343 = vmul.f32 %v2341, 1.442695
      %v2344 = vpow.pop %v2343
      %v2345 = vmul.f32 %v2342, 1.442695
      %v2346 = vpow.pop %v2345
      %v2347 = vadd.f32 %v2344, 1.0
      %v2348 = vadd.f32 %v2346, 1.0
      %v2349 = vrcp.pop %v2347
      %v2350 = vmul.f32 1.0, %v2349
      %v2351 = vrcp.pop %v2348
      %v2352 = vmul.f32 1.0, %v2351
      %v2355 = vcombine.low %v2350, %v2352
      %v2357 = vunpack.c.l.s4 1966171168
      %v2358 = vunpack.c.0.s8 %v2357
      %v2359 = vlaneseq
      %v2360 = vshrl.u32 %v2359, 7
      %v2361 = vsub.s32 %v2358, %v2360
      %v2362 = vrot.slane %v2355, %v2361
      %v2364 = vunpack.c.l.s4 1966171168
      %v2365 = vunpack.c.0.s8 %v2364
      %v2366 = vlaneseq
      %v2367 = vshrl.u32 %v2366, 7
      %v2368 = vsub.s32 %v2365, %v2367
      %v2369 = vrot.slane %v2362, %v2368
      %v2371 = vmul.f32 %v2340, %v2369
      %v2372 = vlaneseq
      %vm2373 = vcmp.ge.s32.totalorder %v2372, 0
      %vm2374 = vcmp.lt.s32.totalorder %v2372, 256
      %vm2375 = vmand %vm2373, %vm2374
      %2376 = vst.msk [vmem:[%s322] ss:$4 sm:$0x3] %vm2375, %v2371
      %s2377 = scalar_lea.vmem %s2, 16
      %v2378 = vld [vmem:[%s2377] sm:$0xff]
      %v2379 = vld [vmem:[%s2377 + $0x8] sm:$0xff]
      %2382 = vrot.lane.b32.xlu0 %v2338, 34
      %v2383 = vpop.permute.xlu0 %2382
      %2384 = vrot.lane.b32.xlu0 %v2339, 34
      %v2385 = vpop.permute.xlu0 %2384
      %v2386 = vsel %vm424, %v2383, %v2385
      %v2389 = vsel %vm424, 0.0, %v2383
      %v2390 = vmul.f32 %v2389, %v360
      %v2391 = vmul.f32 %v2386, %v361
      %2393 = vset.pattern.permute.xlu0 0
      %2394 = vperm.xlu0 %2393, %v2378
      %v2395 = vpop.permute.xlu0 %2394
      %2398 = vset.pattern.permute.xlu0 0
      %2399 = vperm.xlu0 %2398, %v2379
      %v2400 = vpop.permute.xlu0 %2399
      %v2402 = vlaneseq
      %v2403 = vshrl.u32 %v2402, 7
      %v2404 = vsub.s32 0, %v2403
      %v2405 = vrot.slane %v2390, %v2404
      %v2406 = vlaneseq
      %v2407 = vshrl.u32 %v2406, 7
      %v2408 = vsub.s32 0, %v2407
      %v2409 = vrot.slane %v2391, %v2408
      %v2410 = vmul.f32 %v2395, %v2405
      %v2411 = vmul.f32 %v2395, %v2409
      %v2412 = vmul.f32 %v2400, %v2405
      %v2413 = vmul.f32 %v2400, %v2409
      %v2414 = vadd.f32 %v2410, 0.0
      %v2415 = vadd.f32 %v2411, 0.0
      %v2416 = vadd.f32 %v2412, 0.0
      %v2417 = vadd.f32 %v2413, 0.0
      %2418 = vrot.lane.b32.xlu0 %v2338, 33
      %v2419 = vpop.permute.xlu0 %2418
      %2420 = vrot.lane.b32.xlu0 %v2339, 33
      %v2421 = vpop.permute.xlu0 %2420
      %v2422 = vsel %vm461, %v2419, %v2421
      %v2425 = vsel %vm461, 0.0, %v2419
      %v2426 = vmul.f32 %v2425, %v372
      %v2427 = vmul.f32 %v2422, %v373
      %2428 = vset.pattern.permute.xlu0 1
      %2429 = vperm.xlu0 %2428, %v2378
      %v2430 = vpop.permute.xlu0 %2429
      %2432 = vset.pattern.permute.xlu0 1
      %2433 = vperm.xlu0 %2432, %v2379
      %v2434 = vpop.permute.xlu0 %2433
      %v2436 = vlaneseq
      %v2437 = vshrl.u32 %v2436, 7
      %v2438 = vsub.s32 0, %v2437
      %v2439 = vrot.slane %v2426, %v2438
      %v2440 = vlaneseq
      %v2441 = vshrl.u32 %v2440, 7
      %v2442 = vsub.s32 0, %v2441
      %v2443 = vrot.slane %v2427, %v2442
      %v2444 = vmul.f32 %v2430, %v2439
      %v2445 = vmul.f32 %v2430, %v2443
      %v2446 = vmul.f32 %v2434, %v2439
      %v2447 = vmul.f32 %v2434, %v2443
      %v2448 = vadd.f32 %v2414, %v2444
      %v2449 = vadd.f32 %v2415, %v2445
      %v2450 = vadd.f32 %v2416, %v2446
      %v2451 = vadd.f32 %v2417, %v2447
      %2452 = vrot.lane.b32.xlu0 %v2338, 32
      %v2453 = vpop.permute.xlu0 %2452
      %2454 = vrot.lane.b32.xlu0 %v2339, 32
      %v2455 = vpop.permute.xlu0 %2454
      %v2456 = vsel %vm496, %v2453, %v2455
      %v2459 = vsel %vm496, 0.0, %v2453
      %v2460 = vmul.f32 %v2459, %v382
      %v2461 = vmul.f32 %v2456, %v383
      %2462 = vset.pattern.permute.xlu0 2
      %2463 = vperm.xlu0 %2462, %v2378
      %v2464 = vpop.permute.xlu0 %2463
      %2466 = vset.pattern.permute.xlu0 2
      %2467 = vperm.xlu0 %2466, %v2379
      %v2468 = vpop.permute.xlu0 %2467
      %v2470 = vlaneseq
      %v2471 = vshrl.u32 %v2470, 7
      %v2472 = vsub.s32 0, %v2471
      %v2473 = vrot.slane %v2460, %v2472
      %v2474 = vlaneseq
      %v2475 = vshrl.u32 %v2474, 7
      %v2476 = vsub.s32 0, %v2475
      %v2477 = vrot.slane %v2461, %v2476
      %v2478 = vmul.f32 %v2464, %v2473
      %v2479 = vmul.f32 %v2464, %v2477
      %v2480 = vmul.f32 %v2468, %v2473
      %v2481 = vmul.f32 %v2468, %v2477
      %v2482 = vadd.f32 %v2448, %v2478
      %v2483 = vadd.f32 %v2449, %v2479
      %v2484 = vadd.f32 %v2450, %v2480
      %v2485 = vadd.f32 %v2451, %v2481
      %2486 = vrot.lane.b32.xlu0 %v2338, 31
      %v2487 = vpop.permute.xlu0 %2486
      %2488 = vrot.lane.b32.xlu0 %v2339, 31
      %v2489 = vpop.permute.xlu0 %2488
      %v2490 = vsel %vm531, %v2487, %v2489
      %v2493 = vsel %vm531, 0.0, %v2487
      %v2494 = vmul.f32 %v2493, %v394
      %v2495 = vmul.f32 %v2490, %v395
      %2496 = vset.pattern.permute.xlu0 3
      %2497 = vperm.xlu0 %2496, %v2378
      %v2498 = vpop.permute.xlu0 %2497
      %2500 = vset.pattern.permute.xlu0 3
      %2501 = vperm.xlu0 %2500, %v2379
      %v2502 = vpop.permute.xlu0 %2501
      %v2504 = vlaneseq
      %v2505 = vshrl.u32 %v2504, 7
      %v2506 = vsub.s32 0, %v2505
      %v2507 = vrot.slane %v2494, %v2506
      %v2508 = vlaneseq
      %v2509 = vshrl.u32 %v2508, 7
      %v2510 = vsub.s32 0, %v2509
      %v2511 = vrot.slane %v2495, %v2510
      %v2512 = vmul.f32 %v2498, %v2507
      %v2513 = vmul.f32 %v2498, %v2511
      %v2514 = vmul.f32 %v2502, %v2507
      %v2515 = vmul.f32 %v2502, %v2511
      %v2516 = vadd.f32 %v2482, %v2512
      %v2517 = vadd.f32 %v2483, %v2513
      %v2518 = vadd.f32 %v2484, %v2514
      %v2519 = vadd.f32 %v2485, %v2515
      %2520 = vrot.lane.b32.xlu0 %v2338, 30
      %v2521 = vpop.permute.xlu0 %2520
      %2522 = vrot.lane.b32.xlu0 %v2339, 30
      %v2523 = vpop.permute.xlu0 %2522
      %v2524 = vsel %vm566, %v2521, %v2523
      %v2527 = vsel %vm566, 0.0, %v2521
      %v2528 = vmul.f32 %v2527, %v406
      %v2529 = vmul.f32 %v2524, %v407
      %2530 = vset.pattern.permute.xlu0 4
      %2531 = vperm.xlu0 %2530, %v2378
      %v2532 = vpop.permute.xlu0 %2531
      %2534 = vset.pattern.permute.xlu0 4
      %2535 = vperm.xlu0 %2534, %v2379
      %v2536 = vpop.permute.xlu0 %2535
      %v2538 = vlaneseq
      %v2539 = vshrl.u32 %v2538, 7
      %v2540 = vsub.s32 0, %v2539
      %v2541 = vrot.slane %v2528, %v2540
      %v2542 = vlaneseq
      %v2543 = vshrl.u32 %v2542, 7
      %v2544 = vsub.s32 0, %v2543
      %v2545 = vrot.slane %v2529, %v2544
      %v2546 = vmul.f32 %v2532, %v2541
      %v2547 = vmul.f32 %v2532, %v2545
      %v2548 = vmul.f32 %v2536, %v2541
      %v2549 = vmul.f32 %v2536, %v2545
      %v2550 = vadd.f32 %v2516, %v2546
      %v2551 = vadd.f32 %v2517, %v2547
      %v2552 = vadd.f32 %v2518, %v2548
      %v2553 = vadd.f32 %v2519, %v2549
      %2554 = vrot.lane.b32.xlu0 %v2338, 18
      %v2555 = vpop.permute.xlu0 %2554
      %2556 = vrot.lane.b32.xlu0 %v2339, 18
      %v2557 = vpop.permute.xlu0 %2556
      %v2558 = vsel %vm601, %v2555, %v2557
      %v2561 = vsel %vm601, 0.0, %v2555
      %v2562 = vmul.f32 %v2561, %v360
      %v2563 = vmul.f32 %v2558, %v361
      %2564 = vset.pattern.permute.xlu0 5
      %2565 = vperm.xlu0 %2564, %v2378
      %v2566 = vpop.permute.xlu0 %2565
      %2568 = vset.pattern.permute.xlu0 5
      %2569 = vperm.xlu0 %2568, %v2379
      %v2570 = vpop.permute.xlu0 %2569
      %v2572 = vlaneseq
      %v2573 = vshrl.u32 %v2572, 7
      %v2574 = vsub.s32 0, %v2573
      %v2575 = vrot.slane %v2562, %v2574
      %v2576 = vlaneseq
      %v2577 = vshrl.u32 %v2576, 7
      %v2578 = vsub.s32 0, %v2577
      %v2579 = vrot.slane %v2563, %v2578
      %v2580 = vmul.f32 %v2566, %v2575
      %v2581 = vmul.f32 %v2566, %v2579
      %v2582 = vmul.f32 %v2570, %v2575
      %v2583 = vmul.f32 %v2570, %v2579
      %v2584 = vadd.f32 %v2550, %v2580
      %v2585 = vadd.f32 %v2551, %v2581
      %v2586 = vadd.f32 %v2552, %v2582
      %v2587 = vadd.f32 %v2553, %v2583
      %2588 = vrot.lane.b32.xlu0 %v2338, 17
      %v2589 = vpop.permute.xlu0 %2588
      %2590 = vrot.lane.b32.xlu0 %v2339, 17
      %v2591 = vpop.permute.xlu0 %2590
      %v2592 = vsel %vm636, %v2589, %v2591
      %v2595 = vsel %vm636, 0.0, %v2589
      %v2596 = vmul.f32 %v2595, %v372
      %v2597 = vmul.f32 %v2592, %v373
      %2598 = vset.pattern.permute.xlu0 6
      %2599 = vperm.xlu0 %2598, %v2378
      %v2600 = vpop.permute.xlu0 %2599
      %2602 = vset.pattern.permute.xlu0 6
      %2603 = vperm.xlu0 %2602, %v2379
      %v2604 = vpop.permute.xlu0 %2603
      %v2606 = vlaneseq
      %v2607 = vshrl.u32 %v2606, 7
      %v2608 = vsub.s32 0, %v2607
      %v2609 = vrot.slane %v2596, %v2608
      %v2610 = vlaneseq
      %v2611 = vshrl.u32 %v2610, 7
      %v2612 = vsub.s32 0, %v2611
      %v2613 = vrot.slane %v2597, %v2612
      %v2614 = vmul.f32 %v2600, %v2609
      %v2615 = vmul.f32 %v2600, %v2613
      %v2616 = vmul.f32 %v2604, %v2609
      %v2617 = vmul.f32 %v2604, %v2613
      %v2618 = vadd.f32 %v2584, %v2614
      %v2619 = vadd.f32 %v2585, %v2615
      %v2620 = vadd.f32 %v2586, %v2616
      %v2621 = vadd.f32 %v2587, %v2617
      %2622 = vrot.lane.b32.xlu0 %v2338, 16
      %v2623 = vpop.permute.xlu0 %2622
      %2624 = vrot.lane.b32.xlu0 %v2339, 16
      %v2625 = vpop.permute.xlu0 %2624
      %v2626 = vsel %vm671, %v2623, %v2625
      %v2629 = vsel %vm671, 0.0, %v2623
      %v2630 = vmul.f32 %v2629, %v382
      %v2631 = vmul.f32 %v2626, %v383
      %2632 = vset.pattern.permute.xlu0 7
      %2633 = vperm.xlu0 %2632, %v2378
      %v2634 = vpop.permute.xlu0 %2633
      %2636 = vset.pattern.permute.xlu0 7
      %2637 = vperm.xlu0 %2636, %v2379
      %v2638 = vpop.permute.xlu0 %2637
      %v2640 = vlaneseq
      %v2641 = vshrl.u32 %v2640, 7
      %v2642 = vsub.s32 0, %v2641
      %v2643 = vrot.slane %v2630, %v2642
      %v2644 = vlaneseq
      %v2645 = vshrl.u32 %v2644, 7
      %v2646 = vsub.s32 0, %v2645
      %v2647 = vrot.slane %v2631, %v2646
      %v2648 = vmul.f32 %v2634, %v2643
      %v2649 = vmul.f32 %v2634, %v2647
      %v2650 = vmul.f32 %v2638, %v2643
      %v2651 = vmul.f32 %v2638, %v2647
      %v2652 = vadd.f32 %v2618, %v2648
      %v2653 = vadd.f32 %v2619, %v2649
      %v2654 = vadd.f32 %v2620, %v2650
      %v2655 = vadd.f32 %v2621, %v2651
      %2656 = vrot.lane.b32.xlu0 %v2338, 15
      %v2657 = vpop.permute.xlu0 %2656
      %2658 = vrot.lane.b32.xlu0 %v2339, 15
      %v2659 = vpop.permute.xlu0 %2658
      %v2660 = vsel %vm706, %v2657, %v2659
      %v2663 = vsel %vm706, 0.0, %v2657
      %v2664 = vmul.f32 %v2663, %v394
      %v2665 = vmul.f32 %v2660, %v395
      %2666 = vset.pattern.permute.xlu0 8
      %2667 = vperm.xlu0 %2666, %v2378
      %v2668 = vpop.permute.xlu0 %2667
      %2670 = vset.pattern.permute.xlu0 8
      %2671 = vperm.xlu0 %2670, %v2379
      %v2672 = vpop.permute.xlu0 %2671
      %v2674 = vlaneseq
      %v2675 = vshrl.u32 %v2674, 7
      %v2676 = vsub.s32 0, %v2675
      %v2677 = vrot.slane %v2664, %v2676
      %v2678 = vlaneseq
      %v2679 = vshrl.u32 %v2678, 7
      %v2680 = vsub.s32 0, %v2679
      %v2681 = vrot.slane %v2665, %v2680
      %v2682 = vmul.f32 %v2668, %v2677
      %v2683 = vmul.f32 %v2668, %v2681
      %v2684 = vmul.f32 %v2672, %v2677
      %v2685 = vmul.f32 %v2672, %v2681
      %v2686 = vadd.f32 %v2652, %v2682
      %v2687 = vadd.f32 %v2653, %v2683
      %v2688 = vadd.f32 %v2654, %v2684
      %v2689 = vadd.f32 %v2655, %v2685
      %2690 = vrot.lane.b32.xlu0 %v2338, 14
      %v2691 = vpop.permute.xlu0 %2690
      %2692 = vrot.lane.b32.xlu0 %v2339, 14
      %v2693 = vpop.permute.xlu0 %2692
      %v2694 = vsel %vm741, %v2691, %v2693
      %v2697 = vsel %vm741, 0.0, %v2691
      %v2698 = vmul.f32 %v2697, %v406
      %v2699 = vmul.f32 %v2694, %v407
      %2700 = vset.pattern.permute.xlu0 9
      %2701 = vperm.xlu0 %2700, %v2378
      %v2702 = vpop.permute.xlu0 %2701
      %2704 = vset.pattern.permute.xlu0 9
      %2705 = vperm.xlu0 %2704, %v2379
      %v2706 = vpop.permute.xlu0 %2705
      %v2708 = vlaneseq
      %v2709 = vshrl.u32 %v2708, 7
      %v2710 = vsub.s32 0, %v2709
      %v2711 = vrot.slane %v2698, %v2710
      %v2712 = vlaneseq
      %v2713 = vshrl.u32 %v2712, 7
      %v2714 = vsub.s32 0, %v2713
      %v2715 = vrot.slane %v2699, %v2714
      %v2716 = vmul.f32 %v2702, %v2711
      %v2717 = vmul.f32 %v2702, %v2715
      %v2718 = vmul.f32 %v2706, %v2711
      %v2719 = vmul.f32 %v2706, %v2715
      %v2720 = vadd.f32 %v2686, %v2716
      %v2721 = vadd.f32 %v2687, %v2717
      %v2722 = vadd.f32 %v2688, %v2718
      %v2723 = vadd.f32 %v2689, %v2719
      %2724 = vrot.lane.b32.xlu0 %v2338, 2
      %v2725 = vpop.permute.xlu0 %2724
      %2726 = vrot.lane.b32.xlu0 %v2339, 2
      %v2727 = vpop.permute.xlu0 %2726
      %v2728 = vsel %vm776, %v2725, %v2727
      %v2731 = vsel %vm776, 0.0, %v2725
      %v2732 = vmul.f32 %v2731, %v360
      %v2733 = vmul.f32 %v2728, %v361
      %2734 = vset.pattern.permute.xlu0 10
      %2735 = vperm.xlu0 %2734, %v2378
      %v2736 = vpop.permute.xlu0 %2735
      %2738 = vset.pattern.permute.xlu0 10
      %2739 = vperm.xlu0 %2738, %v2379
      %v2740 = vpop.permute.xlu0 %2739
      %v2742 = vlaneseq
      %v2743 = vshrl.u32 %v2742, 7
      %v2744 = vsub.s32 0, %v2743
      %v2745 = vrot.slane %v2732, %v2744
      %v2746 = vlaneseq
      %v2747 = vshrl.u32 %v2746, 7
      %v2748 = vsub.s32 0, %v2747
      %v2749 = vrot.slane %v2733, %v2748
      %v2750 = vmul.f32 %v2736, %v2745
      %v2751 = vmul.f32 %v2736, %v2749
      %v2752 = vmul.f32 %v2740, %v2745
      %v2753 = vmul.f32 %v2740, %v2749
      %v2754 = vadd.f32 %v2720, %v2750
      %v2755 = vadd.f32 %v2721, %v2751
      %v2756 = vadd.f32 %v2722, %v2752
      %v2757 = vadd.f32 %v2723, %v2753
      %2758 = vrot.lane.b32.xlu0 %v2338, 1
      %v2759 = vpop.permute.xlu0 %2758
      %2760 = vrot.lane.b32.xlu0 %v2339, 1
      %v2761 = vpop.permute.xlu0 %2760
      %v2762 = vsel %vm811, %v2759, %v2761
      %v2765 = vsel %vm811, 0.0, %v2759
      %v2766 = vmul.f32 %v2765, %v372
      %v2767 = vmul.f32 %v2762, %v373
      %2768 = vset.pattern.permute.xlu0 11
      %2769 = vperm.xlu0 %2768, %v2378
      %v2770 = vpop.permute.xlu0 %2769
      %2772 = vset.pattern.permute.xlu0 11
      %2773 = vperm.xlu0 %2772, %v2379
      %v2774 = vpop.permute.xlu0 %2773
      %v2776 = vlaneseq
      %v2777 = vshrl.u32 %v2776, 7
      %v2778 = vsub.s32 0, %v2777
      %v2779 = vrot.slane %v2766, %v2778
      %v2780 = vlaneseq
      %v2781 = vshrl.u32 %v2780, 7
      %v2782 = vsub.s32 0, %v2781
      %v2783 = vrot.slane %v2767, %v2782
      %v2784 = vmul.f32 %v2770, %v2779
      %v2785 = vmul.f32 %v2770, %v2783
      %v2786 = vmul.f32 %v2774, %v2779
      %v2787 = vmul.f32 %v2774, %v2783
      %v2788 = vadd.f32 %v2754, %v2784
      %v2789 = vadd.f32 %v2755, %v2785
      %v2790 = vadd.f32 %v2756, %v2786
      %v2791 = vadd.f32 %v2757, %v2787
      %v2792 = vmul.f32 %v2338, %v382
      %v2793 = vmul.f32 %v2339, %v383
      %2794 = vset.pattern.permute.xlu0 12
      %2795 = vperm.xlu0 %2794, %v2378
      %v2796 = vpop.permute.xlu0 %2795
      %2798 = vset.pattern.permute.xlu0 12
      %2799 = vperm.xlu0 %2798, %v2379
      %v2800 = vpop.permute.xlu0 %2799
      %v2802 = vmul.f32 %v2796, %v2792
      %v2803 = vmul.f32 %v2796, %v2793
      %v2804 = vmul.f32 %v2800, %v2792
      %v2805 = vmul.f32 %v2800, %v2793
      %v2806 = vadd.f32 %v2788, %v2802
      %v2807 = vadd.f32 %v2789, %v2803
      %v2808 = vadd.f32 %v2790, %v2804
      %v2809 = vadd.f32 %v2791, %v2805
      %2810 = vrot.lane.b32.xlu0 %v2338, 127
      %v2811 = vpop.permute.xlu0 %2810
      %2812 = vrot.lane.b32.xlu0 %v2339, 127
      %v2813 = vpop.permute.xlu0 %2812
      %v2814 = vsel %vm892, %v2811, %v2813
      %v2817 = vsel %vm892, %v2813, 0.0
      %v2818 = vmul.f32 %v2814, %v394
      %v2819 = vmul.f32 %v2817, %v395
      %2820 = vset.pattern.permute.xlu0 13
      %2821 = vperm.xlu0 %2820, %v2378
      %v2822 = vpop.permute.xlu0 %2821
      %2824 = vset.pattern.permute.xlu0 13
      %2825 = vperm.xlu0 %2824, %v2379
      %v2826 = vpop.permute.xlu0 %2825
      %v2828 = vlaneseq
      %v2829 = vshrl.u32 %v2828, 7
      %v2830 = vsub.s32 0, %v2829
      %v2831 = vrot.slane %v2818, %v2830
      %v2832 = vlaneseq
      %v2833 = vshrl.u32 %v2832, 7
      %v2834 = vsub.s32 0, %v2833
      %v2835 = vrot.slane %v2819, %v2834
      %v2836 = vmul.f32 %v2822, %v2831
      %v2837 = vmul.f32 %v2822, %v2835
      %v2838 = vmul.f32 %v2826, %v2831
      %v2839 = vmul.f32 %v2826, %v2835
      %v2840 = vadd.f32 %v2806, %v2836
      %v2841 = vadd.f32 %v2807, %v2837
      %v2842 = vadd.f32 %v2808, %v2838
      %v2843 = vadd.f32 %v2809, %v2839
      %2844 = vrot.lane.b32.xlu0 %v2338, 126
      %v2845 = vpop.permute.xlu0 %2844
      %2846 = vrot.lane.b32.xlu0 %v2339, 126
      %v2847 = vpop.permute.xlu0 %2846
      %v2848 = vsel %vm927, %v2845, %v2847
      %v2851 = vsel %vm927, %v2847, 0.0
      %v2852 = vmul.f32 %v2848, %v406
      %v2853 = vmul.f32 %v2851, %v407
      %2854 = vset.pattern.permute.xlu0 14
      %2855 = vperm.xlu0 %2854, %v2378
      %v2856 = vpop.permute.xlu0 %2855
      %2858 = vset.pattern.permute.xlu0 14
      %2859 = vperm.xlu0 %2858, %v2379
      %v2860 = vpop.permute.xlu0 %2859
      %v2862 = vlaneseq
      %v2863 = vshrl.u32 %v2862, 7
      %v2864 = vsub.s32 0, %v2863
      %v2865 = vrot.slane %v2852, %v2864
      %v2866 = vlaneseq
      %v2867 = vshrl.u32 %v2866, 7
      %v2868 = vsub.s32 0, %v2867
      %v2869 = vrot.slane %v2853, %v2868
      %v2870 = vmul.f32 %v2856, %v2865
      %v2871 = vmul.f32 %v2856, %v2869
      %v2872 = vmul.f32 %v2860, %v2865
      %v2873 = vmul.f32 %v2860, %v2869
      %v2874 = vadd.f32 %v2840, %v2870
      %v2875 = vadd.f32 %v2841, %v2871
      %v2876 = vadd.f32 %v2842, %v2872
      %v2877 = vadd.f32 %v2843, %v2873
      %2878 = vrot.lane.b32.xlu0 %v2338, 114
      %v2879 = vpop.permute.xlu0 %2878
      %2880 = vrot.lane.b32.xlu0 %v2339, 114
      %v2881 = vpop.permute.xlu0 %2880
      %v2882 = vsel %vm962, %v2879, %v2881
      %v2885 = vsel %vm962, %v2881, 0.0
      %v2886 = vmul.f32 %v2882, %v360
      %v2887 = vmul.f32 %v2885, %v361
      %2888 = vset.pattern.permute.xlu0 15
      %2889 = vperm.xlu0 %2888, %v2378
      %v2890 = vpop.permute.xlu0 %2889
      %2892 = vset.pattern.permute.xlu0 15
      %2893 = vperm.xlu0 %2892, %v2379
      %v2894 = vpop.permute.xlu0 %2893
      %v2896 = vlaneseq
      %v2897 = vshrl.u32 %v2896, 7
      %v2898 = vsub.s32 0, %v2897
      %v2899 = vrot.slane %v2886, %v2898
      %v2900 = vlaneseq
      %v2901 = vshrl.u32 %v2900, 7
      %v2902 = vsub.s32 0, %v2901
      %v2903 = vrot.slane %v2887, %v2902
      %v2904 = vmul.f32 %v2890, %v2899
      %v2905 = vmul.f32 %v2890, %v2903
      %v2906 = vmul.f32 %v2894, %v2899
      %v2907 = vmul.f32 %v2894, %v2903
      %v2908 = vadd.f32 %v2874, %v2904
      %v2909 = vadd.f32 %v2875, %v2905
      %v2910 = vadd.f32 %v2876, %v2906
      %v2911 = vadd.f32 %v2877, %v2907
      %2912 = vrot.lane.b32.xlu0 %v2338, 113
      %v2913 = vpop.permute.xlu0 %2912
      %2914 = vrot.lane.b32.xlu0 %v2339, 113
      %v2915 = vpop.permute.xlu0 %2914
      %v2916 = vsel %vm997, %v2913, %v2915
      %v2919 = vsel %vm997, %v2915, 0.0
      %v2920 = vmul.f32 %v2916, %v372
      %v2921 = vmul.f32 %v2919, %v373
      %2922 = vset.pattern.permute.xlu0 16
      %2923 = vperm.xlu0 %2922, %v2378
      %v2924 = vpop.permute.xlu0 %2923
      %2926 = vset.pattern.permute.xlu0 16
      %2927 = vperm.xlu0 %2926, %v2379
      %v2928 = vpop.permute.xlu0 %2927
      %v2930 = vlaneseq
      %v2931 = vshrl.u32 %v2930, 7
      %v2932 = vsub.s32 0, %v2931
      %v2933 = vrot.slane %v2920, %v2932
      %v2934 = vlaneseq
      %v2935 = vshrl.u32 %v2934, 7
      %v2936 = vsub.s32 0, %v2935
      %v2937 = vrot.slane %v2921, %v2936
      %v2938 = vmul.f32 %v2924, %v2933
      %v2939 = vmul.f32 %v2924, %v2937
      %v2940 = vmul.f32 %v2928, %v2933
      %v2941 = vmul.f32 %v2928, %v2937
      %v2942 = vadd.f32 %v2908, %v2938
      %v2943 = vadd.f32 %v2909, %v2939
      %v2944 = vadd.f32 %v2910, %v2940
      %v2945 = vadd.f32 %v2911, %v2941
      %2946 = vrot.lane.b32.xlu0 %v2338, 112
      %v2947 = vpop.permute.xlu0 %2946
      %2948 = vrot.lane.b32.xlu0 %v2339, 112
      %v2949 = vpop.permute.xlu0 %2948
      %v2950 = vsel %vm1032, %v2947, %v2949
      %v2953 = vsel %vm1032, %v2949, 0.0
      %v2954 = vmul.f32 %v2950, %v382
      %v2955 = vmul.f32 %v2953, %v383
      %2956 = vset.pattern.permute.xlu0 17
      %2957 = vperm.xlu0 %2956, %v2378
      %v2958 = vpop.permute.xlu0 %2957
      %2960 = vset.pattern.permute.xlu0 17
      %2961 = vperm.xlu0 %2960, %v2379
      %v2962 = vpop.permute.xlu0 %2961
      %v2964 = vlaneseq
      %v2965 = vshrl.u32 %v2964, 7
      %v2966 = vsub.s32 0, %v2965
      %v2967 = vrot.slane %v2954, %v2966
      %v2968 = vlaneseq
      %v2969 = vshrl.u32 %v2968, 7
      %v2970 = vsub.s32 0, %v2969
      %v2971 = vrot.slane %v2955, %v2970
      %v2972 = vmul.f32 %v2958, %v2967
      %v2973 = vmul.f32 %v2958, %v2971
      %v2974 = vmul.f32 %v2962, %v2967
      %v2975 = vmul.f32 %v2962, %v2971
      %v2976 = vadd.f32 %v2942, %v2972
      %v2977 = vadd.f32 %v2943, %v2973
      %v2978 = vadd.f32 %v2944, %v2974
      %v2979 = vadd.f32 %v2945, %v2975
      %2980 = vrot.lane.b32.xlu0 %v2338, 111
      %v2981 = vpop.permute.xlu0 %2980
      %2982 = vrot.lane.b32.xlu0 %v2339, 111
      %v2983 = vpop.permute.xlu0 %2982
      %v2984 = vsel %vm1067, %v2981, %v2983
      %v2987 = vsel %vm1067, %v2983, 0.0
      %v2988 = vmul.f32 %v2984, %v394
      %v2989 = vmul.f32 %v2987, %v395
      %2990 = vset.pattern.permute.xlu0 18
      %2991 = vperm.xlu0 %2990, %v2378
      %v2992 = vpop.permute.xlu0 %2991
      %2994 = vset.pattern.permute.xlu0 18
      %2995 = vperm.xlu0 %2994, %v2379
      %v2996 = vpop.permute.xlu0 %2995
      %v2998 = vlaneseq
      %v2999 = vshrl.u32 %v2998, 7
      %v3000 = vsub.s32 0, %v2999
      %v3001 = vrot.slane %v2988, %v3000
      %v3002 = vlaneseq
      %v3003 = vshrl.u32 %v3002, 7
      %v3004 = vsub.s32 0, %v3003
      %v3005 = vrot.slane %v2989, %v3004
      %v3006 = vmul.f32 %v2992, %v3001
      %v3007 = vmul.f32 %v2992, %v3005
      %v3008 = vmul.f32 %v2996, %v3001
      %v3009 = vmul.f32 %v2996, %v3005
      %v3010 = vadd.f32 %v2976, %v3006
      %v3011 = vadd.f32 %v2977, %v3007
      %v3012 = vadd.f32 %v2978, %v3008
      %v3013 = vadd.f32 %v2979, %v3009
      %3014 = vrot.lane.b32.xlu0 %v2338, 110
      %v3015 = vpop.permute.xlu0 %3014
      %3016 = vrot.lane.b32.xlu0 %v2339, 110
      %v3017 = vpop.permute.xlu0 %3016
      %v3018 = vsel %vm1102, %v3015, %v3017
      %v3021 = vsel %vm1102, %v3017, 0.0
      %v3022 = vmul.f32 %v3018, %v406
      %v3023 = vmul.f32 %v3021, %v407
      %3024 = vset.pattern.permute.xlu0 19
      %3025 = vperm.xlu0 %3024, %v2378
      %v3026 = vpop.permute.xlu0 %3025
      %3028 = vset.pattern.permute.xlu0 19
      %3029 = vperm.xlu0 %3028, %v2379
      %v3030 = vpop.permute.xlu0 %3029
      %v3032 = vlaneseq
      %v3033 = vshrl.u32 %v3032, 7
      %v3034 = vsub.s32 0, %v3033
      %v3035 = vrot.slane %v3022, %v3034
      %v3036 = vlaneseq
      %v3037 = vshrl.u32 %v3036, 7
      %v3038 = vsub.s32 0, %v3037
      %v3039 = vrot.slane %v3023, %v3038
      %v3040 = vmul.f32 %v3026, %v3035
      %v3041 = vmul.f32 %v3026, %v3039
      %v3042 = vmul.f32 %v3030, %v3035
      %v3043 = vmul.f32 %v3030, %v3039
      %v3044 = vadd.f32 %v3010, %v3040
      %v3045 = vadd.f32 %v3011, %v3041
      %v3046 = vadd.f32 %v3012, %v3042
      %v3047 = vadd.f32 %v3013, %v3043
      %3048 = vrot.lane.b32.xlu0 %v2338, 98
      %v3049 = vpop.permute.xlu0 %3048
      %3050 = vrot.lane.b32.xlu0 %v2339, 98
      %v3051 = vpop.permute.xlu0 %3050
      %v3052 = vsel %vm1137, %v3049, %v3051
      %v3055 = vsel %vm1137, %v3051, 0.0
      %v3056 = vmul.f32 %v3052, %v360
      %v3057 = vmul.f32 %v3055, %v361
      %3058 = vset.pattern.permute.xlu0 20
      %3059 = vperm.xlu0 %3058, %v2378
      %v3060 = vpop.permute.xlu0 %3059
      %3062 = vset.pattern.permute.xlu0 20
      %3063 = vperm.xlu0 %3062, %v2379
      %v3064 = vpop.permute.xlu0 %3063
      %v3066 = vlaneseq
      %v3067 = vshrl.u32 %v3066, 7
      %v3068 = vsub.s32 0, %v3067
      %v3069 = vrot.slane %v3056, %v3068
      %v3070 = vlaneseq
      %v3071 = vshrl.u32 %v3070, 7
      %v3072 = vsub.s32 0, %v3071
      %v3073 = vrot.slane %v3057, %v3072
      %v3074 = vmul.f32 %v3060, %v3069
      %v3075 = vmul.f32 %v3060, %v3073
      %v3076 = vmul.f32 %v3064, %v3069
      %v3077 = vmul.f32 %v3064, %v3073
      %v3078 = vadd.f32 %v3044, %v3074
      %v3079 = vadd.f32 %v3045, %v3075
      %v3080 = vadd.f32 %v3046, %v3076
      %v3081 = vadd.f32 %v3047, %v3077
      %3082 = vrot.lane.b32.xlu0 %v2338, 97
      %v3083 = vpop.permute.xlu0 %3082
      %3084 = vrot.lane.b32.xlu0 %v2339, 97
      %v3085 = vpop.permute.xlu0 %3084
      %v3086 = vsel %vm1172, %v3083, %v3085
      %v3089 = vsel %vm1172, %v3085, 0.0
      %v3090 = vmul.f32 %v3086, %v372
      %v3091 = vmul.f32 %v3089, %v373
      %3092 = vset.pattern.permute.xlu0 21
      %3093 = vperm.xlu0 %3092, %v2378
      %v3094 = vpop.permute.xlu0 %3093
      %3096 = vset.pattern.permute.xlu0 21
      %3097 = vperm.xlu0 %3096, %v2379
      %v3098 = vpop.permute.xlu0 %3097
      %v3100 = vlaneseq
      %v3101 = vshrl.u32 %v3100, 7
      %v3102 = vsub.s32 0, %v3101
      %v3103 = vrot.slane %v3090, %v3102
      %v3104 = vlaneseq
      %v3105 = vshrl.u32 %v3104, 7
      %v3106 = vsub.s32 0, %v3105
      %v3107 = vrot.slane %v3091, %v3106
      %v3108 = vmul.f32 %v3094, %v3103
      %v3109 = vmul.f32 %v3094, %v3107
      %v3110 = vmul.f32 %v3098, %v3103
      %v3111 = vmul.f32 %v3098, %v3107
      %v3112 = vadd.f32 %v3078, %v3108
      %v3113 = vadd.f32 %v3079, %v3109
      %v3114 = vadd.f32 %v3080, %v3110
      %v3115 = vadd.f32 %v3081, %v3111
      %3116 = vrot.lane.b32.xlu0 %v2338, 96
      %v3117 = vpop.permute.xlu0 %3116
      %3118 = vrot.lane.b32.xlu0 %v2339, 96
      %v3119 = vpop.permute.xlu0 %3118
      %v3120 = vsel %vm1207, %v3117, %v3119
      %v3123 = vsel %vm1207, %v3119, 0.0
      %v3124 = vmul.f32 %v3120, %v382
      %v3125 = vmul.f32 %v3123, %v383
      %3126 = vset.pattern.permute.xlu0 22
      %3127 = vperm.xlu0 %3126, %v2378
      %v3128 = vpop.permute.xlu0 %3127
      %3130 = vset.pattern.permute.xlu0 22
      %3131 = vperm.xlu0 %3130, %v2379
      %v3132 = vpop.permute.xlu0 %3131
      %v3134 = vlaneseq
      %v3135 = vshrl.u32 %v3134, 7
      %v3136 = vsub.s32 0, %v3135
      %v3137 = vrot.slane %v3124, %v3136
      %v3138 = vlaneseq
      %v3139 = vshrl.u32 %v3138, 7
      %v3140 = vsub.s32 0, %v3139
      %v3141 = vrot.slane %v3125, %v3140
      %v3142 = vmul.f32 %v3128, %v3137
      %v3143 = vmul.f32 %v3128, %v3141
      %v3144 = vmul.f32 %v3132, %v3137
      %v3145 = vmul.f32 %v3132, %v3141
      %v3146 = vadd.f32 %v3112, %v3142
      %v3147 = vadd.f32 %v3113, %v3143
      %v3148 = vadd.f32 %v3114, %v3144
      %v3149 = vadd.f32 %v3115, %v3145
      %3150 = vrot.lane.b32.xlu0 %v2338, 95
      %v3151 = vpop.permute.xlu0 %3150
      %3152 = vrot.lane.b32.xlu0 %v2339, 95
      %v3153 = vpop.permute.xlu0 %3152
      %v3154 = vsel %vm1242, %v3151, %v3153
      %v3157 = vsel %vm1242, %v3153, 0.0
      %v3158 = vmul.f32 %v3154, %v394
      %v3159 = vmul.f32 %v3157, %v395
      %3160 = vset.pattern.permute.xlu0 23
      %3161 = vperm.xlu0 %3160, %v2378
      %v3162 = vpop.permute.xlu0 %3161
      %3164 = vset.pattern.permute.xlu0 23
      %3165 = vperm.xlu0 %3164, %v2379
      %v3166 = vpop.permute.xlu0 %3165
      %v3168 = vlaneseq
      %v3169 = vshrl.u32 %v3168, 7
      %v3170 = vsub.s32 0, %v3169
      %v3171 = vrot.slane %v3158, %v3170
      %v3172 = vlaneseq
      %v3173 = vshrl.u32 %v3172, 7
      %v3174 = vsub.s32 0, %v3173
      %v3175 = vrot.slane %v3159, %v3174
      %v3176 = vmul.f32 %v3162, %v3171
      %v3177 = vmul.f32 %v3162, %v3175
      %v3178 = vmul.f32 %v3166, %v3171
      %v3179 = vmul.f32 %v3166, %v3175
      %v3180 = vadd.f32 %v3146, %v3176
      %v3181 = vadd.f32 %v3147, %v3177
      %v3182 = vadd.f32 %v3148, %v3178
      %v3183 = vadd.f32 %v3149, %v3179
      %3184 = vrot.lane.b32.xlu0 %v2338, 94
      %v3185 = vpop.permute.xlu0 %3184
      %3186 = vrot.lane.b32.xlu0 %v2339, 94
      %v3187 = vpop.permute.xlu0 %3186
      %v3188 = vsel %vm1277, %v3185, %v3187
      %v3191 = vsel %vm1277, %v3187, 0.0
      %v3192 = vmul.f32 %v3188, %v406
      %v3193 = vmul.f32 %v3191, %v407
      %3194 = vset.pattern.permute.xlu0 24
      %3195 = vperm.xlu0 %3194, %v2378
      %v3196 = vpop.permute.xlu0 %3195
      %3198 = vset.pattern.permute.xlu0 24
      %3199 = vperm.xlu0 %3198, %v2379
      %v3200 = vpop.permute.xlu0 %3199
      %v3202 = vlaneseq
      %v3203 = vshrl.u32 %v3202, 7
      %v3204 = vsub.s32 0, %v3203
      %v3205 = vrot.slane %v3192, %v3204
      %v3206 = vlaneseq
      %v3207 = vshrl.u32 %v3206, 7
      %v3208 = vsub.s32 0, %v3207
      %v3209 = vrot.slane %v3193, %v3208
      %v3210 = vmul.f32 %v3196, %v3205
      %v3211 = vmul.f32 %v3196, %v3209
      %v3212 = vmul.f32 %v3200, %v3205
      %v3213 = vmul.f32 %v3200, %v3209
      %v3214 = vadd.f32 %v3180, %v3210
      %v3215 = vadd.f32 %v3181, %v3211
      %v3216 = vadd.f32 %v3182, %v3212
      %v3217 = vadd.f32 %v3183, %v3213
      %s3218 = scalar_lea.vmem %s3, 16
      %v3219 = vld [vmem:[%s3218] sm:$0xff]
      %v3220 = vld [vmem:[%s3218 + $0x8] sm:$0xff]
      %3222 = vset.pattern.permute.xlu0 0
      %3223 = vperm.xlu0 %3222, %v3219
      %v3224 = vpop.permute.xlu0 %3223
      %3227 = vset.pattern.permute.xlu0 0
      %3228 = vperm.xlu0 %3227, %v3220
      %v3229 = vpop.permute.xlu0 %3228
      %v3231 = vadd.f32 %v3214, %v3224
      %v3232 = vadd.f32 %v3215, %v3224
      %v3233 = vadd.f32 %v3216, %v3229
      %v3234 = vadd.f32 %v3217, %v3229
      %vm3235 = vcmp.ge.f32.partialorder %v3231, 0.0
      %vm3236 = vcmp.ge.f32.partialorder %v3232, 0.0
      %vm3237 = vcmp.ge.f32.partialorder %v3233, 0.0
      %vm3238 = vcmp.ge.f32.partialorder %v3234, 0.0
      %v3239 = vmul.f32 %v3231, 0.2
      %v3240 = vmul.f32 %v3232, 0.2
      %v3241 = vmul.f32 %v3233, 0.2
      %v3242 = vmul.f32 %v3234, 0.2
      %v3243 = vsel %vm3235, %v3231, %v3239
      %v3244 = vsel %vm3236, %v3232, %v3240
      %v3245 = vsel %vm3237, %v3233, %v3241
      %v3246 = vsel %vm3238, %v3234, %v3242
      %3251 = vrot.lane.b32.xlu0 %v3243, 34
      %v3252 = vpop.permute.xlu0 %3251
      %3253 = vrot.lane.b32.xlu0 %v3244, 34
      %v3254 = vpop.permute.xlu0 %3253
      %3255 = vrot.lane.b32.xlu0 %v3245, 34
      %v3256 = vpop.permute.xlu0 %3255
      %3257 = vrot.lane.b32.xlu0 %v3246, 34
      %v3258 = vpop.permute.xlu0 %3257
      %v3259 = vsel %vm424, %v3252, %v3254
      %v3260 = vsel %vm424, %v3256, %v3258
      %v3265 = vsel %vm424, 0.0, %v3252
      %v3266 = vsel %vm424, 0.0, %v3256
      %v3267 = vmul.f32 %v3265, %v360
      %v3268 = vmul.f32 %v3259, %v361
      %v3269 = vmul.f32 %v3266, %v360
      %v3270 = vmul.f32 %v3260, %v361
      %3271 = vst [vmem:[#allocation2] sm:$0xff] %v3267
      %3272 = vst [vmem:[#allocation2 + $0x8] sm:$0xff] %v3268
      %3273 = vst [vmem:[#allocation2 + $0x10] sm:$0xff] %v3269
      %3274 = vst [vmem:[#allocation2 + $0x18] sm:$0xff] %v3270
      %3275 = vrot.lane.b32.xlu0 %v3243, 33
      %v3276 = vpop.permute.xlu0 %3275
      %3277 = vrot.lane.b32.xlu0 %v3244, 33
      %v3278 = vpop.permute.xlu0 %3277
      %3279 = vrot.lane.b32.xlu0 %v3245, 33
      %v3280 = vpop.permute.xlu0 %3279
      %3281 = vrot.lane.b32.xlu0 %v3246, 33
      %v3282 = vpop.permute.xlu0 %3281
      %v3283 = vsel %vm461, %v3276, %v3278
      %v3284 = vsel %vm461, %v3280, %v3282
      %v3289 = vsel %vm461, 0.0, %v3276
      %v3290 = vsel %vm461, 0.0, %v3280
      %v3291 = vmul.f32 %v3289, %v372
      %v3292 = vmul.f32 %v3283, %v373
      %v3293 = vmul.f32 %v3290, %v372
      %v3294 = vmul.f32 %v3284, %v373
      %3295 = vst [vmem:[#allocation2 + $0x20] sm:$0xff] %v3291
      %3296 = vst [vmem:[#allocation2 + $0x28] sm:$0xff] %v3292
      %3297 = vst [vmem:[#allocation2 + $0x30] sm:$0xff] %v3293
      %3298 = vst [vmem:[#allocation2 + $0x38] sm:$0xff] %v3294
      %3299 = vrot.lane.b32.xlu0 %v3243, 32
      %v3300 = vpop.permute.xlu0 %3299
      %3301 = vrot.lane.b32.xlu0 %v3244, 32
      %v3302 = vpop.permute.xlu0 %3301
      %3303 = vrot.lane.b32.xlu0 %v3245, 32
      %v3304 = vpop.permute.xlu0 %3303
      %3305 = vrot.lane.b32.xlu0 %v3246, 32
      %v3306 = vpop.permute.xlu0 %3305
      %v3307 = vsel %vm496, %v3300, %v3302
      %v3308 = vsel %vm496, %v3304, %v3306
      %v3313 = vsel %vm496, 0.0, %v3300
      %v3314 = vsel %vm496, 0.0, %v3304
      %v3315 = vmul.f32 %v3313, %v382
      %v3316 = vmul.f32 %v3307, %v383
      %v3317 = vmul.f32 %v3314, %v382
      %v3318 = vmul.f32 %v3308, %v383
      %3319 = vst [vmem:[#allocation2 + $0x40] sm:$0xff] %v3315
      %3320 = vst [vmem:[#allocation2 + $0x48] sm:$0xff] %v3316
      %3321 = vst [vmem:[#allocation2 + $0x50] sm:$0xff] %v3317
      %3322 = vst [vmem:[#allocation2 + $0x58] sm:$0xff] %v3318
      %3323 = vrot.lane.b32.xlu0 %v3243, 31
      %v3324 = vpop.permute.xlu0 %3323
      %3325 = vrot.lane.b32.xlu0 %v3244, 31
      %v3326 = vpop.permute.xlu0 %3325
      %3327 = vrot.lane.b32.xlu0 %v3245, 31
      %v3328 = vpop.permute.xlu0 %3327
      %3329 = vrot.lane.b32.xlu0 %v3246, 31
      %v3330 = vpop.permute.xlu0 %3329
      %v3331 = vsel %vm531, %v3324, %v3326
      %v3332 = vsel %vm531, %v3328, %v3330
      %v3337 = vsel %vm531, 0.0, %v3324
      %v3338 = vsel %vm531, 0.0, %v3328
      %v3339 = vmul.f32 %v3337, %v394
      %v3340 = vmul.f32 %v3331, %v395
      %v3341 = vmul.f32 %v3338, %v394
      %v3342 = vmul.f32 %v3332, %v395
      %3343 = vst [vmem:[#allocation2 + $0x60] sm:$0xff] %v3339
      %3344 = vst [vmem:[#allocation2 + $0x68] sm:$0xff] %v3340
      %3345 = vst [vmem:[#allocation2 + $0x70] sm:$0xff] %v3341
      %3346 = vst [vmem:[#allocation2 + $0x78] sm:$0xff] %v3342
      %3347 = vrot.lane.b32.xlu0 %v3243, 30
      %v3348 = vpop.permute.xlu0 %3347
      %3349 = vrot.lane.b32.xlu0 %v3244, 30
      %v3350 = vpop.permute.xlu0 %3349
      %3351 = vrot.lane.b32.xlu0 %v3245, 30
      %v3352 = vpop.permute.xlu0 %3351
      %3353 = vrot.lane.b32.xlu0 %v3246, 30
      %v3354 = vpop.permute.xlu0 %3353
      %v3355 = vsel %vm566, %v3348, %v3350
      %v3356 = vsel %vm566, %v3352, %v3354
      %v3361 = vsel %vm566, 0.0, %v3348
      %v3362 = vsel %vm566, 0.0, %v3352
      %v3363 = vmul.f32 %v3361, %v406
      %v3364 = vmul.f32 %v3355, %v407
      %v3365 = vmul.f32 %v3362, %v406
      %v3366 = vmul.f32 %v3356, %v407
      %3367 = vst [vmem:[#allocation2 + $0x80] sm:$0xff] %v3363
      %3368 = vst [vmem:[#allocation2 + $0x88] sm:$0xff] %v3364
      %3369 = vst [vmem:[#allocation2 + $0x90] sm:$0xff] %v3365
      %3370 = vst [vmem:[#allocation2 + $0x98] sm:$0xff] %v3366
      %3371 = vrot.lane.b32.xlu0 %v3243, 18
      %v3372 = vpop.permute.xlu0 %3371
      %3373 = vrot.lane.b32.xlu0 %v3244, 18
      %v3374 = vpop.permute.xlu0 %3373
      %3375 = vrot.lane.b32.xlu0 %v3245, 18
      %v3376 = vpop.permute.xlu0 %3375
      %3377 = vrot.lane.b32.xlu0 %v3246, 18
      %v3378 = vpop.permute.xlu0 %3377
      %v3379 = vsel %vm601, %v3372, %v3374
      %v3380 = vsel %vm601, %v3376, %v3378
      %v3385 = vsel %vm601, 0.0, %v3372
      %v3386 = vsel %vm601, 0.0, %v3376
      %v3387 = vmul.f32 %v3385, %v360
      %v3388 = vmul.f32 %v3379, %v361
      %v3389 = vmul.f32 %v3386, %v360
      %v3390 = vmul.f32 %v3380, %v361
      %3391 = vst [vmem:[#allocation2 + $0xa0] sm:$0xff] %v3387
      %3392 = vst [vmem:[#allocation2 + $0xa8] sm:$0xff] %v3388
      %3393 = vst [vmem:[#allocation2 + $0xb0] sm:$0xff] %v3389
      %3394 = vst [vmem:[#allocation2 + $0xb8] sm:$0xff] %v3390
      %3395 = vrot.lane.b32.xlu0 %v3243, 17
      %v3396 = vpop.permute.xlu0 %3395
      %3397 = vrot.lane.b32.xlu0 %v3244, 17
      %v3398 = vpop.permute.xlu0 %3397
      %3399 = vrot.lane.b32.xlu0 %v3245, 17
      %v3400 = vpop.permute.xlu0 %3399
      %3401 = vrot.lane.b32.xlu0 %v3246, 17
      %v3402 = vpop.permute.xlu0 %3401
      %v3403 = vsel %vm636, %v3396, %v3398
      %v3404 = vsel %vm636, %v3400, %v3402
      %v3409 = vsel %vm636, 0.0, %v3396
      %v3410 = vsel %vm636, 0.0, %v3400
      %v3411 = vmul.f32 %v3409, %v372
      %v3412 = vmul.f32 %v3403, %v373
      %v3413 = vmul.f32 %v3410, %v372
      %v3414 = vmul.f32 %v3404, %v373
      %3415 = vst [vmem:[#allocation2 + $0xc0] sm:$0xff] %v3411
      %3416 = vst [vmem:[#allocation2 + $0xc8] sm:$0xff] %v3412
      %3417 = vst [vmem:[#allocation2 + $0xd0] sm:$0xff] %v3413
      %3418 = vst [vmem:[#allocation2 + $0xd8] sm:$0xff] %v3414
      %3419 = vrot.lane.b32.xlu0 %v3243, 16
      %v3420 = vpop.permute.xlu0 %3419
      %3421 = vrot.lane.b32.xlu0 %v3244, 16
      %v3422 = vpop.permute.xlu0 %3421
      %3423 = vrot.lane.b32.xlu0 %v3245, 16
      %v3424 = vpop.permute.xlu0 %3423
      %3425 = vrot.lane.b32.xlu0 %v3246, 16
      %v3426 = vpop.permute.xlu0 %3425
      %v3427 = vsel %vm671, %v3420, %v3422
      %v3428 = vsel %vm671, %v3424, %v3426
      %v3433 = vsel %vm671, 0.0, %v3420
      %v3434 = vsel %vm671, 0.0, %v3424
      %v3435 = vmul.f32 %v3433, %v382
      %v3436 = vmul.f32 %v3427, %v383
      %v3437 = vmul.f32 %v3434, %v382
      %v3438 = vmul.f32 %v3428, %v383
      %3439 = vst [vmem:[#allocation2 + $0xe0] sm:$0xff] %v3435
      %3440 = vst [vmem:[#allocation2 + $0xe8] sm:$0xff] %v3436
      %3441 = vst [vmem:[#allocation2 + $0xf0] sm:$0xff] %v3437
      %3442 = vst [vmem:[#allocation2 + $0xf8] sm:$0xff] %v3438
      %3443 = vrot.lane.b32.xlu0 %v3243, 15
      %v3444 = vpop.permute.xlu0 %3443
      %3445 = vrot.lane.b32.xlu0 %v3244, 15
      %v3446 = vpop.permute.xlu0 %3445
      %3447 = vrot.lane.b32.xlu0 %v3245, 15
      %v3448 = vpop.permute.xlu0 %3447
      %3449 = vrot.lane.b32.xlu0 %v3246, 15
      %v3450 = vpop.permute.xlu0 %3449
      %v3451 = vsel %vm706, %v3444, %v3446
      %v3452 = vsel %vm706, %v3448, %v3450
      %v3457 = vsel %vm706, 0.0, %v3444
      %v3458 = vsel %vm706, 0.0, %v3448
      %v3459 = vmul.f32 %v3457, %v394
      %v3460 = vmul.f32 %v3451, %v395
      %v3461 = vmul.f32 %v3458, %v394
      %v3462 = vmul.f32 %v3452, %v395
      %3463 = vst [vmem:[#allocation2 + $0x100] sm:$0xff] %v3459
      %3464 = vst [vmem:[#allocation2 + $0x108] sm:$0xff] %v3460
      %3465 = vst [vmem:[#allocation2 + $0x110] sm:$0xff] %v3461
      %3466 = vst [vmem:[#allocation2 + $0x118] sm:$0xff] %v3462
      %3467 = vrot.lane.b32.xlu0 %v3243, 14
      %v3468 = vpop.permute.xlu0 %3467
      %3469 = vrot.lane.b32.xlu0 %v3244, 14
      %v3470 = vpop.permute.xlu0 %3469
      %3471 = vrot.lane.b32.xlu0 %v3245, 14
      %v3472 = vpop.permute.xlu0 %3471
      %3473 = vrot.lane.b32.xlu0 %v3246, 14
      %v3474 = vpop.permute.xlu0 %3473
      %v3475 = vsel %vm741, %v3468, %v3470
      %v3476 = vsel %vm741, %v3472, %v3474
      %v3481 = vsel %vm741, 0.0, %v3468
      %v3482 = vsel %vm741, 0.0, %v3472
      %v3483 = vmul.f32 %v3481, %v406
      %v3484 = vmul.f32 %v3475, %v407
      %v3485 = vmul.f32 %v3482, %v406
      %v3486 = vmul.f32 %v3476, %v407
      %3487 = vst [vmem:[#allocation2 + $0x120] sm:$0xff] %v3483
      %3488 = vst [vmem:[#allocation2 + $0x128] sm:$0xff] %v3484
      %3489 = vst [vmem:[#allocation2 + $0x130] sm:$0xff] %v3485
      %3490 = vst [vmem:[#allocation2 + $0x138] sm:$0xff] %v3486
      %3491 = vrot.lane.b32.xlu0 %v3243, 2
      %v3492 = vpop.permute.xlu0 %3491
      %3493 = vrot.lane.b32.xlu0 %v3244, 2
      %v3494 = vpop.permute.xlu0 %3493
      %3495 = vrot.lane.b32.xlu0 %v3245, 2
      %v3496 = vpop.permute.xlu0 %3495
      %3497 = vrot.lane.b32.xlu0 %v3246, 2
      %v3498 = vpop.permute.xlu0 %3497
      %v3499 = vsel %vm776, %v3492, %v3494
      %v3500 = vsel %vm776, %v3496, %v3498
      %v3505 = vsel %vm776, 0.0, %v3492
      %v3506 = vsel %vm776, 0.0, %v3496
      %v3507 = vmul.f32 %v3505, %v360
      %v3508 = vmul.f32 %v3499, %v361
      %v3509 = vmul.f32 %v3506, %v360
      %v3510 = vmul.f32 %v3500, %v361
      %3511 = vst [vmem:[#allocation2 + $0x140] sm:$0xff] %v3507
      %3512 = vst [vmem:[#allocation2 + $0x148] sm:$0xff] %v3508
      %3513 = vst [vmem:[#allocation2 + $0x150] sm:$0xff] %v3509
      %3514 = vst [vmem:[#allocation2 + $0x158] sm:$0xff] %v3510
      %3515 = vrot.lane.b32.xlu0 %v3243, 1
      %v3516 = vpop.permute.xlu0 %3515
      %3517 = vrot.lane.b32.xlu0 %v3244, 1
      %v3518 = vpop.permute.xlu0 %3517
      %3519 = vrot.lane.b32.xlu0 %v3245, 1
      %v3520 = vpop.permute.xlu0 %3519
      %3521 = vrot.lane.b32.xlu0 %v3246, 1
      %v3522 = vpop.permute.xlu0 %3521
      %v3523 = vsel %vm811, %v3516, %v3518
      %v3524 = vsel %vm811, %v3520, %v3522
      %v3529 = vsel %vm811, 0.0, %v3516
      %v3530 = vsel %vm811, 0.0, %v3520
      %v3531 = vmul.f32 %v3529, %v372
      %v3532 = vmul.f32 %v3523, %v373
      %v3533 = vmul.f32 %v3530, %v372
      %v3534 = vmul.f32 %v3524, %v373
      %3535 = vst [vmem:[#allocation2 + $0x160] sm:$0xff] %v3531
      %3536 = vst [vmem:[#allocation2 + $0x168] sm:$0xff] %v3532
      %3537 = vst [vmem:[#allocation2 + $0x170] sm:$0xff] %v3533
      %3538 = vst [vmem:[#allocation2 + $0x178] sm:$0xff] %v3534
      %v3539 = vmul.f32 %v3243, %v382
      %v3540 = vmul.f32 %v3244, %v383
      %v3541 = vmul.f32 %v3245, %v382
      %v3542 = vmul.f32 %v3246, %v383
      %3543 = vst [vmem:[#allocation2 + $0x180] sm:$0xff] %v3539
      %3544 = vst [vmem:[#allocation2 + $0x188] sm:$0xff] %v3540
      %3545 = vst [vmem:[#allocation2 + $0x190] sm:$0xff] %v3541
      %3546 = vst [vmem:[#allocation2 + $0x198] sm:$0xff] %v3542
      %3547 = vrot.lane.b32.xlu0 %v3243, 127
      %v3548 = vpop.permute.xlu0 %3547
      %3549 = vrot.lane.b32.xlu0 %v3244, 127
      %v3550 = vpop.permute.xlu0 %3549
      %3551 = vrot.lane.b32.xlu0 %v3245, 127
      %v3552 = vpop.permute.xlu0 %3551
      %3553 = vrot.lane.b32.xlu0 %v3246, 127
      %v3554 = vpop.permute.xlu0 %3553
      %v3555 = vsel %vm892, %v3548, %v3550
      %v3556 = vsel %vm892, %v3552, %v3554
      %v3561 = vsel %vm892, %v3550, 0.0
      %v3562 = vsel %vm892, %v3554, 0.0
      %v3563 = vmul.f32 %v3555, %v394
      %v3564 = vmul.f32 %v3561, %v395
      %v3565 = vmul.f32 %v3556, %v394
      %v3566 = vmul.f32 %v3562, %v395
      %3567 = vst [vmem:[#allocation2 + $0x1a0] sm:$0xff] %v3563
      %3568 = vst [vmem:[#allocation2 + $0x1a8] sm:$0xff] %v3564
      %3569 = vst [vmem:[#allocation2 + $0x1b0] sm:$0xff] %v3565
      %3570 = vst [vmem:[#allocation2 + $0x1b8] sm:$0xff] %v3566
      %3571 = vrot.lane.b32.xlu0 %v3243, 126
      %v3572 = vpop.permute.xlu0 %3571
      %3573 = vrot.lane.b32.xlu0 %v3244, 126
      %v3574 = vpop.permute.xlu0 %3573
      %3575 = vrot.lane.b32.xlu0 %v3245, 126
      %v3576 = vpop.permute.xlu0 %3575
      %3577 = vrot.lane.b32.xlu0 %v3246, 126
      %v3578 = vpop.permute.xlu0 %3577
      %v3579 = vsel %vm927, %v3572, %v3574
      %v3580 = vsel %vm927, %v3576, %v3578
      %v3585 = vsel %vm927, %v3574, 0.0
      %v3586 = vsel %vm927, %v3578, 0.0
      %v3587 = vmul.f32 %v3579, %v406
      %v3588 = vmul.f32 %v3585, %v407
      %v3589 = vmul.f32 %v3580, %v406
      %v3590 = vmul.f32 %v3586, %v407
      %3591 = vst [vmem:[#allocation2 + $0x1c0] sm:$0xff] %v3587
      %3592 = vst [vmem:[#allocation2 + $0x1c8] sm:$0xff] %v3588
      %3593 = vst [vmem:[#allocation2 + $0x1d0] sm:$0xff] %v3589
      %3594 = vst [vmem:[#allocation2 + $0x1d8] sm:$0xff] %v3590
      %3595 = vrot.lane.b32.xlu0 %v3243, 114
      %v3596 = vpop.permute.xlu0 %3595
      %3597 = vrot.lane.b32.xlu0 %v3244, 114
      %v3598 = vpop.permute.xlu0 %3597
      %3599 = vrot.lane.b32.xlu0 %v3245, 114
      %v3600 = vpop.permute.xlu0 %3599
      %3601 = vrot.lane.b32.xlu0 %v3246, 114
      %v3602 = vpop.permute.xlu0 %3601
      %v3603 = vsel %vm962, %v3596, %v3598
      %v3604 = vsel %vm962, %v3600, %v3602
      %v3609 = vsel %vm962, %v3598, 0.0
      %v3610 = vsel %vm962, %v3602, 0.0
      %v3611 = vmul.f32 %v3603, %v360
      %v3612 = vmul.f32 %v3609, %v361
      %v3613 = vmul.f32 %v3604, %v360
      %v3614 = vmul.f32 %v3610, %v361
      %3615 = vst [vmem:[#allocation2 + $0x1e0] sm:$0xff] %v3611
      %3616 = vst [vmem:[#allocation2 + $0x1e8] sm:$0xff] %v3612
      %3617 = vst [vmem:[#allocation2 + $0x1f0] sm:$0xff] %v3613
      %3618 = vst [vmem:[#allocation2 + $0x1f8] sm:$0xff] %v3614
      %3619 = vrot.lane.b32.xlu0 %v3243, 113
      %v3620 = vpop.permute.xlu0 %3619
      %3621 = vrot.lane.b32.xlu0 %v3244, 113
      %v3622 = vpop.permute.xlu0 %3621
      %3623 = vrot.lane.b32.xlu0 %v3245, 113
      %v3624 = vpop.permute.xlu0 %3623
      %3625 = vrot.lane.b32.xlu0 %v3246, 113
      %v3626 = vpop.permute.xlu0 %3625
      %v3627 = vsel %vm997, %v3620, %v3622
      %v3628 = vsel %vm997, %v3624, %v3626
      %v3633 = vsel %vm997, %v3622, 0.0
      %v3634 = vsel %vm997, %v3626, 0.0
      %v3635 = vmul.f32 %v3627, %v372
      %v3636 = vmul.f32 %v3633, %v373
      %v3637 = vmul.f32 %v3628, %v372
      %v3638 = vmul.f32 %v3634, %v373
      %3639 = vst [vmem:[#allocation2 + $0x200] sm:$0xff] %v3635
      %3640 = vst [vmem:[#allocation2 + $0x208] sm:$0xff] %v3636
      %3641 = vst [vmem:[#allocation2 + $0x210] sm:$0xff] %v3637
      %3642 = vst [vmem:[#allocation2 + $0x218] sm:$0xff] %v3638
      %3643 = vrot.lane.b32.xlu0 %v3243, 112
      %v3644 = vpop.permute.xlu0 %3643
      %3645 = vrot.lane.b32.xlu0 %v3244, 112
      %v3646 = vpop.permute.xlu0 %3645
      %3647 = vrot.lane.b32.xlu0 %v3245, 112
      %v3648 = vpop.permute.xlu0 %3647
      %3649 = vrot.lane.b32.xlu0 %v3246, 112
      %v3650 = vpop.permute.xlu0 %3649
      %v3651 = vsel %vm1032, %v3644, %v3646
      %v3652 = vsel %vm1032, %v3648, %v3650
      %v3657 = vsel %vm1032, %v3646, 0.0
      %v3658 = vsel %vm1032, %v3650, 0.0
      %v3659 = vmul.f32 %v3651, %v382
      %v3660 = vmul.f32 %v3657, %v383
      %v3661 = vmul.f32 %v3652, %v382
      %v3662 = vmul.f32 %v3658, %v383
      %3663 = vst [vmem:[#allocation2 + $0x220] sm:$0xff] %v3659
      %3664 = vst [vmem:[#allocation2 + $0x228] sm:$0xff] %v3660
      %3665 = vst [vmem:[#allocation2 + $0x230] sm:$0xff] %v3661
      %3666 = vst [vmem:[#allocation2 + $0x238] sm:$0xff] %v3662
      %3667 = vrot.lane.b32.xlu0 %v3243, 111
      %v3668 = vpop.permute.xlu0 %3667
      %3669 = vrot.lane.b32.xlu0 %v3244, 111
      %v3670 = vpop.permute.xlu0 %3669
      %3671 = vrot.lane.b32.xlu0 %v3245, 111
      %v3672 = vpop.permute.xlu0 %3671
      %3673 = vrot.lane.b32.xlu0 %v3246, 111
      %v3674 = vpop.permute.xlu0 %3673
      %v3675 = vsel %vm1067, %v3668, %v3670
      %v3676 = vsel %vm1067, %v3672, %v3674
      %v3681 = vsel %vm1067, %v3670, 0.0
      %v3682 = vsel %vm1067, %v3674, 0.0
      %v3683 = vmul.f32 %v3675, %v394
      %v3684 = vmul.f32 %v3681, %v395
      %v3685 = vmul.f32 %v3676, %v394
      %v3686 = vmul.f32 %v3682, %v395
      %3687 = vst [vmem:[#allocation2 + $0x240] sm:$0xff] %v3683
      %3688 = vst [vmem:[#allocation2 + $0x248] sm:$0xff] %v3684
      %3689 = vst [vmem:[#allocation2 + $0x250] sm:$0xff] %v3685
      %3690 = vst [vmem:[#allocation2 + $0x258] sm:$0xff] %v3686
      %3691 = vrot.lane.b32.xlu0 %v3243, 110
      %v3692 = vpop.permute.xlu0 %3691
      %3693 = vrot.lane.b32.xlu0 %v3244, 110
      %v3694 = vpop.permute.xlu0 %3693
      %3695 = vrot.lane.b32.xlu0 %v3245, 110
      %v3696 = vpop.permute.xlu0 %3695
      %3697 = vrot.lane.b32.xlu0 %v3246, 110
      %v3698 = vpop.permute.xlu0 %3697
      %v3699 = vsel %vm1102, %v3692, %v3694
      %v3700 = vsel %vm1102, %v3696, %v3698
      %v3705 = vsel %vm1102, %v3694, 0.0
      %v3706 = vsel %vm1102, %v3698, 0.0
      %v3707 = vmul.f32 %v3699, %v406
      %v3708 = vmul.f32 %v3705, %v407
      %v3709 = vmul.f32 %v3700, %v406
      %v3710 = vmul.f32 %v3706, %v407
      %3711 = vst [vmem:[#allocation2 + $0x260] sm:$0xff] %v3707
      %3712 = vst [vmem:[#allocation2 + $0x268] sm:$0xff] %v3708
      %3713 = vst [vmem:[#allocation2 + $0x270] sm:$0xff] %v3709
      %3714 = vst [vmem:[#allocation2 + $0x278] sm:$0xff] %v3710
      %3715 = vrot.lane.b32.xlu0 %v3243, 98
      %v3716 = vpop.permute.xlu0 %3715
      %3717 = vrot.lane.b32.xlu0 %v3244, 98
      %v3718 = vpop.permute.xlu0 %3717
      %3719 = vrot.lane.b32.xlu0 %v3245, 98
      %v3720 = vpop.permute.xlu0 %3719
      %3721 = vrot.lane.b32.xlu0 %v3246, 98
      %v3722 = vpop.permute.xlu0 %3721
      %v3723 = vsel %vm1137, %v3716, %v3718
      %v3724 = vsel %vm1137, %v3720, %v3722
      %v3729 = vsel %vm1137, %v3718, 0.0
      %v3730 = vsel %vm1137, %v3722, 0.0
      %v3731 = vmul.f32 %v3723, %v360
      %v3732 = vmul.f32 %v3729, %v361
      %v3733 = vmul.f32 %v3724, %v360
      %v3734 = vmul.f32 %v3730, %v361
      %3735 = vst [vmem:[#allocation2 + $0x280] sm:$0xff] %v3731
      %3736 = vst [vmem:[#allocation2 + $0x288] sm:$0xff] %v3732
      %3737 = vst [vmem:[#allocation2 + $0x290] sm:$0xff] %v3733
      %3738 = vst [vmem:[#allocation2 + $0x298] sm:$0xff] %v3734
      %3739 = vrot.lane.b32.xlu0 %v3243, 97
      %v3740 = vpop.permute.xlu0 %3739
      %3741 = vrot.lane.b32.xlu0 %v3244, 97
      %v3742 = vpop.permute.xlu0 %3741
      %3743 = vrot.lane.b32.xlu0 %v3245, 97
      %v3744 = vpop.permute.xlu0 %3743
      %3745 = vrot.lane.b32.xlu0 %v3246, 97
      %v3746 = vpop.permute.xlu0 %3745
      %v3747 = vsel %vm1172, %v3740, %v3742
      %v3748 = vsel %vm1172, %v3744, %v3746
      %v3753 = vsel %vm1172, %v3742, 0.0
      %v3754 = vsel %vm1172, %v3746, 0.0
      %v3755 = vmul.f32 %v3747, %v372
      %v3756 = vmul.f32 %v3753, %v373
      %v3757 = vmul.f32 %v3748, %v372
      %v3758 = vmul.f32 %v3754, %v373
      %3759 = vst [vmem:[#allocation2 + $0x2a0] sm:$0xff] %v3755
      %3760 = vst [vmem:[#allocation2 + $0x2a8] sm:$0xff] %v3756
      %3761 = vst [vmem:[#allocation2 + $0x2b0] sm:$0xff] %v3757
      %3762 = vst [vmem:[#allocation2 + $0x2b8] sm:$0xff] %v3758
      %3763 = vrot.lane.b32.xlu0 %v3243, 96
      %v3764 = vpop.permute.xlu0 %3763
      %3765 = vrot.lane.b32.xlu0 %v3244, 96
      %v3766 = vpop.permute.xlu0 %3765
      %3767 = vrot.lane.b32.xlu0 %v3245, 96
      %v3768 = vpop.permute.xlu0 %3767
      %3769 = vrot.lane.b32.xlu0 %v3246, 96
      %v3770 = vpop.permute.xlu0 %3769
      %v3771 = vsel %vm1207, %v3764, %v3766
      %v3772 = vsel %vm1207, %v3768, %v3770
      %v3777 = vsel %vm1207, %v3766, 0.0
      %v3778 = vsel %vm1207, %v3770, 0.0
      %v3779 = vmul.f32 %v3771, %v382
      %v3780 = vmul.f32 %v3777, %v383
      %v3781 = vmul.f32 %v3772, %v382
      %v3782 = vmul.f32 %v3778, %v383
      %3783 = vst [vmem:[#allocation2 + $0x2c0] sm:$0xff] %v3779
      %3784 = vst [vmem:[#allocation2 + $0x2c8] sm:$0xff] %v3780
      %3785 = vst [vmem:[#allocation2 + $0x2d0] sm:$0xff] %v3781
      %3786 = vst [vmem:[#allocation2 + $0x2d8] sm:$0xff] %v3782
      %3787 = vrot.lane.b32.xlu0 %v3243, 95
      %v3788 = vpop.permute.xlu0 %3787
      %3789 = vrot.lane.b32.xlu0 %v3244, 95
      %v3790 = vpop.permute.xlu0 %3789
      %3791 = vrot.lane.b32.xlu0 %v3245, 95
      %v3792 = vpop.permute.xlu0 %3791
      %3793 = vrot.lane.b32.xlu0 %v3246, 95
      %v3794 = vpop.permute.xlu0 %3793
      %v3795 = vsel %vm1242, %v3788, %v3790
      %v3796 = vsel %vm1242, %v3792, %v3794
      %v3801 = vsel %vm1242, %v3790, 0.0
      %v3802 = vsel %vm1242, %v3794, 0.0
      %v3803 = vmul.f32 %v3795, %v394
      %v3804 = vmul.f32 %v3801, %v395
      %v3805 = vmul.f32 %v3796, %v394
      %v3806 = vmul.f32 %v3802, %v395
      %3807 = vst [vmem:[#allocation2 + $0x2e0] sm:$0xff] %v3803
      %3808 = vst [vmem:[#allocation2 + $0x2e8] sm:$0xff] %v3804
      %3809 = vst [vmem:[#allocation2 + $0x2f0] sm:$0xff] %v3805
      %3810 = vst [vmem:[#allocation2 + $0x2f8] sm:$0xff] %v3806
      %3811 = vrot.lane.b32.xlu0 %v3243, 94
      %v3812 = vpop.permute.xlu0 %3811
      %3813 = vrot.lane.b32.xlu0 %v3244, 94
      %v3814 = vpop.permute.xlu0 %3813
      %3815 = vrot.lane.b32.xlu0 %v3245, 94
      %v3816 = vpop.permute.xlu0 %3815
      %3817 = vrot.lane.b32.xlu0 %v3246, 94
      %v3818 = vpop.permute.xlu0 %3817
      %v3819 = vsel %vm1277, %v3812, %v3814
      %v3820 = vsel %vm1277, %v3816, %v3818
      %v3825 = vsel %vm1277, %v3814, 0.0
      %v3826 = vsel %vm1277, %v3818, 0.0
      %v3827 = vmul.f32 %v3819, %v406
      %v3828 = vmul.f32 %v3825, %v407
      %v3829 = vmul.f32 %v3820, %v406
      %v3830 = vmul.f32 %v3826, %v407
      %3831 = vst [vmem:[#allocation2 + $0x300] sm:$0xff] %v3827
      %3832 = vst [vmem:[#allocation2 + $0x308] sm:$0xff] %v3828
      %3833 = vst [vmem:[#allocation2 + $0x310] sm:$0xff] %v3829
      %3834 = vst [vmem:[#allocation2 + $0x318] sm:$0xff] %v3830
      %s3835 = scalar_lea.vmem %s4, 128
      %v3836 = vld [vmem:[%s3835] sm:$0xff]
      %v3837 = vld [vmem:[%s3835 + $0x8] sm:$0xff]
      %v3838 = vld [vmem:[%s3835 + $0x10] sm:$0xff]
      %v3839 = vld [vmem:[%s3835 + $0x18] sm:$0xff]
      %v3840 = vld [vmem:[%s3835 + $0x20] sm:$0xff]
      %v3841 = vld [vmem:[%s3835 + $0x28] sm:$0xff]
      %v3842 = vld [vmem:[%s3835 + $0x30] sm:$0xff]
      %v3843 = vld [vmem:[%s3835 + $0x38] sm:$0xff]
      %v3844 = vld [vmem:[%s3835 + $0x40] sm:$0xff]
      %v3845 = vld [vmem:[%s3835 + $0x48] sm:$0xff]
      %v3846 = vld [vmem:[%s3835 + $0x50] sm:$0xff]
      %v3847 = vld [vmem:[%s3835 + $0x58] sm:$0xff]
      %v3848 = vld [vmem:[%s3835 + $0x60] sm:$0xff]
      %v3849 = vld [vmem:[%s3835 + $0x68] sm:$0xff]
      %v3850 = vld [vmem:[%s3835 + $0x70] sm:$0xff]
      %v3851 = vld [vmem:[%s3835 + $0x78] sm:$0xff]
      %v3852 = vld [vmem:[#allocation2] sm:$0xff]
      %v3853 = vld [vmem:[#allocation2 + $0x8] sm:$0xff]
      %v3854 = vld [vmem:[#allocation2 + $0x10] sm:$0xff]
      %v3855 = vld [vmem:[#allocation2 + $0x18] sm:$0xff]
      %v3856 = vld [vmem:[#allocation2 + $0x20] sm:$0xff]
      %v3857 = vld [vmem:[#allocation2 + $0x28] sm:$0xff]
      %v3858 = vld [vmem:[#allocation2 + $0x30] sm:$0xff]
      %v3859 = vld [vmem:[#allocation2 + $0x38] sm:$0xff]
      %v3860 = vld [vmem:[#allocation2 + $0x40] sm:$0xff]
      %v3861 = vld [vmem:[#allocation2 + $0x48] sm:$0xff]
      %v3862 = vld [vmem:[#allocation2 + $0x50] sm:$0xff]
      %v3863 = vld [vmem:[#allocation2 + $0x58] sm:$0xff]
      %v3864 = vld [vmem:[#allocation2 + $0x60] sm:$0xff]
      %v3865 = vld [vmem:[#allocation2 + $0x68] sm:$0xff]
      %v3866 = vld [vmem:[#allocation2 + $0x70] sm:$0xff]
      %v3867 = vld [vmem:[#allocation2 + $0x78] sm:$0xff]
      %v3868 = vld [vmem:[#allocation2 + $0x80] sm:$0xff]
      %v3869 = vld [vmem:[#allocation2 + $0x88] sm:$0xff]
      %v3870 = vld [vmem:[#allocation2 + $0x90] sm:$0xff]
      %v3871 = vld [vmem:[#allocation2 + $0x98] sm:$0xff]
      %v3872 = vld [vmem:[#allocation2 + $0xa0] sm:$0xff]
      %v3873 = vld [vmem:[#allocation2 + $0xa8] sm:$0xff]
      %v3874 = vld [vmem:[#allocation2 + $0xb0] sm:$0xff]
      %v3875 = vld [vmem:[#allocation2 + $0xb8] sm:$0xff]
      %v3876 = vld [vmem:[#allocation2 + $0xc0] sm:$0xff]
      %v3877 = vld [vmem:[#allocation2 + $0xc8] sm:$0xff]
      %v3878 = vld [vmem:[#allocation2 + $0xd0] sm:$0xff]
      %v3879 = vld [vmem:[#allocation2 + $0xd8] sm:$0xff]
      %v3880 = vld [vmem:[#allocation2 + $0xe0] sm:$0xff]
      %v3881 = vld [vmem:[#allocation2 + $0xe8] sm:$0xff]
      %v3882 = vld [vmem:[#allocation2 + $0xf0] sm:$0xff]
      %v3883 = vld [vmem:[#allocation2 + $0xf8] sm:$0xff]
      %v3884 = vld [vmem:[#allocation2 + $0x100] sm:$0xff]
      %v3885 = vld [vmem:[#allocation2 + $0x108] sm:$0xff]
      %v3886 = vld [vmem:[#allocation2 + $0x110] sm:$0xff]
      %v3887 = vld [vmem:[#allocation2 + $0x118] sm:$0xff]
      %v3888 = vld [vmem:[#allocation2 + $0x120] sm:$0xff]
      %v3889 = vld [vmem:[#allocation2 + $0x128] sm:$0xff]
      %v3890 = vld [vmem:[#allocation2 + $0x130] sm:$0xff]
      %v3891 = vld [vmem:[#allocation2 + $0x138] sm:$0xff]
      %v3892 = vld [vmem:[#allocation2 + $0x140] sm:$0xff]
      %v3893 = vld [vmem:[#allocation2 + $0x148] sm:$0xff]
      %v3894 = vld [vmem:[#allocation2 + $0x150] sm:$0xff]
      %v3895 = vld [vmem:[#allocation2 + $0x158] sm:$0xff]
      %v3896 = vld [vmem:[#allocation2 + $0x160] sm:$0xff]
      %v3897 = vld [vmem:[#allocation2 + $0x168] sm:$0xff]
      %v3898 = vld [vmem:[#allocation2 + $0x170] sm:$0xff]
      %v3899 = vld [vmem:[#allocation2 + $0x178] sm:$0xff]
      %v3900 = vld [vmem:[#allocation2 + $0x180] sm:$0xff]
      %v3901 = vld [vmem:[#allocation2 + $0x188] sm:$0xff]
      %v3902 = vld [vmem:[#allocation2 + $0x190] sm:$0xff]
      %v3903 = vld [vmem:[#allocation2 + $0x198] sm:$0xff]
      %v3904 = vld [vmem:[#allocation2 + $0x1a0] sm:$0xff]
      %v3905 = vld [vmem:[#allocation2 + $0x1a8] sm:$0xff]
      %v3906 = vld [vmem:[#allocation2 + $0x1b0] sm:$0xff]
      %v3907 = vld [vmem:[#allocation2 + $0x1b8] sm:$0xff]
      %v3908 = vld [vmem:[#allocation2 + $0x1c0] sm:$0xff]
      %v3909 = vld [vmem:[#allocation2 + $0x1c8] sm:$0xff]
      %v3910 = vld [vmem:[#allocation2 + $0x1d0] sm:$0xff]
      %v3911 = vld [vmem:[#allocation2 + $0x1d8] sm:$0xff]
      %v3912 = vld [vmem:[#allocation2 + $0x1e0] sm:$0xff]
      %v3913 = vld [vmem:[#allocation2 + $0x1e8] sm:$0xff]
      %v3914 = vld [vmem:[#allocation2 + $0x1f0] sm:$0xff]
      %v3915 = vld [vmem:[#allocation2 + $0x1f8] sm:$0xff]
      %v3916 = vld [vmem:[#allocation2 + $0x200] sm:$0xff]
      %v3917 = vld [vmem:[#allocation2 + $0x208] sm:$0xff]
      %v3918 = vld [vmem:[#allocation2 + $0x210] sm:$0xff]
      %v3919 = vld [vmem:[#allocation2 + $0x218] sm:$0xff]
      %v3920 = vld [vmem:[#allocation2 + $0x220] sm:$0xff]
      %v3921 = vld [vmem:[#allocation2 + $0x228] sm:$0xff]
      %v3922 = vld [vmem:[#allocation2 + $0x230] sm:$0xff]
      %v3923 = vld [vmem:[#allocation2 + $0x238] sm:$0xff]
      %v3924 = vld [vmem:[#allocation2 + $0x240] sm:$0xff]
      %v3925 = vld [vmem:[#allocation2 + $0x248] sm:$0xff]
      %v3926 = vld [vmem:[#allocation2 + $0x250] sm:$0xff]
      %v3927 = vld [vmem:[#allocation2 + $0x258] sm:$0xff]
      %v3928 = vld [vmem:[#allocation2 + $0x260] sm:$0xff]
      %v3929 = vld [vmem:[#allocation2 + $0x268] sm:$0xff]
      %v3930 = vld [vmem:[#allocation2 + $0x270] sm:$0xff]
      %v3931 = vld [vmem:[#allocation2 + $0x278] sm:$0xff]
      %v3932 = vld [vmem:[#allocation2 + $0x280] sm:$0xff]
      %v3933 = vld [vmem:[#allocation2 + $0x288] sm:$0xff]
      %v3934 = vld [vmem:[#allocation2 + $0x290] sm:$0xff]
      %v3935 = vld [vmem:[#allocation2 + $0x298] sm:$0xff]
      %v3936 = vld [vmem:[#allocation2 + $0x2a0] sm:$0xff]
      %v3937 = vld [vmem:[#allocation2 + $0x2a8] sm:$0xff]
      %v3938 = vld [vmem:[#allocation2 + $0x2b0] sm:$0xff]
      %v3939 = vld [vmem:[#allocation2 + $0x2b8] sm:$0xff]
      %v3940 = vld [vmem:[#allocation2 + $0x2c0] sm:$0xff]
      %v3941 = vld [vmem:[#allocation2 + $0x2c8] sm:$0xff]
      %v3942 = vld [vmem:[#allocation2 + $0x2d0] sm:$0xff]
      %v3943 = vld [vmem:[#allocation2 + $0x2d8] sm:$0xff]
      %v3944 = vld [vmem:[#allocation2 + $0x2e0] sm:$0xff]
      %v3945 = vld [vmem:[#allocation2 + $0x2e8] sm:$0xff]
      %v3946 = vld [vmem:[#allocation2 + $0x2f0] sm:$0xff]
      %v3947 = vld [vmem:[#allocation2 + $0x2f8] sm:$0xff]
      %v3948 = vld [vmem:[#allocation2 + $0x300] sm:$0xff]
      %v3949 = vld [vmem:[#allocation2 + $0x308] sm:$0xff]
      %v3950 = vld [vmem:[#allocation2 + $0x310] sm:$0xff]
      %v3951 = vld [vmem:[#allocation2 + $0x318] sm:$0xff]
      %s3952 = scalar_lea.vmem %s5, 32
      %v3953 = vld [vmem:[%s3952] sm:$0xff]
      %v3954 = vld [vmem:[%s3952 + $0x8] sm:$0xff]
      %v3955 = vld [vmem:[%s3952 + $0x10] sm:$0xff]
      %v3956 = vld [vmem:[%s3952 + $0x18] sm:$0xff]
      %3958 = vset.pattern.permute.xlu0 0
      %3959 = vperm.xlu0 %3958, %v3953
      %v3960 = vpop.permute.xlu0 %3959
      %3963 = vset.pattern.permute.xlu0 0
      %3964 = vperm.xlu0 %3963, %v3954
      %v3965 = vpop.permute.xlu0 %3964
      %3968 = vset.pattern.permute.xlu0 0
      %3969 = vperm.xlu0 %3968, %v3955
      %v3970 = vpop.permute.xlu0 %3969
      %3973 = vset.pattern.permute.xlu0 0
      %3974 = vperm.xlu0 %3973, %v3956
      %v3975 = vpop.permute.xlu0 %3974
      %v3978 = vsel %vm671, %v3839, 0
      %v3981 = vsel %vm671, %v3843, 0
      %v3984 = vsel %vm671, %v3847, 0
      %v3987 = vsel %vm671, %v3851, 0
      %3989 = vmatprep.subr.mxu0 %v3883
      %3990 = vmatpush1.msra.mxu0 %v3882
      %3991 = vmatprep.subr.mxu0 %v3881
      %3992 = vmatpush1.msra.mxu0 %v3880
      %3993 = vmatprep.subr.mxu0 %v3879
      %3994 = vmatpush1.msra.mxu0 %v3878
      %3995 = vmatprep.subr.mxu0 %v3877
      %3996 = vmatpush1.msra.mxu0 %v3876
      %3997 = vmatprep.subr.mxu0 %v3875
      %3998 = vmatpush1.msra.mxu0 %v3874
      %3999 = vmatprep.subr.mxu0 %v3873
      %4000 = vmatpush1.msra.mxu0 %v3872
      %4001 = vmatprep.subr.mxu0 %v3871
      %4002 = vmatpush1.msra.mxu0 %v3870
      %4003 = vmatprep.subr.mxu0 %v3869
      %4004 = vmatpush1.msra.mxu0 %v3868
      %4005 = vmatprep.subr.mxu0 %v3867
      %4006 = vmatpush1.msra.mxu0 %v3866
      %4007 = vmatprep.subr.mxu0 %v3865
      %4008 = vmatpush1.msra.mxu0 %v3864
      %4009 = vmatprep.subr.mxu0 %v3863
      %4010 = vmatpush1.msra.mxu0 %v3862
      %4011 = vmatprep.subr.mxu0 %v3861
      %4012 = vmatpush1.msra.mxu0 %v3860
      %4013 = vmatprep.subr.mxu0 %v3859
      %4014 = vmatpush1.msra.mxu0 %v3858
      %4015 = vmatprep.subr.mxu0 %v3857
      %4016 = vmatpush1.msra.mxu0 %v3856
      %4017 = vmatprep.subr.mxu0 %v3855
      %4018 = vmatpush1.msra.mxu0 %v3854
      %4019 = vmatprep.subr.mxu0 %v3853
      %4020 = vmatpush1.msra.mxu0 %v3852
      %4021 = vmatprep.subr.mxu0 %v3915
      %4022 = vmatpush2.msra.mxu0 %v3914
      %4023 = vmatprep.subr.mxu0 %v3913
      %4024 = vmatpush2.msra.mxu0 %v3912
      %4025 = vmatprep.subr.mxu0 %v3911
      %4026 = vmatpush2.msra.mxu0 %v3910
      %4027 = vmatprep.subr.mxu0 %v3909
      %4028 = vmatpush2.msra.mxu0 %v3908
      %4029 = vmatprep.subr.mxu0 %v3907
      %4030 = vmatpush2.msra.mxu0 %v3906
      %4031 = vmatprep.subr.mxu0 %v3905
      %4032 = vmatpush2.msra.mxu0 %v3904
      %4033 = vmatprep.subr.mxu0 %v3903
      %4034 = vmatpush2.msra.mxu0 %v3902
      %4035 = vmatprep.subr.mxu0 %v3901
      %4036 = vmatpush2.msra.mxu0 %v3900
      %4037 = vmatprep.subr.mxu0 %v3899
      %4038 = vmatpush2.msra.mxu0 %v3898
      %4039 = vmatprep.subr.mxu0 %v3897
      %4040 = vmatpush2.msra.mxu0 %v3896
      %4041 = vmatprep.subr.mxu0 %v3895
      %4042 = vmatpush2.msra.mxu0 %v3894
      %4043 = vmatprep.subr.mxu0 %v3893
      %4044 = vmatpush2.msra.mxu0 %v3892
      %4045 = vmatprep.subr.mxu0 %v3891
      %4046 = vmatpush2.msra.mxu0 %v3890
      %4047 = vmatprep.subr.mxu0 %v3889
      %4048 = vmatpush2.msra.mxu0 %v3888
      %4049 = vmatprep.subr.mxu0 %v3887
      %4050 = vmatpush2.msra.mxu0 %v3886
      %4051 = vmatprep.subr.mxu0 %v3885
      %4052 = vmatpush2.msra.mxu0 %v3884
      %4053 = vmatprep.mubr.f32.mxu0 %v3837
      %4054 = vmatmul.mubr.f32.gmra.mxu0 %v3836
      %v4055 = vpop.f32.mrf.mxu0
      %v4056 = vadd.f32 %v3960, %v4055
      %v4057 = vpop.f32.mrf.mxu0
      %v4058 = vadd.f32 %v3960, %v4057
      %4059 = vmatprep.mubr.f32.mxu0 %v3841
      %4060 = vmatmul.mubr.f32.gmra.mxu0 %v3840
      %v4061 = vpop.f32.mrf.mxu0
      %v4062 = vadd.f32 %v3965, %v4061
      %v4063 = vpop.f32.mrf.mxu0
      %v4064 = vadd.f32 %v3965, %v4063
      %4065 = vmatprep.mubr.f32.mxu0 %v3845
      %4066 = vmatmul.mubr.f32.gmra.mxu0 %v3844
      %v4067 = vpop.f32.mrf.mxu0
      %v4068 = vadd.f32 %v3970, %v4067
      %v4069 = vpop.f32.mrf.mxu0
      %v4070 = vadd.f32 %v3970, %v4069
      %4071 = vmatprep.mubr.f32.mxu0 %v3849
      %4072 = vmatmul.mubr.f32.gmra.mxu0 %v3848
      %v4073 = vpop.f32.mrf.mxu0
      %v4074 = vadd.f32 %v3975, %v4073
      %v4075 = vpop.f32.mrf.mxu0
      %v4076 = vadd.f32 %v3975, %v4075
      %4077 = vdwg.mxu0
      %4078 = vmatprep.subr.mxu0 %v3947
      %4079 = vmatpush1.msra.mxu0 %v3946
      %4080 = vmatprep.subr.mxu0 %v3945
      %4081 = vmatpush1.msra.mxu0 %v3944
      %4082 = vmatprep.subr.mxu0 %v3943
      %4083 = vmatpush1.msra.mxu0 %v3942
      %4084 = vmatprep.subr.mxu0 %v3941
      %4085 = vmatpush1.msra.mxu0 %v3940
      %4086 = vmatprep.subr.mxu0 %v3939
      %4087 = vmatpush1.msra.mxu0 %v3938
      %4088 = vmatprep.subr.mxu0 %v3937
      %4089 = vmatpush1.msra.mxu0 %v3936
      %4090 = vmatprep.subr.mxu0 %v3935
      %4091 = vmatpush1.msra.mxu0 %v3934
      %4092 = vmatprep.subr.mxu0 %v3933
      %4093 = vmatpush1.msra.mxu0 %v3932
      %4094 = vmatprep.subr.mxu0 %v3931
      %4095 = vmatpush1.msra.mxu0 %v3930
      %4096 = vmatprep.subr.mxu0 %v3929
      %4097 = vmatpush1.msra.mxu0 %v3928
      %4098 = vmatprep.subr.mxu0 %v3927
      %4099 = vmatpush1.msra.mxu0 %v3926
      %4100 = vmatprep.subr.mxu0 %v3925
      %4101 = vmatpush1.msra.mxu0 %v3924
      %4102 = vmatprep.subr.mxu0 %v3923
      %4103 = vmatpush1.msra.mxu0 %v3922
      %4104 = vmatprep.subr.mxu0 %v3921
      %4105 = vmatpush1.msra.mxu0 %v3920
      %4106 = vmatprep.subr.mxu0 %v3919
      %4107 = vmatpush1.msra.mxu0 %v3918
      %4108 = vmatprep.subr.mxu0 %v3917
      %4109 = vmatpush1.msra.mxu0 %v3916
      %4110 = vmatprep.subr.mxu0 0.0
      %4111 = vmatpush2.msra.mxu0 0.0
      %4112 = vmatprep.subr.mxu0 0.0
      %4113 = vmatpush2.msra.mxu0 0.0
      %4114 = vmatprep.subr.mxu0 0.0
      %4115 = vmatpush2.msra.mxu0 0.0
      %4116 = vmatprep.subr.mxu0 0.0
      %4117 = vmatpush2.msra.mxu0 0.0
      %4118 = vmatprep.subr.mxu0 0.0
      %4119 = vmatpush2.msra.mxu0 0.0
      %4120 = vmatprep.subr.mxu0 0.0
      %4121 = vmatpush2.msra.mxu0 0.0
      %4122 = vmatprep.subr.mxu0 0.0
      %4123 = vmatpush2.msra.mxu0 0.0
      %4124 = vmatprep.subr.mxu0 0.0
      %4125 = vmatpush2.msra.mxu0 0.0
      %4126 = vmatprep.subr.mxu0 0.0
      %4127 = vmatpush2.msra.mxu0 0.0
      %4128 = vmatprep.subr.mxu0 0.0
      %4129 = vmatpush2.msra.mxu0 0.0
      %4130 = vmatprep.subr.mxu0 0.0
      %4131 = vmatpush2.msra.mxu0 0.0
      %4132 = vmatprep.subr.mxu0 0.0
      %4133 = vmatpush2.msra.mxu0 0.0
      %4134 = vmatprep.subr.mxu0 0.0
      %4135 = vmatpush2.msra.mxu0 0.0
      %4136 = vmatprep.subr.mxu0 0.0
      %4137 = vmatpush2.msra.mxu0 0.0
      %4138 = vmatprep.subr.mxu0 %v3951
      %4139 = vmatpush2.msra.mxu0 %v3950
      %4140 = vmatprep.subr.mxu0 %v3949
      %4141 = vmatpush2.msra.mxu0 %v3948
      %4142 = vmatprep.mubr.f32.mxu0 %v3978
      %4143 = vmatmul.mubr.f32.gmra.mxu0 %v3838
      %v4144 = vpop.f32.mrf.mxu0
      %v4145 = vadd.f32 %v4056, %v4144
      %v4146 = vpop.f32.mrf.mxu0
      %v4147 = vadd.f32 %v4058, %v4146
      %4148 = vmatprep.mubr.f32.mxu0 %v3981
      %4149 = vmatmul.mubr.f32.gmra.mxu0 %v3842
      %v4150 = vpop.f32.mrf.mxu0
      %v4151 = vadd.f32 %v4062, %v4150
      %v4152 = vpop.f32.mrf.mxu0
      %v4153 = vadd.f32 %v4064, %v4152
      %4154 = vmatprep.mubr.f32.mxu0 %v3984
      %4155 = vmatmul.mubr.f32.gmra.mxu0 %v3846
      %v4156 = vpop.f32.mrf.mxu0
      %v4157 = vadd.f32 %v4068, %v4156
      %v4158 = vpop.f32.mrf.mxu0
      %v4159 = vadd.f32 %v4070, %v4158
      %4160 = vmatprep.mubr.f32.mxu0 %v3987
      %4161 = vmatmul.mubr.f32.gmra.mxu0 %v3850
      %v4162 = vpop.f32.mrf.mxu0
      %v4163 = vadd.f32 %v4074, %v4162
      %v4164 = vpop.f32.mrf.mxu0
      %v4165 = vadd.f32 %v4076, %v4164
      %4166 = vdwg.mxu0
      %vm4167 = vcmp.ge.f32.partialorder %v4145, 0.0
      %vm4168 = vcmp.ge.f32.partialorder %v4147, 0.0
      %vm4169 = vcmp.ge.f32.partialorder %v4151, 0.0
      %vm4170 = vcmp.ge.f32.partialorder %v4153, 0.0
      %vm4171 = vcmp.ge.f32.partialorder %v4157, 0.0
      %vm4172 = vcmp.ge.f32.partialorder %v4159, 0.0
      %vm4173 = vcmp.ge.f32.partialorder %v4163, 0.0
      %vm4174 = vcmp.ge.f32.partialorder %v4165, 0.0
      %v4175 = vmul.f32 %v4145, 0.2
      %v4176 = vmul.f32 %v4147, 0.2
      %v4177 = vmul.f32 %v4151, 0.2
      %v4178 = vmul.f32 %v4153, 0.2
      %v4179 = vmul.f32 %v4157, 0.2
      %v4180 = vmul.f32 %v4159, 0.2
      %v4181 = vmul.f32 %v4163, 0.2
      %v4182 = vmul.f32 %v4165, 0.2
      %v4183 = vsel %vm4167, %v4145, %v4175
      %v4184 = vsel %vm4168, %v4147, %v4176
      %v4185 = vsel %vm4169, %v4151, %v4177
      %v4186 = vsel %vm4170, %v4153, %v4178
      %v4187 = vsel %vm4171, %v4157, %v4179
      %v4188 = vsel %vm4172, %v4159, %v4180
      %v4189 = vsel %vm4173, %v4163, %v4181
      %v4190 = vsel %vm4174, %v4165, %v4182
      %s4191 = scalar_lea.vmem %s6, 32
      %v4192 = vld [vmem:[%s4191] sm:$0xff]
      %v4193 = vld [vmem:[%s4191 + $0x8] sm:$0xff]
      %v4194 = vld [vmem:[%s4191 + $0x10] sm:$0xff]
      %v4195 = vld [vmem:[%s4191 + $0x18] sm:$0xff]
      %4197 = vset.pattern.permute.xlu0 0
      %4198 = vperm.xlu0 %4197, %v4192
      %v4199 = vpop.permute.xlu0 %4198
      %4202 = vset.pattern.permute.xlu0 0
      %4203 = vperm.xlu0 %4202, %v4193
      %v4204 = vpop.permute.xlu0 %4203
      %4207 = vset.pattern.permute.xlu0 0
      %4208 = vperm.xlu0 %4207, %v4194
      %v4209 = vpop.permute.xlu0 %4208
      %4212 = vset.pattern.permute.xlu0 0
      %4213 = vperm.xlu0 %4212, %v4195
      %v4214 = vpop.permute.xlu0 %4213
      %v4216 = vmul.f32 %v4183, %v4199
      %v4217 = vmul.f32 %v4184, %v4199
      %v4218 = vmul.f32 %v4185, %v4204
      %v4219 = vmul.f32 %v4186, %v4204
      %v4220 = vmul.f32 %v4187, %v4209
      %v4221 = vmul.f32 %v4188, %v4209
      %v4222 = vmul.f32 %v4189, %v4214
      %v4223 = vmul.f32 %v4190, %v4214
      %v4224 = vadd.f32 %v4216, %v4218
      %v4225 = vadd.f32 %v4224, %v4220
      %v4226 = vadd.f32 %v4225, %v4222
      %v4227 = vrot.slane %v4226, 4
      %v4228 = vadd.f32 %v4226, %v4227
      %v4229 = vrot.slane %v4228, 2
      %v4230 = vadd.f32 %v4228, %v4229
      %v4231 = vrot.slane %v4230, 1
      %v4232 = vadd.f32 %v4230, %v4231
      %v4233 = vadd.f32 %v4217, %v4219
      %v4234 = vadd.f32 %v4233, %v4221
      %v4235 = vadd.f32 %v4234, %v4223
      %v4236 = vrot.slane %v4235, 4
      %v4237 = vadd.f32 %v4235, %v4236
      %v4238 = vrot.slane %v4237, 2
      %v4239 = vadd.f32 %v4237, %v4238
      %v4240 = vrot.slane %v4239, 1
      %v4241 = vadd.f32 %v4239, %v4240
      %s4242 = scalar_lea.vmem %s7, 1
      %v4243 = vld [vmem:[%s4242] sm:$0x1]
      %4245 = vset.pattern.permute.xlu0 0
      %4246 = vperm.xlu0 %4245, %v4243
      %v4247 = vpop.permute.xlu0 %4246
      %v4249 = vlaneseq
      %v4250 = vshrl.u32 %v4249, 7
      %v4251 = vsub.s32 0, %v4250
      %v4252 = vrot.slane %v4247, %v4251
      %v4253 = vadd.f32 %v4232, %v4252
      %v4254 = vadd.f32 %v4241, %v4252
      %s4255 = scalar_lea.vmem %s317, 1
      %v4256 = vld [vmem:[%s4255] ss:$4 sm:$0x3]
      %v4257 = vxor.u32 %v4253, 2147483648
      %v4258 = vxor.u32 %v4254, 2147483648
      %v4259 = vmul.f32 %v4257, 1.442695
      %v4260 = vpow.pop %v4259
      %v4261 = vmul.f32 %v4258, 1.442695
      %v4262 = vpow.pop %v4261
      %v4263 = vadd.f32 %v4260, 1.0
      %v4264 = vadd.f32 %v4262, 1.0
      %v4265 = vrcp.pop %v4263
      %v4266 = vmul.f32 1.0, %v4265
      %v4267 = vrcp.pop %v4264
      %v4268 = vmul.f32 1.0, %v4267
      %v4271 = vcombine.low %v4266, %v4268
      %v4273 = vunpack.c.l.s4 1966171168
      %v4274 = vunpack.c.0.s8 %v4273
      %v4275 = vlaneseq
      %v4276 = vshrl.u32 %v4275, 7
      %v4277 = vsub.s32 %v4274, %v4276
      %v4278 = vrot.slane %v4271, %v4277
      %v4280 = vunpack.c.l.s4 1966171168
      %v4281 = vunpack.c.0.s8 %v4280
      %v4282 = vlaneseq
      %v4283 = vshrl.u32 %v4282, 7
      %v4284 = vsub.s32 %v4281, %v4283
      %v4285 = vrot.slane %v4278, %v4284
      %v4287 = vmul.f32 %v4256, %v4285
      %s4288 = scalar_lea.vmem %s322, 1
      %4289 = vst.msk [vmem:[%s4288] ss:$4 sm:$0x3] %vm2375, %v4287
      %s4290 = scalar_lea.vmem %s2, 32
      %v4291 = vld [vmem:[%s4290] sm:$0xff]
      %v4292 = vld [vmem:[%s4290 + $0x8] sm:$0xff]
      %4295 = vrot.lane.b32.xlu0 %v4253, 34
      %v4296 = vpop.permute.xlu0 %4295
      %4297 = vrot.lane.b32.xlu0 %v4254, 34
      %v4298 = vpop.permute.xlu0 %4297
      %v4299 = vsel %vm424, %v4296, %v4298
      %v4302 = vsel %vm424, 0.0, %v4296
      %v4303 = vmul.f32 %v4302, %v360
      %v4304 = vmul.f32 %v4299, %v361
      %4306 = vset.pattern.permute.xlu0 0
      %4307 = vperm.xlu0 %4306, %v4291
      %v4308 = vpop.permute.xlu0 %4307
      %4311 = vset.pattern.permute.xlu0 0
      %4312 = vperm.xlu0 %4311, %v4292
      %v4313 = vpop.permute.xlu0 %4312
      %v4315 = vlaneseq
      %v4316 = vshrl.u32 %v4315, 7
      %v4317 = vsub.s32 0, %v4316
      %v4318 = vrot.slane %v4303, %v4317
      %v4319 = vlaneseq
      %v4320 = vshrl.u32 %v4319, 7
      %v4321 = vsub.s32 0, %v4320
      %v4322 = vrot.slane %v4304, %v4321
      %v4323 = vmul.f32 %v4308, %v4318
      %v4324 = vmul.f32 %v4308, %v4322
      %v4325 = vmul.f32 %v4313, %v4318
      %v4326 = vmul.f32 %v4313, %v4322
      %v4327 = vadd.f32 %v4323, 0.0
      %v4328 = vadd.f32 %v4324, 0.0
      %v4329 = vadd.f32 %v4325, 0.0
      %v4330 = vadd.f32 %v4326, 0.0
      %4331 = vrot.lane.b32.xlu0 %v4253, 33
      %v4332 = vpop.permute.xlu0 %4331
      %4333 = vrot.lane.b32.xlu0 %v4254, 33
      %v4334 = vpop.permute.xlu0 %4333
      %v4335 = vsel %vm461, %v4332, %v4334
      %v4338 = vsel %vm461, 0.0, %v4332
      %v4339 = vmul.f32 %v4338, %v372
      %v4340 = vmul.f32 %v4335, %v373
      %4341 = vset.pattern.permute.xlu0 1
      %4342 = vperm.xlu0 %4341, %v4291
      %v4343 = vpop.permute.xlu0 %4342
      %4345 = vset.pattern.permute.xlu0 1
      %4346 = vperm.xlu0 %4345, %v4292
      %v4347 = vpop.permute.xlu0 %4346
      %v4349 = vlaneseq
      %v4350 = vshrl.u32 %v4349, 7
      %v4351 = vsub.s32 0, %v4350
      %v4352 = vrot.slane %v4339, %v4351
      %v4353 = vlaneseq
      %v4354 = vshrl.u32 %v4353, 7
      %v4355 = vsub.s32 0, %v4354
      %v4356 = vrot.slane %v4340, %v4355
      %v4357 = vmul.f32 %v4343, %v4352
      %v4358 = vmul.f32 %v4343, %v4356
      %v4359 = vmul.f32 %v4347, %v4352
      %v4360 = vmul.f32 %v4347, %v4356
      %v4361 = vadd.f32 %v4327, %v4357
      %v4362 = vadd.f32 %v4328, %v4358
      %v4363 = vadd.f32 %v4329, %v4359
      %v4364 = vadd.f32 %v4330, %v4360
      %4365 = vrot.lane.b32.xlu0 %v4253, 32
      %v4366 = vpop.permute.xlu0 %4365
      %4367 = vrot.lane.b32.xlu0 %v4254, 32
      %v4368 = vpop.permute.xlu0 %4367
      %v4369 = vsel %vm496, %v4366, %v4368
      %v4372 = vsel %vm496, 0.0, %v4366
      %v4373 = vmul.f32 %v4372, %v382
      %v4374 = vmul.f32 %v4369, %v383
      %4375 = vset.pattern.permute.xlu0 2
      %4376 = vperm.xlu0 %4375, %v4291
      %v4377 = vpop.permute.xlu0 %4376
      %4379 = vset.pattern.permute.xlu0 2
      %4380 = vperm.xlu0 %4379, %v4292
      %v4381 = vpop.permute.xlu0 %4380
      %v4383 = vlaneseq
      %v4384 = vshrl.u32 %v4383, 7
      %v4385 = vsub.s32 0, %v4384
      %v4386 = vrot.slane %v4373, %v4385
      %v4387 = vlaneseq
      %v4388 = vshrl.u32 %v4387, 7
      %v4389 = vsub.s32 0, %v4388
      %v4390 = vrot.slane %v4374, %v4389
      %v4391 = vmul.f32 %v4377, %v4386
      %v4392 = vmul.f32 %v4377, %v4390
      %v4393 = vmul.f32 %v4381, %v4386
      %v4394 = vmul.f32 %v4381, %v4390
      %v4395 = vadd.f32 %v4361, %v4391
      %v4396 = vadd.f32 %v4362, %v4392
      %v4397 = vadd.f32 %v4363, %v4393
      %v4398 = vadd.f32 %v4364, %v4394
      %4399 = vrot.lane.b32.xlu0 %v4253, 31
      %v4400 = vpop.permute.xlu0 %4399
      %4401 = vrot.lane.b32.xlu0 %v4254, 31
      %v4402 = vpop.permute.xlu0 %4401
      %v4403 = vsel %vm531, %v4400, %v4402
      %v4406 = vsel %vm531, 0.0, %v4400
      %v4407 = vmul.f32 %v4406, %v394
      %v4408 = vmul.f32 %v4403, %v395
      %4409 = vset.pattern.permute.xlu0 3
      %4410 = vperm.xlu0 %4409, %v4291
      %v4411 = vpop.permute.xlu0 %4410
      %4413 = vset.pattern.permute.xlu0 3
      %4414 = vperm.xlu0 %4413, %v4292
      %v4415 = vpop.permute.xlu0 %4414
      %v4417 = vlaneseq
      %v4418 = vshrl.u32 %v4417, 7
      %v4419 = vsub.s32 0, %v4418
      %v4420 = vrot.slane %v4407, %v4419
      %v4421 = vlaneseq
      %v4422 = vshrl.u32 %v4421, 7
      %v4423 = vsub.s32 0, %v4422
      %v4424 = vrot.slane %v4408, %v4423
      %v4425 = vmul.f32 %v4411, %v4420
      %v4426 = vmul.f32 %v4411, %v4424
      %v4427 = vmul.f32 %v4415, %v4420
      %v4428 = vmul.f32 %v4415, %v4424
      %v4429 = vadd.f32 %v4395, %v4425
      %v4430 = vadd.f32 %v4396, %v4426
      %v4431 = vadd.f32 %v4397, %v4427
      %v4432 = vadd.f32 %v4398, %v4428
      %4433 = vrot.lane.b32.xlu0 %v4253, 30
      %v4434 = vpop.permute.xlu0 %4433
      %4435 = vrot.lane.b32.xlu0 %v4254, 30
      %v4436 = vpop.permute.xlu0 %4435
      %v4437 = vsel %vm566, %v4434, %v4436
      %v4440 = vsel %vm566, 0.0, %v4434
      %v4441 = vmul.f32 %v4440, %v406
      %v4442 = vmul.f32 %v4437, %v407
      %4443 = vset.pattern.permute.xlu0 4
      %4444 = vperm.xlu0 %4443, %v4291
      %v4445 = vpop.permute.xlu0 %4444
      %4447 = vset.pattern.permute.xlu0 4
      %4448 = vperm.xlu0 %4447, %v4292
      %v4449 = vpop.permute.xlu0 %4448
      %v4451 = vlaneseq
      %v4452 = vshrl.u32 %v4451, 7
      %v4453 = vsub.s32 0, %v4452
      %v4454 = vrot.slane %v4441, %v4453
      %v4455 = vlaneseq
      %v4456 = vshrl.u32 %v4455, 7
      %v4457 = vsub.s32 0, %v4456
      %v4458 = vrot.slane %v4442, %v4457
      %v4459 = vmul.f32 %v4445, %v4454
      %v4460 = vmul.f32 %v4445, %v4458
      %v4461 = vmul.f32 %v4449, %v4454
      %v4462 = vmul.f32 %v4449, %v4458
      %v4463 = vadd.f32 %v4429, %v4459
      %v4464 = vadd.f32 %v4430, %v4460
      %v4465 = vadd.f32 %v4431, %v4461
      %v4466 = vadd.f32 %v4432, %v4462
      %4467 = vrot.lane.b32.xlu0 %v4253, 18
      %v4468 = vpop.permute.xlu0 %4467
      %4469 = vrot.lane.b32.xlu0 %v4254, 18
      %v4470 = vpop.permute.xlu0 %4469
      %v4471 = vsel %vm601, %v4468, %v4470
      %v4474 = vsel %vm601, 0.0, %v4468
      %v4475 = vmul.f32 %v4474, %v360
      %v4476 = vmul.f32 %v4471, %v361
      %4477 = vset.pattern.permute.xlu0 5
      %4478 = vperm.xlu0 %4477, %v4291
      %v4479 = vpop.permute.xlu0 %4478
      %4481 = vset.pattern.permute.xlu0 5
      %4482 = vperm.xlu0 %4481, %v4292
      %v4483 = vpop.permute.xlu0 %4482
      %v4485 = vlaneseq
      %v4486 = vshrl.u32 %v4485, 7
      %v4487 = vsub.s32 0, %v4486
      %v4488 = vrot.slane %v4475, %v4487
      %v4489 = vlaneseq
      %v4490 = vshrl.u32 %v4489, 7
      %v4491 = vsub.s32 0, %v4490
      %v4492 = vrot.slane %v4476, %v4491
      %v4493 = vmul.f32 %v4479, %v4488
      %v4494 = vmul.f32 %v4479, %v4492
      %v4495 = vmul.f32 %v4483, %v4488
      %v4496 = vmul.f32 %v4483, %v4492
      %v4497 = vadd.f32 %v4463, %v4493
      %v4498 = vadd.f32 %v4464, %v4494
      %v4499 = vadd.f32 %v4465, %v4495
      %v4500 = vadd.f32 %v4466, %v4496
      %4501 = vrot.lane.b32.xlu0 %v4253, 17
      %v4502 = vpop.permute.xlu0 %4501
      %4503 = vrot.lane.b32.xlu0 %v4254, 17
      %v4504 = vpop.permute.xlu0 %4503
      %v4505 = vsel %vm636, %v4502, %v4504
      %v4508 = vsel %vm636, 0.0, %v4502
      %v4509 = vmul.f32 %v4508, %v372
      %v4510 = vmul.f32 %v4505, %v373
      %4511 = vset.pattern.permute.xlu0 6
      %4512 = vperm.xlu0 %4511, %v4291
      %v4513 = vpop.permute.xlu0 %4512
      %4515 = vset.pattern.permute.xlu0 6
      %4516 = vperm.xlu0 %4515, %v4292
      %v4517 = vpop.permute.xlu0 %4516
      %v4519 = vlaneseq
      %v4520 = vshrl.u32 %v4519, 7
      %v4521 = vsub.s32 0, %v4520
      %v4522 = vrot.slane %v4509, %v4521
      %v4523 = vlaneseq
      %v4524 = vshrl.u32 %v4523, 7
      %v4525 = vsub.s32 0, %v4524
      %v4526 = vrot.slane %v4510, %v4525
      %v4527 = vmul.f32 %v4513, %v4522
      %v4528 = vmul.f32 %v4513, %v4526
      %v4529 = vmul.f32 %v4517, %v4522
      %v4530 = vmul.f32 %v4517, %v4526
      %v4531 = vadd.f32 %v4497, %v4527
      %v4532 = vadd.f32 %v4498, %v4528
      %v4533 = vadd.f32 %v4499, %v4529
      %v4534 = vadd.f32 %v4500, %v4530
      %4535 = vrot.lane.b32.xlu0 %v4253, 16
      %v4536 = vpop.permute.xlu0 %4535
      %4537 = vrot.lane.b32.xlu0 %v4254, 16
      %v4538 = vpop.permute.xlu0 %4537
      %v4539 = vsel %vm671, %v4536, %v4538
      %v4542 = vsel %vm671, 0.0, %v4536
      %v4543 = vmul.f32 %v4542, %v382
      %v4544 = vmul.f32 %v4539, %v383
      %4545 = vset.pattern.permute.xlu0 7
      %4546 = vperm.xlu0 %4545, %v4291
      %v4547 = vpop.permute.xlu0 %4546
      %4549 = vset.pattern.permute.xlu0 7
      %4550 = vperm.xlu0 %4549, %v4292
      %v4551 = vpop.permute.xlu0 %4550
      %v4553 = vlaneseq
      %v4554 = vshrl.u32 %v4553, 7
      %v4555 = vsub.s32 0, %v4554
      %v4556 = vrot.slane %v4543, %v4555
      %v4557 = vlaneseq
      %v4558 = vshrl.u32 %v4557, 7
      %v4559 = vsub.s32 0, %v4558
      %v4560 = vrot.slane %v4544, %v4559
      %v4561 = vmul.f32 %v4547, %v4556
      %v4562 = vmul.f32 %v4547, %v4560
      %v4563 = vmul.f32 %v4551, %v4556
      %v4564 = vmul.f32 %v4551, %v4560
      %v4565 = vadd.f32 %v4531, %v4561
      %v4566 = vadd.f32 %v4532, %v4562
      %v4567 = vadd.f32 %v4533, %v4563
      %v4568 = vadd.f32 %v4534, %v4564
      %4569 = vrot.lane.b32.xlu0 %v4253, 15
      %v4570 = vpop.permute.xlu0 %4569
      %4571 = vrot.lane.b32.xlu0 %v4254, 15
      %v4572 = vpop.permute.xlu0 %4571
      %v4573 = vsel %vm706, %v4570, %v4572
      %v4576 = vsel %vm706, 0.0, %v4570
      %v4577 = vmul.f32 %v4576, %v394
      %v4578 = vmul.f32 %v4573, %v395
      %4579 = vset.pattern.permute.xlu0 8
      %4580 = vperm.xlu0 %4579, %v4291
      %v4581 = vpop.permute.xlu0 %4580
      %4583 = vset.pattern.permute.xlu0 8
      %4584 = vperm.xlu0 %4583, %v4292
      %v4585 = vpop.permute.xlu0 %4584
      %v4587 = vlaneseq
      %v4588 = vshrl.u32 %v4587, 7
      %v4589 = vsub.s32 0, %v4588
      %v4590 = vrot.slane %v4577, %v4589
      %v4591 = vlaneseq
      %v4592 = vshrl.u32 %v4591, 7
      %v4593 = vsub.s32 0, %v4592
      %v4594 = vrot.slane %v4578, %v4593
      %v4595 = vmul.f32 %v4581, %v4590
      %v4596 = vmul.f32 %v4581, %v4594
      %v4597 = vmul.f32 %v4585, %v4590
      %v4598 = vmul.f32 %v4585, %v4594
      %v4599 = vadd.f32 %v4565, %v4595
      %v4600 = vadd.f32 %v4566, %v4596
      %v4601 = vadd.f32 %v4567, %v4597
      %v4602 = vadd.f32 %v4568, %v4598
      %4603 = vrot.lane.b32.xlu0 %v4253, 14
      %v4604 = vpop.permute.xlu0 %4603
      %4605 = vrot.lane.b32.xlu0 %v4254, 14
      %v4606 = vpop.permute.xlu0 %4605
      %v4607 = vsel %vm741, %v4604, %v4606
      %v4610 = vsel %vm741, 0.0, %v4604
      %v4611 = vmul.f32 %v4610, %v406
      %v4612 = vmul.f32 %v4607, %v407
      %4613 = vset.pattern.permute.xlu0 9
      %4614 = vperm.xlu0 %4613, %v4291
      %v4615 = vpop.permute.xlu0 %4614
      %4617 = vset.pattern.permute.xlu0 9
      %4618 = vperm.xlu0 %4617, %v4292
      %v4619 = vpop.permute.xlu0 %4618
      %v4621 = vlaneseq
      %v4622 = vshrl.u32 %v4621, 7
      %v4623 = vsub.s32 0, %v4622
      %v4624 = vrot.slane %v4611, %v4623
      %v4625 = vlaneseq
      %v4626 = vshrl.u32 %v4625, 7
      %v4627 = vsub.s32 0, %v4626
      %v4628 = vrot.slane %v4612, %v4627
      %v4629 = vmul.f32 %v4615, %v4624
      %v4630 = vmul.f32 %v4615, %v4628
      %v4631 = vmul.f32 %v4619, %v4624
      %v4632 = vmul.f32 %v4619, %v4628
      %v4633 = vadd.f32 %v4599, %v4629
      %v4634 = vadd.f32 %v4600, %v4630
      %v4635 = vadd.f32 %v4601, %v4631
      %v4636 = vadd.f32 %v4602, %v4632
      %4637 = vrot.lane.b32.xlu0 %v4253, 2
      %v4638 = vpop.permute.xlu0 %4637
      %4639 = vrot.lane.b32.xlu0 %v4254, 2
      %v4640 = vpop.permute.xlu0 %4639
      %v4641 = vsel %vm776, %v4638, %v4640
      %v4644 = vsel %vm776, 0.0, %v4638
      %v4645 = vmul.f32 %v4644, %v360
      %v4646 = vmul.f32 %v4641, %v361
      %4647 = vset.pattern.permute.xlu0 10
      %4648 = vperm.xlu0 %4647, %v4291
      %v4649 = vpop.permute.xlu0 %4648
      %4651 = vset.pattern.permute.xlu0 10
      %4652 = vperm.xlu0 %4651, %v4292
      %v4653 = vpop.permute.xlu0 %4652
      %v4655 = vlaneseq
      %v4656 = vshrl.u32 %v4655, 7
      %v4657 = vsub.s32 0, %v4656
      %v4658 = vrot.slane %v4645, %v4657
      %v4659 = vlaneseq
      %v4660 = vshrl.u32 %v4659, 7
      %v4661 = vsub.s32 0, %v4660
      %v4662 = vrot.slane %v4646, %v4661
      %v4663 = vmul.f32 %v4649, %v4658
      %v4664 = vmul.f32 %v4649, %v4662
      %v4665 = vmul.f32 %v4653, %v4658
      %v4666 = vmul.f32 %v4653, %v4662
      %v4667 = vadd.f32 %v4633, %v4663
      %v4668 = vadd.f32 %v4634, %v4664
      %v4669 = vadd.f32 %v4635, %v4665
      %v4670 = vadd.f32 %v4636, %v4666
      %4671 = vrot.lane.b32.xlu0 %v4253, 1
      %v4672 = vpop.permute.xlu0 %4671
      %4673 = vrot.lane.b32.xlu0 %v4254, 1
      %v4674 = vpop.permute.xlu0 %4673
      %v4675 = vsel %vm811, %v4672, %v4674
      %v4678 = vsel %vm811, 0.0, %v4672
      %v4679 = vmul.f32 %v4678, %v372
      %v4680 = vmul.f32 %v4675, %v373
      %4681 = vset.pattern.permute.xlu0 11
      %4682 = vperm.xlu0 %4681, %v4291
      %v4683 = vpop.permute.xlu0 %4682
      %4685 = vset.pattern.permute.xlu0 11
      %4686 = vperm.xlu0 %4685, %v4292
      %v4687 = vpop.permute.xlu0 %4686
      %v4689 = vlaneseq
      %v4690 = vshrl.u32 %v4689, 7
      %v4691 = vsub.s32 0, %v4690
      %v4692 = vrot.slane %v4679, %v4691
      %v4693 = vlaneseq
      %v4694 = vshrl.u32 %v4693, 7
      %v4695 = vsub.s32 0, %v4694
      %v4696 = vrot.slane %v4680, %v4695
      %v4697 = vmul.f32 %v4683, %v4692
      %v4698 = vmul.f32 %v4683, %v4696
      %v4699 = vmul.f32 %v4687, %v4692
      %v4700 = vmul.f32 %v4687, %v4696
      %v4701 = vadd.f32 %v4667, %v4697
      %v4702 = vadd.f32 %v4668, %v4698
      %v4703 = vadd.f32 %v4669, %v4699
      %v4704 = vadd.f32 %v4670, %v4700
      %v4705 = vmul.f32 %v4253, %v382
      %v4706 = vmul.f32 %v4254, %v383
      %4707 = vset.pattern.permute.xlu0 12
      %4708 = vperm.xlu0 %4707, %v4291
      %v4709 = vpop.permute.xlu0 %4708
      %4711 = vset.pattern.permute.xlu0 12
      %4712 = vperm.xlu0 %4711, %v4292
      %v4713 = vpop.permute.xlu0 %4712
      %v4715 = vmul.f32 %v4709, %v4705
      %v4716 = vmul.f32 %v4709, %v4706
      %v4717 = vmul.f32 %v4713, %v4705
      %v4718 = vmul.f32 %v4713, %v4706
      %v4719 = vadd.f32 %v4701, %v4715
      %v4720 = vadd.f32 %v4702, %v4716
      %v4721 = vadd.f32 %v4703, %v4717
      %v4722 = vadd.f32 %v4704, %v4718
      %4723 = vrot.lane.b32.xlu0 %v4253, 127
      %v4724 = vpop.permute.xlu0 %4723
      %4725 = vrot.lane.b32.xlu0 %v4254, 127
      %v4726 = vpop.permute.xlu0 %4725
      %v4727 = vsel %vm892, %v4724, %v4726
      %v4730 = vsel %vm892, %v4726, 0.0
      %v4731 = vmul.f32 %v4727, %v394
      %v4732 = vmul.f32 %v4730, %v395
      %4733 = vset.pattern.permute.xlu0 13
      %4734 = vperm.xlu0 %4733, %v4291
      %v4735 = vpop.permute.xlu0 %4734
      %4737 = vset.pattern.permute.xlu0 13
      %4738 = vperm.xlu0 %4737, %v4292
      %v4739 = vpop.permute.xlu0 %4738
      %v4741 = vlaneseq
      %v4742 = vshrl.u32 %v4741, 7
      %v4743 = vsub.s32 0, %v4742
      %v4744 = vrot.slane %v4731, %v4743
      %v4745 = vlaneseq
      %v4746 = vshrl.u32 %v4745, 7
      %v4747 = vsub.s32 0, %v4746
      %v4748 = vrot.slane %v4732, %v4747
      %v4749 = vmul.f32 %v4735, %v4744
      %v4750 = vmul.f32 %v4735, %v4748
      %v4751 = vmul.f32 %v4739, %v4744
      %v4752 = vmul.f32 %v4739, %v4748
      %v4753 = vadd.f32 %v4719, %v4749
      %v4754 = vadd.f32 %v4720, %v4750
      %v4755 = vadd.f32 %v4721, %v4751
      %v4756 = vadd.f32 %v4722, %v4752
      %4757 = vrot.lane.b32.xlu0 %v4253, 126
      %v4758 = vpop.permute.xlu0 %4757
      %4759 = vrot.lane.b32.xlu0 %v4254, 126
      %v4760 = vpop.permute.xlu0 %4759
      %v4761 = vsel %vm927, %v4758, %v4760
      %v4764 = vsel %vm927, %v4760, 0.0
      %v4765 = vmul.f32 %v4761, %v406
      %v4766 = vmul.f32 %v4764, %v407
      %4767 = vset.pattern.permute.xlu0 14
      %4768 = vperm.xlu0 %4767, %v4291
      %v4769 = vpop.permute.xlu0 %4768
      %4771 = vset.pattern.permute.xlu0 14
      %4772 = vperm.xlu0 %4771, %v4292
      %v4773 = vpop.permute.xlu0 %4772
      %v4775 = vlaneseq
      %v4776 = vshrl.u32 %v4775, 7
      %v4777 = vsub.s32 0, %v4776
      %v4778 = vrot.slane %v4765, %v4777
      %v4779 = vlaneseq
      %v4780 = vshrl.u32 %v4779, 7
      %v4781 = vsub.s32 0, %v4780
      %v4782 = vrot.slane %v4766, %v4781
      %v4783 = vmul.f32 %v4769, %v4778
      %v4784 = vmul.f32 %v4769, %v4782
      %v4785 = vmul.f32 %v4773, %v4778
      %v4786 = vmul.f32 %v4773, %v4782
      %v4787 = vadd.f32 %v4753, %v4783
      %v4788 = vadd.f32 %v4754, %v4784
      %v4789 = vadd.f32 %v4755, %v4785
      %v4790 = vadd.f32 %v4756, %v4786
      %4791 = vrot.lane.b32.xlu0 %v4253, 114
      %v4792 = vpop.permute.xlu0 %4791
      %4793 = vrot.lane.b32.xlu0 %v4254, 114
      %v4794 = vpop.permute.xlu0 %4793
      %v4795 = vsel %vm962, %v4792, %v4794
      %v4798 = vsel %vm962, %v4794, 0.0
      %v4799 = vmul.f32 %v4795, %v360
      %v4800 = vmul.f32 %v4798, %v361
      %4801 = vset.pattern.permute.xlu0 15
      %4802 = vperm.xlu0 %4801, %v4291
      %v4803 = vpop.permute.xlu0 %4802
      %4805 = vset.pattern.permute.xlu0 15
      %4806 = vperm.xlu0 %4805, %v4292
      %v4807 = vpop.permute.xlu0 %4806
      %v4809 = vlaneseq
      %v4810 = vshrl.u32 %v4809, 7
      %v4811 = vsub.s32 0, %v4810
      %v4812 = vrot.slane %v4799, %v4811
      %v4813 = vlaneseq
      %v4814 = vshrl.u32 %v4813, 7
      %v4815 = vsub.s32 0, %v4814
      %v4816 = vrot.slane %v4800, %v4815
      %v4817 = vmul.f32 %v4803, %v4812
      %v4818 = vmul.f32 %v4803, %v4816
      %v4819 = vmul.f32 %v4807, %v4812
      %v4820 = vmul.f32 %v4807, %v4816
      %v4821 = vadd.f32 %v4787, %v4817
      %v4822 = vadd.f32 %v4788, %v4818
      %v4823 = vadd.f32 %v4789, %v4819
      %v4824 = vadd.f32 %v4790, %v4820
      %4825 = vrot.lane.b32.xlu0 %v4253, 113
      %v4826 = vpop.permute.xlu0 %4825
      %4827 = vrot.lane.b32.xlu0 %v4254, 113
      %v4828 = vpop.permute.xlu0 %4827
      %v4829 = vsel %vm997, %v4826, %v4828
      %v4832 = vsel %vm997, %v4828, 0.0
      %v4833 = vmul.f32 %v4829, %v372
      %v4834 = vmul.f32 %v4832, %v373
      %4835 = vset.pattern.permute.xlu0 16
      %4836 = vperm.xlu0 %4835, %v4291
      %v4837 = vpop.permute.xlu0 %4836
      %4839 = vset.pattern.permute.xlu0 16
      %4840 = vperm.xlu0 %4839, %v4292
      %v4841 = vpop.permute.xlu0 %4840
      %v4843 = vlaneseq
      %v4844 = vshrl.u32 %v4843, 7
      %v4845 = vsub.s32 0, %v4844
      %v4846 = vrot.slane %v4833, %v4845
      %v4847 = vlaneseq
      %v4848 = vshrl.u32 %v4847, 7
      %v4849 = vsub.s32 0, %v4848
      %v4850 = vrot.slane %v4834, %v4849
      %v4851 = vmul.f32 %v4837, %v4846
      %v4852 = vmul.f32 %v4837, %v4850
      %v4853 = vmul.f32 %v4841, %v4846
      %v4854 = vmul.f32 %v4841, %v4850
      %v4855 = vadd.f32 %v4821, %v4851
      %v4856 = vadd.f32 %v4822, %v4852
      %v4857 = vadd.f32 %v4823, %v4853
      %v4858 = vadd.f32 %v4824, %v4854
      %4859 = vrot.lane.b32.xlu0 %v4253, 112
      %v4860 = vpop.permute.xlu0 %4859
      %4861 = vrot.lane.b32.xlu0 %v4254, 112
      %v4862 = vpop.permute.xlu0 %4861
      %v4863 = vsel %vm1032, %v4860, %v4862
      %v4866 = vsel %vm1032, %v4862, 0.0
      %v4867 = vmul.f32 %v4863, %v382
      %v4868 = vmul.f32 %v4866, %v383
      %4869 = vset.pattern.permute.xlu0 17
      %4870 = vperm.xlu0 %4869, %v4291
      %v4871 = vpop.permute.xlu0 %4870
      %4873 = vset.pattern.permute.xlu0 17
      %4874 = vperm.xlu0 %4873, %v4292
      %v4875 = vpop.permute.xlu0 %4874
      %v4877 = vlaneseq
      %v4878 = vshrl.u32 %v4877, 7
      %v4879 = vsub.s32 0, %v4878
      %v4880 = vrot.slane %v4867, %v4879
      %v4881 = vlaneseq
      %v4882 = vshrl.u32 %v4881, 7
      %v4883 = vsub.s32 0, %v4882
      %v4884 = vrot.slane %v4868, %v4883
      %v4885 = vmul.f32 %v4871, %v4880
      %v4886 = vmul.f32 %v4871, %v4884
      %v4887 = vmul.f32 %v4875, %v4880
      %v4888 = vmul.f32 %v4875, %v4884
      %v4889 = vadd.f32 %v4855, %v4885
      %v4890 = vadd.f32 %v4856, %v4886
      %v4891 = vadd.f32 %v4857, %v4887
      %v4892 = vadd.f32 %v4858, %v4888
      %4893 = vrot.lane.b32.xlu0 %v4253, 111
      %v4894 = vpop.permute.xlu0 %4893
      %4895 = vrot.lane.b32.xlu0 %v4254, 111
      %v4896 = vpop.permute.xlu0 %4895
      %v4897 = vsel %vm1067, %v4894, %v4896
      %v4900 = vsel %vm1067, %v4896, 0.0
      %v4901 = vmul.f32 %v4897, %v394
      %v4902 = vmul.f32 %v4900, %v395
      %4903 = vset.pattern.permute.xlu0 18
      %4904 = vperm.xlu0 %4903, %v4291
      %v4905 = vpop.permute.xlu0 %4904
      %4907 = vset.pattern.permute.xlu0 18
      %4908 = vperm.xlu0 %4907, %v4292
      %v4909 = vpop.permute.xlu0 %4908
      %v4911 = vlaneseq
      %v4912 = vshrl.u32 %v4911, 7
      %v4913 = vsub.s32 0, %v4912
      %v4914 = vrot.slane %v4901, %v4913
      %v4915 = vlaneseq
      %v4916 = vshrl.u32 %v4915, 7
      %v4917 = vsub.s32 0, %v4916
      %v4918 = vrot.slane %v4902, %v4917
      %v4919 = vmul.f32 %v4905, %v4914
      %v4920 = vmul.f32 %v4905, %v4918
      %v4921 = vmul.f32 %v4909, %v4914
      %v4922 = vmul.f32 %v4909, %v4918
      %v4923 = vadd.f32 %v4889, %v4919
      %v4924 = vadd.f32 %v4890, %v4920
      %v4925 = vadd.f32 %v4891, %v4921
      %v4926 = vadd.f32 %v4892, %v4922
      %4927 = vrot.lane.b32.xlu0 %v4253, 110
      %v4928 = vpop.permute.xlu0 %4927
      %4929 = vrot.lane.b32.xlu0 %v4254, 110
      %v4930 = vpop.permute.xlu0 %4929
      %v4931 = vsel %vm1102, %v4928, %v4930
      %v4934 = vsel %vm1102, %v4930, 0.0
      %v4935 = vmul.f32 %v4931, %v406
      %v4936 = vmul.f32 %v4934, %v407
      %4937 = vset.pattern.permute.xlu0 19
      %4938 = vperm.xlu0 %4937, %v4291
      %v4939 = vpop.permute.xlu0 %4938
      %4941 = vset.pattern.permute.xlu0 19
      %4942 = vperm.xlu0 %4941, %v4292
      %v4943 = vpop.permute.xlu0 %4942
      %v4945 = vlaneseq
      %v4946 = vshrl.u32 %v4945, 7
      %v4947 = vsub.s32 0, %v4946
      %v4948 = vrot.slane %v4935, %v4947
      %v4949 = vlaneseq
      %v4950 = vshrl.u32 %v4949, 7
      %v4951 = vsub.s32 0, %v4950
      %v4952 = vrot.slane %v4936, %v4951
      %v4953 = vmul.f32 %v4939, %v4948
      %v4954 = vmul.f32 %v4939, %v4952
      %v4955 = vmul.f32 %v4943, %v4948
      %v4956 = vmul.f32 %v4943, %v4952
      %v4957 = vadd.f32 %v4923, %v4953
      %v4958 = vadd.f32 %v4924, %v4954
      %v4959 = vadd.f32 %v4925, %v4955
      %v4960 = vadd.f32 %v4926, %v4956
      %4961 = vrot.lane.b32.xlu0 %v4253, 98
      %v4962 = vpop.permute.xlu0 %4961
      %4963 = vrot.lane.b32.xlu0 %v4254, 98
      %v4964 = vpop.permute.xlu0 %4963
      %v4965 = vsel %vm1137, %v4962, %v4964
      %v4968 = vsel %vm1137, %v4964, 0.0
      %v4969 = vmul.f32 %v4965, %v360
      %v4970 = vmul.f32 %v4968, %v361
      %4971 = vset.pattern.permute.xlu0 20
      %4972 = vperm.xlu0 %4971, %v4291
      %v4973 = vpop.permute.xlu0 %4972
      %4975 = vset.pattern.permute.xlu0 20
      %4976 = vperm.xlu0 %4975, %v4292
      %v4977 = vpop.permute.xlu0 %4976
      %v4979 = vlaneseq
      %v4980 = vshrl.u32 %v4979, 7
      %v4981 = vsub.s32 0, %v4980
      %v4982 = vrot.slane %v4969, %v4981
      %v4983 = vlaneseq
      %v4984 = vshrl.u32 %v4983, 7
      %v4985 = vsub.s32 0, %v4984
      %v4986 = vrot.slane %v4970, %v4985
      %v4987 = vmul.f32 %v4973, %v4982
      %v4988 = vmul.f32 %v4973, %v4986
      %v4989 = vmul.f32 %v4977, %v4982
      %v4990 = vmul.f32 %v4977, %v4986
      %v4991 = vadd.f32 %v4957, %v4987
      %v4992 = vadd.f32 %v4958, %v4988
      %v4993 = vadd.f32 %v4959, %v4989
      %v4994 = vadd.f32 %v4960, %v4990
      %4995 = vrot.lane.b32.xlu0 %v4253, 97
      %v4996 = vpop.permute.xlu0 %4995
      %4997 = vrot.lane.b32.xlu0 %v4254, 97
      %v4998 = vpop.permute.xlu0 %4997
      %v4999 = vsel %vm1172, %v4996, %v4998
      %v5002 = vsel %vm1172, %v4998, 0.0
      %v5003 = vmul.f32 %v4999, %v372
      %v5004 = vmul.f32 %v5002, %v373
      %5005 = vset.pattern.permute.xlu0 21
      %5006 = vperm.xlu0 %5005, %v4291
      %v5007 = vpop.permute.xlu0 %5006
      %5009 = vset.pattern.permute.xlu0 21
      %5010 = vperm.xlu0 %5009, %v4292
      %v5011 = vpop.permute.xlu0 %5010
      %v5013 = vlaneseq
      %v5014 = vshrl.u32 %v5013, 7
      %v5015 = vsub.s32 0, %v5014
      %v5016 = vrot.slane %v5003, %v5015
      %v5017 = vlaneseq
      %v5018 = vshrl.u32 %v5017, 7
      %v5019 = vsub.s32 0, %v5018
      %v5020 = vrot.slane %v5004, %v5019
      %v5021 = vmul.f32 %v5007, %v5016
      %v5022 = vmul.f32 %v5007, %v5020
      %v5023 = vmul.f32 %v5011, %v5016
      %v5024 = vmul.f32 %v5011, %v5020
      %v5025 = vadd.f32 %v4991, %v5021
      %v5026 = vadd.f32 %v4992, %v5022
      %v5027 = vadd.f32 %v4993, %v5023
      %v5028 = vadd.f32 %v4994, %v5024
      %5029 = vrot.lane.b32.xlu0 %v4253, 96
      %v5030 = vpop.permute.xlu0 %5029
      %5031 = vrot.lane.b32.xlu0 %v4254, 96
      %v5032 = vpop.permute.xlu0 %5031
      %v5033 = vsel %vm1207, %v5030, %v5032
      %v5036 = vsel %vm1207, %v5032, 0.0
      %v5037 = vmul.f32 %v5033, %v382
      %v5038 = vmul.f32 %v5036, %v383
      %5039 = vset.pattern.permute.xlu0 22
      %5040 = vperm.xlu0 %5039, %v4291
      %v5041 = vpop.permute.xlu0 %5040
      %5043 = vset.pattern.permute.xlu0 22
      %5044 = vperm.xlu0 %5043, %v4292
      %v5045 = vpop.permute.xlu0 %5044
      %v5047 = vlaneseq
      %v5048 = vshrl.u32 %v5047, 7
      %v5049 = vsub.s32 0, %v5048
      %v5050 = vrot.slane %v5037, %v5049
      %v5051 = vlaneseq
      %v5052 = vshrl.u32 %v5051, 7
      %v5053 = vsub.s32 0, %v5052
      %v5054 = vrot.slane %v5038, %v5053
      %v5055 = vmul.f32 %v5041, %v5050
      %v5056 = vmul.f32 %v5041, %v5054
      %v5057 = vmul.f32 %v5045, %v5050
      %v5058 = vmul.f32 %v5045, %v5054
      %v5059 = vadd.f32 %v5025, %v5055
      %v5060 = vadd.f32 %v5026, %v5056
      %v5061 = vadd.f32 %v5027, %v5057
      %v5062 = vadd.f32 %v5028, %v5058
      %5063 = vrot.lane.b32.xlu0 %v4253, 95
      %v5064 = vpop.permute.xlu0 %5063
      %5065 = vrot.lane.b32.xlu0 %v4254, 95
      %v5066 = vpop.permute.xlu0 %5065
      %v5067 = vsel %vm1242, %v5064, %v5066
      %v5070 = vsel %vm1242, %v5066, 0.0
      %v5071 = vmul.f32 %v5067, %v394
      %v5072 = vmul.f32 %v5070, %v395
      %5073 = vset.pattern.permute.xlu0 23
      %5074 = vperm.xlu0 %5073, %v4291
      %v5075 = vpop.permute.xlu0 %5074
      %5077 = vset.pattern.permute.xlu0 23
      %5078 = vperm.xlu0 %5077, %v4292
      %v5079 = vpop.permute.xlu0 %5078
      %v5081 = vlaneseq
      %v5082 = vshrl.u32 %v5081, 7
      %v5083 = vsub.s32 0, %v5082
      %v5084 = vrot.slane %v5071, %v5083
      %v5085 = vlaneseq
      %v5086 = vshrl.u32 %v5085, 7
      %v5087 = vsub.s32 0, %v5086
      %v5088 = vrot.slane %v5072, %v5087
      %v5089 = vmul.f32 %v5075, %v5084
      %v5090 = vmul.f32 %v5075, %v5088
      %v5091 = vmul.f32 %v5079, %v5084
      %v5092 = vmul.f32 %v5079, %v5088
      %v5093 = vadd.f32 %v5059, %v5089
      %v5094 = vadd.f32 %v5060, %v5090
      %v5095 = vadd.f32 %v5061, %v5091
      %v5096 = vadd.f32 %v5062, %v5092
      %5097 = vrot.lane.b32.xlu0 %v4253, 94
      %v5098 = vpop.permute.xlu0 %5097
      %5099 = vrot.lane.b32.xlu0 %v4254, 94
      %v5100 = vpop.permute.xlu0 %5099
      %v5101 = vsel %vm1277, %v5098, %v5100
      %v5104 = vsel %vm1277, %v5100, 0.0
      %v5105 = vmul.f32 %v5101, %v406
      %v5106 = vmul.f32 %v5104, %v407
      %5107 = vset.pattern.permute.xlu0 24
      %5108 = vperm.xlu0 %5107, %v4291
      %v5109 = vpop.permute.xlu0 %5108
      %5111 = vset.pattern.permute.xlu0 24
      %5112 = vperm.xlu0 %5111, %v4292
      %v5113 = vpop.permute.xlu0 %5112
      %v5115 = vlaneseq
      %v5116 = vshrl.u32 %v5115, 7
      %v5117 = vsub.s32 0, %v5116
      %v5118 = vrot.slane %v5105, %v5117
      %v5119 = vlaneseq
      %v5120 = vshrl.u32 %v5119, 7
      %v5121 = vsub.s32 0, %v5120
      %v5122 = vrot.slane %v5106, %v5121
      %v5123 = vmul.f32 %v5109, %v5118
      %v5124 = vmul.f32 %v5109, %v5122
      %v5125 = vmul.f32 %v5113, %v5118
      %v5126 = vmul.f32 %v5113, %v5122
      %v5127 = vadd.f32 %v5093, %v5123
      %v5128 = vadd.f32 %v5094, %v5124
      %v5129 = vadd.f32 %v5095, %v5125
      %v5130 = vadd.f32 %v5096, %v5126
      %s5131 = scalar_lea.vmem %s3, 32
      %v5132 = vld [vmem:[%s5131] sm:$0xff]
      %v5133 = vld [vmem:[%s5131 + $0x8] sm:$0xff]
      %5135 = vset.pattern.permute.xlu0 0
      %5136 = vperm.xlu0 %5135, %v5132
      %v5137 = vpop.permute.xlu0 %5136
      %5140 = vset.pattern.permute.xlu0 0
      %5141 = vperm.xlu0 %5140, %v5133
      %v5142 = vpop.permute.xlu0 %5141
      %v5144 = vadd.f32 %v5127, %v5137
      %v5145 = vadd.f32 %v5128, %v5137
      %v5146 = vadd.f32 %v5129, %v5142
      %v5147 = vadd.f32 %v5130, %v5142
      %vm5148 = vcmp.ge.f32.partialorder %v5144, 0.0
      %vm5149 = vcmp.ge.f32.partialorder %v5145, 0.0
      %vm5150 = vcmp.ge.f32.partialorder %v5146, 0.0
      %vm5151 = vcmp.ge.f32.partialorder %v5147, 0.0
      %v5152 = vmul.f32 %v5144, 0.2
      %v5153 = vmul.f32 %v5145, 0.2
      %v5154 = vmul.f32 %v5146, 0.2
      %v5155 = vmul.f32 %v5147, 0.2
      %v5156 = vsel %vm5148, %v5144, %v5152
      %v5157 = vsel %vm5149, %v5145, %v5153
      %v5158 = vsel %vm5150, %v5146, %v5154
      %v5159 = vsel %vm5151, %v5147, %v5155
      %5164 = vrot.lane.b32.xlu0 %v5156, 34
      %v5165 = vpop.permute.xlu0 %5164
      %5166 = vrot.lane.b32.xlu0 %v5157, 34
      %v5167 = vpop.permute.xlu0 %5166
      %5168 = vrot.lane.b32.xlu0 %v5158, 34
      %v5169 = vpop.permute.xlu0 %5168
      %5170 = vrot.lane.b32.xlu0 %v5159, 34
      %v5171 = vpop.permute.xlu0 %5170
      %v5172 = vsel %vm424, %v5165, %v5167
      %v5173 = vsel %vm424, %v5169, %v5171
      %v5178 = vsel %vm424, 0.0, %v5165
      %v5179 = vsel %vm424, 0.0, %v5169
      %v5180 = vmul.f32 %v5178, %v360
      %v5181 = vmul.f32 %v5172, %v361
      %v5182 = vmul.f32 %v5179, %v360
      %v5183 = vmul.f32 %v5173, %v361
      %5184 = vst [vmem:[#allocation2] sm:$0xff] %v5180
      %5185 = vst [vmem:[#allocation2 + $0x8] sm:$0xff] %v5181
      %5186 = vst [vmem:[#allocation2 + $0x10] sm:$0xff] %v5182
      %5187 = vst [vmem:[#allocation2 + $0x18] sm:$0xff] %v5183
      %5188 = vrot.lane.b32.xlu0 %v5156, 33
      %v5189 = vpop.permute.xlu0 %5188
      %5190 = vrot.lane.b32.xlu0 %v5157, 33
      %v5191 = vpop.permute.xlu0 %5190
      %5192 = vrot.lane.b32.xlu0 %v5158, 33
      %v5193 = vpop.permute.xlu0 %5192
      %5194 = vrot.lane.b32.xlu0 %v5159, 33
      %v5195 = vpop.permute.xlu0 %5194
      %v5196 = vsel %vm461, %v5189, %v5191
      %v5197 = vsel %vm461, %v5193, %v5195
      %v5202 = vsel %vm461, 0.0, %v5189
      %v5203 = vsel %vm461, 0.0, %v5193
      %v5204 = vmul.f32 %v5202, %v372
      %v5205 = vmul.f32 %v5196, %v373
      %v5206 = vmul.f32 %v5203, %v372
      %v5207 = vmul.f32 %v5197, %v373
      %5208 = vst [vmem:[#allocation2 + $0x20] sm:$0xff] %v5204
      %5209 = vst [vmem:[#allocation2 + $0x28] sm:$0xff] %v5205
      %5210 = vst [vmem:[#allocation2 + $0x30] sm:$0xff] %v5206
      %5211 = vst [vmem:[#allocation2 + $0x38] sm:$0xff] %v5207
      %5212 = vrot.lane.b32.xlu0 %v5156, 32
      %v5213 = vpop.permute.xlu0 %5212
      %5214 = vrot.lane.b32.xlu0 %v5157, 32
      %v5215 = vpop.permute.xlu0 %5214
      %5216 = vrot.lane.b32.xlu0 %v5158, 32
      %v5217 = vpop.permute.xlu0 %5216
      %5218 = vrot.lane.b32.xlu0 %v5159, 32
      %v5219 = vpop.permute.xlu0 %5218
      %v5220 = vsel %vm496, %v5213, %v5215
      %v5221 = vsel %vm496, %v5217, %v5219
      %v5226 = vsel %vm496, 0.0, %v5213
      %v5227 = vsel %vm496, 0.0, %v5217
      %v5228 = vmul.f32 %v5226, %v382
      %v5229 = vmul.f32 %v5220, %v383
      %v5230 = vmul.f32 %v5227, %v382
      %v5231 = vmul.f32 %v5221, %v383
      %5232 = vst [vmem:[#allocation2 + $0x40] sm:$0xff] %v5228
      %5233 = vst [vmem:[#allocation2 + $0x48] sm:$0xff] %v5229
      %5234 = vst [vmem:[#allocation2 + $0x50] sm:$0xff] %v5230
      %5235 = vst [vmem:[#allocation2 + $0x58] sm:$0xff] %v5231
      %5236 = vrot.lane.b32.xlu0 %v5156, 31
      %v5237 = vpop.permute.xlu0 %5236
      %5238 = vrot.lane.b32.xlu0 %v5157, 31
      %v5239 = vpop.permute.xlu0 %5238
      %5240 = vrot.lane.b32.xlu0 %v5158, 31
      %v5241 = vpop.permute.xlu0 %5240
      %5242 = vrot.lane.b32.xlu0 %v5159, 31
      %v5243 = vpop.permute.xlu0 %5242
      %v5244 = vsel %vm531, %v5237, %v5239
      %v5245 = vsel %vm531, %v5241, %v5243
      %v5250 = vsel %vm531, 0.0, %v5237
      %v5251 = vsel %vm531, 0.0, %v5241
      %v5252 = vmul.f32 %v5250, %v394
      %v5253 = vmul.f32 %v5244, %v395
      %v5254 = vmul.f32 %v5251, %v394
      %v5255 = vmul.f32 %v5245, %v395
      %5256 = vst [vmem:[#allocation2 + $0x60] sm:$0xff] %v5252
      %5257 = vst [vmem:[#allocation2 + $0x68] sm:$0xff] %v5253
      %5258 = vst [vmem:[#allocation2 + $0x70] sm:$0xff] %v5254
      %5259 = vst [vmem:[#allocation2 + $0x78] sm:$0xff] %v5255
      %5260 = vrot.lane.b32.xlu0 %v5156, 30
      %v5261 = vpop.permute.xlu0 %5260
      %5262 = vrot.lane.b32.xlu0 %v5157, 30
      %v5263 = vpop.permute.xlu0 %5262
      %5264 = vrot.lane.b32.xlu0 %v5158, 30
      %v5265 = vpop.permute.xlu0 %5264
      %5266 = vrot.lane.b32.xlu0 %v5159, 30
      %v5267 = vpop.permute.xlu0 %5266
      %v5268 = vsel %vm566, %v5261, %v5263
      %v5269 = vsel %vm566, %v5265, %v5267
      %v5274 = vsel %vm566, 0.0, %v5261
      %v5275 = vsel %vm566, 0.0, %v5265
      %v5276 = vmul.f32 %v5274, %v406
      %v5277 = vmul.f32 %v5268, %v407
      %v5278 = vmul.f32 %v5275, %v406
      %v5279 = vmul.f32 %v5269, %v407
      %5280 = vst [vmem:[#allocation2 + $0x80] sm:$0xff] %v5276
      %5281 = vst [vmem:[#allocation2 + $0x88] sm:$0xff] %v5277
      %5282 = vst [vmem:[#allocation2 + $0x90] sm:$0xff] %v5278
      %5283 = vst [vmem:[#allocation2 + $0x98] sm:$0xff] %v5279
      %5284 = vrot.lane.b32.xlu0 %v5156, 18
      %v5285 = vpop.permute.xlu0 %5284
      %5286 = vrot.lane.b32.xlu0 %v5157, 18
      %v5287 = vpop.permute.xlu0 %5286
      %5288 = vrot.lane.b32.xlu0 %v5158, 18
      %v5289 = vpop.permute.xlu0 %5288
      %5290 = vrot.lane.b32.xlu0 %v5159, 18
      %v5291 = vpop.permute.xlu0 %5290
      %v5292 = vsel %vm601, %v5285, %v5287
      %v5293 = vsel %vm601, %v5289, %v5291
      %v5298 = vsel %vm601, 0.0, %v5285
      %v5299 = vsel %vm601, 0.0, %v5289
      %v5300 = vmul.f32 %v5298, %v360
      %v5301 = vmul.f32 %v5292, %v361
      %v5302 = vmul.f32 %v5299, %v360
      %v5303 = vmul.f32 %v5293, %v361
      %5304 = vst [vmem:[#allocation2 + $0xa0] sm:$0xff] %v5300
      %5305 = vst [vmem:[#allocation2 + $0xa8] sm:$0xff] %v5301
      %5306 = vst [vmem:[#allocation2 + $0xb0] sm:$0xff] %v5302
      %5307 = vst [vmem:[#allocation2 + $0xb8] sm:$0xff] %v5303
      %5308 = vrot.lane.b32.xlu0 %v5156, 17
      %v5309 = vpop.permute.xlu0 %5308
      %5310 = vrot.lane.b32.xlu0 %v5157, 17
      %v5311 = vpop.permute.xlu0 %5310
      %5312 = vrot.lane.b32.xlu0 %v5158, 17
      %v5313 = vpop.permute.xlu0 %5312
      %5314 = vrot.lane.b32.xlu0 %v5159, 17
      %v5315 = vpop.permute.xlu0 %5314
      %v5316 = vsel %vm636, %v5309, %v5311
      %v5317 = vsel %vm636, %v5313, %v5315
      %v5322 = vsel %vm636, 0.0, %v5309
      %v5323 = vsel %vm636, 0.0, %v5313
      %v5324 = vmul.f32 %v5322, %v372
      %v5325 = vmul.f32 %v5316, %v373
      %v5326 = vmul.f32 %v5323, %v372
      %v5327 = vmul.f32 %v5317, %v373
      %5328 = vst [vmem:[#allocation2 + $0xc0] sm:$0xff] %v5324
      %5329 = vst [vmem:[#allocation2 + $0xc8] sm:$0xff] %v5325
      %5330 = vst [vmem:[#allocation2 + $0xd0] sm:$0xff] %v5326
      %5331 = vst [vmem:[#allocation2 + $0xd8] sm:$0xff] %v5327
      %5332 = vrot.lane.b32.xlu0 %v5156, 16
      %v5333 = vpop.permute.xlu0 %5332
      %5334 = vrot.lane.b32.xlu0 %v5157, 16
      %v5335 = vpop.permute.xlu0 %5334
      %5336 = vrot.lane.b32.xlu0 %v5158, 16
      %v5337 = vpop.permute.xlu0 %5336
      %5338 = vrot.lane.b32.xlu0 %v5159, 16
      %v5339 = vpop.permute.xlu0 %5338
      %v5340 = vsel %vm671, %v5333, %v5335
      %v5341 = vsel %vm671, %v5337, %v5339
      %v5346 = vsel %vm671, 0.0, %v5333
      %v5347 = vsel %vm671, 0.0, %v5337
      %v5348 = vmul.f32 %v5346, %v382
      %v5349 = vmul.f32 %v5340, %v383
      %v5350 = vmul.f32 %v5347, %v382
      %v5351 = vmul.f32 %v5341, %v383
      %5352 = vst [vmem:[#allocation2 + $0xe0] sm:$0xff] %v5348
      %5353 = vst [vmem:[#allocation2 + $0xe8] sm:$0xff] %v5349
      %5354 = vst [vmem:[#allocation2 + $0xf0] sm:$0xff] %v5350
      %5355 = vst [vmem:[#allocation2 + $0xf8] sm:$0xff] %v5351
      %5356 = vrot.lane.b32.xlu0 %v5156, 15
      %v5357 = vpop.permute.xlu0 %5356
      %5358 = vrot.lane.b32.xlu0 %v5157, 15
      %v5359 = vpop.permute.xlu0 %5358
      %5360 = vrot.lane.b32.xlu0 %v5158, 15
      %v5361 = vpop.permute.xlu0 %5360
      %5362 = vrot.lane.b32.xlu0 %v5159, 15
      %v5363 = vpop.permute.xlu0 %5362
      %v5364 = vsel %vm706, %v5357, %v5359
      %v5365 = vsel %vm706, %v5361, %v5363
      %v5370 = vsel %vm706, 0.0, %v5357
      %v5371 = vsel %vm706, 0.0, %v5361
      %v5372 = vmul.f32 %v5370, %v394
      %v5373 = vmul.f32 %v5364, %v395
      %v5374 = vmul.f32 %v5371, %v394
      %v5375 = vmul.f32 %v5365, %v395
      %5376 = vst [vmem:[#allocation2 + $0x100] sm:$0xff] %v5372
      %5377 = vst [vmem:[#allocation2 + $0x108] sm:$0xff] %v5373
      %5378 = vst [vmem:[#allocation2 + $0x110] sm:$0xff] %v5374
      %5379 = vst [vmem:[#allocation2 + $0x118] sm:$0xff] %v5375
      %5380 = vrot.lane.b32.xlu0 %v5156, 14
      %v5381 = vpop.permute.xlu0 %5380
      %5382 = vrot.lane.b32.xlu0 %v5157, 14
      %v5383 = vpop.permute.xlu0 %5382
      %5384 = vrot.lane.b32.xlu0 %v5158, 14
      %v5385 = vpop.permute.xlu0 %5384
      %5386 = vrot.lane.b32.xlu0 %v5159, 14
      %v5387 = vpop.permute.xlu0 %5386
      %v5388 = vsel %vm741, %v5381, %v5383
      %v5389 = vsel %vm741, %v5385, %v5387
      %v5394 = vsel %vm741, 0.0, %v5381
      %v5395 = vsel %vm741, 0.0, %v5385
      %v5396 = vmul.f32 %v5394, %v406
      %v5397 = vmul.f32 %v5388, %v407
      %v5398 = vmul.f32 %v5395, %v406
      %v5399 = vmul.f32 %v5389, %v407
      %5400 = vst [vmem:[#allocation2 + $0x120] sm:$0xff] %v5396
      %5401 = vst [vmem:[#allocation2 + $0x128] sm:$0xff] %v5397
      %5402 = vst [vmem:[#allocation2 + $0x130] sm:$0xff] %v5398
      %5403 = vst [vmem:[#allocation2 + $0x138] sm:$0xff] %v5399
      %5404 = vrot.lane.b32.xlu0 %v5156, 2
      %v5405 = vpop.permute.xlu0 %5404
      %5406 = vrot.lane.b32.xlu0 %v5157, 2
      %v5407 = vpop.permute.xlu0 %5406
      %5408 = vrot.lane.b32.xlu0 %v5158, 2
      %v5409 = vpop.permute.xlu0 %5408
      %5410 = vrot.lane.b32.xlu0 %v5159, 2
      %v5411 = vpop.permute.xlu0 %5410
      %v5412 = vsel %vm776, %v5405, %v5407
      %v5413 = vsel %vm776, %v5409, %v5411
      %v5418 = vsel %vm776, 0.0, %v5405
      %v5419 = vsel %vm776, 0.0, %v5409
      %v5420 = vmul.f32 %v5418, %v360
      %v5421 = vmul.f32 %v5412, %v361
      %v5422 = vmul.f32 %v5419, %v360
      %v5423 = vmul.f32 %v5413, %v361
      %5424 = vst [vmem:[#allocation2 + $0x140] sm:$0xff] %v5420
      %5425 = vst [vmem:[#allocation2 + $0x148] sm:$0xff] %v5421
      %5426 = vst [vmem:[#allocation2 + $0x150] sm:$0xff] %v5422
      %5427 = vst [vmem:[#allocation2 + $0x158] sm:$0xff] %v5423
      %5428 = vrot.lane.b32.xlu0 %v5156, 1
      %v5429 = vpop.permute.xlu0 %5428
      %5430 = vrot.lane.b32.xlu0 %v5157, 1
      %v5431 = vpop.permute.xlu0 %5430
      %5432 = vrot.lane.b32.xlu0 %v5158, 1
      %v5433 = vpop.permute.xlu0 %5432
      %5434 = vrot.lane.b32.xlu0 %v5159, 1
      %v5435 = vpop.permute.xlu0 %5434
      %v5436 = vsel %vm811, %v5429, %v5431
      %v5437 = vsel %vm811, %v5433, %v5435
      %v5442 = vsel %vm811, 0.0, %v5429
      %v5443 = vsel %vm811, 0.0, %v5433
      %v5444 = vmul.f32 %v5442, %v372
      %v5445 = vmul.f32 %v5436, %v373
      %v5446 = vmul.f32 %v5443, %v372
      %v5447 = vmul.f32 %v5437, %v373
      %5448 = vst [vmem:[#allocation2 + $0x160] sm:$0xff] %v5444
      %5449 = vst [vmem:[#allocation2 + $0x168] sm:$0xff] %v5445
      %5450 = vst [vmem:[#allocation2 + $0x170] sm:$0xff] %v5446
      %5451 = vst [vmem:[#allocation2 + $0x178] sm:$0xff] %v5447
      %v5452 = vmul.f32 %v5156, %v382
      %v5453 = vmul.f32 %v5157, %v383
      %v5454 = vmul.f32 %v5158, %v382
      %v5455 = vmul.f32 %v5159, %v383
      %5456 = vst [vmem:[#allocation2 + $0x180] sm:$0xff] %v5452
      %5457 = vst [vmem:[#allocation2 + $0x188] sm:$0xff] %v5453
      %5458 = vst [vmem:[#allocation2 + $0x190] sm:$0xff] %v5454
      %5459 = vst [vmem:[#allocation2 + $0x198] sm:$0xff] %v5455
      %5460 = vrot.lane.b32.xlu0 %v5156, 127
      %v5461 = vpop.permute.xlu0 %5460
      %5462 = vrot.lane.b32.xlu0 %v5157, 127
      %v5463 = vpop.permute.xlu0 %5462
      %5464 = vrot.lane.b32.xlu0 %v5158, 127
      %v5465 = vpop.permute.xlu0 %5464
      %5466 = vrot.lane.b32.xlu0 %v5159, 127
      %v5467 = vpop.permute.xlu0 %5466
      %v5468 = vsel %vm892, %v5461, %v5463
      %v5469 = vsel %vm892, %v5465, %v5467
      %v5474 = vsel %vm892, %v5463, 0.0
      %v5475 = vsel %vm892, %v5467, 0.0
      %v5476 = vmul.f32 %v5468, %v394
      %v5477 = vmul.f32 %v5474, %v395
      %v5478 = vmul.f32 %v5469, %v394
      %v5479 = vmul.f32 %v5475, %v395
      %5480 = vst [vmem:[#allocation2 + $0x1a0] sm:$0xff] %v5476
      %5481 = vst [vmem:[#allocation2 + $0x1a8] sm:$0xff] %v5477
      %5482 = vst [vmem:[#allocation2 + $0x1b0] sm:$0xff] %v5478
      %5483 = vst [vmem:[#allocation2 + $0x1b8] sm:$0xff] %v5479
      %5484 = vrot.lane.b32.xlu0 %v5156, 126
      %v5485 = vpop.permute.xlu0 %5484
      %5486 = vrot.lane.b32.xlu0 %v5157, 126
      %v5487 = vpop.permute.xlu0 %5486
      %5488 = vrot.lane.b32.xlu0 %v5158, 126
      %v5489 = vpop.permute.xlu0 %5488
      %5490 = vrot.lane.b32.xlu0 %v5159, 126
      %v5491 = vpop.permute.xlu0 %5490
      %v5492 = vsel %vm927, %v5485, %v5487
      %v5493 = vsel %vm927, %v5489, %v5491
      %v5498 = vsel %vm927, %v5487, 0.0
      %v5499 = vsel %vm927, %v5491, 0.0
      %v5500 = vmul.f32 %v5492, %v406
      %v5501 = vmul.f32 %v5498, %v407
      %v5502 = vmul.f32 %v5493, %v406
      %v5503 = vmul.f32 %v5499, %v407
      %5504 = vst [vmem:[#allocation2 + $0x1c0] sm:$0xff] %v5500
      %5505 = vst [vmem:[#allocation2 + $0x1c8] sm:$0xff] %v5501
      %5506 = vst [vmem:[#allocation2 + $0x1d0] sm:$0xff] %v5502
      %5507 = vst [vmem:[#allocation2 + $0x1d8] sm:$0xff] %v5503
      %5508 = vrot.lane.b32.xlu0 %v5156, 114
      %v5509 = vpop.permute.xlu0 %5508
      %5510 = vrot.lane.b32.xlu0 %v5157, 114
      %v5511 = vpop.permute.xlu0 %5510
      %5512 = vrot.lane.b32.xlu0 %v5158, 114
      %v5513 = vpop.permute.xlu0 %5512
      %5514 = vrot.lane.b32.xlu0 %v5159, 114
      %v5515 = vpop.permute.xlu0 %5514
      %v5516 = vsel %vm962, %v5509, %v5511
      %v5517 = vsel %vm962, %v5513, %v5515
      %v5522 = vsel %vm962, %v5511, 0.0
      %v5523 = vsel %vm962, %v5515, 0.0
      %v5524 = vmul.f32 %v5516, %v360
      %v5525 = vmul.f32 %v5522, %v361
      %v5526 = vmul.f32 %v5517, %v360
      %v5527 = vmul.f32 %v5523, %v361
      %5528 = vst [vmem:[#allocation2 + $0x1e0] sm:$0xff] %v5524
      %5529 = vst [vmem:[#allocation2 + $0x1e8] sm:$0xff] %v5525
      %5530 = vst [vmem:[#allocation2 + $0x1f0] sm:$0xff] %v5526
      %5531 = vst [vmem:[#allocation2 + $0x1f8] sm:$0xff] %v5527
      %5532 = vrot.lane.b32.xlu0 %v5156, 113
      %v5533 = vpop.permute.xlu0 %5532
      %5534 = vrot.lane.b32.xlu0 %v5157, 113
      %v5535 = vpop.permute.xlu0 %5534
      %5536 = vrot.lane.b32.xlu0 %v5158, 113
      %v5537 = vpop.permute.xlu0 %5536
      %5538 = vrot.lane.b32.xlu0 %v5159, 113
      %v5539 = vpop.permute.xlu0 %5538
      %v5540 = vsel %vm997, %v5533, %v5535
      %v5541 = vsel %vm997, %v5537, %v5539
      %v5546 = vsel %vm997, %v5535, 0.0
      %v5547 = vsel %vm997, %v5539, 0.0
      %v5548 = vmul.f32 %v5540, %v372
      %v5549 = vmul.f32 %v5546, %v373
      %v5550 = vmul.f32 %v5541, %v372
      %v5551 = vmul.f32 %v5547, %v373
      %5552 = vst [vmem:[#allocation2 + $0x200] sm:$0xff] %v5548
      %5553 = vst [vmem:[#allocation2 + $0x208] sm:$0xff] %v5549
      %5554 = vst [vmem:[#allocation2 + $0x210] sm:$0xff] %v5550
      %5555 = vst [vmem:[#allocation2 + $0x218] sm:$0xff] %v5551
      %5556 = vrot.lane.b32.xlu0 %v5156, 112
      %v5557 = vpop.permute.xlu0 %5556
      %5558 = vrot.lane.b32.xlu0 %v5157, 112
      %v5559 = vpop.permute.xlu0 %5558
      %5560 = vrot.lane.b32.xlu0 %v5158, 112
      %v5561 = vpop.permute.xlu0 %5560
      %5562 = vrot.lane.b32.xlu0 %v5159, 112
      %v5563 = vpop.permute.xlu0 %5562
      %v5564 = vsel %vm1032, %v5557, %v5559
      %v5565 = vsel %vm1032, %v5561, %v5563
      %v5570 = vsel %vm1032, %v5559, 0.0
      %v5571 = vsel %vm1032, %v5563, 0.0
      %v5572 = vmul.f32 %v5564, %v382
      %v5573 = vmul.f32 %v5570, %v383
      %v5574 = vmul.f32 %v5565, %v382
      %v5575 = vmul.f32 %v5571, %v383
      %5576 = vst [vmem:[#allocation2 + $0x220] sm:$0xff] %v5572
      %5577 = vst [vmem:[#allocation2 + $0x228] sm:$0xff] %v5573
      %5578 = vst [vmem:[#allocation2 + $0x230] sm:$0xff] %v5574
      %5579 = vst [vmem:[#allocation2 + $0x238] sm:$0xff] %v5575
      %5580 = vrot.lane.b32.xlu0 %v5156, 111
      %v5581 = vpop.permute.xlu0 %5580
      %5582 = vrot.lane.b32.xlu0 %v5157, 111
      %v5583 = vpop.permute.xlu0 %5582
      %5584 = vrot.lane.b32.xlu0 %v5158, 111
      %v5585 = vpop.permute.xlu0 %5584
      %5586 = vrot.lane.b32.xlu0 %v5159, 111
      %v5587 = vpop.permute.xlu0 %5586
      %v5588 = vsel %vm1067, %v5581, %v5583
      %v5589 = vsel %vm1067, %v5585, %v5587
      %v5594 = vsel %vm1067, %v5583, 0.0
      %v5595 = vsel %vm1067, %v5587, 0.0
      %v5596 = vmul.f32 %v5588, %v394
      %v5597 = vmul.f32 %v5594, %v395
      %v5598 = vmul.f32 %v5589, %v394
      %v5599 = vmul.f32 %v5595, %v395
      %5600 = vst [vmem:[#allocation2 + $0x240] sm:$0xff] %v5596
      %5601 = vst [vmem:[#allocation2 + $0x248] sm:$0xff] %v5597
      %5602 = vst [vmem:[#allocation2 + $0x250] sm:$0xff] %v5598
      %5603 = vst [vmem:[#allocation2 + $0x258] sm:$0xff] %v5599
      %5604 = vrot.lane.b32.xlu0 %v5156, 110
      %v5605 = vpop.permute.xlu0 %5604
      %5606 = vrot.lane.b32.xlu0 %v5157, 110
      %v5607 = vpop.permute.xlu0 %5606
      %5608 = vrot.lane.b32.xlu0 %v5158, 110
      %v5609 = vpop.permute.xlu0 %5608
      %5610 = vrot.lane.b32.xlu0 %v5159, 110
      %v5611 = vpop.permute.xlu0 %5610
      %v5612 = vsel %vm1102, %v5605, %v5607
      %v5613 = vsel %vm1102, %v5609, %v5611
      %v5618 = vsel %vm1102, %v5607, 0.0
      %v5619 = vsel %vm1102, %v5611, 0.0
      %v5620 = vmul.f32 %v5612, %v406
      %v5621 = vmul.f32 %v5618, %v407
      %v5622 = vmul.f32 %v5613, %v406
      %v5623 = vmul.f32 %v5619, %v407
      %5624 = vst [vmem:[#allocation2 + $0x260] sm:$0xff] %v5620
      %5625 = vst [vmem:[#allocation2 + $0x268] sm:$0xff] %v5621
      %5626 = vst [vmem:[#allocation2 + $0x270] sm:$0xff] %v5622
      %5627 = vst [vmem:[#allocation2 + $0x278] sm:$0xff] %v5623
      %5628 = vrot.lane.b32.xlu0 %v5156, 98
      %v5629 = vpop.permute.xlu0 %5628
      %5630 = vrot.lane.b32.xlu0 %v5157, 98
      %v5631 = vpop.permute.xlu0 %5630
      %5632 = vrot.lane.b32.xlu0 %v5158, 98
      %v5633 = vpop.permute.xlu0 %5632
      %5634 = vrot.lane.b32.xlu0 %v5159, 98
      %v5635 = vpop.permute.xlu0 %5634
      %v5636 = vsel %vm1137, %v5629, %v5631
      %v5637 = vsel %vm1137, %v5633, %v5635
      %v5642 = vsel %vm1137, %v5631, 0.0
      %v5643 = vsel %vm1137, %v5635, 0.0
      %v5644 = vmul.f32 %v5636, %v360
      %v5645 = vmul.f32 %v5642, %v361
      %v5646 = vmul.f32 %v5637, %v360
      %v5647 = vmul.f32 %v5643, %v361
      %5648 = vst [vmem:[#allocation2 + $0x280] sm:$0xff] %v5644
      %5649 = vst [vmem:[#allocation2 + $0x288] sm:$0xff] %v5645
      %5650 = vst [vmem:[#allocation2 + $0x290] sm:$0xff] %v5646
      %5651 = vst [vmem:[#allocation2 + $0x298] sm:$0xff] %v5647
      %5652 = vrot.lane.b32.xlu0 %v5156, 97
      %v5653 = vpop.permute.xlu0 %5652
      %5654 = vrot.lane.b32.xlu0 %v5157, 97
      %v5655 = vpop.permute.xlu0 %5654
      %5656 = vrot.lane.b32.xlu0 %v5158, 97
      %v5657 = vpop.permute.xlu0 %5656
      %5658 = vrot.lane.b32.xlu0 %v5159, 97
      %v5659 = vpop.permute.xlu0 %5658
      %v5660 = vsel %vm1172, %v5653, %v5655
      %v5661 = vsel %vm1172, %v5657, %v5659
      %v5666 = vsel %vm1172, %v5655, 0.0
      %v5667 = vsel %vm1172, %v5659, 0.0
      %v5668 = vmul.f32 %v5660, %v372
      %v5669 = vmul.f32 %v5666, %v373
      %v5670 = vmul.f32 %v5661, %v372
      %v5671 = vmul.f32 %v5667, %v373
      %5672 = vst [vmem:[#allocation2 + $0x2a0] sm:$0xff] %v5668
      %5673 = vst [vmem:[#allocation2 + $0x2a8] sm:$0xff] %v5669
      %5674 = vst [vmem:[#allocation2 + $0x2b0] sm:$0xff] %v5670
      %5675 = vst [vmem:[#allocation2 + $0x2b8] sm:$0xff] %v5671
      %5676 = vrot.lane.b32.xlu0 %v5156, 96
      %v5677 = vpop.permute.xlu0 %5676
      %5678 = vrot.lane.b32.xlu0 %v5157, 96
      %v5679 = vpop.permute.xlu0 %5678
      %5680 = vrot.lane.b32.xlu0 %v5158, 96
      %v5681 = vpop.permute.xlu0 %5680
      %5682 = vrot.lane.b32.xlu0 %v5159, 96
      %v5683 = vpop.permute.xlu0 %5682
      %v5684 = vsel %vm1207, %v5677, %v5679
      %v5685 = vsel %vm1207, %v5681, %v5683
      %v5690 = vsel %vm1207, %v5679, 0.0
      %v5691 = vsel %vm1207, %v5683, 0.0
      %v5692 = vmul.f32 %v5684, %v382
      %v5693 = vmul.f32 %v5690, %v383
      %v5694 = vmul.f32 %v5685, %v382
      %v5695 = vmul.f32 %v5691, %v383
      %5696 = vst [vmem:[#allocation2 + $0x2c0] sm:$0xff] %v5692
      %5697 = vst [vmem:[#allocation2 + $0x2c8] sm:$0xff] %v5693
      %5698 = vst [vmem:[#allocation2 + $0x2d0] sm:$0xff] %v5694
      %5699 = vst [vmem:[#allocation2 + $0x2d8] sm:$0xff] %v5695
      %5700 = vrot.lane.b32.xlu0 %v5156, 95
      %v5701 = vpop.permute.xlu0 %5700
      %5702 = vrot.lane.b32.xlu0 %v5157, 95
      %v5703 = vpop.permute.xlu0 %5702
      %5704 = vrot.lane.b32.xlu0 %v5158, 95
      %v5705 = vpop.permute.xlu0 %5704
      %5706 = vrot.lane.b32.xlu0 %v5159, 95
      %v5707 = vpop.permute.xlu0 %5706
      %v5708 = vsel %vm1242, %v5701, %v5703
      %v5709 = vsel %vm1242, %v5705, %v5707
      %v5714 = vsel %vm1242, %v5703, 0.0
      %v5715 = vsel %vm1242, %v5707, 0.0
      %v5716 = vmul.f32 %v5708, %v394
      %v5717 = vmul.f32 %v5714, %v395
      %v5718 = vmul.f32 %v5709, %v394
      %v5719 = vmul.f32 %v5715, %v395
      %5720 = vst [vmem:[#allocation2 + $0x2e0] sm:$0xff] %v5716
      %5721 = vst [vmem:[#allocation2 + $0x2e8] sm:$0xff] %v5717
      %5722 = vst [vmem:[#allocation2 + $0x2f0] sm:$0xff] %v5718
      %5723 = vst [vmem:[#allocation2 + $0x2f8] sm:$0xff] %v5719
      %5724 = vrot.lane.b32.xlu0 %v5156, 94
      %v5725 = vpop.permute.xlu0 %5724
      %5726 = vrot.lane.b32.xlu0 %v5157, 94
      %v5727 = vpop.permute.xlu0 %5726
      %5728 = vrot.lane.b32.xlu0 %v5158, 94
      %v5729 = vpop.permute.xlu0 %5728
      %5730 = vrot.lane.b32.xlu0 %v5159, 94
      %v5731 = vpop.permute.xlu0 %5730
      %v5732 = vsel %vm1277, %v5725, %v5727
      %v5733 = vsel %vm1277, %v5729, %v5731
      %v5738 = vsel %vm1277, %v5727, 0.0
      %v5739 = vsel %vm1277, %v5731, 0.0
      %v5740 = vmul.f32 %v5732, %v406
      %v5741 = vmul.f32 %v5738, %v407
      %v5742 = vmul.f32 %v5733, %v406
      %v5743 = vmul.f32 %v5739, %v407
      %5744 = vst [vmem:[#allocation2 + $0x300] sm:$0xff] %v5740
      %5745 = vst [vmem:[#allocation2 + $0x308] sm:$0xff] %v5741
      %5746 = vst [vmem:[#allocation2 + $0x310] sm:$0xff] %v5742
      %5747 = vst [vmem:[#allocation2 + $0x318] sm:$0xff] %v5743
      %s5748 = scalar_lea.vmem %s4, 256
      %v5749 = vld [vmem:[%s5748] sm:$0xff]
      %v5750 = vld [vmem:[%s5748 + $0x8] sm:$0xff]
      %v5751 = vld [vmem:[%s5748 + $0x10] sm:$0xff]
      %v5752 = vld [vmem:[%s5748 + $0x18] sm:$0xff]
      %v5753 = vld [vmem:[%s5748 + $0x20] sm:$0xff]
      %v5754 = vld [vmem:[%s5748 + $0x28] sm:$0xff]
      %v5755 = vld [vmem:[%s5748 + $0x30] sm:$0xff]
      %v5756 = vld [vmem:[%s5748 + $0x38] sm:$0xff]
      %v5757 = vld [vmem:[%s5748 + $0x40] sm:$0xff]
      %v5758 = vld [vmem:[%s5748 + $0x48] sm:$0xff]
      %v5759 = vld [vmem:[%s5748 + $0x50] sm:$0xff]
      %v5760 = vld [vmem:[%s5748 + $0x58] sm:$0xff]
      %v5761 = vld [vmem:[%s5748 + $0x60] sm:$0xff]
      %v5762 = vld [vmem:[%s5748 + $0x68] sm:$0xff]
      %v5763 = vld [vmem:[%s5748 + $0x70] sm:$0xff]
      %v5764 = vld [vmem:[%s5748 + $0x78] sm:$0xff]
      %v5765 = vld [vmem:[#allocation2] sm:$0xff]
      %v5766 = vld [vmem:[#allocation2 + $0x8] sm:$0xff]
      %v5767 = vld [vmem:[#allocation2 + $0x10] sm:$0xff]
      %v5768 = vld [vmem:[#allocation2 + $0x18] sm:$0xff]
      %v5769 = vld [vmem:[#allocation2 + $0x20] sm:$0xff]
      %v5770 = vld [vmem:[#allocation2 + $0x28] sm:$0xff]
      %v5771 = vld [vmem:[#allocation2 + $0x30] sm:$0xff]
      %v5772 = vld [vmem:[#allocation2 + $0x38] sm:$0xff]
      %v5773 = vld [vmem:[#allocation2 + $0x40] sm:$0xff]
      %v5774 = vld [vmem:[#allocation2 + $0x48] sm:$0xff]
      %v5775 = vld [vmem:[#allocation2 + $0x50] sm:$0xff]
      %v5776 = vld [vmem:[#allocation2 + $0x58] sm:$0xff]
      %v5777 = vld [vmem:[#allocation2 + $0x60] sm:$0xff]
      %v5778 = vld [vmem:[#allocation2 + $0x68] sm:$0xff]
      %v5779 = vld [vmem:[#allocation2 + $0x70] sm:$0xff]
      %v5780 = vld [vmem:[#allocation2 + $0x78] sm:$0xff]
      %v5781 = vld [vmem:[#allocation2 + $0x80] sm:$0xff]
      %v5782 = vld [vmem:[#allocation2 + $0x88] sm:$0xff]
      %v5783 = vld [vmem:[#allocation2 + $0x90] sm:$0xff]
      %v5784 = vld [vmem:[#allocation2 + $0x98] sm:$0xff]
      %v5785 = vld [vmem:[#allocation2 + $0xa0] sm:$0xff]
      %v5786 = vld [vmem:[#allocation2 + $0xa8] sm:$0xff]
      %v5787 = vld [vmem:[#allocation2 + $0xb0] sm:$0xff]
      %v5788 = vld [vmem:[#allocation2 + $0xb8] sm:$0xff]
      %v5789 = vld [vmem:[#allocation2 + $0xc0] sm:$0xff]
      %v5790 = vld [vmem:[#allocation2 + $0xc8] sm:$0xff]
      %v5791 = vld [vmem:[#allocation2 + $0xd0] sm:$0xff]
      %v5792 = vld [vmem:[#allocation2 + $0xd8] sm:$0xff]
      %v5793 = vld [vmem:[#allocation2 + $0xe0] sm:$0xff]
      %v5794 = vld [vmem:[#allocation2 + $0xe8] sm:$0xff]
      %v5795 = vld [vmem:[#allocation2 + $0xf0] sm:$0xff]
      %v5796 = vld [vmem:[#allocation2 + $0xf8] sm:$0xff]
      %v5797 = vld [vmem:[#allocation2 + $0x100] sm:$0xff]
      %v5798 = vld [vmem:[#allocation2 + $0x108] sm:$0xff]
      %v5799 = vld [vmem:[#allocation2 + $0x110] sm:$0xff]
      %v5800 = vld [vmem:[#allocation2 + $0x118] sm:$0xff]
      %v5801 = vld [vmem:[#allocation2 + $0x120] sm:$0xff]
      %v5802 = vld [vmem:[#allocation2 + $0x128] sm:$0xff]
      %v5803 = vld [vmem:[#allocation2 + $0x130] sm:$0xff]
      %v5804 = vld [vmem:[#allocation2 + $0x138] sm:$0xff]
      %v5805 = vld [vmem:[#allocation2 + $0x140] sm:$0xff]
      %v5806 = vld [vmem:[#allocation2 + $0x148] sm:$0xff]
      %v5807 = vld [vmem:[#allocation2 + $0x150] sm:$0xff]
      %v5808 = vld [vmem:[#allocation2 + $0x158] sm:$0xff]
      %v5809 = vld [vmem:[#allocation2 + $0x160] sm:$0xff]
      %v5810 = vld [vmem:[#allocation2 + $0x168] sm:$0xff]
      %v5811 = vld [vmem:[#allocation2 + $0x170] sm:$0xff]
      %v5812 = vld [vmem:[#allocation2 + $0x178] sm:$0xff]
      %v5813 = vld [vmem:[#allocation2 + $0x180] sm:$0xff]
      %v5814 = vld [vmem:[#allocation2 + $0x188] sm:$0xff]
      %v5815 = vld [vmem:[#allocation2 + $0x190] sm:$0xff]
      %v5816 = vld [vmem:[#allocation2 + $0x198] sm:$0xff]
      %v5817 = vld [vmem:[#allocation2 + $0x1a0] sm:$0xff]
      %v5818 = vld [vmem:[#allocation2 + $0x1a8] sm:$0xff]
      %v5819 = vld [vmem:[#allocation2 + $0x1b0] sm:$0xff]
      %v5820 = vld [vmem:[#allocation2 + $0x1b8] sm:$0xff]
      %v5821 = vld [vmem:[#allocation2 + $0x1c0] sm:$0xff]
      %v5822 = vld [vmem:[#allocation2 + $0x1c8] sm:$0xff]
      %v5823 = vld [vmem:[#allocation2 + $0x1d0] sm:$0xff]
      %v5824 = vld [vmem:[#allocation2 + $0x1d8] sm:$0xff]
      %v5825 = vld [vmem:[#allocation2 + $0x1e0] sm:$0xff]
      %v5826 = vld [vmem:[#allocation2 + $0x1e8] sm:$0xff]
      %v5827 = vld [vmem:[#allocation2 + $0x1f0] sm:$0xff]
      %v5828 = vld [vmem:[#allocation2 + $0x1f8] sm:$0xff]
      %v5829 = vld [vmem:[#allocation2 + $0x200] sm:$0xff]
      %v5830 = vld [vmem:[#allocation2 + $0x208] sm:$0xff]
      %v5831 = vld [vmem:[#allocation2 + $0x210] sm:$0xff]
      %v5832 = vld [vmem:[#allocation2 + $0x218] sm:$0xff]
      %v5833 = vld [vmem:[#allocation2 + $0x220] sm:$0xff]
      %v5834 = vld [vmem:[#allocation2 + $0x228] sm:$0xff]
      %v5835 = vld [vmem:[#allocation2 + $0x230] sm:$0xff]
      %v5836 = vld [vmem:[#allocation2 + $0x238] sm:$0xff]
      %v5837 = vld [vmem:[#allocation2 + $0x240] sm:$0xff]
      %v5838 = vld [vmem:[#allocation2 + $0x248] sm:$0xff]
      %v5839 = vld [vmem:[#allocation2 + $0x250] sm:$0xff]
      %v5840 = vld [vmem:[#allocation2 + $0x258] sm:$0xff]
      %v5841 = vld [vmem:[#allocation2 + $0x260] sm:$0xff]
      %v5842 = vld [vmem:[#allocation2 + $0x268] sm:$0xff]
      %v5843 = vld [vmem:[#allocation2 + $0x270] sm:$0xff]
      %v5844 = vld [vmem:[#allocation2 + $0x278] sm:$0xff]
      %v5845 = vld [vmem:[#allocation2 + $0x280] sm:$0xff]
      %v5846 = vld [vmem:[#allocation2 + $0x288] sm:$0xff]
      %v5847 = vld [vmem:[#allocation2 + $0x290] sm:$0xff]
      %v5848 = vld [vmem:[#allocation2 + $0x298] sm:$0xff]
      %v5849 = vld [vmem:[#allocation2 + $0x2a0] sm:$0xff]
      %v5850 = vld [vmem:[#allocation2 + $0x2a8] sm:$0xff]
      %v5851 = vld [vmem:[#allocation2 + $0x2b0] sm:$0xff]
      %v5852 = vld [vmem:[#allocation2 + $0x2b8] sm:$0xff]
      %v5853 = vld [vmem:[#allocation2 + $0x2c0] sm:$0xff]
      %v5854 = vld [vmem:[#allocation2 + $0x2c8] sm:$0xff]
      %v5855 = vld [vmem:[#allocation2 + $0x2d0] sm:$0xff]
      %v5856 = vld [vmem:[#allocation2 + $0x2d8] sm:$0xff]
      %v5857 = vld [vmem:[#allocation2 + $0x2e0] sm:$0xff]
      %v5858 = vld [vmem:[#allocation2 + $0x2e8] sm:$0xff]
      %v5859 = vld [vmem:[#allocation2 + $0x2f0] sm:$0xff]
      %v5860 = vld [vmem:[#allocation2 + $0x2f8] sm:$0xff]
      %v5861 = vld [vmem:[#allocation2 + $0x300] sm:$0xff]
      %v5862 = vld [vmem:[#allocation2 + $0x308] sm:$0xff]
      %v5863 = vld [vmem:[#allocation2 + $0x310] sm:$0xff]
      %v5864 = vld [vmem:[#allocation2 + $0x318] sm:$0xff]
      %s5865 = scalar_lea.vmem %s5, 64
      %v5866 = vld [vmem:[%s5865] sm:$0xff]
      %v5867 = vld [vmem:[%s5865 + $0x8] sm:$0xff]
      %v5868 = vld [vmem:[%s5865 + $0x10] sm:$0xff]
      %v5869 = vld [vmem:[%s5865 + $0x18] sm:$0xff]
      %5871 = vset.pattern.permute.xlu0 0
      %5872 = vperm.xlu0 %5871, %v5866
      %v5873 = vpop.permute.xlu0 %5872
      %5876 = vset.pattern.permute.xlu0 0
      %5877 = vperm.xlu0 %5876, %v5867
      %v5878 = vpop.permute.xlu0 %5877
      %5881 = vset.pattern.permute.xlu0 0
      %5882 = vperm.xlu0 %5881, %v5868
      %v5883 = vpop.permute.xlu0 %5882
      %5886 = vset.pattern.permute.xlu0 0
      %5887 = vperm.xlu0 %5886, %v5869
      %v5888 = vpop.permute.xlu0 %5887
      %v5891 = vsel %vm671, %v5752, 0
      %v5894 = vsel %vm671, %v5756, 0
      %v5897 = vsel %vm671, %v5760, 0
      %v5900 = vsel %vm671, %v5764, 0
      %5902 = vmatprep.subr.mxu0 %v5796
      %5903 = vmatpush1.msra.mxu0 %v5795
      %5904 = vmatprep.subr.mxu0 %v5794
      %5905 = vmatpush1.msra.mxu0 %v5793
      %5906 = vmatprep.subr.mxu0 %v5792
      %5907 = vmatpush1.msra.mxu0 %v5791
      %5908 = vmatprep.subr.mxu0 %v5790
      %5909 = vmatpush1.msra.mxu0 %v5789
      %5910 = vmatprep.subr.mxu0 %v5788
      %5911 = vmatpush1.msra.mxu0 %v5787
      %5912 = vmatprep.subr.mxu0 %v5786
      %5913 = vmatpush1.msra.mxu0 %v5785
      %5914 = vmatprep.subr.mxu0 %v5784
      %5915 = vmatpush1.msra.mxu0 %v5783
      %5916 = vmatprep.subr.mxu0 %v5782
      %5917 = vmatpush1.msra.mxu0 %v5781
      %5918 = vmatprep.subr.mxu0 %v5780
      %5919 = vmatpush1.msra.mxu0 %v5779
      %5920 = vmatprep.subr.mxu0 %v5778
      %5921 = vmatpush1.msra.mxu0 %v5777
      %5922 = vmatprep.subr.mxu0 %v5776
      %5923 = vmatpush1.msra.mxu0 %v5775
      %5924 = vmatprep.subr.mxu0 %v5774
      %5925 = vmatpush1.msra.mxu0 %v5773
      %5926 = vmatprep.subr.mxu0 %v5772
      %5927 = vmatpush1.msra.mxu0 %v5771
      %5928 = vmatprep.subr.mxu0 %v5770
      %5929 = vmatpush1.msra.mxu0 %v5769
      %5930 = vmatprep.subr.mxu0 %v5768
      %5931 = vmatpush1.msra.mxu0 %v5767
      %5932 = vmatprep.subr.mxu0 %v5766
      %5933 = vmatpush1.msra.mxu0 %v5765
      %5934 = vmatprep.subr.mxu0 %v5828
      %5935 = vmatpush2.msra.mxu0 %v5827
      %5936 = vmatprep.subr.mxu0 %v5826
      %5937 = vmatpush2.msra.mxu0 %v5825
      %5938 = vmatprep.subr.mxu0 %v5824
      %5939 = vmatpush2.msra.mxu0 %v5823
      %5940 = vmatprep.subr.mxu0 %v5822
      %5941 = vmatpush2.msra.mxu0 %v5821
      %5942 = vmatprep.subr.mxu0 %v5820
      %5943 = vmatpush2.msra.mxu0 %v5819
      %5944 = vmatprep.subr.mxu0 %v5818
      %5945 = vmatpush2.msra.mxu0 %v5817
      %5946 = vmatprep.subr.mxu0 %v5816
      %5947 = vmatpush2.msra.mxu0 %v5815
      %5948 = vmatprep.subr.mxu0 %v5814
      %5949 = vmatpush2.msra.mxu0 %v5813
      %5950 = vmatprep.subr.mxu0 %v5812
      %5951 = vmatpush2.msra.mxu0 %v5811
      %5952 = vmatprep.subr.mxu0 %v5810
      %5953 = vmatpush2.msra.mxu0 %v5809
      %5954 = vmatprep.subr.mxu0 %v5808
      %5955 = vmatpush2.msra.mxu0 %v5807
      %5956 = vmatprep.subr.mxu0 %v5806
      %5957 = vmatpush2.msra.mxu0 %v5805
      %5958 = vmatprep.subr.mxu0 %v5804
      %5959 = vmatpush2.msra.mxu0 %v5803
      %5960 = vmatprep.subr.mxu0 %v5802
      %5961 = vmatpush2.msra.mxu0 %v5801
      %5962 = vmatprep.subr.mxu0 %v5800
      %5963 = vmatpush2.msra.mxu0 %v5799
      %5964 = vmatprep.subr.mxu0 %v5798
      %5965 = vmatpush2.msra.mxu0 %v5797
      %5966 = vmatprep.mubr.f32.mxu0 %v5750
      %5967 = vmatmul.mubr.f32.gmra.mxu0 %v5749
      %v5968 = vpop.f32.mrf.mxu0
      %v5969 = vadd.f32 %v5873, %v5968
      %v5970 = vpop.f32.mrf.mxu0
      %v5971 = vadd.f32 %v5873, %v5970
      %5972 = vmatprep.mubr.f32.mxu0 %v5754
      %5973 = vmatmul.mubr.f32.gmra.mxu0 %v5753
      %v5974 = vpop.f32.mrf.mxu0
      %v5975 = vadd.f32 %v5878, %v5974
      %v5976 = vpop.f32.mrf.mxu0
      %v5977 = vadd.f32 %v5878, %v5976
      %5978 = vmatprep.mubr.f32.mxu0 %v5758
      %5979 = vmatmul.mubr.f32.gmra.mxu0 %v5757
      %v5980 = vpop.f32.mrf.mxu0
      %v5981 = vadd.f32 %v5883, %v5980
      %v5982 = vpop.f32.mrf.mxu0
      %v5983 = vadd.f32 %v5883, %v5982
      %5984 = vmatprep.mubr.f32.mxu0 %v5762
      %5985 = vmatmul.mubr.f32.gmra.mxu0 %v5761
      %v5986 = vpop.f32.mrf.mxu0
      %v5987 = vadd.f32 %v5888, %v5986
      %v5988 = vpop.f32.mrf.mxu0
      %v5989 = vadd.f32 %v5888, %v5988
      %5990 = vdwg.mxu0
      %5991 = vmatprep.subr.mxu0 %v5860
      %5992 = vmatpush1.msra.mxu0 %v5859
      %5993 = vmatprep.subr.mxu0 %v5858
      %5994 = vmatpush1.msra.mxu0 %v5857
      %5995 = vmatprep.subr.mxu0 %v5856
      %5996 = vmatpush1.msra.mxu0 %v5855
      %5997 = vmatprep.subr.mxu0 %v5854
      %5998 = vmatpush1.msra.mxu0 %v5853
      %5999 = vmatprep.subr.mxu0 %v5852
      %6000 = vmatpush1.msra.mxu0 %v5851
      %6001 = vmatprep.subr.mxu0 %v5850
      %6002 = vmatpush1.msra.mxu0 %v5849
      %6003 = vmatprep.subr.mxu0 %v5848
      %6004 = vmatpush1.msra.mxu0 %v5847
      %6005 = vmatprep.subr.mxu0 %v5846
      %6006 = vmatpush1.msra.mxu0 %v5845
      %6007 = vmatprep.subr.mxu0 %v5844
      %6008 = vmatpush1.msra.mxu0 %v5843
      %6009 = vmatprep.subr.mxu0 %v5842
      %6010 = vmatpush1.msra.mxu0 %v5841
      %6011 = vmatprep.subr.mxu0 %v5840
      %6012 = vmatpush1.msra.mxu0 %v5839
      %6013 = vmatprep.subr.mxu0 %v5838
      %6014 = vmatpush1.msra.mxu0 %v5837
      %6015 = vmatprep.subr.mxu0 %v5836
      %6016 = vmatpush1.msra.mxu0 %v5835
      %6017 = vmatprep.subr.mxu0 %v5834
      %6018 = vmatpush1.msra.mxu0 %v5833
      %6019 = vmatprep.subr.mxu0 %v5832
      %6020 = vmatpush1.msra.mxu0 %v5831
      %6021 = vmatprep.subr.mxu0 %v5830
      %6022 = vmatpush1.msra.mxu0 %v5829
      %6023 = vmatprep.subr.mxu0 0.0
      %6024 = vmatpush2.msra.mxu0 0.0
      %6025 = vmatprep.subr.mxu0 0.0
      %6026 = vmatpush2.msra.mxu0 0.0
      %6027 = vmatprep.subr.mxu0 0.0
      %6028 = vmatpush2.msra.mxu0 0.0
      %6029 = vmatprep.subr.mxu0 0.0
      %6030 = vmatpush2.msra.mxu0 0.0
      %6031 = vmatprep.subr.mxu0 0.0
      %6032 = vmatpush2.msra.mxu0 0.0
      %6033 = vmatprep.subr.mxu0 0.0
      %6034 = vmatpush2.msra.mxu0 0.0
      %6035 = vmatprep.subr.mxu0 0.0
      %6036 = vmatpush2.msra.mxu0 0.0
      %6037 = vmatprep.subr.mxu0 0.0
      %6038 = vmatpush2.msra.mxu0 0.0
      %6039 = vmatprep.subr.mxu0 0.0
      %6040 = vmatpush2.msra.mxu0 0.0
      %6041 = vmatprep.subr.mxu0 0.0
      %6042 = vmatpush2.msra.mxu0 0.0
      %6043 = vmatprep.subr.mxu0 0.0
      %6044 = vmatpush2.msra.mxu0 0.0
      %6045 = vmatprep.subr.mxu0 0.0
      %6046 = vmatpush2.msra.mxu0 0.0
      %6047 = vmatprep.subr.mxu0 0.0
      %6048 = vmatpush2.msra.mxu0 0.0
      %6049 = vmatprep.subr.mxu0 0.0
      %6050 = vmatpush2.msra.mxu0 0.0
      %6051 = vmatprep.subr.mxu0 %v5864
      %6052 = vmatpush2.msra.mxu0 %v5863
      %6053 = vmatprep.subr.mxu0 %v5862
      %6054 = vmatpush2.msra.mxu0 %v5861
      %6055 = vmatprep.mubr.f32.mxu0 %v5891
      %6056 = vmatmul.mubr.f32.gmra.mxu0 %v5751
      %v6057 = vpop.f32.mrf.mxu0
      %v6058 = vadd.f32 %v5969, %v6057
      %v6059 = vpop.f32.mrf.mxu0
      %v6060 = vadd.f32 %v5971, %v6059
      %6061 = vmatprep.mubr.f32.mxu0 %v5894
      %6062 = vmatmul.mubr.f32.gmra.mxu0 %v5755
      %v6063 = vpop.f32.mrf.mxu0
      %v6064 = vadd.f32 %v5975, %v6063
      %v6065 = vpop.f32.mrf.mxu0
      %v6066 = vadd.f32 %v5977, %v6065
      %6067 = vmatprep.mubr.f32.mxu0 %v5897
      %6068 = vmatmul.mubr.f32.gmra.mxu0 %v5759
      %v6069 = vpop.f32.mrf.mxu0
      %v6070 = vadd.f32 %v5981, %v6069
      %v6071 = vpop.f32.mrf.mxu0
      %v6072 = vadd.f32 %v5983, %v6071
      %6073 = vmatprep.mubr.f32.mxu0 %v5900
      %6074 = vmatmul.mubr.f32.gmra.mxu0 %v5763
      %v6075 = vpop.f32.mrf.mxu0
      %v6076 = vadd.f32 %v5987, %v6075
      %v6077 = vpop.f32.mrf.mxu0
      %v6078 = vadd.f32 %v5989, %v6077
      %6079 = vdwg.mxu0
      %vm6080 = vcmp.ge.f32.partialorder %v6058, 0.0
      %vm6081 = vcmp.ge.f32.partialorder %v6060, 0.0
      %vm6082 = vcmp.ge.f32.partialorder %v6064, 0.0
      %vm6083 = vcmp.ge.f32.partialorder %v6066, 0.0
      %vm6084 = vcmp.ge.f32.partialorder %v6070, 0.0
      %vm6085 = vcmp.ge.f32.partialorder %v6072, 0.0
      %vm6086 = vcmp.ge.f32.partialorder %v6076, 0.0
      %vm6087 = vcmp.ge.f32.partialorder %v6078, 0.0
      %v6088 = vmul.f32 %v6058, 0.2
      %v6089 = vmul.f32 %v6060, 0.2
      %v6090 = vmul.f32 %v6064, 0.2
      %v6091 = vmul.f32 %v6066, 0.2
      %v6092 = vmul.f32 %v6070, 0.2
      %v6093 = vmul.f32 %v6072, 0.2
      %v6094 = vmul.f32 %v6076, 0.2
      %v6095 = vmul.f32 %v6078, 0.2
      %v6096 = vsel %vm6080, %v6058, %v6088
      %v6097 = vsel %vm6081, %v6060, %v6089
      %v6098 = vsel %vm6082, %v6064, %v6090
      %v6099 = vsel %vm6083, %v6066, %v6091
      %v6100 = vsel %vm6084, %v6070, %v6092
      %v6101 = vsel %vm6085, %v6072, %v6093
      %v6102 = vsel %vm6086, %v6076, %v6094
      %v6103 = vsel %vm6087, %v6078, %v6095
      %s6104 = scalar_lea.vmem %s6, 64
      %v6105 = vld [vmem:[%s6104] sm:$0xff]
      %v6106 = vld [vmem:[%s6104 + $0x8] sm:$0xff]
      %v6107 = vld [vmem:[%s6104 + $0x10] sm:$0xff]
      %v6108 = vld [vmem:[%s6104 + $0x18] sm:$0xff]
      %6110 = vset.pattern.permute.xlu0 0
      %6111 = vperm.xlu0 %6110, %v6105
      %v6112 = vpop.permute.xlu0 %6111
      %6115 = vset.pattern.permute.xlu0 0
      %6116 = vperm.xlu0 %6115, %v6106
      %v6117 = vpop.permute.xlu0 %6116
      %6120 = vset.pattern.permute.xlu0 0
      %6121 = vperm.xlu0 %6120, %v6107
      %v6122 = vpop.permute.xlu0 %6121
      %6125 = vset.pattern.permute.xlu0 0
      %6126 = vperm.xlu0 %6125, %v6108
      %v6127 = vpop.permute.xlu0 %6126
      %v6129 = vmul.f32 %v6096, %v6112
      %v6130 = vmul.f32 %v6097, %v6112
      %v6131 = vmul.f32 %v6098, %v6117
      %v6132 = vmul.f32 %v6099, %v6117
      %v6133 = vmul.f32 %v6100, %v6122
      %v6134 = vmul.f32 %v6101, %v6122
      %v6135 = vmul.f32 %v6102, %v6127
      %v6136 = vmul.f32 %v6103, %v6127
      %v6137 = vadd.f32 %v6129, %v6131
      %v6138 = vadd.f32 %v6137, %v6133
      %v6139 = vadd.f32 %v6138, %v6135
      %v6140 = vrot.slane %v6139, 4
      %v6141 = vadd.f32 %v6139, %v6140
      %v6142 = vrot.slane %v6141, 2
      %v6143 = vadd.f32 %v6141, %v6142
      %v6144 = vrot.slane %v6143, 1
      %v6145 = vadd.f32 %v6143, %v6144
      %v6146 = vadd.f32 %v6130, %v6132
      %v6147 = vadd.f32 %v6146, %v6134
      %v6148 = vadd.f32 %v6147, %v6136
      %v6149 = vrot.slane %v6148, 4
      %v6150 = vadd.f32 %v6148, %v6149
      %v6151 = vrot.slane %v6150, 2
      %v6152 = vadd.f32 %v6150, %v6151
      %v6153 = vrot.slane %v6152, 1
      %v6154 = vadd.f32 %v6152, %v6153
      %s6155 = scalar_lea.vmem %s7, 2
      %v6156 = vld [vmem:[%s6155] sm:$0x1]
      %6158 = vset.pattern.permute.xlu0 0
      %6159 = vperm.xlu0 %6158, %v6156
      %v6160 = vpop.permute.xlu0 %6159
      %v6162 = vlaneseq
      %v6163 = vshrl.u32 %v6162, 7
      %v6164 = vsub.s32 0, %v6163
      %v6165 = vrot.slane %v6160, %v6164
      %v6166 = vadd.f32 %v6145, %v6165
      %v6167 = vadd.f32 %v6154, %v6165
      %s6168 = scalar_lea.vmem %s317, 2
      %v6169 = vld [vmem:[%s6168] ss:$4 sm:$0x3]
      %v6170 = vxor.u32 %v6166, 2147483648
      %v6171 = vxor.u32 %v6167, 2147483648
      %v6172 = vmul.f32 %v6170, 1.442695
      %v6173 = vpow.pop %v6172
      %v6174 = vmul.f32 %v6171, 1.442695
      %v6175 = vpow.pop %v6174
      %v6176 = vadd.f32 %v6173, 1.0
      %v6177 = vadd.f32 %v6175, 1.0
      %v6178 = vrcp.pop %v6176
      %v6179 = vmul.f32 1.0, %v6178
      %v6180 = vrcp.pop %v6177
      %v6181 = vmul.f32 1.0, %v6180
      %v6184 = vcombine.low %v6179, %v6181
      %v6186 = vunpack.c.l.s4 1966171168
      %v6187 = vunpack.c.0.s8 %v6186
      %v6188 = vlaneseq
      %v6189 = vshrl.u32 %v6188, 7
      %v6190 = vsub.s32 %v6187, %v6189
      %v6191 = vrot.slane %v6184, %v6190
      %v6193 = vunpack.c.l.s4 1966171168
      %v6194 = vunpack.c.0.s8 %v6193
      %v6195 = vlaneseq
      %v6196 = vshrl.u32 %v6195, 7
      %v6197 = vsub.s32 %v6194, %v6196
      %v6198 = vrot.slane %v6191, %v6197
      %v6200 = vmul.f32 %v6169, %v6198
      %s6201 = scalar_lea.vmem %s322, 2
      %6202 = vst.msk [vmem:[%s6201] ss:$4 sm:$0x3] %vm2375, %v6200
      %p6203 = scmp.lt.s32.totalorder %s19, 1
      %s6204 = scalar_select %p6203, %s19, 1
      %s6205 = smul.addr %s6204, 2
      %s6206 = smul.addr %s6205, 4
      %s6207 = scalar_lea.vmem %s8, %s6206
      // Predicated region
      $region53: #{target_attention_forward.1} parent=51 // pred_check
        %p6208 = pneg %p215
      $region54: #{target_attention_forward.1} parent=51 // pred_check_branch
        %6210 = sbr.rel (%p6208) target = $region56
      $region55: #{target_attention_forward.1} parent=51 // pred_region
        _
      $region56: #{target_attention_forward.1} parent=51 // pred_fallthru
        _
    $region52: #{target_attention_forward.1} parent=5 // pred_fallthru
      _
    %p6211 = scmp.le.s32.totalorder 2, %s14
    // Predicated region
    $region57: #{target_attention_forward.1} parent=5 // pred_check
      %p6212 = pneg %p6211
    $region58: #{target_attention_forward.1} parent=5 // pred_check_branch
      %6214 = sbr.rel (%p6212) target = $region60
    $region59: #{target_attention_forward.1} parent=5 // pred_region
      %s6215 = ssub.s32 %s14, 2
      // Predicated region
      $region61: #{target_attention_forward.1} parent=59 // pred_check
        %p6216 = pneg %p221
      $region62: #{target_attention_forward.1} parent=59 // pred_check_branch
        %6218 = sbr.rel (%p6216) target = $region64
      $region63: #{target_attention_forward.1} parent=59 // pred_region
        %p6219 = scmp.lt.s32.totalorder %s20, 1
        %s6220 = scalar_select %p6219, %s20, 1
        %s6221 = smul.addr %s6220, 2
        %s6222 = smul.addr %s6221, 4
        %s6223 = scalar_lea.vmem %s8, %s6222
      $region64: #{target_attention_forward.1} parent=59 // pred_fallthru
        _
    $region60: #{target_attention_forward.1} parent=5 // pred_fallthru
      _
  $region6: #{target_attention_forward.1} parent=0 // loop_footer
    %s18 = sadd.s32 1, %s14
  $region7: #{target_attention_forward.1} parent=0 // loop_footer_branch
    %13 = sbr.rel target = $region3
  $region8: #{target_attention_forward.1} parent=0 // loop_exit
    _

</llo_original>
